<compile_context>
chip_gen: v7x
topology: tpu7x:2x2x1
jax: 0.10.0
libtpu: 0.0.40
codegen_flags: <defaults>
</compile_context>

<pallas_src>
import functools

import jax
import jax.numpy as jnp
from jax import lax
from jax.experimental import pallas as pl
from jax.experimental.pallas import tpu as pltpu

F32 = jnp.float32
BF16 = jnp.bfloat16


def _round_up(x, m):
    return (x + m - 1) // m * m


# ------------------------------ fused kernel -------------------------------

def _fused_forward_kernel(
    x_ref,
    w1_ref, s1_ref, b1_ref,
    w2_ref, s2_ref, b2_ref,
    S1_ref,
    w3_ref, s3_ref, b3_ref,
    S2_ref,
    wd1_ref, sd1_ref, bd1_ref, E1_ref,
    wd2_ref, sd2_ref, bd2_ref, E2_ref,
    w4_ref, b4_ref,
    o_ref,
    pad_ref,
    *, H, W, PB,
):
    """Whole DenoisingCNN forward for one batch element; activations in VMEM.

    Activations are channels-last and spatially flattened: (H*W, C), C on the
    128-lane axis, H*W on sublanes.
    """
    HW = H * W
    H2, W2 = H // 2, W // 2
    HW2 = H2 * W2

    # ---- hoisted column-wrap masks (computed once, reused by every conv) ----
    def col_masks(HWl, Wl):
        idx = lax.broadcasted_iota(jnp.int32, (HWl, 1), 0)
        if Wl & (Wl - 1) == 0:                 # power of two: avoid integer rem
            col = jnp.bitwise_and(idx, Wl - 1)
        else:
            col = idx % Wl
        return col >= 1, col <= Wl - 2          # masks for kw=0 / kw=2 taps

    masks_full = col_masks(HW, W)
    masks_half = col_masks(HW2, W2)

    def store_bands(x, HWl, Wl):
        # Store three kh-shifted copies of x (HWl, C) into column bands of the
        # padded scratch so every kw tap of a 3x3 conv reads ONE contiguous,
        # 8-aligned (HWl, 3C) slab (taps merged along K).  Only the margin
        # rows actually read as zero padding are cleared.
        C = x.shape[1]
        zeros = jnp.zeros((Wl, C), F32)
        pad_ref[PB:PB + Wl, 0:C] = zeros                        # kh=0 top margin
        pad_ref[PB + HWl - Wl:PB + HWl, 2 * C:3 * C] = zeros    # kh=2 bottom margin
        pad_ref[PB + Wl:PB + Wl + HWl, 0:C] = x                 # kh = 0 band
        pad_ref[PB:PB + HWl, C:2 * C] = x                       # kh = 1 band
        pad_ref[PB - Wl:PB - Wl + HWl, 2 * C:3 * C] = x         # kh = 2 band

    def conv3x3(x, HWl, Wl, masks, w_ref, scale, bias):
        # 3x3 SAME conv + folded-BN affine: one K=3*Cin matmul per kw tap.
        C = x.shape[1]
        Cout = w_ref.shape[2]
        store_bands(x, HWl, Wl)
        m0, m2 = masks
        acc = jnp.zeros((HWl, Cout), F32)
        for kw in range(3):
            src = pad_ref[PB + kw - 1:PB + kw - 1 + HWl, 0:3 * C]
            if kw == 0:
                src = jnp.where(m0, src, 0.0)
            elif kw == 2:
                src = jnp.where(m2, src, 0.0)
            src = src.astype(w_ref.dtype)
            acc += jnp.dot(src, w_ref[kw], preferred_element_type=F32)
        return acc * scale + bias

    def conv3x3_final(x, HWl, Wl, masks, w_ref, bias):
        # Final Cout=1 conv computed directly in lane-dense (1, HWl) layout via
        # a transposed contraction (avoids N=1 matmuls and 1-lane stores).
        C = x.shape[1]
        store_bands(x, HWl, Wl)
        m0, m2 = masks
        dn = (((1,), (1,)), ((), ()))
        acc = jnp.zeros((1, HWl), F32)
        for kw in range(3):
            src = pad_ref[PB + kw - 1:PB + kw - 1 + HWl, 0:3 * C]
            if kw == 0:
                src = jnp.where(m0, src, 0.0)
            elif kw == 2:
                src = jnp.where(m2, src, 0.0)
            acc += lax.dot_general(w_ref[kw], src.astype(BF16),
                                   dimension_numbers=dn,
                                   preferred_element_type=F32)
        return acc + bias

    def maxpool2x2(x, HWl, Wl, S_ref):
        # 2x2/stride-2 max pool: elementwise max of the 4 window taps, then an
        # exact bf16 0/1 selection matmul compacting to the pooled grid.
        C = x.shape[1]
        pad_ref[PB:PB + HWl, 0:C] = x
        pad_ref[PB + HWl:PB + HWl + Wl + 1, 0:C] = jnp.zeros((Wl + 1, C), F32)

        def rd(s):
            return pad_ref[PB + s:PB + s + HWl, 0:C]

        m = jnp.maximum(jnp.maximum(rd(0), rd(1)),
                        jnp.maximum(rd(Wl), rd(Wl + 1)))
        return jnp.dot(S_ref[...], m.astype(BF16), preferred_element_type=F32)

    def deconv2x2(z, wd_ref, E_ref, scale, bias):
        # ConvTranspose2d(k=2, s=2): ONE fused tap matmul producing all four
        # taps (N = 4*Cout = 128 lanes), then 4 exact bf16 0/1 scatter matmuls
        # interleaving onto the 2x-upsampled grid, + folded BN + ReLU.
        HWo = E_ref.shape[1]
        Cout = wd_ref.shape[1] // 4
        Y = jnp.dot(z.astype(BF16), wd_ref[...], preferred_element_type=F32)
        u = jnp.zeros((HWo, Cout), F32)
        for t in range(4):
            yt = Y[:, t * Cout:(t + 1) * Cout].astype(BF16)
            u += jnp.dot(E_ref[t], yt, preferred_element_type=F32)
        return jnp.maximum(u * scale + bias, 0.0)

    relu = lambda v: jnp.maximum(v, 0.0)
    x = x_ref[0]                                                      # (HW, 1)

    # ---- encoder ----
    a = relu(conv3x3(x, HW, W, masks_full, w1_ref, s1_ref[...], b1_ref[...]))
    a = relu(conv3x3(a, HW, W, masks_full, w2_ref, s2_ref[...], b2_ref[...]))
    a = maxpool2x2(a, HW, W, S1_ref)                                  # (HW/4, F)
    a = relu(conv3x3(a, HW2, W2, masks_half, w3_ref, s3_ref[...], b3_ref[...]))
    a = maxpool2x2(a, HW2, W2, S2_ref)                                # (HW/16, 2F)

    # ---- decoder ----
    a = deconv2x2(a, wd1_ref, E1_ref, sd1_ref[...], bd1_ref[...])     # (HW/4, F)
    a = deconv2x2(a, wd2_ref, E2_ref, sd2_ref[...], bd2_ref[...])     # (HW, F)

    y = conv3x3_final(a, HW, W, masks_full, w4_ref, b4_ref[...])      # (1, HW)
    out = 1.0 / (1.0 + jnp.exp(-y))                                   # sigmoid
    o_ref[...] = out[None].astype(o_ref.dtype)                        # (1,1,HW)


# ----------------------------- parameter prep ------------------------------

def _fold_bn(conv_bias, bn, eps=1e-5):
    """Fold conv bias + inference-mode BatchNorm into a (1, C) scale/bias."""
    gamma, beta, mean, var = bn
    scale = gamma / jnp.sqrt(var + eps)
    bias = (conv_bias - mean) * scale + beta
    return scale.reshape(1, -1).astype(F32), bias.reshape(1, -1).astype(F32)


def _conv_kw_stack(w_oihw, dtype):
    """Conv2d weight (Cout, Cin, 3, 3) -> (kw, 3*Cin, Cout), kh-major rows."""
    cout, cin = w_oihw.shape[0], w_oihw.shape[1]
    w = jnp.transpose(w_oihw, (3, 2, 1, 0))             # (kw, kh, cin, cout)
    return w.reshape(3, 3 * cin, cout).astype(dtype)


def _conv_kw_rows(w_oihw, dtype):
    """Final Cout=1 conv weight -> (kw, 1, 3*Cin) rows for the dense output."""
    cin = w_oihw.shape[1]
    w = jnp.transpose(w_oihw, (3, 2, 1, 0)).reshape(3, 3 * cin, 1)
    return jnp.transpose(w, (0, 2, 1)).astype(dtype)     # (3, 1, 3*cin)


def _deconv_fused(w_iohw, dtype):
    """ConvTranspose2d weight (Cin, Cout, 2, 2) -> (Cin, 4*Cout), tap-major."""
    cin, cout = w_iohw.shape[0], w_iohw.shape[1]
    w = jnp.transpose(w_iohw, (0, 2, 3, 1))              # (cin, kh, kw, cout)
    return w.reshape(cin, 4 * cout).astype(dtype)


def _pool_select(H, W):
    """bf16 0/1 matrix selecting the top-left pixel of each 2x2 window."""
    Ho, Wo = H // 2, W // 2
    i = jnp.arange(Ho * Wo)
    src = 2 * (i // Wo) * W + 2 * (i % Wo)
    j = jnp.arange(H * W)
    return (j[None, :] == src[:, None]).astype(BF16)      # (Ho*Wo, H*W)


def _deconv_scatter(Hi, Wi):
    """bf16 0/1 matrices scattering tap t=2*kh+kw onto the 2x-upsampled grid."""
    HWi = Hi * Wi
    p = jnp.arange(HWi)
    h, w = p // Wi, p % Wi
    q = jnp.arange(4 * HWi)
    mats = []
    for kh in range(2):
        for kw in range(2):
            tgt = (2 * h + kh) * (2 * Wi) + (2 * w + kw)
            mats.append((q[:, None] == tgt[None, :]).astype(BF16))
    return jnp.stack(mats)                                 # (4, 4*HWi, HWi)


# ------------------------------- forward -----------------------------------

def denoising_cnn_forward(x_nchw, p, H, W, F):
    N = x_nchw.shape[0]
    HW = H * W
    H2, W2, H4, W4 = H // 2, W // 2, H // 4, W // 4

    assert H % 4 == 0 and W % 4 == 0, "two MaxPool2d(2) stages need H, W % 4 == 0"
    # Guard the O(HW^2) bf16 pool-select / deconv-scatter matrices (see TODO).
    assert 2 * HW * HW <= 8 * 1024 * 1024, "image too large for matmul pool/upsample"

    x = jnp.transpose(x_nchw, (0, 2, 3, 1)).reshape(N, HW, 1).astype(F32)

    w1 = _conv_kw_stack(p['w1'], F32)                # (3, 3, F)    f32 (K=3)
    s1, b1 = _fold_bn(p['b1'], p['bn1'])
    w2 = _conv_kw_stack(p['w2'], BF16)               # (3, 3F, F)
    s2, b2 = _fold_bn(p['b2'], p['bn2'])
    w3 = _conv_kw_stack(p['w3'], BF16)               # (3, 3F, 2F)
    s3, b3 = _fold_bn(p['b3'], p['bn3'])
    wd1 = _deconv_fused(p['wd1'], BF16)              # (2F, 4F)
    sd1, bd1 = _fold_bn(p['bd1'], p['bn4'])
    wd2 = _deconv_fused(p['wd2'], BF16)              # (F, 4F)
    sd2, bd2 = _fold_bn(p['bd2'], p['bn5'])
    w4 = _conv_kw_rows(p['w4'], BF16)                # (3, 1, 3F)
    b4 = p['b4'].reshape(1, 1).astype(F32)

    S1 = _pool_select(H, W)                          # (HW/4,  HW)       bf16
    S2 = _pool_select(H2, W2)                        # (HW/16, HW/4)     bf16
    E1 = _deconv_scatter(H4, W4)                     # (4, HW/4,  HW/16) bf16
    E2 = _deconv_scatter(H2, W2)                     # (4, HW,    HW/4)  bf16

    PB = _round_up(W + 8, 8)                         # >= W, 8-aligned pad offset
    pad_rows = HW + 2 * PB

    args = (x, w1, s1, b1, w2, s2, b2, S1, w3, s3, b3, S2,
            wd1, sd1, bd1, E1, wd2, sd2, bd2, E2, w4, b4)

    def const_spec(a):
        if a.ndim == 2:
            return pl.BlockSpec(a.shape, lambda n: (0, 0))
        return pl.BlockSpec(a.shape, lambda n: (0, 0, 0))

    in_specs = [pl.BlockSpec((1, HW, 1), lambda n: (n, 0, 0))]
    in_specs += [const_spec(a) for a in args[1:]]

    flops = 2 * N * (
        HW * 9 * (1 * F + F * F)                      # conv1 + conv2
        + (HW // 4) * 9 * F * (2 * F)                 # conv3
        + (HW // 4) * HW * F + (HW // 16) * (HW // 4) * 2 * F      # pools
        + (HW // 16) * 2 * F * 4 * F + 4 * (HW // 4) * (HW // 16) * F  # deconv1
        + (HW // 4) * F * 4 * F + 4 * HW * (HW // 4) * F               # deconv2
        + HW * 9 * F)                                 # final conv
    bytes_accessed = int(sum(a.size * a.dtype.itemsize for a in args)
                         + N * HW * 4)
    cost = pl.CostEstimate(flops=int(flops), transcendentals=int(N * HW),
                           bytes_accessed=bytes_accessed)

    kern = functools.partial(_fused_forward_kernel, H=H, W=W, PB=PB)
    out = pl.pallas_call(
        kern,
        out_shape=jax.ShapeDtypeStruct((N, 1, HW), F32),   # lane-dense output
        grid=(N,),
        in_specs=in_specs,
        out_specs=pl.BlockSpec((1, 1, HW), lambda n: (n, 0, 0)),
        scratch_shapes=[pltpu.VMEM((pad_rows, 3 * F), F32)],
        compiler_params=pltpu.CompilerParams(
            dimension_semantics=("parallel",)),
        cost_estimate=cost,
    )(*args)

    return out.reshape(N, 1, H, W)                         # NCHW


# -------------------- reference (plain JAX, NCHW) --------------------------

def ref_forward(x, p, eps=1e-5):
    def conv(x, w, b):
        y = lax.conv_general_dilated(x, w, (1, 1), 'SAME',
                                     dimension_numbers=('NCHW', 'OIHW', 'NCHW'))
        return y + b.reshape(1, -1, 1, 1)

    def bn(x, prm):
        g, bta, m, v = prm
        return ((x - m.reshape(1, -1, 1, 1))
                / jnp.sqrt(v.reshape(1, -1, 1, 1) + eps)
                * g.reshape(1, -1, 1, 1) + bta.reshape(1, -1, 1, 1))

    def relu(x):
        return jnp.maximum(x, 0.0)

    def pool(x):
        return lax.reduce_window(x, jnp.array(-jnp.inf, F32), lax.max,
                                 (1, 1, 2, 2), (1, 1, 2, 2), 'VALID')

    def deconv(x, w, b):
        w_oihw = jnp.transpose(w, (1, 0, 2, 3))[:, :, ::-1, ::-1]
        y = lax.conv_general_dilated(x, w_oihw, (1, 1), [(1, 1), (1, 1)],
                                     lhs_dilation=(2, 2),
                                     dimension_numbers=('NCHW', 'OIHW', 'NCHW'))
        return y + b.reshape(1, -1, 1, 1)

    y = relu(bn(conv(x, p['w1'], p['b1']), p['bn1']))
    y = relu(bn(conv(y, p['w2'], p['b2']), p['bn2']))
    y = pool(y)
    y = relu(bn(conv(y, p['w3'], p['b3']), p['bn3']))
    y = pool(y)
    y = relu(bn(deconv(y, p['wd1'], p['bd1']), p['bn4']))
    y = relu(bn(deconv(y, p['wd2'], p['bd2']), p['bn5']))
    y = 1.0 / (1.0 + jnp.exp(-conv(y, p['w4'], p['b4'])))
    return y


# ------------------------------ parameters ---------------------------------

def init_params(key, F):
    ks = jax.random.split(key, 32)
    idx = iter(range(32))

    def nrm(shape, scale=0.05):
        return scale * jax.random.normal(ks[next(idx)], shape, dtype=F32)

    def bn_params(C):
        g = 1.0 + 0.1 * jax.random.normal(ks[next(idx)], (C,), dtype=F32)
        bta = 0.1 * jax.random.normal(ks[next(idx)], (C,), dtype=F32)
        m = 0.1 * jax.random.normal(ks[next(idx)], (C,), dtype=F32)
        v = 0.5 + jax.random.uniform(ks[next(idx)], (C,), dtype=F32)
        return (g, bta, m, v)

    p = {}
    p['w1'] = nrm((F, 1, 3, 3));      p['b1'] = nrm((F,));     p['bn1'] = bn_params(F)
    p['w2'] = nrm((F, F, 3, 3));      p['b2'] = nrm((F,));     p['bn2'] = bn_params(F)
    p['w3'] = nrm((2 * F, F, 3, 3));  p['b3'] = nrm((2 * F,)); p['bn3'] = bn_params(2 * F)
    p['wd1'] = nrm((2 * F, F, 2, 2)); p['bd1'] = nrm((F,));    p['bn4'] = bn_params(F)
    p['wd2'] = nrm((F, F, 2, 2));     p['bd2'] = nrm((F,));    p['bn5'] = bn_params(F)
    p['w4'] = nrm((1, F, 3, 3));      p['b4'] = nrm((1,))
    return p


if __name__ == "__main__":
    # N=2 keeps both v7x TensorCores busy under the "parallel" batch grid axis.
    N, H, W, F = 2, 16, 16, 32  # small num_features for a small synthetic run
    key = jax.random.PRNGKey(0)
    kx, kp = jax.random.split(key)
    x = jax.random.normal(kx, (N, 1, H, W), dtype=F32)
    params = init_params(kp, F)

    out = jax.block_until_ready(denoising_cnn_forward(x, params, H, W, F))
    assert out.shape == (N, 1, H, W)

    ref = jax.block_until_ready(ref_forward(x, params))
    max_err = float(jnp.max(jnp.abs(out - ref)))
    # Tolerance covers bf16 MXU operands through all seven layers vs. the
    # pure-f32 reference (sigmoid itself is exact f32).
    assert max_err < 2e-2, f"mismatch vs reference: max abs err {max_err}"

    print("KERNEL_OK")
</pallas_src>

<mosaic_0001>
module attributes {stable_mosaic.version = 11 : i64} {
  func.func @_fused_forward_kernel(%arg0: i32, %arg1: memref<1x256x1xf32, #tpu.memory_space<vmem>>, %arg2: memref<3x3x32xf32, #tpu.memory_space<vmem>>, %arg3: memref<1x32xf32, #tpu.memory_space<vmem>>, %arg4: memref<1x32xf32, #tpu.memory_space<vmem>>, %arg5: memref<3x96x32xbf16, #tpu.memory_space<vmem>>, %arg6: memref<1x32xf32, #tpu.memory_space<vmem>>, %arg7: memref<1x32xf32, #tpu.memory_space<vmem>>, %arg8: memref<64x256xbf16, #tpu.memory_space<vmem>>, %arg9: memref<3x96x64xbf16, #tpu.memory_space<vmem>>, %arg10: memref<1x64xf32, #tpu.memory_space<vmem>>, %arg11: memref<1x64xf32, #tpu.memory_space<vmem>>, %arg12: memref<16x64xbf16, #tpu.memory_space<vmem>>, %arg13: memref<64x128xbf16, #tpu.memory_space<vmem>>, %arg14: memref<1x32xf32, #tpu.memory_space<vmem>>, %arg15: memref<1x32xf32, #tpu.memory_space<vmem>>, %arg16: memref<4x64x16xbf16, #tpu.memory_space<vmem>>, %arg17: memref<32x128xbf16, #tpu.memory_space<vmem>>, %arg18: memref<1x32xf32, #tpu.memory_space<vmem>>, %arg19: memref<1x32xf32, #tpu.memory_space<vmem>>, %arg20: memref<4x256x64xbf16, #tpu.memory_space<vmem>>, %arg21: memref<3x1x96xbf16, #tpu.memory_space<vmem>>, %arg22: memref<1x1xf32, #tpu.memory_space<vmem>>, %arg23: memref<1x1x256xf32, #tpu.memory_space<vmem>>, %arg24: memref<304x96xf32, #tpu.memory_space<vmem>>) attributes {dimension_semantics = [#tpu.dimension_semantics<parallel>], iteration_bounds = array<i64: 2>, scalar_prefetch = 0 : i64, scratch_operands = 1 : i64, tpu.core_type = #tpu.core_type<tc>, window_params = [{transform_indices = @transform_0, window_bounds = array<i64: 1, 256, 1>}, {pipeline_mode = #tpu.pipeline_mode<synchronous>, transform_indices = @transform_1, window_bounds = array<i64: 3, 3, 32>}, {pipeline_mode = #tpu.pipeline_mode<synchronous>, transform_indices = @transform_2, window_bounds = array<i64: 1, 32>}, {pipeline_mode = #tpu.pipeline_mode<synchronous>, transform_indices = @transform_3, window_bounds = array<i64: 1, 32>}, {pipeline_mode = #tpu.pipeline_mode<synchronous>, transform_indices = @transform_4, window_bounds = array<i64: 3, 96, 32>}, {pipeline_mode = #tpu.pipeline_mode<synchronous>, transform_indices = @transform_5, window_bounds = array<i64: 1, 32>}, {pipeline_mode = #tpu.pipeline_mode<synchronous>, transform_indices = @transform_6, window_bounds = array<i64: 1, 32>}, {pipeline_mode = #tpu.pipeline_mode<synchronous>, transform_indices = @transform_7, window_bounds = array<i64: 64, 256>}, {pipeline_mode = #tpu.pipeline_mode<synchronous>, transform_indices = @transform_8, window_bounds = array<i64: 3, 96, 64>}, {pipeline_mode = #tpu.pipeline_mode<synchronous>, transform_indices = @transform_9, window_bounds = array<i64: 1, 64>}, {pipeline_mode = #tpu.pipeline_mode<synchronous>, transform_indices = @transform_10, window_bounds = array<i64: 1, 64>}, {pipeline_mode = #tpu.pipeline_mode<synchronous>, transform_indices = @transform_11, window_bounds = array<i64: 16, 64>}, {pipeline_mode = #tpu.pipeline_mode<synchronous>, transform_indices = @transform_12, window_bounds = array<i64: 64, 128>}, {pipeline_mode = #tpu.pipeline_mode<synchronous>, transform_indices = @transform_13, window_bounds = array<i64: 1, 32>}, {pipeline_mode = #tpu.pipeline_mode<synchronous>, transform_indices = @transform_14, window_bounds = array<i64: 1, 32>}, {pipeline_mode = #tpu.pipeline_mode<synchronous>, transform_indices = @transform_15, window_bounds = array<i64: 4, 64, 16>}, {pipeline_mode = #tpu.pipeline_mode<synchronous>, transform_indices = @transform_16, window_bounds = array<i64: 32, 128>}, {pipeline_mode = #tpu.pipeline_mode<synchronous>, transform_indices = @transform_17, window_bounds = array<i64: 1, 32>}, {pipeline_mode = #tpu.pipeline_mode<synchronous>, transform_indices = @transform_18, window_bounds = array<i64: 1, 32>}, {pipeline_mode = #tpu.pipeline_mode<synchronous>, transform_indices = @transform_19, window_bounds = array<i64: 4, 256, 64>}, {pipeline_mode = #tpu.pipeline_mode<synchronous>, transform_indices = @transform_20, window_bounds = array<i64: 3, 1, 96>}, {pipeline_mode = #tpu.pipeline_mode<synchronous>, transform_indices = @transform_21, window_bounds = array<i64: 1, 1>}, {transform_indices = @transform_22, window_bounds = array<i64: 1, 1, 256>}]} {
    %0 = tpu.iota {dimensions = array<i32: 0>} : vector<256x1xi32>
    %c15_i32 = arith.constant 15 : i32
    %1 = vector.broadcast %c15_i32 : i32 to vector<256x1xi32>
    %2 = arith.andi %0, %1 : vector<256x1xi32>
    %c1_i32 = arith.constant 1 : i32
    %3 = vector.broadcast %c1_i32 : i32 to vector<256x1xi32>
    %4 = arith.cmpi sge, %2, %3 : vector<256x1xi32>
    %c14_i32 = arith.constant 14 : i32
    %5 = vector.broadcast %c14_i32 : i32 to vector<256x1xi32>
    %6 = arith.cmpi sle, %2, %5 : vector<256x1xi32>
    %7 = tpu.iota {dimensions = array<i32: 0>} : vector<64x1xi32>
    %c7_i32 = arith.constant 7 : i32
    %8 = vector.broadcast %c7_i32 : i32 to vector<64x1xi32>
    %9 = arith.andi %7, %8 : vector<64x1xi32>
    %c1_i32_0 = arith.constant 1 : i32
    %10 = vector.broadcast %c1_i32_0 : i32 to vector<64x1xi32>
    %11 = arith.cmpi sge, %9, %10 : vector<64x1xi32>
    %c6_i32 = arith.constant 6 : i32
    %12 = vector.broadcast %c6_i32 : i32 to vector<64x1xi32>
    %13 = arith.cmpi sle, %9, %12 : vector<64x1xi32>
    %c0 = arith.constant 0 : index
    %c0_1 = arith.constant 0 : index
    %c0_2 = arith.constant 0 : index
    %14 = vector.load %arg1[%c0, %c0_1, %c0_2] : memref<1x256x1xf32, #tpu.memory_space<vmem>>, vector<1x256x1xf32>
    %15 = vector.shape_cast %14 : vector<1x256x1xf32> to vector<256x1xf32>
    %c0_3 = arith.constant 0 : index
    %c0_4 = arith.constant 0 : index
    %16 = vector.load %arg3[%c0_3, %c0_4] : memref<1x32xf32, #tpu.memory_space<vmem>>, vector<1x32xf32>
    %c0_5 = arith.constant 0 : index
    %c0_6 = arith.constant 0 : index
    %17 = vector.load %arg4[%c0_5, %c0_6] : memref<1x32xf32, #tpu.memory_space<vmem>>, vector<1x32xf32>
    %cst = arith.constant 0.000000e+00 : f32
    %18 = vector.broadcast %cst : f32 to vector<16x1xf32>
    %c24 = arith.constant 24 : index
    %c0_7 = arith.constant 0 : index
    %19 = vector.load %arg24[%c24, %c0_7] : memref<304x96xf32, #tpu.memory_space<vmem>>, vector<16x1xf32>
    tpu.vector_store %arg24[%c24, %c0_7], %18 {strides = array<i32>} : memref<304x96xf32, #tpu.memory_space<vmem>>, vector<16x1xf32>,
    %c264 = arith.constant 264 : index
    %c2 = arith.constant 2 : index
    %20 = vector.load %arg24[%c264, %c2] : memref<304x96xf32, #tpu.memory_space<vmem>>, vector<16x1xf32>
    tpu.vector_store %arg24[%c264, %c2], %18 {strides = array<i32>} : memref<304x96xf32, #tpu.memory_space<vmem>>, vector<16x1xf32>,
    %c40 = arith.constant 40 : index
    %c0_8 = arith.constant 0 : index
    %21 = vector.load %arg24[%c40, %c0_8] : memref<304x96xf32, #tpu.memory_space<vmem>>, vector<256x1xf32>
    tpu.vector_store %arg24[%c40, %c0_8], %15 {strides = array<i32>} : memref<304x96xf32, #tpu.memory_space<vmem>>, vector<256x1xf32>,
    %c24_9 = arith.constant 24 : index
    %c1 = arith.constant 1 : index
    %22 = vector.load %arg24[%c24_9, %c1] : memref<304x96xf32, #tpu.memory_space<vmem>>, vector<256x1xf32>
    tpu.vector_store %arg24[%c24_9, %c1], %15 {strides = array<i32>} : memref<304x96xf32, #tpu.memory_space<vmem>>, vector<256x1xf32>,
    %c8 = arith.constant 8 : index
    %c2_10 = arith.constant 2 : index
    %23 = vector.load %arg24[%c8, %c2_10] : memref<304x96xf32, #tpu.memory_space<vmem>>, vector<256x1xf32>
    tpu.vector_store %arg24[%c8, %c2_10], %15 {strides = array<i32>} : memref<304x96xf32, #tpu.memory_space<vmem>>, vector<256x1xf32>,
    %cst_11 = arith.constant 0.000000e+00 : f32
    %24 = vector.broadcast %cst_11 : f32 to vector<256x32xf32>
    %c23 = arith.constant 23 : index
    %c0_12 = arith.constant 0 : index
    %25 = vector.load %arg24[%c23, %c0_12] : memref<304x96xf32, #tpu.memory_space<vmem>>, vector<256x3xf32>
    %cst_13 = arith.constant 0.000000e+00 : f32
    %26 = vector.shape_cast %4 : vector<256x1xi1> to vector<256x1xi1>
    %27 = vector.broadcast %26 : vector<256x1xi1> to vector<256x3xi1>
    %28 = vector.broadcast %cst_13 : f32 to vector<256x3xf32>
    %29 = arith.select %27, %25, %28 : vector<256x3xi1>, vector<256x3xf32>
    %c0_14 = arith.constant 0 : index
    %c0_15 = arith.constant 0 : index
    %c0_16 = arith.constant 0 : index
    %30 = vector.load %arg2[%c0_14, %c0_15, %c0_16] : memref<3x3x32xf32, #tpu.memory_space<vmem>>, vector<1x3x32xf32>
    %31 = vector.shape_cast %30 : vector<1x3x32xf32> to vector<3x32xf32>
    %cst_17 = arith.constant dense<0.000000e+00> : vector<256x32xf32>
    %32 = tpu.matmul %29, %31, %cst_17 {dimension_numbers = #tpu.dot_dimension_numbers<[1], [0], [0], [1], [0, 0, 1, 1], [], []>} : vector<256x3xf32>, vector<3x32xf32>, vector<256x32xf32> -> vector<256x32xf32>
    %33 = arith.addf %24, %32 : vector<256x32xf32>
    %c24_18 = arith.constant 24 : index
    %c0_19 = arith.constant 0 : index
    %34 = vector.load %arg24[%c24_18, %c0_19] : memref<304x96xf32, #tpu.memory_space<vmem>>, vector<256x3xf32>
    %c1_20 = arith.constant 1 : index
    %c0_21 = arith.constant 0 : index
    %c0_22 = arith.constant 0 : index
    %35 = vector.load %arg2[%c1_20, %c0_21, %c0_22] : memref<3x3x32xf32, #tpu.memory_space<vmem>>, vector<1x3x32xf32>
    %36 = vector.shape_cast %35 : vector<1x3x32xf32> to vector<3x32xf32>
    %cst_23 = arith.constant dense<0.000000e+00> : vector<256x32xf32>
    %37 = tpu.matmul %34, %36, %cst_23 {dimension_numbers = #tpu.dot_dimension_numbers<[1], [0], [0], [1], [0, 0, 1, 1], [], []>} : vector<256x3xf32>, vector<3x32xf32>, vector<256x32xf32> -> vector<256x32xf32>
    %38 = arith.addf %33, %37 : vector<256x32xf32>
    %c25 = arith.constant 25 : index
    %c0_24 = arith.constant 0 : index
    %39 = vector.load %arg24[%c25, %c0_24] : memref<304x96xf32, #tpu.memory_space<vmem>>, vector<256x3xf32>
    %cst_25 = arith.constant 0.000000e+00 : f32
    %40 = vector.shape_cast %6 : vector<256x1xi1> to vector<256x1xi1>
    %41 = vector.broadcast %40 : vector<256x1xi1> to vector<256x3xi1>
    %42 = vector.broadcast %cst_25 : f32 to vector<256x3xf32>
    %43 = arith.select %41, %39, %42 : vector<256x3xi1>, vector<256x3xf32>
    %c2_26 = arith.constant 2 : index
    %c0_27 = arith.constant 0 : index
    %c0_28 = arith.constant 0 : index
    %44 = vector.load %arg2[%c2_26, %c0_27, %c0_28] : memref<3x3x32xf32, #tpu.memory_space<vmem>>, vector<1x3x32xf32>
    %45 = vector.shape_cast %44 : vector<1x3x32xf32> to vector<3x32xf32>
    %cst_29 = arith.constant dense<0.000000e+00> : vector<256x32xf32>
    %46 = tpu.matmul %43, %45, %cst_29 {dimension_numbers = #tpu.dot_dimension_numbers<[1], [0], [0], [1], [0, 0, 1, 1], [], []>} : vector<256x3xf32>, vector<3x32xf32>, vector<256x32xf32> -> vector<256x32xf32>
    %47 = arith.addf %38, %46 : vector<256x32xf32>
    %48 = vector.broadcast %16 : vector<1x32xf32> to vector<256x32xf32>
    %49 = arith.mulf %47, %48 : vector<256x32xf32>
    %50 = vector.broadcast %17 : vector<1x32xf32> to vector<256x32xf32>
    %51 = arith.addf %49, %50 : vector<256x32xf32>
    %cst_30 = arith.constant 0.000000e+00 : f32
    %52 = vector.broadcast %cst_30 : f32 to vector<256x32xf32>
    %53 = arith.maximumf %51, %52 : vector<256x32xf32>
    %c0_31 = arith.constant 0 : index
    %c0_32 = arith.constant 0 : index
    %54 = vector.load %arg6[%c0_31, %c0_32] : memref<1x32xf32, #tpu.memory_space<vmem>>, vector<1x32xf32>
    %c0_33 = arith.constant 0 : index
    %c0_34 = arith.constant 0 : index
    %55 = vector.load %arg7[%c0_33, %c0_34] : memref<1x32xf32, #tpu.memory_space<vmem>>, vector<1x32xf32>
    %cst_35 = arith.constant 0.000000e+00 : f32
    %56 = vector.broadcast %cst_35 : f32 to vector<16x32xf32>
    %c24_36 = arith.constant 24 : index
    %c0_37 = arith.constant 0 : index
    %57 = vector.load %arg24[%c24_36, %c0_37] : memref<304x96xf32, #tpu.memory_space<vmem>>, vector<16x32xf32>
    tpu.vector_store %arg24[%c24_36, %c0_37], %56 {strides = array<i32>} : memref<304x96xf32, #tpu.memory_space<vmem>>, vector<16x32xf32>,
    %c264_38 = arith.constant 264 : index
    %c64 = arith.constant 64 : index
    %58 = vector.load %arg24[%c264_38, %c64] : memref<304x96xf32, #tpu.memory_space<vmem>>, vector<16x32xf32>
    tpu.vector_store %arg24[%c264_38, %c64], %56 {strides = array<i32>} : memref<304x96xf32, #tpu.memory_space<vmem>>, vector<16x32xf32>,
    %c40_39 = arith.constant 40 : index
    %c0_40 = arith.constant 0 : index
    %59 = vector.load %arg24[%c40_39, %c0_40] : memref<304x96xf32, #tpu.memory_space<vmem>>, vector<256x32xf32>
    tpu.vector_store %arg24[%c40_39, %c0_40], %53 {strides = array<i32>} : memref<304x96xf32, #tpu.memory_space<vmem>>, vector<256x32xf32>,
    %c24_41 = arith.constant 24 : index
    %c32 = arith.constant 32 : index
    %60 = vector.load %arg24[%c24_41, %c32] : memref<304x96xf32, #tpu.memory_space<vmem>>, vector<256x32xf32>
    tpu.vector_store %arg24[%c24_41, %c32], %53 {strides = array<i32>} : memref<304x96xf32, #tpu.memory_space<vmem>>, vector<256x32xf32>,
    %c8_42 = arith.constant 8 : index
    %c64_43 = arith.constant 64 : index
    %61 = vector.load %arg24[%c8_42, %c64_43] : memref<304x96xf32, #tpu.memory_space<vmem>>, vector<256x32xf32>
    tpu.vector_store %arg24[%c8_42, %c64_43], %53 {strides = array<i32>} : memref<304x96xf32, #tpu.memory_space<vmem>>, vector<256x32xf32>,
    %cst_44 = arith.constant 0.000000e+00 : f32
    %62 = vector.broadcast %cst_44 : f32 to vector<256x32xf32>
    %c23_45 = arith.constant 23 : index
    %c0_46 = arith.constant 0 : index
    %63 = vector.load %arg24[%c23_45, %c0_46] : memref<304x96xf32, #tpu.memory_space<vmem>>, vector<256x96xf32>
    %cst_47 = arith.constant 0.000000e+00 : f32
    %64 = vector.shape_cast %4 : vector<256x1xi1> to vector<256x1xi1>
    %65 = vector.broadcast %64 : vector<256x1xi1> to vector<256x96xi1>
    %66 = vector.broadcast %cst_47 : f32 to vector<256x96xf32>
    %67 = arith.select %65, %63, %66 : vector<256x96xi1>, vector<256x96xf32>
    %68 = arith.truncf %67 : vector<256x96xf32> to vector<256x96xbf16>
    %c0_48 = arith.constant 0 : index
    %c0_49 = arith.constant 0 : index
    %c0_50 = arith.constant 0 : index
    %69 = vector.load %arg5[%c0_48, %c0_49, %c0_50] : memref<3x96x32xbf16, #tpu.memory_space<vmem>>, vector<1x96x32xbf16>
    %70 = vector.shape_cast %69 : vector<1x96x32xbf16> to vector<96x32xbf16>
    %cst_51 = arith.constant dense<0.000000e+00> : vector<256x32xf32>
    %71 = tpu.matmul %68, %70, %cst_51 {dimension_numbers = #tpu.dot_dimension_numbers<[1], [0], [0], [1], [0, 0, 1, 1], [], []>} : vector<256x96xbf16>, vector<96x32xbf16>, vector<256x32xf32> -> vector<256x32xf32>
    %72 = arith.addf %62, %71 : vector<256x32xf32>
    %c24_52 = arith.constant 24 : index
    %c0_53 = arith.constant 0 : index
    %73 = vector.load %arg24[%c24_52, %c0_53] : memref<304x96xf32, #tpu.memory_space<vmem>>, vector<256x96xf32>
    %74 = arith.truncf %73 : vector<256x96xf32> to vector<256x96xbf16>
    %c1_54 = arith.constant 1 : index
    %c0_55 = arith.constant 0 : index
    %c0_56 = arith.constant 0 : index
    %75 = vector.load %arg5[%c1_54, %c0_55, %c0_56] : memref<3x96x32xbf16, #tpu.memory_space<vmem>>, vector<1x96x32xbf16>
    %76 = vector.shape_cast %75 : vector<1x96x32xbf16> to vector<96x32xbf16>
    %cst_57 = arith.constant dense<0.000000e+00> : vector<256x32xf32>
    %77 = tpu.matmul %74, %76, %cst_57 {dimension_numbers = #tpu.dot_dimension_numbers<[1], [0], [0], [1], [0, 0, 1, 1], [], []>} : vector<256x96xbf16>, vector<96x32xbf16>, vector<256x32xf32> -> vector<256x32xf32>
    %78 = arith.addf %72, %77 : vector<256x32xf32>
    %c25_58 = arith.constant 25 : index
    %c0_59 = arith.constant 0 : index
    %79 = vector.load %arg24[%c25_58, %c0_59] : memref<304x96xf32, #tpu.memory_space<vmem>>, vector<256x96xf32>
    %cst_60 = arith.constant 0.000000e+00 : f32
    %80 = vector.shape_cast %6 : vector<256x1xi1> to vector<256x1xi1>
    %81 = vector.broadcast %80 : vector<256x1xi1> to vector<256x96xi1>
    %82 = vector.broadcast %cst_60 : f32 to vector<256x96xf32>
    %83 = arith.select %81, %79, %82 : vector<256x96xi1>, vector<256x96xf32>
    %84 = arith.truncf %83 : vector<256x96xf32> to vector<256x96xbf16>
    %c2_61 = arith.constant 2 : index
    %c0_62 = arith.constant 0 : index
    %c0_63 = arith.constant 0 : index
    %85 = vector.load %arg5[%c2_61, %c0_62, %c0_63] : memref<3x96x32xbf16, #tpu.memory_space<vmem>>, vector<1x96x32xbf16>
    %86 = vector.shape_cast %85 : vector<1x96x32xbf16> to vector<96x32xbf16>
    %cst_64 = arith.constant dense<0.000000e+00> : vector<256x32xf32>
    %87 = tpu.matmul %84, %86, %cst_64 {dimension_numbers = #tpu.dot_dimension_numbers<[1], [0], [0], [1], [0, 0, 1, 1], [], []>} : vector<256x96xbf16>, vector<96x32xbf16>, vector<256x32xf32> -> vector<256x32xf32>
    %88 = arith.addf %78, %87 : vector<256x32xf32>
    %89 = vector.broadcast %54 : vector<1x32xf32> to vector<256x32xf32>
    %90 = arith.mulf %88, %89 : vector<256x32xf32>
    %91 = vector.broadcast %55 : vector<1x32xf32> to vector<256x32xf32>
    %92 = arith.addf %90, %91 : vector<256x32xf32>
    %cst_65 = arith.constant 0.000000e+00 : f32
    %93 = vector.broadcast %cst_65 : f32 to vector<256x32xf32>
    %94 = arith.maximumf %92, %93 : vector<256x32xf32>
    %c24_66 = arith.constant 24 : index
    %c0_67 = arith.constant 0 : index
    %95 = vector.load %arg24[%c24_66, %c0_67] : memref<304x96xf32, #tpu.memory_space<vmem>>, vector<256x32xf32>
    tpu.vector_store %arg24[%c24_66, %c0_67], %94 {strides = array<i32>} : memref<304x96xf32, #tpu.memory_space<vmem>>, vector<256x32xf32>,
    %cst_68 = arith.constant 0.000000e+00 : f32
    %96 = vector.broadcast %cst_68 : f32 to vector<17x32xf32>
    %c280 = arith.constant 280 : index
    %c0_69 = arith.constant 0 : index
    %97 = vector.load %arg24[%c280, %c0_69] : memref<304x96xf32, #tpu.memory_space<vmem>>, vector<17x32xf32>
    tpu.vector_store %arg24[%c280, %c0_69], %96 {strides = array<i32>} : memref<304x96xf32, #tpu.memory_space<vmem>>, vector<17x32xf32>,
    %c24_70 = arith.constant 24 : index
    %c0_71 = arith.constant 0 : index
    %98 = vector.load %arg24[%c24_70, %c0_71] : memref<304x96xf32, #tpu.memory_space<vmem>>, vector<256x32xf32>
    %c25_72 = arith.constant 25 : index
    %c0_73 = arith.constant 0 : index
    %99 = vector.load %arg24[%c25_72, %c0_73] : memref<304x96xf32, #tpu.memory_space<vmem>>, vector<256x32xf32>
    %100 = arith.maximumf %98, %99 : vector<256x32xf32>
    %c40_74 = arith.constant 40 : index
    %c0_75 = arith.constant 0 : index
    %101 = vector.load %arg24[%c40_74, %c0_75] : memref<304x96xf32, #tpu.memory_space<vmem>>, vector<256x32xf32>
    %c41 = arith.constant 41 : index
    %c0_76 = arith.constant 0 : index
    %102 = vector.load %arg24[%c41, %c0_76] : memref<304x96xf32, #tpu.memory_space<vmem>>, vector<256x32xf32>
    %103 = arith.maximumf %101, %102 : vector<256x32xf32>
    %104 = arith.maximumf %100, %103 : vector<256x32xf32>
    %c0_77 = arith.constant 0 : index
    %c0_78 = arith.constant 0 : index
    %105 = vector.load %arg8[%c0_77, %c0_78] : memref<64x256xbf16, #tpu.memory_space<vmem>>, vector<64x256xbf16>
    %106 = arith.truncf %104 : vector<256x32xf32> to vector<256x32xbf16>
    %cst_79 = arith.constant dense<0.000000e+00> : vector<64x32xf32>
    %107 = tpu.matmul %105, %106, %cst_79 {dimension_numbers = #tpu.dot_dimension_numbers<[1], [0], [0], [1], [0, 0, 1, 1], [], []>} : vector<64x256xbf16>, vector<256x32xbf16>, vector<64x32xf32> -> vector<64x32xf32>
    %c0_80 = arith.constant 0 : index
    %c0_81 = arith.constant 0 : index
    %108 = vector.load %arg10[%c0_80, %c0_81] : memref<1x64xf32, #tpu.memory_space<vmem>>, vector<1x64xf32>
    %c0_82 = arith.constant 0 : index
    %c0_83 = arith.constant 0 : index
    %109 = vector.load %arg11[%c0_82, %c0_83] : memref<1x64xf32, #tpu.memory_space<vmem>>, vector<1x64xf32>
    %cst_84 = arith.constant 0.000000e+00 : f32
    %110 = vector.broadcast %cst_84 : f32 to vector<8x32xf32>
    %c24_85 = arith.constant 24 : index
    %c0_86 = arith.constant 0 : index
    %111 = vector.load %arg24[%c24_85, %c0_86] : memref<304x96xf32, #tpu.memory_space<vmem>>, vector<8x32xf32>
    tpu.vector_store %arg24[%c24_85, %c0_86], %110 {strides = array<i32>} : memref<304x96xf32, #tpu.memory_space<vmem>>, vector<8x32xf32>,
    %c80 = arith.constant 80 : index
    %c64_87 = arith.constant 64 : index
    %112 = vector.load %arg24[%c80, %c64_87] : memref<304x96xf32, #tpu.memory_space<vmem>>, vector<8x32xf32>
    tpu.vector_store %arg24[%c80, %c64_87], %110 {strides = array<i32>} : memref<304x96xf32, #tpu.memory_space<vmem>>, vector<8x32xf32>,
    %c32_88 = arith.constant 32 : index
    %c0_89 = arith.constant 0 : index
    %113 = vector.load %arg24[%c32_88, %c0_89] : memref<304x96xf32, #tpu.memory_space<vmem>>, vector<64x32xf32>
    tpu.vector_store %arg24[%c32_88, %c0_89], %107 {strides = array<i32>} : memref<304x96xf32, #tpu.memory_space<vmem>>, vector<64x32xf32>,
    %c24_90 = arith.constant 24 : index
    %c32_91 = arith.constant 32 : index
    %114 = vector.load %arg24[%c24_90, %c32_91] : memref<304x96xf32, #tpu.memory_space<vmem>>, vector<64x32xf32>
    tpu.vector_store %arg24[%c24_90, %c32_91], %107 {strides = array<i32>} : memref<304x96xf32, #tpu.memory_space<vmem>>, vector<64x32xf32>,
    %c16 = arith.constant 16 : index
    %c64_92 = arith.constant 64 : index
    %115 = vector.load %arg24[%c16, %c64_92] : memref<304x96xf32, #tpu.memory_space<vmem>>, vector<64x32xf32>
    tpu.vector_store %arg24[%c16, %c64_92], %107 {strides = array<i32>} : memref<304x96xf32, #tpu.memory_space<vmem>>, vector<64x32xf32>,
    %cst_93 = arith.constant 0.000000e+00 : f32
    %116 = vector.broadcast %cst_93 : f32 to vector<64x64xf32>
    %c23_94 = arith.constant 23 : index
    %c0_95 = arith.constant 0 : index
    %117 = vector.load %arg24[%c23_94, %c0_95] : memref<304x96xf32, #tpu.memory_space<vmem>>, vector<64x96xf32>
    %cst_96 = arith.constant 0.000000e+00 : f32
    %118 = vector.shape_cast %11 : vector<64x1xi1> to vector<64x1xi1>
    %119 = vector.broadcast %118 : vector<64x1xi1> to vector<64x96xi1>
    %120 = vector.broadcast %cst_96 : f32 to vector<64x96xf32>
    %121 = arith.select %119, %117, %120 : vector<64x96xi1>, vector<64x96xf32>
    %122 = arith.truncf %121 : vector<64x96xf32> to vector<64x96xbf16>
    %c0_97 = arith.constant 0 : index
    %c0_98 = arith.constant 0 : index
    %c0_99 = arith.constant 0 : index
    %123 = vector.load %arg9[%c0_97, %c0_98, %c0_99] : memref<3x96x64xbf16, #tpu.memory_space<vmem>>, vector<1x96x64xbf16>
    %124 = vector.shape_cast %123 : vector<1x96x64xbf16> to vector<96x64xbf16>
    %cst_100 = arith.constant dense<0.000000e+00> : vector<64x64xf32>
    %125 = tpu.matmul %122, %124, %cst_100 {dimension_numbers = #tpu.dot_dimension_numbers<[1], [0], [0], [1], [0, 0, 1, 1], [], []>} : vector<64x96xbf16>, vector<96x64xbf16>, vector<64x64xf32> -> vector<64x64xf32>
    %126 = arith.addf %116, %125 : vector<64x64xf32>
    %c24_101 = arith.constant 24 : index
    %c0_102 = arith.constant 0 : index
    %127 = vector.load %arg24[%c24_101, %c0_102] : memref<304x96xf32, #tpu.memory_space<vmem>>, vector<64x96xf32>
    %128 = arith.truncf %127 : vector<64x96xf32> to vector<64x96xbf16>
    %c1_103 = arith.constant 1 : index
    %c0_104 = arith.constant 0 : index
    %c0_105 = arith.constant 0 : index
    %129 = vector.load %arg9[%c1_103, %c0_104, %c0_105] : memref<3x96x64xbf16, #tpu.memory_space<vmem>>, vector<1x96x64xbf16>
    %130 = vector.shape_cast %129 : vector<1x96x64xbf16> to vector<96x64xbf16>
    %cst_106 = arith.constant dense<0.000000e+00> : vector<64x64xf32>
    %131 = tpu.matmul %128, %130, %cst_106 {dimension_numbers = #tpu.dot_dimension_numbers<[1], [0], [0], [1], [0, 0, 1, 1], [], []>} : vector<64x96xbf16>, vector<96x64xbf16>, vector<64x64xf32> -> vector<64x64xf32>
    %132 = arith.addf %126, %131 : vector<64x64xf32>
    %c25_107 = arith.constant 25 : index
    %c0_108 = arith.constant 0 : index
    %133 = vector.load %arg24[%c25_107, %c0_108] : memref<304x96xf32, #tpu.memory_space<vmem>>, vector<64x96xf32>
    %cst_109 = arith.constant 0.000000e+00 : f32
    %134 = vector.shape_cast %13 : vector<64x1xi1> to vector<64x1xi1>
    %135 = vector.broadcast %134 : vector<64x1xi1> to vector<64x96xi1>
    %136 = vector.broadcast %cst_109 : f32 to vector<64x96xf32>
    %137 = arith.select %135, %133, %136 : vector<64x96xi1>, vector<64x96xf32>
    %138 = arith.truncf %137 : vector<64x96xf32> to vector<64x96xbf16>
    %c2_110 = arith.constant 2 : index
    %c0_111 = arith.constant 0 : index
    %c0_112 = arith.constant 0 : index
    %139 = vector.load %arg9[%c2_110, %c0_111, %c0_112] : memref<3x96x64xbf16, #tpu.memory_space<vmem>>, vector<1x96x64xbf16>
    %140 = vector.shape_cast %139 : vector<1x96x64xbf16> to vector<96x64xbf16>
    %cst_113 = arith.constant dense<0.000000e+00> : vector<64x64xf32>
    %141 = tpu.matmul %138, %140, %cst_113 {dimension_numbers = #tpu.dot_dimension_numbers<[1], [0], [0], [1], [0, 0, 1, 1], [], []>} : vector<64x96xbf16>, vector<96x64xbf16>, vector<64x64xf32> -> vector<64x64xf32>
    %142 = arith.addf %132, %141 : vector<64x64xf32>
    %143 = vector.broadcast %108 : vector<1x64xf32> to vector<64x64xf32>
    %144 = arith.mulf %142, %143 : vector<64x64xf32>
    %145 = vector.broadcast %109 : vector<1x64xf32> to vector<64x64xf32>
    %146 = arith.addf %144, %145 : vector<64x64xf32>
    %cst_114 = arith.constant 0.000000e+00 : f32
    %147 = vector.broadcast %cst_114 : f32 to vector<64x64xf32>
    %148 = arith.maximumf %146, %147 : vector<64x64xf32>
    %c24_115 = arith.constant 24 : index
    %c0_116 = arith.constant 0 : index
    %149 = vector.load %arg24[%c24_115, %c0_116] : memref<304x96xf32, #tpu.memory_space<vmem>>, vector<64x64xf32>
    tpu.vector_store %arg24[%c24_115, %c0_116], %148 {strides = array<i32>} : memref<304x96xf32, #tpu.memory_space<vmem>>, vector<64x64xf32>,
    %cst_117 = arith.constant 0.000000e+00 : f32
    %150 = vector.broadcast %cst_117 : f32 to vector<9x64xf32>
    %c88 = arith.constant 88 : index
    %c0_118 = arith.constant 0 : index
    %151 = vector.load %arg24[%c88, %c0_118] : memref<304x96xf32, #tpu.memory_space<vmem>>, vector<9x64xf32>
    tpu.vector_store %arg24[%c88, %c0_118], %150 {strides = array<i32>} : memref<304x96xf32, #tpu.memory_space<vmem>>, vector<9x64xf32>,
    %c24_119 = arith.constant 24 : index
    %c0_120 = arith.constant 0 : index
    %152 = vector.load %arg24[%c24_119, %c0_120] : memref<304x96xf32, #tpu.memory_space<vmem>>, vector<64x64xf32>
    %c25_121 = arith.constant 25 : index
    %c0_122 = arith.constant 0 : index
    %153 = vector.load %arg24[%c25_121, %c0_122] : memref<304x96xf32, #tpu.memory_space<vmem>>, vector<64x64xf32>
    %154 = arith.maximumf %152, %153 : vector<64x64xf32>
    %c32_123 = arith.constant 32 : index
    %c0_124 = arith.constant 0 : index
    %155 = vector.load %arg24[%c32_123, %c0_124] : memref<304x96xf32, #tpu.memory_space<vmem>>, vector<64x64xf32>
    %c33 = arith.constant 33 : index
    %c0_125 = arith.constant 0 : index
    %156 = vector.load %arg24[%c33, %c0_125] : memref<304x96xf32, #tpu.memory_space<vmem>>, vector<64x64xf32>
    %157 = arith.maximumf %155, %156 : vector<64x64xf32>
    %158 = arith.maximumf %154, %157 : vector<64x64xf32>
    %c0_126 = arith.constant 0 : index
    %c0_127 = arith.constant 0 : index
    %159 = vector.load %arg12[%c0_126, %c0_127] : memref<16x64xbf16, #tpu.memory_space<vmem>>, vector<16x64xbf16>
    %160 = arith.truncf %158 : vector<64x64xf32> to vector<64x64xbf16>
    %cst_128 = arith.constant dense<0.000000e+00> : vector<16x64xf32>
    %161 = tpu.matmul %159, %160, %cst_128 {dimension_numbers = #tpu.dot_dimension_numbers<[1], [0], [0], [1], [0, 0, 1, 1], [], []>} : vector<16x64xbf16>, vector<64x64xbf16>, vector<16x64xf32> -> vector<16x64xf32>
    %c0_129 = arith.constant 0 : index
    %c0_130 = arith.constant 0 : index
    %162 = vector.load %arg14[%c0_129, %c0_130] : memref<1x32xf32, #tpu.memory_space<vmem>>, vector<1x32xf32>
    %c0_131 = arith.constant 0 : index
    %c0_132 = arith.constant 0 : index
    %163 = vector.load %arg15[%c0_131, %c0_132] : memref<1x32xf32, #tpu.memory_space<vmem>>, vector<1x32xf32>
    %164 = arith.truncf %161 : vector<16x64xf32> to vector<16x64xbf16>
    %c0_133 = arith.constant 0 : index
    %c0_134 = arith.constant 0 : index
    %165 = vector.load %arg13[%c0_133, %c0_134] : memref<64x128xbf16, #tpu.memory_space<vmem>>, vector<64x128xbf16>
    %cst_135 = arith.constant dense<0.000000e+00> : vector<16x128xf32>
    %166 = tpu.matmul %164, %165, %cst_135 {dimension_numbers = #tpu.dot_dimension_numbers<[1], [0], [0], [1], [0, 0, 1, 1], [], []>} : vector<16x64xbf16>, vector<64x128xbf16>, vector<16x128xf32> -> vector<16x128xf32>
    %cst_136 = arith.constant 0.000000e+00 : f32
    %167 = vector.broadcast %cst_136 : f32 to vector<64x32xf32>
    %168 = vector.extract_strided_slice %166 {offsets = [0, 0], sizes = [16, 32], strides = [1, 1]} : vector<16x128xf32> to vector<16x32xf32>
    %169 = arith.truncf %168 : vector<16x32xf32> to vector<16x32xbf16>
    %c0_137 = arith.constant 0 : index
    %c0_138 = arith.constant 0 : index
    %c0_139 = arith.constant 0 : index
    %170 = vector.load %arg16[%c0_137, %c0_138, %c0_139] : memref<4x64x16xbf16, #tpu.memory_space<vmem>>, vector<1x64x16xbf16>
    %171 = vector.shape_cast %170 : vector<1x64x16xbf16> to vector<64x16xbf16>
    %cst_140 = arith.constant dense<0.000000e+00> : vector<64x32xf32>
    %172 = tpu.matmul %171, %169, %cst_140 {dimension_numbers = #tpu.dot_dimension_numbers<[1], [0], [0], [1], [0, 0, 1, 1], [], []>} : vector<64x16xbf16>, vector<16x32xbf16>, vector<64x32xf32> -> vector<64x32xf32>
    %173 = arith.addf %167, %172 : vector<64x32xf32>
    %174 = vector.extract_strided_slice %166 {offsets = [0, 32], sizes = [16, 32], strides = [1, 1]} : vector<16x128xf32> to vector<16x32xf32>
    %175 = arith.truncf %174 : vector<16x32xf32> to vector<16x32xbf16>
    %c1_141 = arith.constant 1 : index
    %c0_142 = arith.constant 0 : index
    %c0_143 = arith.constant 0 : index
    %176 = vector.load %arg16[%c1_141, %c0_142, %c0_143] : memref<4x64x16xbf16, #tpu.memory_space<vmem>>, vector<1x64x16xbf16>
    %177 = vector.shape_cast %176 : vector<1x64x16xbf16> to vector<64x16xbf16>
    %cst_144 = arith.constant dense<0.000000e+00> : vector<64x32xf32>
    %178 = tpu.matmul %177, %175, %cst_144 {dimension_numbers = #tpu.dot_dimension_numbers<[1], [0], [0], [1], [0, 0, 1, 1], [], []>} : vector<64x16xbf16>, vector<16x32xbf16>, vector<64x32xf32> -> vector<64x32xf32>
    %179 = arith.addf %173, %178 : vector<64x32xf32>
    %180 = vector.extract_strided_slice %166 {offsets = [0, 64], sizes = [16, 32], strides = [1, 1]} : vector<16x128xf32> to vector<16x32xf32>
    %181 = arith.truncf %180 : vector<16x32xf32> to vector<16x32xbf16>
    %c2_145 = arith.constant 2 : index
    %c0_146 = arith.constant 0 : index
    %c0_147 = arith.constant 0 : index
    %182 = vector.load %arg16[%c2_145, %c0_146, %c0_147] : memref<4x64x16xbf16, #tpu.memory_space<vmem>>, vector<1x64x16xbf16>
    %183 = vector.shape_cast %182 : vector<1x64x16xbf16> to vector<64x16xbf16>
    %cst_148 = arith.constant dense<0.000000e+00> : vector<64x32xf32>
    %184 = tpu.matmul %183, %181, %cst_148 {dimension_numbers = #tpu.dot_dimension_numbers<[1], [0], [0], [1], [0, 0, 1, 1], [], []>} : vector<64x16xbf16>, vector<16x32xbf16>, vector<64x32xf32> -> vector<64x32xf32>
    %185 = arith.addf %179, %184 : vector<64x32xf32>
    %186 = vector.extract_strided_slice %166 {offsets = [0, 96], sizes = [16, 32], strides = [1, 1]} : vector<16x128xf32> to vector<16x32xf32>
    %187 = arith.truncf %186 : vector<16x32xf32> to vector<16x32xbf16>
    %c3 = arith.constant 3 : index
    %c0_149 = arith.constant 0 : index
    %c0_150 = arith.constant 0 : index
    %188 = vector.load %arg16[%c3, %c0_149, %c0_150] : memref<4x64x16xbf16, #tpu.memory_space<vmem>>, vector<1x64x16xbf16>
    %189 = vector.shape_cast %188 : vector<1x64x16xbf16> to vector<64x16xbf16>
    %cst_151 = arith.constant dense<0.000000e+00> : vector<64x32xf32>
    %190 = tpu.matmul %189, %187, %cst_151 {dimension_numbers = #tpu.dot_dimension_numbers<[1], [0], [0], [1], [0, 0, 1, 1], [], []>} : vector<64x16xbf16>, vector<16x32xbf16>, vector<64x32xf32> -> vector<64x32xf32>
    %191 = arith.addf %185, %190 : vector<64x32xf32>
    %192 = vector.broadcast %162 : vector<1x32xf32> to vector<64x32xf32>
    %193 = arith.mulf %191, %192 : vector<64x32xf32>
    %194 = vector.broadcast %163 : vector<1x32xf32> to vector<64x32xf32>
    %195 = arith.addf %193, %194 : vector<64x32xf32>
    %cst_152 = arith.constant 0.000000e+00 : f32
    %196 = vector.broadcast %cst_152 : f32 to vector<64x32xf32>
    %197 = arith.maximumf %195, %196 : vector<64x32xf32>
    %c0_153 = arith.constant 0 : index
    %c0_154 = arith.constant 0 : index
    %198 = vector.load %arg18[%c0_153, %c0_154] : memref<1x32xf32, #tpu.memory_space<vmem>>, vector<1x32xf32>
    %c0_155 = arith.constant 0 : index
    %c0_156 = arith.constant 0 : index
    %199 = vector.load %arg19[%c0_155, %c0_156] : memref<1x32xf32, #tpu.memory_space<vmem>>, vector<1x32xf32>
    %200 = arith.truncf %197 : vector<64x32xf32> to vector<64x32xbf16>
    %c0_157 = arith.constant 0 : index
    %c0_158 = arith.constant 0 : index
    %201 = vector.load %arg17[%c0_157, %c0_158] : memref<32x128xbf16, #tpu.memory_space<vmem>>, vector<32x128xbf16>
    %cst_159 = arith.constant dense<0.000000e+00> : vector<64x128xf32>
    %202 = tpu.matmul %200, %201, %cst_159 {dimension_numbers = #tpu.dot_dimension_numbers<[1], [0], [0], [1], [0, 0, 1, 1], [], []>} : vector<64x32xbf16>, vector<32x128xbf16>, vector<64x128xf32> -> vector<64x128xf32>
    %cst_160 = arith.constant 0.000000e+00 : f32
    %203 = vector.broadcast %cst_160 : f32 to vector<256x32xf32>
    %204 = vector.extract_strided_slice %202 {offsets = [0, 0], sizes = [64, 32], strides = [1, 1]} : vector<64x128xf32> to vector<64x32xf32>
    %205 = arith.truncf %204 : vector<64x32xf32> to vector<64x32xbf16>
    %c0_161 = arith.constant 0 : index
    %c0_162 = arith.constant 0 : index
    %c0_163 = arith.constant 0 : index
    %206 = vector.load %arg20[%c0_161, %c0_162, %c0_163] : memref<4x256x64xbf16, #tpu.memory_space<vmem>>, vector<1x256x64xbf16>
    %207 = vector.shape_cast %206 : vector<1x256x64xbf16> to vector<256x64xbf16>
    %cst_164 = arith.constant dense<0.000000e+00> : vector<256x32xf32>
    %208 = tpu.matmul %207, %205, %cst_164 {dimension_numbers = #tpu.dot_dimension_numbers<[1], [0], [0], [1], [0, 0, 1, 1], [], []>} : vector<256x64xbf16>, vector<64x32xbf16>, vector<256x32xf32> -> vector<256x32xf32>
    %209 = arith.addf %203, %208 : vector<256x32xf32>
    %210 = vector.extract_strided_slice %202 {offsets = [0, 32], sizes = [64, 32], strides = [1, 1]} : vector<64x128xf32> to vector<64x32xf32>
    %211 = arith.truncf %210 : vector<64x32xf32> to vector<64x32xbf16>
    %c1_165 = arith.constant 1 : index
    %c0_166 = arith.constant 0 : index
    %c0_167 = arith.constant 0 : index
    %212 = vector.load %arg20[%c1_165, %c0_166, %c0_167] : memref<4x256x64xbf16, #tpu.memory_space<vmem>>, vector<1x256x64xbf16>
    %213 = vector.shape_cast %212 : vector<1x256x64xbf16> to vector<256x64xbf16>
    %cst_168 = arith.constant dense<0.000000e+00> : vector<256x32xf32>
    %214 = tpu.matmul %213, %211, %cst_168 {dimension_numbers = #tpu.dot_dimension_numbers<[1], [0], [0], [1], [0, 0, 1, 1], [], []>} : vector<256x64xbf16>, vector<64x32xbf16>, vector<256x32xf32> -> vector<256x32xf32>
    %215 = arith.addf %209, %214 : vector<256x32xf32>
    %216 = vector.extract_strided_slice %202 {offsets = [0, 64], sizes = [64, 32], strides = [1, 1]} : vector<64x128xf32> to vector<64x32xf32>
    %217 = arith.truncf %216 : vector<64x32xf32> to vector<64x32xbf16>
    %c2_169 = arith.constant 2 : index
    %c0_170 = arith.constant 0 : index
    %c0_171 = arith.constant 0 : index
    %218 = vector.load %arg20[%c2_169, %c0_170, %c0_171] : memref<4x256x64xbf16, #tpu.memory_space<vmem>>, vector<1x256x64xbf16>
    %219 = vector.shape_cast %218 : vector<1x256x64xbf16> to vector<256x64xbf16>
    %cst_172 = arith.constant dense<0.000000e+00> : vector<256x32xf32>
    %220 = tpu.matmul %219, %217, %cst_172 {dimension_numbers = #tpu.dot_dimension_numbers<[1], [0], [0], [1], [0, 0, 1, 1], [], []>} : vector<256x64xbf16>, vector<64x32xbf16>, vector<256x32xf32> -> vector<256x32xf32>
    %221 = arith.addf %215, %220 : vector<256x32xf32>
    %222 = vector.extract_strided_slice %202 {offsets = [0, 96], sizes = [64, 32], strides = [1, 1]} : vector<64x128xf32> to vector<64x32xf32>
    %223 = arith.truncf %222 : vector<64x32xf32> to vector<64x32xbf16>
    %c3_173 = arith.constant 3 : index
    %c0_174 = arith.constant 0 : index
    %c0_175 = arith.constant 0 : index
    %224 = vector.load %arg20[%c3_173, %c0_174, %c0_175] : memref<4x256x64xbf16, #tpu.memory_space<vmem>>, vector<1x256x64xbf16>
    %225 = vector.shape_cast %224 : vector<1x256x64xbf16> to vector<256x64xbf16>
    %cst_176 = arith.constant dense<0.000000e+00> : vector<256x32xf32>
    %226 = tpu.matmul %225, %223, %cst_176 {dimension_numbers = #tpu.dot_dimension_numbers<[1], [0], [0], [1], [0, 0, 1, 1], [], []>} : vector<256x64xbf16>, vector<64x32xbf16>, vector<256x32xf32> -> vector<256x32xf32>
    %227 = arith.addf %221, %226 : vector<256x32xf32>
    %228 = vector.broadcast %198 : vector<1x32xf32> to vector<256x32xf32>
    %229 = arith.mulf %227, %228 : vector<256x32xf32>
    %230 = vector.broadcast %199 : vector<1x32xf32> to vector<256x32xf32>
    %231 = arith.addf %229, %230 : vector<256x32xf32>
    %cst_177 = arith.constant 0.000000e+00 : f32
    %232 = vector.broadcast %cst_177 : f32 to vector<256x32xf32>
    %233 = arith.maximumf %231, %232 : vector<256x32xf32>
    %c0_178 = arith.constant 0 : index
    %c0_179 = arith.constant 0 : index
    %234 = vector.load %arg22[%c0_178, %c0_179] : memref<1x1xf32, #tpu.memory_space<vmem>>, vector<1x1xf32>
    %cst_180 = arith.constant 0.000000e+00 : f32
    %235 = vector.broadcast %cst_180 : f32 to vector<16x32xf32>
    %c24_181 = arith.constant 24 : index
    %c0_182 = arith.constant 0 : index
    %236 = vector.load %arg24[%c24_181, %c0_182] : memref<304x96xf32, #tpu.memory_space<vmem>>, vector<16x32xf32>
    tpu.vector_store %arg24[%c24_181, %c0_182], %235 {strides = array<i32>} : memref<304x96xf32, #tpu.memory_space<vmem>>, vector<16x32xf32>,
    %c264_183 = arith.constant 264 : index
    %c64_184 = arith.constant 64 : index
    %237 = vector.load %arg24[%c264_183, %c64_184] : memref<304x96xf32, #tpu.memory_space<vmem>>, vector<16x32xf32>
    tpu.vector_store %arg24[%c264_183, %c64_184], %235 {strides = array<i32>} : memref<304x96xf32, #tpu.memory_space<vmem>>, vector<16x32xf32>,
    %c40_185 = arith.constant 40 : index
    %c0_186 = arith.constant 0 : index
    %238 = vector.load %arg24[%c40_185, %c0_186] : memref<304x96xf32, #tpu.memory_space<vmem>>, vector<256x32xf32>
    tpu.vector_store %arg24[%c40_185, %c0_186], %233 {strides = array<i32>} : memref<304x96xf32, #tpu.memory_space<vmem>>, vector<256x32xf32>,
    %c24_187 = arith.constant 24 : index
    %c32_188 = arith.constant 32 : index
    %239 = vector.load %arg24[%c24_187, %c32_188] : memref<304x96xf32, #tpu.memory_space<vmem>>, vector<256x32xf32>
    tpu.vector_store %arg24[%c24_187, %c32_188], %233 {strides = array<i32>} : memref<304x96xf32, #tpu.memory_space<vmem>>, vector<256x32xf32>,
    %c8_189 = arith.constant 8 : index
    %c64_190 = arith.constant 64 : index
    %240 = vector.load %arg24[%c8_189, %c64_190] : memref<304x96xf32, #tpu.memory_space<vmem>>, vector<256x32xf32>
    tpu.vector_store %arg24[%c8_189, %c64_190], %233 {strides = array<i32>} : memref<304x96xf32, #tpu.memory_space<vmem>>, vector<256x32xf32>,
    %cst_191 = arith.constant 0.000000e+00 : f32
    %241 = vector.broadcast %cst_191 : f32 to vector<1x256xf32>
    %c23_192 = arith.constant 23 : index
    %c0_193 = arith.constant 0 : index
    %242 = vector.load %arg24[%c23_192, %c0_193] : memref<304x96xf32, #tpu.memory_space<vmem>>, vector<256x96xf32>
    %cst_194 = arith.constant 0.000000e+00 : f32
    %243 = vector.shape_cast %4 : vector<256x1xi1> to vector<256x1xi1>
    %244 = vector.broadcast %243 : vector<256x1xi1> to vector<256x96xi1>
    %245 = vector.broadcast %cst_194 : f32 to vector<256x96xf32>
    %246 = arith.select %244, %242, %245 : vector<256x96xi1>, vector<256x96xf32>
    %c0_195 = arith.constant 0 : index
    %c0_196 = arith.constant 0 : index
    %c0_197 = arith.constant 0 : index
    %247 = vector.load %arg21[%c0_195, %c0_196, %c0_197] : memref<3x1x96xbf16, #tpu.memory_space<vmem>>, vector<1x1x96xbf16>
    %248 = vector.shape_cast %247 : vector<1x1x96xbf16> to vector<1x96xbf16>
    %249 = arith.truncf %246 : vector<256x96xf32> to vector<256x96xbf16>
    %cst_198 = arith.constant dense<0.000000e+00> : vector<1x256xf32>
    %250 = tpu.matmul %248, %249, %cst_198 {dimension_numbers = #tpu.dot_dimension_numbers<[1], [1], [0], [0], [0, 0, 1, 0], [], []>} : vector<1x96xbf16>, vector<256x96xbf16>, vector<1x256xf32> -> vector<1x256xf32>
    %251 = arith.addf %241, %250 : vector<1x256xf32>
    %c24_199 = arith.constant 24 : index
    %c0_200 = arith.constant 0 : index
    %252 = vector.load %arg24[%c24_199, %c0_200] : memref<304x96xf32, #tpu.memory_space<vmem>>, vector<256x96xf32>
    %c1_201 = arith.constant 1 : index
    %c0_202 = arith.constant 0 : index
    %c0_203 = arith.constant 0 : index
    %253 = vector.load %arg21[%c1_201, %c0_202, %c0_203] : memref<3x1x96xbf16, #tpu.memory_space<vmem>>, vector<1x1x96xbf16>
    %254 = vector.shape_cast %253 : vector<1x1x96xbf16> to vector<1x96xbf16>
    %255 = arith.truncf %252 : vector<256x96xf32> to vector<256x96xbf16>
    %cst_204 = arith.constant dense<0.000000e+00> : vector<1x256xf32>
    %256 = tpu.matmul %254, %255, %cst_204 {dimension_numbers = #tpu.dot_dimension_numbers<[1], [1], [0], [0], [0, 0, 1, 0], [], []>} : vector<1x96xbf16>, vector<256x96xbf16>, vector<1x256xf32> -> vector<1x256xf32>
    %257 = arith.addf %251, %256 : vector<1x256xf32>
    %c25_205 = arith.constant 25 : index
    %c0_206 = arith.constant 0 : index
    %258 = vector.load %arg24[%c25_205, %c0_206] : memref<304x96xf32, #tpu.memory_space<vmem>>, vector<256x96xf32>
    %cst_207 = arith.constant 0.000000e+00 : f32
    %259 = vector.shape_cast %6 : vector<256x1xi1> to vector<256x1xi1>
    %260 = vector.broadcast %259 : vector<256x1xi1> to vector<256x96xi1>
    %261 = vector.broadcast %cst_207 : f32 to vector<256x96xf32>
    %262 = arith.select %260, %258, %261 : vector<256x96xi1>, vector<256x96xf32>
    %c2_208 = arith.constant 2 : index
    %c0_209 = arith.constant 0 : index
    %c0_210 = arith.constant 0 : index
    %263 = vector.load %arg21[%c2_208, %c0_209, %c0_210] : memref<3x1x96xbf16, #tpu.memory_space<vmem>>, vector<1x1x96xbf16>
    %264 = vector.shape_cast %263 : vector<1x1x96xbf16> to vector<1x96xbf16>
    %265 = arith.truncf %262 : vector<256x96xf32> to vector<256x96xbf16>
    %cst_211 = arith.constant dense<0.000000e+00> : vector<1x256xf32>
    %266 = tpu.matmul %264, %265, %cst_211 {dimension_numbers = #tpu.dot_dimension_numbers<[1], [1], [0], [0], [0, 0, 1, 0], [], []>} : vector<1x96xbf16>, vector<256x96xbf16>, vector<1x256xf32> -> vector<1x256xf32>
    %267 = arith.addf %257, %266 : vector<1x256xf32>
    %268 = vector.broadcast %234 : vector<1x1xf32> to vector<1x256xf32>
    %269 = arith.addf %267, %268 : vector<1x256xf32>
    %cst_212 = arith.constant 0.000000e+00 : f32
    %270 = vector.broadcast %cst_212 : f32 to vector<1x256xf32>
    %271 = arith.subf %270, %269 : vector<1x256xf32>
    %272 = math.exp %271 : vector<1x256xf32>
    %cst_213 = arith.constant 1.000000e+00 : f32
    %273 = vector.broadcast %cst_213 : f32 to vector<1x256xf32>
    %274 = arith.addf %273, %272 : vector<1x256xf32>
    %cst_214 = arith.constant 1.000000e+00 : f32
    %275 = vector.broadcast %cst_214 : f32 to vector<1x256xf32>
    %276 = arith.divf %275, %274 : vector<1x256xf32>
    %277 = vector.shape_cast %276 : vector<1x256xf32> to vector<1x1x256xf32>
    %c0_215 = arith.constant 0 : index
    %c0_216 = arith.constant 0 : index
    %c0_217 = arith.constant 0 : index
    %278 = vector.load %arg23[%c0_215, %c0_216, %c0_217] : memref<1x1x256xf32, #tpu.memory_space<vmem>>, vector<1x1x256xf32>
    tpu.vector_store %arg23[%c0_215, %c0_216, %c0_217], %277 {strides = array<i32>} : memref<1x1x256xf32, #tpu.memory_space<vmem>>, vector<1x1x256xf32>,
    return
  }
  func.func @transform_0(%arg0: i32) -> (i32, i32, i32) {
    %c0_i32 = arith.constant 0 : i32
    %c0_i32_0 = arith.constant 0 : i32
    %c0_i32_1 = arith.constant 0 : i32
    return %arg0, %c0_i32, %c0_i32_0 : i32, i32, i32
  }
  func.func @transform_1(%arg0: i32) -> (i32, i32, i32) {
    %c0_i32 = arith.constant 0 : i32
    %c0_i32_0 = arith.constant 0 : i32
    %c0_i32_1 = arith.constant 0 : i32
    %c0_i32_2 = arith.constant 0 : i32
    return %c0_i32, %c0_i32_0, %c0_i32_1 : i32, i32, i32
  }
  func.func @transform_2(%arg0: i32) -> (i32, i32) {
    %c0_i32 = arith.constant 0 : i32
    %c0_i32_0 = arith.constant 0 : i32
    %c0_i32_1 = arith.constant 0 : i32
    return %c0_i32, %c0_i32_0 : i32, i32
  }
  func.func @transform_3(%arg0: i32) -> (i32, i32) {
    %c0_i32 = arith.constant 0 : i32
    %c0_i32_0 = arith.constant 0 : i32
    %c0_i32_1 = arith.constant 0 : i32
    return %c0_i32, %c0_i32_0 : i32, i32
  }
  func.func @transform_4(%arg0: i32) -> (i32, i32, i32) {
    %c0_i32 = arith.constant 0 : i32
    %c0_i32_0 = arith.constant 0 : i32
    %c0_i32_1 = arith.constant 0 : i32
    %c0_i32_2 = arith.constant 0 : i32
    return %c0_i32, %c0_i32_0, %c0_i32_1 : i32, i32, i32
  }
  func.func @transform_5(%arg0: i32) -> (i32, i32) {
    %c0_i32 = arith.constant 0 : i32
    %c0_i32_0 = arith.constant 0 : i32
    %c0_i32_1 = arith.constant 0 : i32
    return %c0_i32, %c0_i32_0 : i32, i32
  }
  func.func @transform_6(%arg0: i32) -> (i32, i32) {
    %c0_i32 = arith.constant 0 : i32
    %c0_i32_0 = arith.constant 0 : i32
    %c0_i32_1 = arith.constant 0 : i32
    return %c0_i32, %c0_i32_0 : i32, i32
  }
  func.func @transform_7(%arg0: i32) -> (i32, i32) {
    %c0_i32 = arith.constant 0 : i32
    %c0_i32_0 = arith.constant 0 : i32
    %c0_i32_1 = arith.constant 0 : i32
    return %c0_i32, %c0_i32_0 : i32, i32
  }
  func.func @transform_8(%arg0: i32) -> (i32, i32, i32) {
    %c0_i32 = arith.constant 0 : i32
    %c0_i32_0 = arith.constant 0 : i32
    %c0_i32_1 = arith.constant 0 : i32
    %c0_i32_2 = arith.constant 0 : i32
    return %c0_i32, %c0_i32_0, %c0_i32_1 : i32, i32, i32
  }
  func.func @transform_9(%arg0: i32) -> (i32, i32) {
    %c0_i32 = arith.constant 0 : i32
    %c0_i32_0 = arith.constant 0 : i32
    %c0_i32_1 = arith.constant 0 : i32
    return %c0_i32, %c0_i32_0 : i32, i32
  }
  func.func @transform_10(%arg0: i32) -> (i32, i32) {
    %c0_i32 = arith.constant 0 : i32
    %c0_i32_0 = arith.constant 0 : i32
    %c0_i32_1 = arith.constant 0 : i32
    return %c0_i32, %c0_i32_0 : i32, i32
  }
  func.func @transform_11(%arg0: i32) -> (i32, i32) {
    %c0_i32 = arith.constant 0 : i32
    %c0_i32_0 = arith.constant 0 : i32
    %c0_i32_1 = arith.constant 0 : i32
    return %c0_i32, %c0_i32_0 : i32, i32
  }
  func.func @transform_12(%arg0: i32) -> (i32, i32) {
    %c0_i32 = arith.constant 0 : i32
    %c0_i32_0 = arith.constant 0 : i32
    %c0_i32_1 = arith.constant 0 : i32
    return %c0_i32, %c0_i32_0 : i32, i32
  }
  func.func @transform_13(%arg0: i32) -> (i32, i32) {
    %c0_i32 = arith.constant 0 : i32
    %c0_i32_0 = arith.constant 0 : i32
    %c0_i32_1 = arith.constant 0 : i32
    return %c0_i32, %c0_i32_0 : i32, i32
  }
  func.func @transform_14(%arg0: i32) -> (i32, i32) {
    %c0_i32 = arith.constant 0 : i32
    %c0_i32_0 = arith.constant 0 : i32
    %c0_i32_1 = arith.constant 0 : i32
    return %c0_i32, %c0_i32_0 : i32, i32
  }
  func.func @transform_15(%arg0: i32) -> (i32, i32, i32) {
    %c0_i32 = arith.constant 0 : i32
    %c0_i32_0 = arith.constant 0 : i32
    %c0_i32_1 = arith.constant 0 : i32
    %c0_i32_2 = arith.constant 0 : i32
    return %c0_i32, %c0_i32_0, %c0_i32_1 : i32, i32, i32
  }
  func.func @transform_16(%arg0: i32) -> (i32, i32) {
    %c0_i32 = arith.constant 0 : i32
    %c0_i32_0 = arith.constant 0 : i32
    %c0_i32_1 = arith.constant 0 : i32
    return %c0_i32, %c0_i32_0 : i32, i32
  }
  func.func @transform_17(%arg0: i32) -> (i32, i32) {
    %c0_i32 = arith.constant 0 : i32
    %c0_i32_0 = arith.constant 0 : i32
    %c0_i32_1 = arith.constant 0 : i32
    return %c0_i32, %c0_i32_0 : i32, i32
  }
  func.func @transform_18(%arg0: i32) -> (i32, i32) {
    %c0_i32 = arith.constant 0 : i32
    %c0_i32_0 = arith.constant 0 : i32
    %c0_i32_1 = arith.constant 0 : i32
    return %c0_i32, %c0_i32_0 : i32, i32
  }
  func.func @transform_19(%arg0: i32) -> (i32, i32, i32) {
    %c0_i32 = arith.constant 0 : i32
    %c0_i32_0 = arith.constant 0 : i32
    %c0_i32_1 = arith.constant 0 : i32
    %c0_i32_2 = arith.constant 0 : i32
    return %c0_i32, %c0_i32_0, %c0_i32_1 : i32, i32, i32
  }
  func.func @transform_20(%arg0: i32) -> (i32, i32, i32) {
    %c0_i32 = arith.constant 0 : i32
    %c0_i32_0 = arith.constant 0 : i32
    %c0_i32_1 = arith.constant 0 : i32
    %c0_i32_2 = arith.constant 0 : i32
    return %c0_i32, %c0_i32_0, %c0_i32_1 : i32, i32, i32
  }
  func.func @transform_21(%arg0: i32) -> (i32, i32) {
    %c0_i32 = arith.constant 0 : i32
    %c0_i32_0 = arith.constant 0 : i32
    %c0_i32_1 = arith.constant 0 : i32
    return %c0_i32, %c0_i32_0 : i32, i32
  }
  func.func @transform_22(%arg0: i32) -> (i32, i32, i32) {
    %c0_i32 = arith.constant 0 : i32
    %c0_i32_0 = arith.constant 0 : i32
    %c0_i32_1 = arith.constant 0 : i32
    return %arg0, %c0_i32, %c0_i32_0 : i32, i32, i32
  }
}

</mosaic_0001>

<llo_original>
// kernel: tpu_custom_call.1
$region0: #{tpu_custom_call.1}
  #allocation0 [shape = 'u32[]', space=smem, size = 0x4, offset = 0x4, fixed_abs, tag = 'smem constant byte address 0x4 - core index']
  #allocation1 [shape = 'u32[144,128]{1,0:T(1,128)}', space=vmem, size = 0x12000, scoped, tag = 'internal scratch']
  #allocation2 [shape = 'f32[304,96]{1,0:T(8,128)}', space=vmem, size = 0x26000, scoped, tag = 'scratch operand']
  #allocation3 [shape = 'f32[1,1]{1,0:T(1,128)S(1)}', space=vmem, size = 0x200, scoped, tag = 'scoped memory for tpu_custom_call.1']
  %s0 = inlined_call_operand.vmem [shape: f32[2,256,1], index: 0, kind: input, shape index: {}]
  %s1 = inlined_call_operand.vmem [shape: f32[3,3,32], index: 1, kind: input, shape index: {}]
  %s2 = inlined_call_operand.vmem [shape: f32[1,32], index: 2, kind: input, shape index: {}]
  %s3 = inlined_call_operand.vmem [shape: f32[1,32], index: 3, kind: input, shape index: {}]
  %s4 = inlined_call_operand.vmem [shape: bf16[3,96,32], index: 4, kind: input, shape index: {}]
  %s5 = inlined_call_operand.vmem [shape: f32[1,32], index: 5, kind: input, shape index: {}]
  %s6 = inlined_call_operand.vmem [shape: f32[1,32], index: 6, kind: input, shape index: {}]
  %s7 = inlined_call_operand.vmem [shape: bf16[64,256], index: 7, kind: input, shape index: {}]
  %s8 = inlined_call_operand.vmem [shape: bf16[3,96,64], index: 8, kind: input, shape index: {}]
  %s9 = inlined_call_operand.vmem [shape: f32[1,64], index: 9, kind: input, shape index: {}]
  %s10 = inlined_call_operand.vmem [shape: f32[1,64], index: 10, kind: input, shape index: {}]
  %s11 = inlined_call_operand.vmem [shape: bf16[16,64], index: 11, kind: input, shape index: {}]
  %s12 = inlined_call_operand.vmem [shape: bf16[64,128], index: 12, kind: input, shape index: {}]
  %s13 = inlined_call_operand.vmem [shape: f32[1,32], index: 13, kind: input, shape index: {}]
  %s14 = inlined_call_operand.vmem [shape: f32[1,32], index: 14, kind: input, shape index: {}]
  %s15 = inlined_call_operand.vmem [shape: bf16[4,64,16], index: 15, kind: input, shape index: {}]
  %s16 = inlined_call_operand.vmem [shape: bf16[32,128], index: 16, kind: input, shape index: {}]
  %s17 = inlined_call_operand.vmem [shape: f32[1,32], index: 17, kind: input, shape index: {}]
  %s18 = inlined_call_operand.vmem [shape: f32[1,32], index: 18, kind: input, shape index: {}]
  %s19 = inlined_call_operand.vmem [shape: bf16[4,256,64], index: 19, kind: input, shape index: {}]
  %s20 = inlined_call_operand.vmem [shape: bf16[3,1,96], index: 20, kind: input, shape index: {}]
  %s21 = inlined_call_operand.<no memory space> [shape: f32[1,1], index: 21, kind: input, shape index: {}]
  %s22 = inlined_call_operand.hbm [shape: f32[2,1,256], index: 22, kind: output, shape index: {}]
  %s23 = sld [smem:[#allocation0]]
  $region121: #{tpu_custom_call.1} parent=0
    _
  %s25 = ssub.s32 1, %s23
  %s26 = scalar_select 0, %s25, %s23
  %v27 = vstv %s21
  %28 = vst [vmem:[#allocation3] sm:$0x1] %v27
  $region1: #{tpu_custom_call.1} parent=0
    #allocation4 [shape = 'u8[2048]{0}', space=vmem, size = 0x800, scoped, tag = 'output window, operand 0']
    #allocation5 [shape = 's32[2]{0}', space=sflag, size = 0x8, scoped, tag = 'scoped memory for tpu_custom_call.1']
    %29 = vsyncpa [#allocation5], 0
    %s30 = scalar_lea.sflag [#allocation5], 1
    %31 = vsyncpa %s30, 0
    loop: start=0, step=1, limit=4
    $region2: #{tpu_custom_call.1} parent=1 // loop_pre_header
      _
    $region3: #{tpu_custom_call.1} parent=1 // loop_header
      %s33 = sphi 0, %s37
      %p34 = scmp.ge.s32.totalorder %s33, 4
      %s43 = sphi 0, %s45
      %s46 = sphi 0, %s43
      %s47 = sphi 0, %s46
      %s63 = sphi 0, %s47
      %s67 = sphi 0, %s67
      %s69 = sphi 0, %s67
      %s70 = sphi 0, %s69
      %s84 = sphi 0, %s70
      %s88 = sphi 0, %s88
      %s90 = sphi 0, %s88
      %s91 = sphi 0, %s90
      %s105 = sphi 0, %s91
      %s109 = sphi 0, %s109
      %s111 = sphi 0, %s109
      %s112 = sphi 0, %s111
      %s126 = sphi 0, %s112
      %s130 = sphi 0, %s130
      %s132 = sphi 0, %s130
      %s133 = sphi 0, %s132
      %s147 = sphi 0, %s133
      %s151 = sphi 0, %s151
      %s153 = sphi 0, %s151
      %s154 = sphi 0, %s153
      %s168 = sphi 0, %s154
      %s172 = sphi 0, %s172
      %s174 = sphi 0, %s172
      %s175 = sphi 0, %s174
      %s189 = sphi 0, %s175
      %s193 = sphi 0, %s193
      %s195 = sphi 0, %s193
      %s196 = sphi 0, %s195
      %s210 = sphi 0, %s196
      %s214 = sphi 0, %s214
      %s216 = sphi 0, %s214
      %s217 = sphi 0, %s216
      %s231 = sphi 0, %s217
      %s235 = sphi 0, %s235
      %s237 = sphi 0, %s235
      %s238 = sphi 0, %s237
      %s252 = sphi 0, %s238
      %s256 = sphi 0, %s256
      %s258 = sphi 0, %s256
      %s259 = sphi 0, %s258
      %s273 = sphi 0, %s259
      %s277 = sphi 0, %s277
      %s279 = sphi 0, %s277
      %s280 = sphi 0, %s279
      %s294 = sphi 0, %s280
      %s298 = sphi 0, %s298
      %s300 = sphi 0, %s298
      %s301 = sphi 0, %s300
      %s315 = sphi 0, %s301
      %s319 = sphi 0, %s319
      %s321 = sphi 0, %s319
      %s322 = sphi 0, %s321
      %s336 = sphi 0, %s322
      %s340 = sphi 0, %s340
      %s342 = sphi 0, %s340
      %s343 = sphi 0, %s342
      %s357 = sphi 0, %s343
      %s361 = sphi 0, %s361
      %s363 = sphi 0, %s361
      %s364 = sphi 0, %s363
      %s378 = sphi 0, %s364
      %s382 = sphi 0, %s382
      %s384 = sphi 0, %s382
      %s385 = sphi 0, %s384
      %s399 = sphi 0, %s385
      %s403 = sphi 0, %s403
      %s405 = sphi 0, %s403
      %s406 = sphi 0, %s405
      %s420 = sphi 0, %s406
      %s424 = sphi 0, %s424
      %s426 = sphi 0, %s424
      %s427 = sphi 0, %s426
      %s441 = sphi 0, %s427
      %s445 = sphi 0, %s445
      %s447 = sphi 0, %s445
      %s448 = sphi 0, %s447
      %s462 = sphi 0, %s448
      %s466 = sphi 0, %s466
      %s468 = sphi 0, %s466
      %s469 = sphi 0, %s468
      %s483 = sphi 0, %s469
      %s487 = sphi 0, %s487
      %s489 = sphi 0, %s487
      %s490 = sphi 0, %s489
      %s504 = sphi 0, %s490
      %s510 = sphi 0, %s512
      %s513 = sphi 0, %s510
      %s514 = sphi 0, %s513
      %s530 = sphi 0, %s514
    $region4: #{tpu_custom_call.1} parent=1 // loop_header_branch
      %36 = sbr.rel (%p34) target = $region8
    $region5: #{tpu_custom_call.1} parent=1 // loop_body
      %s38 = ssub.s32 %s33, 1
      %s39 = ssub.s32 %s33, 2
      %s40 = sadd.s32 %s33, 1
      %s41 = ssub.s32 %s33, %s40
      %p42 = scmp.eq.s32.totalorder %s41, 0
      %s44 = sadd.s32 %s43, 1
      %s45 = scalar_select %p42, %s43, %s44
      %p48 = pneg %p42
      %p49 = scmp.eq.s32.totalorder %s33, 1
      %p50 = por %p48, %p49
      %p51 = scmp.ne.s32.totalorder %s43, %s46
      %p52 = scmp.eq.s32.totalorder %s33, 0
      %p53 = por %p51, %p52
      %p54 = scmp.ne.s32.totalorder %s43, %s46
      %p55 = scmp.eq.s32.totalorder %s38, 1
      %p56 = por %p54, %p55
      %p57 = scmp.ne.s32.totalorder %s46, %s47
      %p58 = scmp.eq.s32.totalorder %s38, 0
      %p59 = por %p57, %p58
      %p60 = scmp.ne.s32.totalorder %s46, %s47
      %p61 = scmp.eq.s32.totalorder %s39, 1
      %p62 = por %p60, %p61
      %p64 = scmp.ne.s32.totalorder %s47, %s63
      %p65 = scmp.eq.s32.totalorder %s39, 0
      %p66 = por %p64, %p65
      %s68 = sadd.s32 %s67, 1
      %p71 = scmp.eq.s32.totalorder %s33, 1
      %p72 = scmp.ne.s32.totalorder %s67, %s69
      %p73 = scmp.eq.s32.totalorder %s33, 0
      %p74 = por %p72, %p73
      %p75 = scmp.ne.s32.totalorder %s67, %s69
      %p76 = scmp.eq.s32.totalorder %s38, 1
      %p77 = por %p75, %p76
      %p78 = scmp.ne.s32.totalorder %s69, %s70
      %p79 = scmp.eq.s32.totalorder %s38, 0
      %p80 = por %p78, %p79
      %p81 = scmp.ne.s32.totalorder %s69, %s70
      %p82 = scmp.eq.s32.totalorder %s39, 1
      %p83 = por %p81, %p82
      %p85 = scmp.ne.s32.totalorder %s70, %s84
      %p86 = scmp.eq.s32.totalorder %s39, 0
      %p87 = por %p85, %p86
      %s89 = sadd.s32 %s88, 1
      %p92 = scmp.eq.s32.totalorder %s33, 1
      %p93 = scmp.ne.s32.totalorder %s88, %s90
      %p94 = scmp.eq.s32.totalorder %s33, 0
      %p95 = por %p93, %p94
      %p96 = scmp.ne.s32.totalorder %s88, %s90
      %p97 = scmp.eq.s32.totalorder %s38, 1
      %p98 = por %p96, %p97
      %p99 = scmp.ne.s32.totalorder %s90, %s91
      %p100 = scmp.eq.s32.totalorder %s38, 0
      %p101 = por %p99, %p100
      %p102 = scmp.ne.s32.totalorder %s90, %s91
      %p103 = scmp.eq.s32.totalorder %s39, 1
      %p104 = por %p102, %p103
      %p106 = scmp.ne.s32.totalorder %s91, %s105
      %p107 = scmp.eq.s32.totalorder %s39, 0
      %p108 = por %p106, %p107
      %s110 = sadd.s32 %s109, 1
      %p113 = scmp.eq.s32.totalorder %s33, 1
      %p114 = scmp.ne.s32.totalorder %s109, %s111
      %p115 = scmp.eq.s32.totalorder %s33, 0
      %p116 = por %p114, %p115
      %p117 = scmp.ne.s32.totalorder %s109, %s111
      %p118 = scmp.eq.s32.totalorder %s38, 1
      %p119 = por %p117, %p118
      %p120 = scmp.ne.s32.totalorder %s111, %s112
      %p121 = scmp.eq.s32.totalorder %s38, 0
      %p122 = por %p120, %p121
      %p123 = scmp.ne.s32.totalorder %s111, %s112
      %p124 = scmp.eq.s32.totalorder %s39, 1
      %p125 = por %p123, %p124
      %p127 = scmp.ne.s32.totalorder %s112, %s126
      %p128 = scmp.eq.s32.totalorder %s39, 0
      %p129 = por %p127, %p128
      %s131 = sadd.s32 %s130, 1
      %p134 = scmp.eq.s32.totalorder %s33, 1
      %p135 = scmp.ne.s32.totalorder %s130, %s132
      %p136 = scmp.eq.s32.totalorder %s33, 0
      %p137 = por %p135, %p136
      %p138 = scmp.ne.s32.totalorder %s130, %s132
      %p139 = scmp.eq.s32.totalorder %s38, 1
      %p140 = por %p138, %p139
      %p141 = scmp.ne.s32.totalorder %s132, %s133
      %p142 = scmp.eq.s32.totalorder %s38, 0
      %p143 = por %p141, %p142
      %p144 = scmp.ne.s32.totalorder %s132, %s133
      %p145 = scmp.eq.s32.totalorder %s39, 1
      %p146 = por %p144, %p145
      %p148 = scmp.ne.s32.totalorder %s133, %s147
      %p149 = scmp.eq.s32.totalorder %s39, 0
      %p150 = por %p148, %p149
      %s152 = sadd.s32 %s151, 1
      %p155 = scmp.eq.s32.totalorder %s33, 1
      %p156 = scmp.ne.s32.totalorder %s151, %s153
      %p157 = scmp.eq.s32.totalorder %s33, 0
      %p158 = por %p156, %p157
      %p159 = scmp.ne.s32.totalorder %s151, %s153
      %p160 = scmp.eq.s32.totalorder %s38, 1
      %p161 = por %p159, %p160
      %p162 = scmp.ne.s32.totalorder %s153, %s154
      %p163 = scmp.eq.s32.totalorder %s38, 0
      %p164 = por %p162, %p163
      %p165 = scmp.ne.s32.totalorder %s153, %s154
      %p166 = scmp.eq.s32.totalorder %s39, 1
      %p167 = por %p165, %p166
      %p169 = scmp.ne.s32.totalorder %s154, %s168
      %p170 = scmp.eq.s32.totalorder %s39, 0
      %p171 = por %p169, %p170
      %s173 = sadd.s32 %s172, 1
      %p176 = scmp.eq.s32.totalorder %s33, 1
      %p177 = scmp.ne.s32.totalorder %s172, %s174
      %p178 = scmp.eq.s32.totalorder %s33, 0
      %p179 = por %p177, %p178
      %p180 = scmp.ne.s32.totalorder %s172, %s174
      %p181 = scmp.eq.s32.totalorder %s38, 1
      %p182 = por %p180, %p181
      %p183 = scmp.ne.s32.totalorder %s174, %s175
      %p184 = scmp.eq.s32.totalorder %s38, 0
      %p185 = por %p183, %p184
      %p186 = scmp.ne.s32.totalorder %s174, %s175
      %p187 = scmp.eq.s32.totalorder %s39, 1
      %p188 = por %p186, %p187
      %p190 = scmp.ne.s32.totalorder %s175, %s189
      %p191 = scmp.eq.s32.totalorder %s39, 0
      %p192 = por %p190, %p191
      %s194 = sadd.s32 %s193, 1
      %p197 = scmp.eq.s32.totalorder %s33, 1
      %p198 = scmp.ne.s32.totalorder %s193, %s195
      %p199 = scmp.eq.s32.totalorder %s33, 0
      %p200 = por %p198, %p199
      %p201 = scmp.ne.s32.totalorder %s193, %s195
      %p202 = scmp.eq.s32.totalorder %s38, 1
      %p203 = por %p201, %p202
      %p204 = scmp.ne.s32.totalorder %s195, %s196
      %p205 = scmp.eq.s32.totalorder %s38, 0
      %p206 = por %p204, %p205
      %p207 = scmp.ne.s32.totalorder %s195, %s196
      %p208 = scmp.eq.s32.totalorder %s39, 1
      %p209 = por %p207, %p208
      %p211 = scmp.ne.s32.totalorder %s196, %s210
      %p212 = scmp.eq.s32.totalorder %s39, 0
      %p213 = por %p211, %p212
      %s215 = sadd.s32 %s214, 1
      %p218 = scmp.eq.s32.totalorder %s33, 1
      %p219 = scmp.ne.s32.totalorder %s214, %s216
      %p220 = scmp.eq.s32.totalorder %s33, 0
      %p221 = por %p219, %p220
      %p222 = scmp.ne.s32.totalorder %s214, %s216
      %p223 = scmp.eq.s32.totalorder %s38, 1
      %p224 = por %p222, %p223
      %p225 = scmp.ne.s32.totalorder %s216, %s217
      %p226 = scmp.eq.s32.totalorder %s38, 0
      %p227 = por %p225, %p226
      %p228 = scmp.ne.s32.totalorder %s216, %s217
      %p229 = scmp.eq.s32.totalorder %s39, 1
      %p230 = por %p228, %p229
      %p232 = scmp.ne.s32.totalorder %s217, %s231
      %p233 = scmp.eq.s32.totalorder %s39, 0
      %p234 = por %p232, %p233
      %s236 = sadd.s32 %s235, 1
      %p239 = scmp.eq.s32.totalorder %s33, 1
      %p240 = scmp.ne.s32.totalorder %s235, %s237
      %p241 = scmp.eq.s32.totalorder %s33, 0
      %p242 = por %p240, %p241
      %p243 = scmp.ne.s32.totalorder %s235, %s237
      %p244 = scmp.eq.s32.totalorder %s38, 1
      %p245 = por %p243, %p244
      %p246 = scmp.ne.s32.totalorder %s237, %s238
      %p247 = scmp.eq.s32.totalorder %s38, 0
      %p248 = por %p246, %p247
      %p249 = scmp.ne.s32.totalorder %s237, %s238
      %p250 = scmp.eq.s32.totalorder %s39, 1
      %p251 = por %p249, %p250
      %p253 = scmp.ne.s32.totalorder %s238, %s252
      %p254 = scmp.eq.s32.totalorder %s39, 0
      %p255 = por %p253, %p254
      %s257 = sadd.s32 %s256, 1
      %p260 = scmp.eq.s32.totalorder %s33, 1
      %p261 = scmp.ne.s32.totalorder %s256, %s258
      %p262 = scmp.eq.s32.totalorder %s33, 0
      %p263 = por %p261, %p262
      %p264 = scmp.ne.s32.totalorder %s256, %s258
      %p265 = scmp.eq.s32.totalorder %s38, 1
      %p266 = por %p264, %p265
      %p267 = scmp.ne.s32.totalorder %s258, %s259
      %p268 = scmp.eq.s32.totalorder %s38, 0
      %p269 = por %p267, %p268
      %p270 = scmp.ne.s32.totalorder %s258, %s259
      %p271 = scmp.eq.s32.totalorder %s39, 1
      %p272 = por %p270, %p271
      %p274 = scmp.ne.s32.totalorder %s259, %s273
      %p275 = scmp.eq.s32.totalorder %s39, 0
      %p276 = por %p274, %p275
      %s278 = sadd.s32 %s277, 1
      %p281 = scmp.eq.s32.totalorder %s33, 1
      %p282 = scmp.ne.s32.totalorder %s277, %s279
      %p283 = scmp.eq.s32.totalorder %s33, 0
      %p284 = por %p282, %p283
      %p285 = scmp.ne.s32.totalorder %s277, %s279
      %p286 = scmp.eq.s32.totalorder %s38, 1
      %p287 = por %p285, %p286
      %p288 = scmp.ne.s32.totalorder %s279, %s280
      %p289 = scmp.eq.s32.totalorder %s38, 0
      %p290 = por %p288, %p289
      %p291 = scmp.ne.s32.totalorder %s279, %s280
      %p292 = scmp.eq.s32.totalorder %s39, 1
      %p293 = por %p291, %p292
      %p295 = scmp.ne.s32.totalorder %s280, %s294
      %p296 = scmp.eq.s32.totalorder %s39, 0
      %p297 = por %p295, %p296
      %s299 = sadd.s32 %s298, 1
      %p302 = scmp.eq.s32.totalorder %s33, 1
      %p303 = scmp.ne.s32.totalorder %s298, %s300
      %p304 = scmp.eq.s32.totalorder %s33, 0
      %p305 = por %p303, %p304
      %p306 = scmp.ne.s32.totalorder %s298, %s300
      %p307 = scmp.eq.s32.totalorder %s38, 1
      %p308 = por %p306, %p307
      %p309 = scmp.ne.s32.totalorder %s300, %s301
      %p310 = scmp.eq.s32.totalorder %s38, 0
      %p311 = por %p309, %p310
      %p312 = scmp.ne.s32.totalorder %s300, %s301
      %p313 = scmp.eq.s32.totalorder %s39, 1
      %p314 = por %p312, %p313
      %p316 = scmp.ne.s32.totalorder %s301, %s315
      %p317 = scmp.eq.s32.totalorder %s39, 0
      %p318 = por %p316, %p317
      %s320 = sadd.s32 %s319, 1
      %p323 = scmp.eq.s32.totalorder %s33, 1
      %p324 = scmp.ne.s32.totalorder %s319, %s321
      %p325 = scmp.eq.s32.totalorder %s33, 0
      %p326 = por %p324, %p325
      %p327 = scmp.ne.s32.totalorder %s319, %s321
      %p328 = scmp.eq.s32.totalorder %s38, 1
      %p329 = por %p327, %p328
      %p330 = scmp.ne.s32.totalorder %s321, %s322
      %p331 = scmp.eq.s32.totalorder %s38, 0
      %p332 = por %p330, %p331
      %p333 = scmp.ne.s32.totalorder %s321, %s322
      %p334 = scmp.eq.s32.totalorder %s39, 1
      %p335 = por %p333, %p334
      %p337 = scmp.ne.s32.totalorder %s322, %s336
      %p338 = scmp.eq.s32.totalorder %s39, 0
      %p339 = por %p337, %p338
      %s341 = sadd.s32 %s340, 1
      %p344 = scmp.eq.s32.totalorder %s33, 1
      %p345 = scmp.ne.s32.totalorder %s340, %s342
      %p346 = scmp.eq.s32.totalorder %s33, 0
      %p347 = por %p345, %p346
      %p348 = scmp.ne.s32.totalorder %s340, %s342
      %p349 = scmp.eq.s32.totalorder %s38, 1
      %p350 = por %p348, %p349
      %p351 = scmp.ne.s32.totalorder %s342, %s343
      %p352 = scmp.eq.s32.totalorder %s38, 0
      %p353 = por %p351, %p352
      %p354 = scmp.ne.s32.totalorder %s342, %s343
      %p355 = scmp.eq.s32.totalorder %s39, 1
      %p356 = por %p354, %p355
      %p358 = scmp.ne.s32.totalorder %s343, %s357
      %p359 = scmp.eq.s32.totalorder %s39, 0
      %p360 = por %p358, %p359
      %s362 = sadd.s32 %s361, 1
      %p365 = scmp.eq.s32.totalorder %s33, 1
      %p366 = scmp.ne.s32.totalorder %s361, %s363
      %p367 = scmp.eq.s32.totalorder %s33, 0
      %p368 = por %p366, %p367
      %p369 = scmp.ne.s32.totalorder %s361, %s363
      %p370 = scmp.eq.s32.totalorder %s38, 1
      %p371 = por %p369, %p370
      %p372 = scmp.ne.s32.totalorder %s363, %s364
      %p373 = scmp.eq.s32.totalorder %s38, 0
      %p374 = por %p372, %p373
      %p375 = scmp.ne.s32.totalorder %s363, %s364
      %p376 = scmp.eq.s32.totalorder %s39, 1
      %p377 = por %p375, %p376
      %p379 = scmp.ne.s32.totalorder %s364, %s378
      %p380 = scmp.eq.s32.totalorder %s39, 0
      %p381 = por %p379, %p380
      %s383 = sadd.s32 %s382, 1
      %p386 = scmp.eq.s32.totalorder %s33, 1
      %p387 = scmp.ne.s32.totalorder %s382, %s384
      %p388 = scmp.eq.s32.totalorder %s33, 0
      %p389 = por %p387, %p388
      %p390 = scmp.ne.s32.totalorder %s382, %s384
      %p391 = scmp.eq.s32.totalorder %s38, 1
      %p392 = por %p390, %p391
      %p393 = scmp.ne.s32.totalorder %s384, %s385
      %p394 = scmp.eq.s32.totalorder %s38, 0
      %p395 = por %p393, %p394
      %p396 = scmp.ne.s32.totalorder %s384, %s385
      %p397 = scmp.eq.s32.totalorder %s39, 1
      %p398 = por %p396, %p397
      %p400 = scmp.ne.s32.totalorder %s385, %s399
      %p401 = scmp.eq.s32.totalorder %s39, 0
      %p402 = por %p400, %p401
      %s404 = sadd.s32 %s403, 1
      %p407 = scmp.eq.s32.totalorder %s33, 1
      %p408 = scmp.ne.s32.totalorder %s403, %s405
      %p409 = scmp.eq.s32.totalorder %s33, 0
      %p410 = por %p408, %p409
      %p411 = scmp.ne.s32.totalorder %s403, %s405
      %p412 = scmp.eq.s32.totalorder %s38, 1
      %p413 = por %p411, %p412
      %p414 = scmp.ne.s32.totalorder %s405, %s406
      %p415 = scmp.eq.s32.totalorder %s38, 0
      %p416 = por %p414, %p415
      %p417 = scmp.ne.s32.totalorder %s405, %s406
      %p418 = scmp.eq.s32.totalorder %s39, 1
      %p419 = por %p417, %p418
      %p421 = scmp.ne.s32.totalorder %s406, %s420
      %p422 = scmp.eq.s32.totalorder %s39, 0
      %p423 = por %p421, %p422
      %s425 = sadd.s32 %s424, 1
      %p428 = scmp.eq.s32.totalorder %s33, 1
      %p429 = scmp.ne.s32.totalorder %s424, %s426
      %p430 = scmp.eq.s32.totalorder %s33, 0
      %p431 = por %p429, %p430
      %p432 = scmp.ne.s32.totalorder %s424, %s426
      %p433 = scmp.eq.s32.totalorder %s38, 1
      %p434 = por %p432, %p433
      %p435 = scmp.ne.s32.totalorder %s426, %s427
      %p436 = scmp.eq.s32.totalorder %s38, 0
      %p437 = por %p435, %p436
      %p438 = scmp.ne.s32.totalorder %s426, %s427
      %p439 = scmp.eq.s32.totalorder %s39, 1
      %p440 = por %p438, %p439
      %p442 = scmp.ne.s32.totalorder %s427, %s441
      %p443 = scmp.eq.s32.totalorder %s39, 0
      %p444 = por %p442, %p443
      %s446 = sadd.s32 %s445, 1
      %p449 = scmp.eq.s32.totalorder %s33, 1
      %p450 = scmp.ne.s32.totalorder %s445, %s447
      %p451 = scmp.eq.s32.totalorder %s33, 0
      %p452 = por %p450, %p451
      %p453 = scmp.ne.s32.totalorder %s445, %s447
      %p454 = scmp.eq.s32.totalorder %s38, 1
      %p455 = por %p453, %p454
      %p456 = scmp.ne.s32.totalorder %s447, %s448
      %p457 = scmp.eq.s32.totalorder %s38, 0
      %p458 = por %p456, %p457
      %p459 = scmp.ne.s32.totalorder %s447, %s448
      %p460 = scmp.eq.s32.totalorder %s39, 1
      %p461 = por %p459, %p460
      %p463 = scmp.ne.s32.totalorder %s448, %s462
      %p464 = scmp.eq.s32.totalorder %s39, 0
      %p465 = por %p463, %p464
      %s467 = sadd.s32 %s466, 1
      %p470 = scmp.eq.s32.totalorder %s33, 1
      %p471 = scmp.ne.s32.totalorder %s466, %s468
      %p472 = scmp.eq.s32.totalorder %s33, 0
      %p473 = por %p471, %p472
      %p474 = scmp.ne.s32.totalorder %s466, %s468
      %p475 = scmp.eq.s32.totalorder %s38, 1
      %p476 = por %p474, %p475
      %p477 = scmp.ne.s32.totalorder %s468, %s469
      %p478 = scmp.eq.s32.totalorder %s38, 0
      %p479 = por %p477, %p478
      %p480 = scmp.ne.s32.totalorder %s468, %s469
      %p481 = scmp.eq.s32.totalorder %s39, 1
      %p482 = por %p480, %p481
      %p484 = scmp.ne.s32.totalorder %s469, %s483
      %p485 = scmp.eq.s32.totalorder %s39, 0
      %p486 = por %p484, %p485
      %s488 = sadd.s32 %s487, 1
      %p491 = scmp.eq.s32.totalorder %s33, 1
      %p492 = scmp.ne.s32.totalorder %s487, %s489
      %p493 = scmp.eq.s32.totalorder %s33, 0
      %p494 = por %p492, %p493
      %p495 = scmp.ne.s32.totalorder %s487, %s489
      %p496 = scmp.eq.s32.totalorder %s38, 1
      %p497 = por %p495, %p496
      %p498 = scmp.ne.s32.totalorder %s489, %s490
      %p499 = scmp.eq.s32.totalorder %s38, 0
      %p500 = por %p498, %p499
      %p501 = scmp.ne.s32.totalorder %s489, %s490
      %p502 = scmp.eq.s32.totalorder %s39, 1
      %p503 = por %p501, %p502
      %p505 = scmp.ne.s32.totalorder %s490, %s504
      %p506 = scmp.eq.s32.totalorder %s39, 0
      %p507 = por %p505, %p506
      %s508 = ssub.s32 %s33, %s40
      %p509 = scmp.eq.s32.totalorder %s508, 0
      %s511 = sadd.s32 %s510, 1
      %s512 = scalar_select %p509, %s510, %s511
      %p515 = pneg %p509
      %p516 = scmp.eq.s32.totalorder %s33, 1
      %p517 = por %p515, %p516
      %p518 = scmp.ne.s32.totalorder %s510, %s513
      %p519 = scmp.eq.s32.totalorder %s33, 0
      %p520 = por %p518, %p519
      %p521 = scmp.ne.s32.totalorder %s510, %s513
      %p522 = scmp.eq.s32.totalorder %s38, 1
      %p523 = por %p521, %p522
      %p524 = scmp.ne.s32.totalorder %s513, %s514
      %p525 = scmp.eq.s32.totalorder %s38, 0
      %p526 = por %p524, %p525
      %p527 = scmp.ne.s32.totalorder %s513, %s514
      %p528 = scmp.eq.s32.totalorder %s39, 1
      %p529 = por %p527, %p528
      %p531 = scmp.ne.s32.totalorder %s514, %s530
      %p532 = scmp.eq.s32.totalorder %s39, 0
      %p533 = por %p531, %p532
      %p534 = scmp.le.s32.totalorder 1, %s33
      %p535 = scmp.lt.s32.totalorder %s33, 3
      %p536 = pnand %p534, %p535
      %p537 = pneg %p536
      // Predicated region
      $region9: #{tpu_custom_call.1} parent=5 // pred_check
        _
      $region10: #{tpu_custom_call.1} parent=5 // pred_check_branch
        %539 = sbr.rel (%p536) target = $region12
      $region11: #{tpu_custom_call.1} parent=5 // pred_region
        %s540 = ssub.s32 %s33, 1
        // Predicated region
        $region13: #{tpu_custom_call.1} parent=11 // pred_check
          %p541 = pneg %p80
        $region14: #{tpu_custom_call.1} parent=11 // pred_check_branch
          %543 = sbr.rel (%p541) target = $region16
        $region15: #{tpu_custom_call.1} parent=11 // pred_region
          _
        $region16: #{tpu_custom_call.1} parent=11 // pred_fallthru
          _
        // Predicated region
        $region17: #{tpu_custom_call.1} parent=11 // pred_check
          %p544 = pneg %p101
        $region18: #{tpu_custom_call.1} parent=11 // pred_check_branch
          %546 = sbr.rel (%p544) target = $region20
        $region19: #{tpu_custom_call.1} parent=11 // pred_region
          _
        $region20: #{tpu_custom_call.1} parent=11 // pred_fallthru
          _
        // Predicated region
        $region21: #{tpu_custom_call.1} parent=11 // pred_check
          %p547 = pneg %p122
        $region22: #{tpu_custom_call.1} parent=11 // pred_check_branch
          %549 = sbr.rel (%p547) target = $region24
        $region23: #{tpu_custom_call.1} parent=11 // pred_region
          _
        $region24: #{tpu_custom_call.1} parent=11 // pred_fallthru
          _
        // Predicated region
        $region25: #{tpu_custom_call.1} parent=11 // pred_check
          %p550 = pneg %p143
        $region26: #{tpu_custom_call.1} parent=11 // pred_check_branch
          %552 = sbr.rel (%p550) target = $region28
        $region27: #{tpu_custom_call.1} parent=11 // pred_region
          _
        $region28: #{tpu_custom_call.1} parent=11 // pred_fallthru
          _
        // Predicated region
        $region29: #{tpu_custom_call.1} parent=11 // pred_check
          %p553 = pneg %p164
        $region30: #{tpu_custom_call.1} parent=11 // pred_check_branch
          %555 = sbr.rel (%p553) target = $region32
        $region31: #{tpu_custom_call.1} parent=11 // pred_region
          _
        $region32: #{tpu_custom_call.1} parent=11 // pred_fallthru
          _
        // Predicated region
        $region33: #{tpu_custom_call.1} parent=11 // pred_check
          %p556 = pneg %p185
        $region34: #{tpu_custom_call.1} parent=11 // pred_check_branch
          %558 = sbr.rel (%p556) target = $region36
        $region35: #{tpu_custom_call.1} parent=11 // pred_region
          _
        $region36: #{tpu_custom_call.1} parent=11 // pred_fallthru
          _
        // Predicated region
        $region37: #{tpu_custom_call.1} parent=11 // pred_check
          %p559 = pneg %p206
        $region38: #{tpu_custom_call.1} parent=11 // pred_check_branch
          %561 = sbr.rel (%p559) target = $region40
        $region39: #{tpu_custom_call.1} parent=11 // pred_region
          _
        $region40: #{tpu_custom_call.1} parent=11 // pred_fallthru
          _
        // Predicated region
        $region41: #{tpu_custom_call.1} parent=11 // pred_check
          %p562 = pneg %p227
        $region42: #{tpu_custom_call.1} parent=11 // pred_check_branch
          %564 = sbr.rel (%p562) target = $region44
        $region43: #{tpu_custom_call.1} parent=11 // pred_region
          _
        $region44: #{tpu_custom_call.1} parent=11 // pred_fallthru
          _
        // Predicated region
        $region45: #{tpu_custom_call.1} parent=11 // pred_check
          %p565 = pneg %p248
        $region46: #{tpu_custom_call.1} parent=11 // pred_check_branch
          %567 = sbr.rel (%p565) target = $region48
        $region47: #{tpu_custom_call.1} parent=11 // pred_region
          _
        $region48: #{tpu_custom_call.1} parent=11 // pred_fallthru
          _
        // Predicated region
        $region49: #{tpu_custom_call.1} parent=11 // pred_check
          %p568 = pneg %p269
        $region50: #{tpu_custom_call.1} parent=11 // pred_check_branch
          %570 = sbr.rel (%p568) target = $region52
        $region51: #{tpu_custom_call.1} parent=11 // pred_region
          _
        $region52: #{tpu_custom_call.1} parent=11 // pred_fallthru
          _
        // Predicated region
        $region53: #{tpu_custom_call.1} parent=11 // pred_check
          %p571 = pneg %p290
        $region54: #{tpu_custom_call.1} parent=11 // pred_check_branch
          %573 = sbr.rel (%p571) target = $region56
        $region55: #{tpu_custom_call.1} parent=11 // pred_region
          _
        $region56: #{tpu_custom_call.1} parent=11 // pred_fallthru
          _
        // Predicated region
        $region57: #{tpu_custom_call.1} parent=11 // pred_check
          %p574 = pneg %p311
        $region58: #{tpu_custom_call.1} parent=11 // pred_check_branch
          %576 = sbr.rel (%p574) target = $region60
        $region59: #{tpu_custom_call.1} parent=11 // pred_region
          _
        $region60: #{tpu_custom_call.1} parent=11 // pred_fallthru
          _
        // Predicated region
        $region61: #{tpu_custom_call.1} parent=11 // pred_check
          %p577 = pneg %p332
        $region62: #{tpu_custom_call.1} parent=11 // pred_check_branch
          %579 = sbr.rel (%p577) target = $region64
        $region63: #{tpu_custom_call.1} parent=11 // pred_region
          _
        $region64: #{tpu_custom_call.1} parent=11 // pred_fallthru
          _
        // Predicated region
        $region65: #{tpu_custom_call.1} parent=11 // pred_check
          %p580 = pneg %p353
        $region66: #{tpu_custom_call.1} parent=11 // pred_check_branch
          %582 = sbr.rel (%p580) target = $region68
        $region67: #{tpu_custom_call.1} parent=11 // pred_region
          _
        $region68: #{tpu_custom_call.1} parent=11 // pred_fallthru
          _
        // Predicated region
        $region69: #{tpu_custom_call.1} parent=11 // pred_check
          %p583 = pneg %p374
        $region70: #{tpu_custom_call.1} parent=11 // pred_check_branch
          %585 = sbr.rel (%p583) target = $region72
        $region71: #{tpu_custom_call.1} parent=11 // pred_region
          _
        $region72: #{tpu_custom_call.1} parent=11 // pred_fallthru
          _
        // Predicated region
        $region73: #{tpu_custom_call.1} parent=11 // pred_check
          %p586 = pneg %p395
        $region74: #{tpu_custom_call.1} parent=11 // pred_check_branch
          %588 = sbr.rel (%p586) target = $region76
        $region75: #{tpu_custom_call.1} parent=11 // pred_region
          _
        $region76: #{tpu_custom_call.1} parent=11 // pred_fallthru
          _
        // Predicated region
        $region77: #{tpu_custom_call.1} parent=11 // pred_check
          %p589 = pneg %p416
        $region78: #{tpu_custom_call.1} parent=11 // pred_check_branch
          %591 = sbr.rel (%p589) target = $region80
        $region79: #{tpu_custom_call.1} parent=11 // pred_region
          _
        $region80: #{tpu_custom_call.1} parent=11 // pred_fallthru
          _
        // Predicated region
        $region81: #{tpu_custom_call.1} parent=11 // pred_check
          %p592 = pneg %p437
        $region82: #{tpu_custom_call.1} parent=11 // pred_check_branch
          %594 = sbr.rel (%p592) target = $region84
        $region83: #{tpu_custom_call.1} parent=11 // pred_region
          _
        $region84: #{tpu_custom_call.1} parent=11 // pred_fallthru
          _
        // Predicated region
        $region85: #{tpu_custom_call.1} parent=11 // pred_check
          %p595 = pneg %p458
        $region86: #{tpu_custom_call.1} parent=11 // pred_check_branch
          %597 = sbr.rel (%p595) target = $region88
        $region87: #{tpu_custom_call.1} parent=11 // pred_region
          _
        $region88: #{tpu_custom_call.1} parent=11 // pred_fallthru
          _
        // Predicated region
        $region89: #{tpu_custom_call.1} parent=11 // pred_check
          %p598 = pneg %p479
        $region90: #{tpu_custom_call.1} parent=11 // pred_check_branch
          %600 = sbr.rel (%p598) target = $region92
        $region91: #{tpu_custom_call.1} parent=11 // pred_region
          _
        $region92: #{tpu_custom_call.1} parent=11 // pred_fallthru
          _
        // Predicated region
        $region93: #{tpu_custom_call.1} parent=11 // pred_check
          %p601 = pneg %p500
        $region94: #{tpu_custom_call.1} parent=11 // pred_check_branch
          %603 = sbr.rel (%p601) target = $region96
        $region95: #{tpu_custom_call.1} parent=11 // pred_region
          _
        $region96: #{tpu_custom_call.1} parent=11 // pred_fallthru
          _
      $region12: #{tpu_custom_call.1} parent=5 // pred_fallthru
        _
      %p604 = scmp.lt.s32.totalorder %s33, 2
      // Predicated region
      $region97: #{tpu_custom_call.1} parent=5 // pred_check
        %p605 = pneg %p604
      $region98: #{tpu_custom_call.1} parent=5 // pred_check_branch
        %607 = sbr.rel (%p605) target = $region100
      $region99: #{tpu_custom_call.1} parent=5 // pred_region
        // Predicated region
        $region101: #{tpu_custom_call.1} parent=99 // pred_check
          %p608 = pneg %p53
        $region102: #{tpu_custom_call.1} parent=99 // pred_check_branch
          %610 = sbr.rel (%p608) target = $region104
        $region103: #{tpu_custom_call.1} parent=99 // pred_region
          %p611 = scmp.lt.s32.totalorder %s33, 1
          %s612 = scalar_select %p611, %s33, 1
          %s613 = smul.addr %s612, 32
          %s614 = smul.addr %s613, 8
          %s615 = scalar_lea.vmem %s0, %s614
        $region104: #{tpu_custom_call.1} parent=99 // pred_fallthru
          _
      $region100: #{tpu_custom_call.1} parent=5 // pred_fallthru
        _
      %p616 = scmp.le.s32.totalorder 1, %s33
      %p617 = scmp.lt.s32.totalorder %s33, 3
      %p618 = pnand %p616, %p617
      %p619 = pneg %p618
      // Predicated region
      $region105: #{tpu_custom_call.1} parent=5 // pred_check
        _
      $region106: #{tpu_custom_call.1} parent=5 // pred_check_branch
        %621 = sbr.rel (%p618) target = $region108
      $region107: #{tpu_custom_call.1} parent=5 // pred_region
        %s622 = ssub.s32 %s33, 1
        %p623 = scmp.lt.s32.totalorder %s38, 1
        %s624 = scalar_select %p623, %s38, 1
        %s625 = smul.addr %s624, 32
        %s626 = smul.addr %s625, 8
        %s627 = scalar_lea.vmem %s0, %s626
        %p628 = pneg %p59
        %p629 = pneg %p56
        %p630 = pneg %p80
        %p631 = pneg %p77
        %p632 = pneg %p101
        %p633 = pneg %p98
        %p634 = pneg %p122
        %p635 = pneg %p119
        %p636 = pneg %p143
        %p637 = pneg %p140
        %p638 = pneg %p164
        %p639 = pneg %p161
        %p640 = pneg %p185
        %p641 = pneg %p182
        %p642 = pneg %p206
        %p643 = pneg %p203
        %p644 = pneg %p227
        %p645 = pneg %p224
        %p646 = pneg %p248
        %p647 = pneg %p245
        %p648 = pneg %p269
        %p649 = pneg %p266
        %p650 = pneg %p290
        %p651 = pneg %p287
        %p652 = pneg %p311
        %p653 = pneg %p308
        %p654 = pneg %p332
        %p655 = pneg %p329
        %p656 = pneg %p353
        %p657 = pneg %p350
        %p658 = pneg %p374
        %p659 = pneg %p371
        %p660 = pneg %p395
        %p661 = pneg %p392
        %p662 = pneg %p416
        %p663 = pneg %p413
        %p664 = pneg %p437
        %p665 = pneg %p434
        %p666 = pneg %p458
        %p667 = pneg %p455
        %p668 = pneg %p479
        %p669 = pneg %p476
        %p670 = pneg %p500
        %p671 = pneg %p497
        %p672 = pneg %p526
        %p673 = pneg %p523
        %s674 = sand.u32 %s513, 1
        %s675 = scalar_lea.sflag [#allocation5], %s674
        %s676 = sand.u32 %s513, 1
        %s677 = smul.addr %s676, 2
        %s678 = scalar_lea.vmem [#allocation4], %s677
        %p679 = scmp.lt.s32.totalorder %s38, 1
        %s680 = scalar_select %p679, %s38, 1
        %s681 = smul.addr %s680, 32
        %s682 = smul.addr %s681, 8
        %s683 = scalar_lea.vmem %s0, %s682
        %v685 = vlaneseq
        %v686 = vshrl.u32 %v685, 7
        %v687 = vadd.s32 %v686, 8
        %v688 = vadd.s32 %v686, 16
        %v689 = vadd.s32 %v686, 24
        %v690 = vadd.s32 %v686, 32
        %v691 = vadd.s32 %v686, 40
        %v692 = vadd.s32 %v686, 48
        %v693 = vadd.s32 %v686, 56
        %v694 = vadd.s32 %v686, 64
        %v695 = vadd.s32 %v686, 72
        %v696 = vadd.s32 %v686, 80
        %v697 = vadd.s32 %v686, 88
        %v698 = vadd.s32 %v686, 96
        %v699 = vadd.s32 %v686, 104
        %v700 = vadd.s32 %v686, 112
        %v701 = vadd.s32 %v686, 120
        %v702 = vadd.s32 %v686, 128
        %v703 = vadd.s32 %v686, 136
        %v704 = vadd.s32 %v686, 144
        %v705 = vadd.s32 %v686, 152
        %v706 = vadd.s32 %v686, 160
        %v707 = vadd.s32 %v686, 168
        %v708 = vadd.s32 %v686, 176
        %v709 = vadd.s32 %v686, 184
        %v710 = vadd.s32 %v686, 192
        %v711 = vadd.s32 %v686, 200
        %v712 = vadd.s32 %v686, 208
        %v713 = vadd.s32 %v686, 216
        %v714 = vadd.s32 %v686, 224
        %v715 = vadd.s32 %v686, 232
        %v716 = vadd.s32 %v686, 240
        %v717 = vadd.s32 %v686, 248
        %v718 = vand.u32 %v686, 15
        %v719 = vand.u32 %v687, 15
        %v720 = vand.u32 %v688, 15
        %v721 = vand.u32 %v689, 15
        %v722 = vand.u32 %v690, 15
        %v723 = vand.u32 %v691, 15
        %v724 = vand.u32 %v692, 15
        %v725 = vand.u32 %v693, 15
        %v726 = vand.u32 %v694, 15
        %v727 = vand.u32 %v695, 15
        %v728 = vand.u32 %v696, 15
        %v729 = vand.u32 %v697, 15
        %v730 = vand.u32 %v698, 15
        %v731 = vand.u32 %v699, 15
        %v732 = vand.u32 %v700, 15
        %v733 = vand.u32 %v701, 15
        %v734 = vand.u32 %v702, 15
        %v735 = vand.u32 %v703, 15
        %v736 = vand.u32 %v704, 15
        %v737 = vand.u32 %v705, 15
        %v738 = vand.u32 %v706, 15
        %v739 = vand.u32 %v707, 15
        %v740 = vand.u32 %v708, 15
        %v741 = vand.u32 %v709, 15
        %v742 = vand.u32 %v710, 15
        %v743 = vand.u32 %v711, 15
        %v744 = vand.u32 %v712, 15
        %v745 = vand.u32 %v713, 15
        %v746 = vand.u32 %v714, 15
        %v747 = vand.u32 %v715, 15
        %v748 = vand.u32 %v716, 15
        %v749 = vand.u32 %v717, 15
        %vm750 = vcmp.ge.s32.totalorder %v718, 1
        %vm751 = vcmp.ge.s32.totalorder %v719, 1
        %vm752 = vcmp.ge.s32.totalorder %v720, 1
        %vm753 = vcmp.ge.s32.totalorder %v721, 1
        %vm754 = vcmp.ge.s32.totalorder %v722, 1
        %vm755 = vcmp.ge.s32.totalorder %v723, 1
        %vm756 = vcmp.ge.s32.totalorder %v724, 1
        %vm757 = vcmp.ge.s32.totalorder %v725, 1
        %vm758 = vcmp.ge.s32.totalorder %v726, 1
        %vm759 = vcmp.ge.s32.totalorder %v727, 1
        %vm760 = vcmp.ge.s32.totalorder %v728, 1
        %vm761 = vcmp.ge.s32.totalorder %v729, 1
        %vm762 = vcmp.ge.s32.totalorder %v730, 1
        %vm763 = vcmp.ge.s32.totalorder %v731, 1
        %vm764 = vcmp.ge.s32.totalorder %v732, 1
        %vm765 = vcmp.ge.s32.totalorder %v733, 1
        %vm766 = vcmp.ge.s32.totalorder %v734, 1
        %vm767 = vcmp.ge.s32.totalorder %v735, 1
        %vm768 = vcmp.ge.s32.totalorder %v736, 1
        %vm769 = vcmp.ge.s32.totalorder %v737, 1
        %vm770 = vcmp.ge.s32.totalorder %v738, 1
        %vm771 = vcmp.ge.s32.totalorder %v739, 1
        %vm772 = vcmp.ge.s32.totalorder %v740, 1
        %vm773 = vcmp.ge.s32.totalorder %v741, 1
        %vm774 = vcmp.ge.s32.totalorder %v742, 1
        %vm775 = vcmp.ge.s32.totalorder %v743, 1
        %vm776 = vcmp.ge.s32.totalorder %v744, 1
        %vm777 = vcmp.ge.s32.totalorder %v745, 1
        %vm778 = vcmp.ge.s32.totalorder %v746, 1
        %vm779 = vcmp.ge.s32.totalorder %v747, 1
        %vm780 = vcmp.ge.s32.totalorder %v748, 1
        %vm781 = vcmp.ge.s32.totalorder %v749, 1
        %vm782 = vcmp.le.s32.totalorder %v718, 14
        %vm783 = vcmp.le.s32.totalorder %v719, 14
        %vm784 = vcmp.le.s32.totalorder %v720, 14
        %vm785 = vcmp.le.s32.totalorder %v721, 14
        %vm786 = vcmp.le.s32.totalorder %v722, 14
        %vm787 = vcmp.le.s32.totalorder %v723, 14
        %vm788 = vcmp.le.s32.totalorder %v724, 14
        %vm789 = vcmp.le.s32.totalorder %v725, 14
        %vm790 = vcmp.le.s32.totalorder %v726, 14
        %vm791 = vcmp.le.s32.totalorder %v727, 14
        %vm792 = vcmp.le.s32.totalorder %v728, 14
        %vm793 = vcmp.le.s32.totalorder %v729, 14
        %vm794 = vcmp.le.s32.totalorder %v730, 14
        %vm795 = vcmp.le.s32.totalorder %v731, 14
        %vm796 = vcmp.le.s32.totalorder %v732, 14
        %vm797 = vcmp.le.s32.totalorder %v733, 14
        %vm798 = vcmp.le.s32.totalorder %v734, 14
        %vm799 = vcmp.le.s32.totalorder %v735, 14
        %vm800 = vcmp.le.s32.totalorder %v736, 14
        %vm801 = vcmp.le.s32.totalorder %v737, 14
        %vm802 = vcmp.le.s32.totalorder %v738, 14
        %vm803 = vcmp.le.s32.totalorder %v739, 14
        %vm804 = vcmp.le.s32.totalorder %v740, 14
        %vm805 = vcmp.le.s32.totalorder %v741, 14
        %vm806 = vcmp.le.s32.totalorder %v742, 14
        %vm807 = vcmp.le.s32.totalorder %v743, 14
        %vm808 = vcmp.le.s32.totalorder %v744, 14
        %vm809 = vcmp.le.s32.totalorder %v745, 14
        %vm810 = vcmp.le.s32.totalorder %v746, 14
        %vm811 = vcmp.le.s32.totalorder %v747, 14
        %vm812 = vcmp.le.s32.totalorder %v748, 14
        %vm813 = vcmp.le.s32.totalorder %v749, 14
        %v814 = vand.u32 %v686, 7
        %v815 = vand.u32 %v687, 7
        %v816 = vand.u32 %v688, 7
        %v817 = vand.u32 %v689, 7
        %v818 = vand.u32 %v690, 7
        %v819 = vand.u32 %v691, 7
        %v820 = vand.u32 %v692, 7
        %v821 = vand.u32 %v693, 7
        %vm822 = vcmp.ge.s32.totalorder %v814, 1
        %vm823 = vcmp.ge.s32.totalorder %v815, 1
        %vm824 = vcmp.ge.s32.totalorder %v816, 1
        %vm825 = vcmp.ge.s32.totalorder %v817, 1
        %vm826 = vcmp.ge.s32.totalorder %v818, 1
        %vm827 = vcmp.ge.s32.totalorder %v819, 1
        %vm828 = vcmp.ge.s32.totalorder %v820, 1
        %vm829 = vcmp.ge.s32.totalorder %v821, 1
        %vm830 = vcmp.le.s32.totalorder %v814, 6
        %vm831 = vcmp.le.s32.totalorder %v815, 6
        %vm832 = vcmp.le.s32.totalorder %v816, 6
        %vm833 = vcmp.le.s32.totalorder %v817, 6
        %vm834 = vcmp.le.s32.totalorder %v818, 6
        %vm835 = vcmp.le.s32.totalorder %v819, 6
        %vm836 = vcmp.le.s32.totalorder %v820, 6
        %vm837 = vcmp.le.s32.totalorder %v821, 6
        %v838 = vld [vmem:[%s683] sm:$0xff]
        %v839 = vld [vmem:[%s683 + $0x8] sm:$0xff]
        %v840 = vld [vmem:[%s683 + $0x10] sm:$0xff]
        %v841 = vld [vmem:[%s683 + $0x18] sm:$0xff]
        %v842 = vld [vmem:[%s683 + $0x20] sm:$0xff]
        %v843 = vld [vmem:[%s683 + $0x28] sm:$0xff]
        %v844 = vld [vmem:[%s683 + $0x30] sm:$0xff]
        %v845 = vld [vmem:[%s683 + $0x38] sm:$0xff]
        %v846 = vld [vmem:[%s683 + $0x40] sm:$0xff]
        %v847 = vld [vmem:[%s683 + $0x48] sm:$0xff]
        %v848 = vld [vmem:[%s683 + $0x50] sm:$0xff]
        %v849 = vld [vmem:[%s683 + $0x58] sm:$0xff]
        %v850 = vld [vmem:[%s683 + $0x60] sm:$0xff]
        %v851 = vld [vmem:[%s683 + $0x68] sm:$0xff]
        %v852 = vld [vmem:[%s683 + $0x70] sm:$0xff]
        %v853 = vld [vmem:[%s683 + $0x78] sm:$0xff]
        %v854 = vld [vmem:[%s683 + $0x80] sm:$0xff]
        %v855 = vld [vmem:[%s683 + $0x88] sm:$0xff]
        %v856 = vld [vmem:[%s683 + $0x90] sm:$0xff]
        %v857 = vld [vmem:[%s683 + $0x98] sm:$0xff]
        %v858 = vld [vmem:[%s683 + $0xa0] sm:$0xff]
        %v859 = vld [vmem:[%s683 + $0xa8] sm:$0xff]
        %v860 = vld [vmem:[%s683 + $0xb0] sm:$0xff]
        %v861 = vld [vmem:[%s683 + $0xb8] sm:$0xff]
        %v862 = vld [vmem:[%s683 + $0xc0] sm:$0xff]
        %v863 = vld [vmem:[%s683 + $0xc8] sm:$0xff]
        %v864 = vld [vmem:[%s683 + $0xd0] sm:$0xff]
        %v865 = vld [vmem:[%s683 + $0xd8] sm:$0xff]
        %v866 = vld [vmem:[%s683 + $0xe0] sm:$0xff]
        %v867 = vld [vmem:[%s683 + $0xe8] sm:$0xff]
        %v868 = vld [vmem:[%s683 + $0xf0] sm:$0xff]
        %v869 = vld [vmem:[%s683 + $0xf8] sm:$0xff]
        %v870 = vld [vmem:[%s2] sm:$0x1]
        %v871 = vld [vmem:[%s3] sm:$0x1]
        %vm872 = vcmask 7168
        %873 = vst.msk [vmem:[#allocation2 + $0x18] sm:$0xff] %vm872, 0.0
        %874 = vst.msk [vmem:[#allocation2 + $0x20] sm:$0xff] %vm872, 0.0
        %vm875 = vcmask 23568
        %876 = vst.msk [vmem:[#allocation2 + $0x108] sm:$0xff] %vm875, 0.0
        %877 = vst.msk [vmem:[#allocation2 + $0x110] sm:$0xff] %vm875, 0.0
        %878 = vst.msk [vmem:[#allocation2 + $0x28] sm:$0xff] %vm872, %v838
        %879 = vst.msk [vmem:[#allocation2 + $0x30] sm:$0xff] %vm872, %v839
        %880 = vst.msk [vmem:[#allocation2 + $0x38] sm:$0xff] %vm872, %v840
        %881 = vst.msk [vmem:[#allocation2 + $0x40] sm:$0xff] %vm872, %v841
        %882 = vst.msk [vmem:[#allocation2 + $0x48] sm:$0xff] %vm872, %v842
        %883 = vst.msk [vmem:[#allocation2 + $0x50] sm:$0xff] %vm872, %v843
        %884 = vst.msk [vmem:[#allocation2 + $0x58] sm:$0xff] %vm872, %v844
        %885 = vst.msk [vmem:[#allocation2 + $0x60] sm:$0xff] %vm872, %v845
        %886 = vst.msk [vmem:[#allocation2 + $0x68] sm:$0xff] %vm872, %v846
        %887 = vst.msk [vmem:[#allocation2 + $0x70] sm:$0xff] %vm872, %v847
        %888 = vst.msk [vmem:[#allocation2 + $0x78] sm:$0xff] %vm872, %v848
        %889 = vst.msk [vmem:[#allocation2 + $0x80] sm:$0xff] %vm872, %v849
        %890 = vst.msk [vmem:[#allocation2 + $0x88] sm:$0xff] %vm872, %v850
        %891 = vst.msk [vmem:[#allocation2 + $0x90] sm:$0xff] %vm872, %v851
        %892 = vst.msk [vmem:[#allocation2 + $0x98] sm:$0xff] %vm872, %v852
        %893 = vst.msk [vmem:[#allocation2 + $0xa0] sm:$0xff] %vm872, %v853
        %894 = vst.msk [vmem:[#allocation2 + $0xa8] sm:$0xff] %vm872, %v854
        %895 = vst.msk [vmem:[#allocation2 + $0xb0] sm:$0xff] %vm872, %v855
        %896 = vst.msk [vmem:[#allocation2 + $0xb8] sm:$0xff] %vm872, %v856
        %897 = vst.msk [vmem:[#allocation2 + $0xc0] sm:$0xff] %vm872, %v857
        %898 = vst.msk [vmem:[#allocation2 + $0xc8] sm:$0xff] %vm872, %v858
        %899 = vst.msk [vmem:[#allocation2 + $0xd0] sm:$0xff] %vm872, %v859
        %900 = vst.msk [vmem:[#allocation2 + $0xd8] sm:$0xff] %vm872, %v860
        %901 = vst.msk [vmem:[#allocation2 + $0xe0] sm:$0xff] %vm872, %v861
        %902 = vst.msk [vmem:[#allocation2 + $0xe8] sm:$0xff] %vm872, %v862
        %903 = vst.msk [vmem:[#allocation2 + $0xf0] sm:$0xff] %vm872, %v863
        %904 = vst.msk [vmem:[#allocation2 + $0xf8] sm:$0xff] %vm872, %v864
        %905 = vst.msk [vmem:[#allocation2 + $0x100] sm:$0xff] %vm872, %v865
        %906 = vst.msk [vmem:[#allocation2 + $0x108] sm:$0xff] %vm872, %v866
        %907 = vst.msk [vmem:[#allocation2 + $0x110] sm:$0xff] %vm872, %v867
        %908 = vst.msk [vmem:[#allocation2 + $0x118] sm:$0xff] %vm872, %v868
        %909 = vst.msk [vmem:[#allocation2 + $0x120] sm:$0xff] %vm872, %v869
        %942 = vrot.lane.b32.xlu0 %v838, 1
        %v943 = vpop.permute.xlu0 %942
        %944 = vrot.lane.b32.xlu0 %v839, 1
        %v945 = vpop.permute.xlu0 %944
        %946 = vrot.lane.b32.xlu0 %v840, 1
        %v947 = vpop.permute.xlu0 %946
        %948 = vrot.lane.b32.xlu0 %v841, 1
        %v949 = vpop.permute.xlu0 %948
        %950 = vrot.lane.b32.xlu0 %v842, 1
        %v951 = vpop.permute.xlu0 %950
        %952 = vrot.lane.b32.xlu0 %v843, 1
        %v953 = vpop.permute.xlu0 %952
        %954 = vrot.lane.b32.xlu0 %v844, 1
        %v955 = vpop.permute.xlu0 %954
        %956 = vrot.lane.b32.xlu0 %v845, 1
        %v957 = vpop.permute.xlu0 %956
        %958 = vrot.lane.b32.xlu0 %v846, 1
        %v959 = vpop.permute.xlu0 %958
        %960 = vrot.lane.b32.xlu0 %v847, 1
        %v961 = vpop.permute.xlu0 %960
        %962 = vrot.lane.b32.xlu0 %v848, 1
        %v963 = vpop.permute.xlu0 %962
        %964 = vrot.lane.b32.xlu0 %v849, 1
        %v965 = vpop.permute.xlu0 %964
        %966 = vrot.lane.b32.xlu0 %v850, 1
        %v967 = vpop.permute.xlu0 %966
        %968 = vrot.lane.b32.xlu0 %v851, 1
        %v969 = vpop.permute.xlu0 %968
        %970 = vrot.lane.b32.xlu0 %v852, 1
        %v971 = vpop.permute.xlu0 %970
        %972 = vrot.lane.b32.xlu0 %v853, 1
        %v973 = vpop.permute.xlu0 %972
        %974 = vrot.lane.b32.xlu0 %v854, 1
        %v975 = vpop.permute.xlu0 %974
        %976 = vrot.lane.b32.xlu0 %v855, 1
        %v977 = vpop.permute.xlu0 %976
        %978 = vrot.lane.b32.xlu0 %v856, 1
        %v979 = vpop.permute.xlu0 %978
        %980 = vrot.lane.b32.xlu0 %v857, 1
        %v981 = vpop.permute.xlu0 %980
        %982 = vrot.lane.b32.xlu0 %v858, 1
        %v983 = vpop.permute.xlu0 %982
        %984 = vrot.lane.b32.xlu0 %v859, 1
        %v985 = vpop.permute.xlu0 %984
        %986 = vrot.lane.b32.xlu0 %v860, 1
        %v987 = vpop.permute.xlu0 %986
        %988 = vrot.lane.b32.xlu0 %v861, 1
        %v989 = vpop.permute.xlu0 %988
        %990 = vrot.lane.b32.xlu0 %v862, 1
        %v991 = vpop.permute.xlu0 %990
        %992 = vrot.lane.b32.xlu0 %v863, 1
        %v993 = vpop.permute.xlu0 %992
        %994 = vrot.lane.b32.xlu0 %v864, 1
        %v995 = vpop.permute.xlu0 %994
        %996 = vrot.lane.b32.xlu0 %v865, 1
        %v997 = vpop.permute.xlu0 %996
        %998 = vrot.lane.b32.xlu0 %v866, 1
        %v999 = vpop.permute.xlu0 %998
        %1000 = vrot.lane.b32.xlu0 %v867, 1
        %v1001 = vpop.permute.xlu0 %1000
        %1002 = vrot.lane.b32.xlu0 %v868, 1
        %v1003 = vpop.permute.xlu0 %1002
        %1004 = vrot.lane.b32.xlu0 %v869, 1
        %v1005 = vpop.permute.xlu0 %1004
        %vm1038 = vcmask 15368
        %1039 = vst.msk [vmem:[#allocation2 + $0x18] sm:$0xff] %vm1038, %v943
        %1040 = vst.msk [vmem:[#allocation2 + $0x20] sm:$0xff] %vm1038, %v945
        %1041 = vst.msk [vmem:[#allocation2 + $0x28] sm:$0xff] %vm1038, %v947
        %1042 = vst.msk [vmem:[#allocation2 + $0x30] sm:$0xff] %vm1038, %v949
        %1043 = vst.msk [vmem:[#allocation2 + $0x38] sm:$0xff] %vm1038, %v951
        %1044 = vst.msk [vmem:[#allocation2 + $0x40] sm:$0xff] %vm1038, %v953
        %1045 = vst.msk [vmem:[#allocation2 + $0x48] sm:$0xff] %vm1038, %v955
        %1046 = vst.msk [vmem:[#allocation2 + $0x50] sm:$0xff] %vm1038, %v957
        %1047 = vst.msk [vmem:[#allocation2 + $0x58] sm:$0xff] %vm1038, %v959
        %1048 = vst.msk [vmem:[#allocation2 + $0x60] sm:$0xff] %vm1038, %v961
        %1049 = vst.msk [vmem:[#allocation2 + $0x68] sm:$0xff] %vm1038, %v963
        %1050 = vst.msk [vmem:[#allocation2 + $0x70] sm:$0xff] %vm1038, %v965
        %1051 = vst.msk [vmem:[#allocation2 + $0x78] sm:$0xff] %vm1038, %v967
        %1052 = vst.msk [vmem:[#allocation2 + $0x80] sm:$0xff] %vm1038, %v969
        %1053 = vst.msk [vmem:[#allocation2 + $0x88] sm:$0xff] %vm1038, %v971
        %1054 = vst.msk [vmem:[#allocation2 + $0x90] sm:$0xff] %vm1038, %v973
        %1055 = vst.msk [vmem:[#allocation2 + $0x98] sm:$0xff] %vm1038, %v975
        %1056 = vst.msk [vmem:[#allocation2 + $0xa0] sm:$0xff] %vm1038, %v977
        %1057 = vst.msk [vmem:[#allocation2 + $0xa8] sm:$0xff] %vm1038, %v979
        %1058 = vst.msk [vmem:[#allocation2 + $0xb0] sm:$0xff] %vm1038, %v981
        %1059 = vst.msk [vmem:[#allocation2 + $0xb8] sm:$0xff] %vm1038, %v983
        %1060 = vst.msk [vmem:[#allocation2 + $0xc0] sm:$0xff] %vm1038, %v985
        %1061 = vst.msk [vmem:[#allocation2 + $0xc8] sm:$0xff] %vm1038, %v987
        %1062 = vst.msk [vmem:[#allocation2 + $0xd0] sm:$0xff] %vm1038, %v989
        %1063 = vst.msk [vmem:[#allocation2 + $0xd8] sm:$0xff] %vm1038, %v991
        %1064 = vst.msk [vmem:[#allocation2 + $0xe0] sm:$0xff] %vm1038, %v993
        %1065 = vst.msk [vmem:[#allocation2 + $0xe8] sm:$0xff] %vm1038, %v995
        %1066 = vst.msk [vmem:[#allocation2 + $0xf0] sm:$0xff] %vm1038, %v997
        %1067 = vst.msk [vmem:[#allocation2 + $0xf8] sm:$0xff] %vm1038, %v999
        %1068 = vst.msk [vmem:[#allocation2 + $0x100] sm:$0xff] %vm1038, %v1001
        %1069 = vst.msk [vmem:[#allocation2 + $0x108] sm:$0xff] %vm1038, %v1003
        %1070 = vst.msk [vmem:[#allocation2 + $0x110] sm:$0xff] %vm1038, %v1005
        %1071 = vrot.lane.b32.xlu0 %v838, 2
        %v1072 = vpop.permute.xlu0 %1071
        %1073 = vrot.lane.b32.xlu0 %v839, 2
        %v1074 = vpop.permute.xlu0 %1073
        %1075 = vrot.lane.b32.xlu0 %v840, 2
        %v1076 = vpop.permute.xlu0 %1075
        %1077 = vrot.lane.b32.xlu0 %v841, 2
        %v1078 = vpop.permute.xlu0 %1077
        %1079 = vrot.lane.b32.xlu0 %v842, 2
        %v1080 = vpop.permute.xlu0 %1079
        %1081 = vrot.lane.b32.xlu0 %v843, 2
        %v1082 = vpop.permute.xlu0 %1081
        %1083 = vrot.lane.b32.xlu0 %v844, 2
        %v1084 = vpop.permute.xlu0 %1083
        %1085 = vrot.lane.b32.xlu0 %v845, 2
        %v1086 = vpop.permute.xlu0 %1085
        %1087 = vrot.lane.b32.xlu0 %v846, 2
        %v1088 = vpop.permute.xlu0 %1087
        %1089 = vrot.lane.b32.xlu0 %v847, 2
        %v1090 = vpop.permute.xlu0 %1089
        %1091 = vrot.lane.b32.xlu0 %v848, 2
        %v1092 = vpop.permute.xlu0 %1091
        %1093 = vrot.lane.b32.xlu0 %v849, 2
        %v1094 = vpop.permute.xlu0 %1093
        %1095 = vrot.lane.b32.xlu0 %v850, 2
        %v1096 = vpop.permute.xlu0 %1095
        %1097 = vrot.lane.b32.xlu0 %v851, 2
        %v1098 = vpop.permute.xlu0 %1097
        %1099 = vrot.lane.b32.xlu0 %v852, 2
        %v1100 = vpop.permute.xlu0 %1099
        %1101 = vrot.lane.b32.xlu0 %v853, 2
        %v1102 = vpop.permute.xlu0 %1101
        %1103 = vrot.lane.b32.xlu0 %v854, 2
        %v1104 = vpop.permute.xlu0 %1103
        %1105 = vrot.lane.b32.xlu0 %v855, 2
        %v1106 = vpop.permute.xlu0 %1105
        %1107 = vrot.lane.b32.xlu0 %v856, 2
        %v1108 = vpop.permute.xlu0 %1107
        %1109 = vrot.lane.b32.xlu0 %v857, 2
        %v1110 = vpop.permute.xlu0 %1109
        %1111 = vrot.lane.b32.xlu0 %v858, 2
        %v1112 = vpop.permute.xlu0 %1111
        %1113 = vrot.lane.b32.xlu0 %v859, 2
        %v1114 = vpop.permute.xlu0 %1113
        %1115 = vrot.lane.b32.xlu0 %v860, 2
        %v1116 = vpop.permute.xlu0 %1115
        %1117 = vrot.lane.b32.xlu0 %v861, 2
        %v1118 = vpop.permute.xlu0 %1117
        %1119 = vrot.lane.b32.xlu0 %v862, 2
        %v1120 = vpop.permute.xlu0 %1119
        %1121 = vrot.lane.b32.xlu0 %v863, 2
        %v1122 = vpop.permute.xlu0 %1121
        %1123 = vrot.lane.b32.xlu0 %v864, 2
        %v1124 = vpop.permute.xlu0 %1123
        %1125 = vrot.lane.b32.xlu0 %v865, 2
        %v1126 = vpop.permute.xlu0 %1125
        %1127 = vrot.lane.b32.xlu0 %v866, 2
        %v1128 = vpop.permute.xlu0 %1127
        %1129 = vrot.lane.b32.xlu0 %v867, 2
        %v1130 = vpop.permute.xlu0 %1129
        %1131 = vrot.lane.b32.xlu0 %v868, 2
        %v1132 = vpop.permute.xlu0 %1131
        %1133 = vrot.lane.b32.xlu0 %v869, 2
        %v1134 = vpop.permute.xlu0 %1133
        %1167 = vst.msk [vmem:[#allocation2 + $0x8] sm:$0xff] %vm875, %v1072
        %1168 = vst.msk [vmem:[#allocation2 + $0x10] sm:$0xff] %vm875, %v1074
        %1169 = vst.msk [vmem:[#allocation2 + $0x18] sm:$0xff] %vm875, %v1076
        %1170 = vst.msk [vmem:[#allocation2 + $0x20] sm:$0xff] %vm875, %v1078
        %1171 = vst.msk [vmem:[#allocation2 + $0x28] sm:$0xff] %vm875, %v1080
        %1172 = vst.msk [vmem:[#allocation2 + $0x30] sm:$0xff] %vm875, %v1082
        %1173 = vst.msk [vmem:[#allocation2 + $0x38] sm:$0xff] %vm875, %v1084
        %1174 = vst.msk [vmem:[#allocation2 + $0x40] sm:$0xff] %vm875, %v1086
        %1175 = vst.msk [vmem:[#allocation2 + $0x48] sm:$0xff] %vm875, %v1088
        %1176 = vst.msk [vmem:[#allocation2 + $0x50] sm:$0xff] %vm875, %v1090
        %1177 = vst.msk [vmem:[#allocation2 + $0x58] sm:$0xff] %vm875, %v1092
        %1178 = vst.msk [vmem:[#allocation2 + $0x60] sm:$0xff] %vm875, %v1094
        %1179 = vst.msk [vmem:[#allocation2 + $0x68] sm:$0xff] %vm875, %v1096
        %1180 = vst.msk [vmem:[#allocation2 + $0x70] sm:$0xff] %vm875, %v1098
        %1181 = vst.msk [vmem:[#allocation2 + $0x78] sm:$0xff] %vm875, %v1100
        %1182 = vst.msk [vmem:[#allocation2 + $0x80] sm:$0xff] %vm875, %v1102
        %1183 = vst.msk [vmem:[#allocation2 + $0x88] sm:$0xff] %vm875, %v1104
        %1184 = vst.msk [vmem:[#allocation2 + $0x90] sm:$0xff] %vm875, %v1106
        %1185 = vst.msk [vmem:[#allocation2 + $0x98] sm:$0xff] %vm875, %v1108
        %1186 = vst.msk [vmem:[#allocation2 + $0xa0] sm:$0xff] %vm875, %v1110
        %1187 = vst.msk [vmem:[#allocation2 + $0xa8] sm:$0xff] %vm875, %v1112
        %1188 = vst.msk [vmem:[#allocation2 + $0xb0] sm:$0xff] %vm875, %v1114
        %1189 = vst.msk [vmem:[#allocation2 + $0xb8] sm:$0xff] %vm875, %v1116
        %1190 = vst.msk [vmem:[#allocation2 + $0xc0] sm:$0xff] %vm875, %v1118
        %1191 = vst.msk [vmem:[#allocation2 + $0xc8] sm:$0xff] %vm875, %v1120
        %1192 = vst.msk [vmem:[#allocation2 + $0xd0] sm:$0xff] %vm875, %v1122
        %1193 = vst.msk [vmem:[#allocation2 + $0xd8] sm:$0xff] %vm875, %v1124
        %1194 = vst.msk [vmem:[#allocation2 + $0xe0] sm:$0xff] %vm875, %v1126
        %1195 = vst.msk [vmem:[#allocation2 + $0xe8] sm:$0xff] %vm875, %v1128
        %1196 = vst.msk [vmem:[#allocation2 + $0xf0] sm:$0xff] %vm875, %v1130
        %1197 = vst.msk [vmem:[#allocation2 + $0xf8] sm:$0xff] %vm875, %v1132
        %1198 = vst.msk [vmem:[#allocation2 + $0x100] sm:$0xff] %vm875, %v1134
        %v1199 = vld [vmem:[#allocation2 + $0x17] sm:$0xff]
        %v1200 = vld [vmem:[#allocation2 + $0x1f] sm:$0xff]
        %v1201 = vld [vmem:[#allocation2 + $0x27] sm:$0xff]
        %v1202 = vld [vmem:[#allocation2 + $0x2f] sm:$0xff]
        %v1203 = vld [vmem:[#allocation2 + $0x37] sm:$0xff]
        %v1204 = vld [vmem:[#allocation2 + $0x3f] sm:$0xff]
        %v1205 = vld [vmem:[#allocation2 + $0x47] sm:$0xff]
        %v1206 = vld [vmem:[#allocation2 + $0x4f] sm:$0xff]
        %v1207 = vld [vmem:[#allocation2 + $0x57] sm:$0xff]
        %v1208 = vld [vmem:[#allocation2 + $0x5f] sm:$0xff]
        %v1209 = vld [vmem:[#allocation2 + $0x67] sm:$0xff]
        %v1210 = vld [vmem:[#allocation2 + $0x6f] sm:$0xff]
        %v1211 = vld [vmem:[#allocation2 + $0x77] sm:$0xff]
        %v1212 = vld [vmem:[#allocation2 + $0x7f] sm:$0xff]
        %v1213 = vld [vmem:[#allocation2 + $0x87] sm:$0xff]
        %v1214 = vld [vmem:[#allocation2 + $0x8f] sm:$0xff]
        %v1215 = vld [vmem:[#allocation2 + $0x97] sm:$0xff]
        %v1216 = vld [vmem:[#allocation2 + $0x9f] sm:$0xff]
        %v1217 = vld [vmem:[#allocation2 + $0xa7] sm:$0xff]
        %v1218 = vld [vmem:[#allocation2 + $0xaf] sm:$0xff]
        %v1219 = vld [vmem:[#allocation2 + $0xb7] sm:$0xff]
        %v1220 = vld [vmem:[#allocation2 + $0xbf] sm:$0xff]
        %v1221 = vld [vmem:[#allocation2 + $0xc7] sm:$0xff]
        %v1222 = vld [vmem:[#allocation2 + $0xcf] sm:$0xff]
        %v1223 = vld [vmem:[#allocation2 + $0xd7] sm:$0xff]
        %v1224 = vld [vmem:[#allocation2 + $0xdf] sm:$0xff]
        %v1225 = vld [vmem:[#allocation2 + $0xe7] sm:$0xff]
        %v1226 = vld [vmem:[#allocation2 + $0xef] sm:$0xff]
        %v1227 = vld [vmem:[#allocation2 + $0xf7] sm:$0xff]
        %v1228 = vld [vmem:[#allocation2 + $0xff] sm:$0xff]
        %v1229 = vld [vmem:[#allocation2 + $0x107] sm:$0xff]
        %v1230 = vld [vmem:[#allocation2 + $0x10f] sm:$0xff]
        %v1231 = vsel %vm750, 1, 0
        %v1232 = vsel %vm751, 1, 0
        %v1233 = vsel %vm752, 1, 0
        %v1234 = vsel %vm753, 1, 0
        %v1235 = vsel %vm754, 1, 0
        %v1236 = vsel %vm755, 1, 0
        %v1237 = vsel %vm756, 1, 0
        %v1238 = vsel %vm757, 1, 0
        %v1239 = vsel %vm758, 1, 0
        %v1240 = vsel %vm759, 1, 0
        %v1241 = vsel %vm760, 1, 0
        %v1242 = vsel %vm761, 1, 0
        %v1243 = vsel %vm762, 1, 0
        %v1244 = vsel %vm763, 1, 0
        %v1245 = vsel %vm764, 1, 0
        %v1246 = vsel %vm765, 1, 0
        %v1247 = vsel %vm766, 1, 0
        %v1248 = vsel %vm767, 1, 0
        %v1249 = vsel %vm768, 1, 0
        %v1250 = vsel %vm769, 1, 0
        %v1251 = vsel %vm770, 1, 0
        %v1252 = vsel %vm771, 1, 0
        %v1253 = vsel %vm772, 1, 0
        %v1254 = vsel %vm773, 1, 0
        %v1255 = vsel %vm774, 1, 0
        %v1256 = vsel %vm775, 1, 0
        %v1257 = vsel %vm776, 1, 0
        %v1258 = vsel %vm777, 1, 0
        %v1259 = vsel %vm778, 1, 0
        %v1260 = vsel %vm779, 1, 0
        %v1261 = vsel %vm780, 1, 0
        %v1262 = vsel %vm781, 1, 0
        %vm1263 = vcmp.eq.s32.totalorder %v1231, 1
        %vm1264 = vcmp.eq.s32.totalorder %v1232, 1
        %vm1265 = vcmp.eq.s32.totalorder %v1233, 1
        %vm1266 = vcmp.eq.s32.totalorder %v1234, 1
        %vm1267 = vcmp.eq.s32.totalorder %v1235, 1
        %vm1268 = vcmp.eq.s32.totalorder %v1236, 1
        %vm1269 = vcmp.eq.s32.totalorder %v1237, 1
        %vm1270 = vcmp.eq.s32.totalorder %v1238, 1
        %vm1271 = vcmp.eq.s32.totalorder %v1239, 1
        %vm1272 = vcmp.eq.s32.totalorder %v1240, 1
        %vm1273 = vcmp.eq.s32.totalorder %v1241, 1
        %vm1274 = vcmp.eq.s32.totalorder %v1242, 1
        %vm1275 = vcmp.eq.s32.totalorder %v1243, 1
        %vm1276 = vcmp.eq.s32.totalorder %v1244, 1
        %vm1277 = vcmp.eq.s32.totalorder %v1245, 1
        %vm1278 = vcmp.eq.s32.totalorder %v1246, 1
        %vm1279 = vcmp.eq.s32.totalorder %v1247, 1
        %vm1280 = vcmp.eq.s32.totalorder %v1248, 1
        %vm1281 = vcmp.eq.s32.totalorder %v1249, 1
        %vm1282 = vcmp.eq.s32.totalorder %v1250, 1
        %vm1283 = vcmp.eq.s32.totalorder %v1251, 1
        %vm1284 = vcmp.eq.s32.totalorder %v1252, 1
        %vm1285 = vcmp.eq.s32.totalorder %v1253, 1
        %vm1286 = vcmp.eq.s32.totalorder %v1254, 1
        %vm1287 = vcmp.eq.s32.totalorder %v1255, 1
        %vm1288 = vcmp.eq.s32.totalorder %v1256, 1
        %vm1289 = vcmp.eq.s32.totalorder %v1257, 1
        %vm1290 = vcmp.eq.s32.totalorder %v1258, 1
        %vm1291 = vcmp.eq.s32.totalorder %v1259, 1
        %vm1292 = vcmp.eq.s32.totalorder %v1260, 1
        %vm1293 = vcmp.eq.s32.totalorder %v1261, 1
        %vm1294 = vcmp.eq.s32.totalorder %v1262, 1
        %v1295 = vsel %vm1263, %v1199, 0.0
        %v1296 = vsel %vm1264, %v1200, 0.0
        %v1297 = vsel %vm1265, %v1201, 0.0
        %v1298 = vsel %vm1266, %v1202, 0.0
        %v1299 = vsel %vm1267, %v1203, 0.0
        %v1300 = vsel %vm1268, %v1204, 0.0
        %v1301 = vsel %vm1269, %v1205, 0.0
        %v1302 = vsel %vm1270, %v1206, 0.0
        %v1303 = vsel %vm1271, %v1207, 0.0
        %v1304 = vsel %vm1272, %v1208, 0.0
        %v1305 = vsel %vm1273, %v1209, 0.0
        %v1306 = vsel %vm1274, %v1210, 0.0
        %v1307 = vsel %vm1275, %v1211, 0.0
        %v1308 = vsel %vm1276, %v1212, 0.0
        %v1309 = vsel %vm1277, %v1213, 0.0
        %v1310 = vsel %vm1278, %v1214, 0.0
        %v1311 = vsel %vm1279, %v1215, 0.0
        %v1312 = vsel %vm1280, %v1216, 0.0
        %v1313 = vsel %vm1281, %v1217, 0.0
        %v1314 = vsel %vm1282, %v1218, 0.0
        %v1315 = vsel %vm1283, %v1219, 0.0
        %v1316 = vsel %vm1284, %v1220, 0.0
        %v1317 = vsel %vm1285, %v1221, 0.0
        %v1318 = vsel %vm1286, %v1222, 0.0
        %v1319 = vsel %vm1287, %v1223, 0.0
        %v1320 = vsel %vm1288, %v1224, 0.0
        %v1321 = vsel %vm1289, %v1225, 0.0
        %v1322 = vsel %vm1290, %v1226, 0.0
        %v1323 = vsel %vm1291, %v1227, 0.0
        %v1324 = vsel %vm1292, %v1228, 0.0
        %v1325 = vsel %vm1293, %v1229, 0.0
        %v1326 = vsel %vm1294, %v1230, 0.0
        %v1327 = vld [vmem:[%s1] sm:$0x7]
        %v1328 = vld [vmem:[#allocation2 + $0x18] sm:$0xff]
        %v1329 = vld [vmem:[#allocation2 + $0x20] sm:$0xff]
        %v1330 = vld [vmem:[#allocation2 + $0x28] sm:$0xff]
        %v1331 = vld [vmem:[#allocation2 + $0x30] sm:$0xff]
        %v1332 = vld [vmem:[#allocation2 + $0x38] sm:$0xff]
        %v1333 = vld [vmem:[#allocation2 + $0x40] sm:$0xff]
        %v1334 = vld [vmem:[#allocation2 + $0x48] sm:$0xff]
        %v1335 = vld [vmem:[#allocation2 + $0x50] sm:$0xff]
        %v1336 = vld [vmem:[#allocation2 + $0x58] sm:$0xff]
        %v1337 = vld [vmem:[#allocation2 + $0x60] sm:$0xff]
        %v1338 = vld [vmem:[#allocation2 + $0x68] sm:$0xff]
        %v1339 = vld [vmem:[#allocation2 + $0x70] sm:$0xff]
        %v1340 = vld [vmem:[#allocation2 + $0x78] sm:$0xff]
        %v1341 = vld [vmem:[#allocation2 + $0x80] sm:$0xff]
        %v1342 = vld [vmem:[#allocation2 + $0x88] sm:$0xff]
        %v1343 = vld [vmem:[#allocation2 + $0x90] sm:$0xff]
        %v1344 = vld [vmem:[#allocation2 + $0x98] sm:$0xff]
        %v1345 = vld [vmem:[#allocation2 + $0xa0] sm:$0xff]
        %v1346 = vld [vmem:[#allocation2 + $0xa8] sm:$0xff]
        %v1347 = vld [vmem:[#allocation2 + $0xb0] sm:$0xff]
        %v1348 = vld [vmem:[#allocation2 + $0xb8] sm:$0xff]
        %v1349 = vld [vmem:[#allocation2 + $0xc0] sm:$0xff]
        %v1350 = vld [vmem:[#allocation2 + $0xc8] sm:$0xff]
        %v1351 = vld [vmem:[#allocation2 + $0xd0] sm:$0xff]
        %v1352 = vld [vmem:[#allocation2 + $0xd8] sm:$0xff]
        %v1353 = vld [vmem:[#allocation2 + $0xe0] sm:$0xff]
        %v1354 = vld [vmem:[#allocation2 + $0xe8] sm:$0xff]
        %v1355 = vld [vmem:[#allocation2 + $0xf0] sm:$0xff]
        %v1356 = vld [vmem:[#allocation2 + $0xf8] sm:$0xff]
        %v1357 = vld [vmem:[#allocation2 + $0x100] sm:$0xff]
        %v1358 = vld [vmem:[#allocation2 + $0x108] sm:$0xff]
        %v1359 = vld [vmem:[#allocation2 + $0x110] sm:$0xff]
        %s1360 = scalar_lea.vmem %s1, 4
        %v1361 = vld [vmem:[%s1360] sm:$0x7]
        %vm1362 = vcmask 23552
        %v1364 = vsel %vm1362, %v1328, 0
        %v1367 = vsel %vm1362, %v1329, 0
        %v1370 = vsel %vm1362, %v1330, 0
        %v1373 = vsel %vm1362, %v1331, 0
        %v1376 = vsel %vm1362, %v1332, 0
        %v1379 = vsel %vm1362, %v1333, 0
        %v1382 = vsel %vm1362, %v1334, 0
        %v1385 = vsel %vm1362, %v1335, 0
        %v1388 = vsel %vm1362, %v1336, 0
        %v1391 = vsel %vm1362, %v1337, 0
        %v1394 = vsel %vm1362, %v1338, 0
        %v1397 = vsel %vm1362, %v1339, 0
        %v1400 = vsel %vm1362, %v1340, 0
        %v1403 = vsel %vm1362, %v1341, 0
        %v1406 = vsel %vm1362, %v1342, 0
        %v1409 = vsel %vm1362, %v1343, 0
        %v1412 = vsel %vm1362, %v1344, 0
        %v1415 = vsel %vm1362, %v1345, 0
        %v1418 = vsel %vm1362, %v1346, 0
        %v1421 = vsel %vm1362, %v1347, 0
        %v1424 = vsel %vm1362, %v1348, 0
        %v1427 = vsel %vm1362, %v1349, 0
        %v1430 = vsel %vm1362, %v1350, 0
        %v1433 = vsel %vm1362, %v1351, 0
        %v1436 = vsel %vm1362, %v1352, 0
        %v1439 = vsel %vm1362, %v1353, 0
        %v1442 = vsel %vm1362, %v1354, 0
        %v1445 = vsel %vm1362, %v1355, 0
        %v1448 = vsel %vm1362, %v1356, 0
        %v1451 = vsel %vm1362, %v1357, 0
        %v1454 = vsel %vm1362, %v1358, 0
        %v1457 = vsel %vm1362, %v1359, 0
        %vm1459 = vcmask 1042432
        %v1461 = vsel %vm1459, %v1361, 0
        %1463 = vmatprep.subr.mxu0 0.0
        %1464 = vmatpush1.msra.mxu0 %v1461
        %1465 = vmatprep.subr.mxu0 0.0
        %1466 = vmatpush1.msra.mxu0 0.0
        %1467 = vmatprep.subr.mxu0 0.0
        %1468 = vmatpush1.msra.mxu0 0.0
        %1469 = vmatprep.subr.mxu0 0.0
        %1470 = vmatpush1.msra.mxu0 0.0
        %1471 = vmatprep.subr.mxu0 0.0
        %1472 = vmatpush1.msra.mxu0 0.0
        %1473 = vmatprep.subr.mxu0 0.0
        %1474 = vmatpush1.msra.mxu0 0.0
        %1475 = vmatprep.subr.mxu0 0.0
        %1476 = vmatpush1.msra.mxu0 0.0
        %1477 = vmatprep.subr.mxu0 0.0
        %1478 = vmatpush1.msra.mxu0 0.0
        %1479 = vmatprep.subr.mxu0 0.0
        %1480 = vmatpush1.msra.mxu0 0.0
        %1481 = vmatprep.subr.mxu0 0.0
        %1482 = vmatpush1.msra.mxu0 0.0
        %1483 = vmatprep.subr.mxu0 0.0
        %1484 = vmatpush1.msra.mxu0 0.0
        %1485 = vmatprep.subr.mxu0 0.0
        %1486 = vmatpush1.msra.mxu0 0.0
        %1487 = vmatprep.subr.mxu0 0.0
        %1488 = vmatpush1.msra.mxu0 0.0
        %1489 = vmatprep.subr.mxu0 0.0
        %1490 = vmatpush1.msra.mxu0 0.0
        %1491 = vmatprep.subr.mxu0 0.0
        %1492 = vmatpush1.msra.mxu0 0.0
        %1493 = vmatprep.subr.mxu0 0.0
        %1494 = vmatpush1.msra.mxu0 0.0
        %1495 = vmatprep.subr.mxu0 0.0
        %1496 = vmatpush1.msra.mxu0 0.0
        %1497 = vmatprep.subr.mxu0 0.0
        %1498 = vmatpush1.msra.mxu0 0.0
        %1499 = vmatprep.subr.mxu0 0.0
        %1500 = vmatpush1.msra.mxu0 0.0
        %1501 = vmatprep.subr.mxu0 0.0
        %1502 = vmatpush1.msra.mxu0 0.0
        %1503 = vmatprep.subr.mxu0 0.0
        %1504 = vmatpush1.msra.mxu0 0.0
        %1505 = vmatprep.subr.mxu0 0.0
        %1506 = vmatpush1.msra.mxu0 0.0
        %1507 = vmatprep.subr.mxu0 0.0
        %1508 = vmatpush1.msra.mxu0 0.0
        %1509 = vmatprep.subr.mxu0 0.0
        %1510 = vmatpush1.msra.mxu0 0.0
        %1511 = vmatprep.subr.mxu0 0.0
        %1512 = vmatpush1.msra.mxu0 0.0
        %1513 = vmatprep.subr.mxu0 0.0
        %1514 = vmatpush1.msra.mxu0 0.0
        %1515 = vmatprep.subr.mxu0 0.0
        %1516 = vmatpush1.msra.mxu0 0.0
        %1517 = vmatprep.subr.mxu0 0.0
        %1518 = vmatpush1.msra.mxu0 0.0
        %1519 = vmatprep.subr.mxu0 0.0
        %1520 = vmatpush1.msra.mxu0 0.0
        %1521 = vmatprep.subr.mxu0 0.0
        %1522 = vmatpush1.msra.mxu0 0.0
        %1523 = vmatprep.subr.mxu0 0.0
        %1524 = vmatpush1.msra.mxu0 0.0
        %1525 = vmatprep.subr.mxu0 0.0
        %1526 = vmatpush1.msra.mxu0 0.0
        %1527 = vmatprep.mubr.f32.mxu0 0.0
        %1528 = vmatmul.mubr.f32.gmra.mrb[0].mxu0 %v1364
        %v1529 = vpop.f32.mrb[0].mxu0
        %v1530 = vadd.f32 0.0, %v1529
        %v1531 = vpop.f32.mrb[0].mxu0
        %1532 = vmatprep.mubr.f32.mxu0 0.0
        %1533 = vmatmul.mubr.f32.gmra.mrb[0].mxu0 %v1367
        %v1534 = vpop.f32.mrb[0].mxu0
        %v1535 = vadd.f32 0.0, %v1534
        %v1536 = vpop.f32.mrb[0].mxu0
        %1537 = vmatprep.mubr.f32.mxu0 0.0
        %1538 = vmatmul.mubr.f32.gmra.mrb[0].mxu0 %v1370
        %v1539 = vpop.f32.mrb[0].mxu0
        %v1540 = vadd.f32 0.0, %v1539
        %v1541 = vpop.f32.mrb[0].mxu0
        %1542 = vmatprep.mubr.f32.mxu0 0.0
        %1543 = vmatmul.mubr.f32.gmra.mrb[0].mxu0 %v1373
        %v1544 = vpop.f32.mrb[0].mxu0
        %v1545 = vadd.f32 0.0, %v1544
        %v1546 = vpop.f32.mrb[0].mxu0
        %1547 = vmatprep.mubr.f32.mxu0 0.0
        %1548 = vmatmul.mubr.f32.gmra.mrb[0].mxu0 %v1376
        %v1549 = vpop.f32.mrb[0].mxu0
        %v1550 = vadd.f32 0.0, %v1549
        %v1551 = vpop.f32.mrb[0].mxu0
        %1552 = vmatprep.mubr.f32.mxu0 0.0
        %1553 = vmatmul.mubr.f32.gmra.mrb[0].mxu0 %v1379
        %v1554 = vpop.f32.mrb[0].mxu0
        %v1555 = vadd.f32 0.0, %v1554
        %v1556 = vpop.f32.mrb[0].mxu0
        %1557 = vmatprep.mubr.f32.mxu0 0.0
        %1558 = vmatmul.mubr.f32.gmra.mrb[0].mxu0 %v1382
        %v1559 = vpop.f32.mrb[0].mxu0
        %v1560 = vadd.f32 0.0, %v1559
        %v1561 = vpop.f32.mrb[0].mxu0
        %1562 = vmatprep.mubr.f32.mxu0 0.0
        %1563 = vmatmul.mubr.f32.gmra.mrb[0].mxu0 %v1385
        %v1564 = vpop.f32.mrb[0].mxu0
        %v1565 = vadd.f32 0.0, %v1564
        %v1566 = vpop.f32.mrb[0].mxu0
        %1567 = vmatprep.mubr.f32.mxu0 0.0
        %1568 = vmatmul.mubr.f32.gmra.mrb[0].mxu0 %v1388
        %v1569 = vpop.f32.mrb[0].mxu0
        %v1570 = vadd.f32 0.0, %v1569
        %v1571 = vpop.f32.mrb[0].mxu0
        %1572 = vmatprep.mubr.f32.mxu0 0.0
        %1573 = vmatmul.mubr.f32.gmra.mrb[0].mxu0 %v1391
        %v1574 = vpop.f32.mrb[0].mxu0
        %v1575 = vadd.f32 0.0, %v1574
        %v1576 = vpop.f32.mrb[0].mxu0
        %1577 = vmatprep.mubr.f32.mxu0 0.0
        %1578 = vmatmul.mubr.f32.gmra.mrb[0].mxu0 %v1394
        %v1579 = vpop.f32.mrb[0].mxu0
        %v1580 = vadd.f32 0.0, %v1579
        %v1581 = vpop.f32.mrb[0].mxu0
        %1582 = vmatprep.mubr.f32.mxu0 0.0
        %1583 = vmatmul.mubr.f32.gmra.mrb[0].mxu0 %v1397
        %v1584 = vpop.f32.mrb[0].mxu0
        %v1585 = vadd.f32 0.0, %v1584
        %v1586 = vpop.f32.mrb[0].mxu0
        %1587 = vmatprep.mubr.f32.mxu0 0.0
        %1588 = vmatmul.mubr.f32.gmra.mrb[0].mxu0 %v1400
        %v1589 = vpop.f32.mrb[0].mxu0
        %v1590 = vadd.f32 0.0, %v1589
        %v1591 = vpop.f32.mrb[0].mxu0
        %1592 = vmatprep.mubr.f32.mxu0 0.0
        %1593 = vmatmul.mubr.f32.gmra.mrb[0].mxu0 %v1403
        %v1594 = vpop.f32.mrb[0].mxu0
        %v1595 = vadd.f32 0.0, %v1594
        %v1596 = vpop.f32.mrb[0].mxu0
        %1597 = vmatprep.mubr.f32.mxu0 0.0
        %1598 = vmatmul.mubr.f32.gmra.mrb[0].mxu0 %v1406
        %v1599 = vpop.f32.mrb[0].mxu0
        %v1600 = vadd.f32 0.0, %v1599
        %v1601 = vpop.f32.mrb[0].mxu0
        %1602 = vmatprep.mubr.f32.mxu0 0.0
        %1603 = vmatmul.mubr.f32.gmra.mrb[0].mxu0 %v1409
        %v1604 = vpop.f32.mrb[0].mxu0
        %v1605 = vadd.f32 0.0, %v1604
        %v1606 = vpop.f32.mrb[0].mxu0
        %1607 = vmatprep.mubr.f32.mxu0 0.0
        %1608 = vmatmul.mubr.f32.gmra.mrb[0].mxu0 %v1412
        %v1609 = vpop.f32.mrb[0].mxu0
        %v1610 = vadd.f32 0.0, %v1609
        %v1611 = vpop.f32.mrb[0].mxu0
        %1612 = vmatprep.mubr.f32.mxu0 0.0
        %1613 = vmatmul.mubr.f32.gmra.mrb[0].mxu0 %v1415
        %v1614 = vpop.f32.mrb[0].mxu0
        %v1615 = vadd.f32 0.0, %v1614
        %v1616 = vpop.f32.mrb[0].mxu0
        %1617 = vmatprep.mubr.f32.mxu0 0.0
        %1618 = vmatmul.mubr.f32.gmra.mrb[0].mxu0 %v1418
        %v1619 = vpop.f32.mrb[0].mxu0
        %v1620 = vadd.f32 0.0, %v1619
        %v1621 = vpop.f32.mrb[0].mxu0
        %1622 = vmatprep.mubr.f32.mxu0 0.0
        %1623 = vmatmul.mubr.f32.gmra.mrb[0].mxu0 %v1421
        %v1624 = vpop.f32.mrb[0].mxu0
        %v1625 = vadd.f32 0.0, %v1624
        %v1626 = vpop.f32.mrb[0].mxu0
        %1627 = vmatprep.mubr.f32.mxu0 0.0
        %1628 = vmatmul.mubr.f32.gmra.mrb[0].mxu0 %v1424
        %v1629 = vpop.f32.mrb[0].mxu0
        %v1630 = vadd.f32 0.0, %v1629
        %v1631 = vpop.f32.mrb[0].mxu0
        %1632 = vmatprep.mubr.f32.mxu0 0.0
        %1633 = vmatmul.mubr.f32.gmra.mrb[0].mxu0 %v1427
        %v1634 = vpop.f32.mrb[0].mxu0
        %v1635 = vadd.f32 0.0, %v1634
        %v1636 = vpop.f32.mrb[0].mxu0
        %1637 = vmatprep.mubr.f32.mxu0 0.0
        %1638 = vmatmul.mubr.f32.gmra.mrb[0].mxu0 %v1430
        %v1639 = vpop.f32.mrb[0].mxu0
        %v1640 = vadd.f32 0.0, %v1639
        %v1641 = vpop.f32.mrb[0].mxu0
        %1642 = vmatprep.mubr.f32.mxu0 0.0
        %1643 = vmatmul.mubr.f32.gmra.mrb[0].mxu0 %v1433
        %v1644 = vpop.f32.mrb[0].mxu0
        %v1645 = vadd.f32 0.0, %v1644
        %v1646 = vpop.f32.mrb[0].mxu0
        %1647 = vmatprep.mubr.f32.mxu0 0.0
        %1648 = vmatmul.mubr.f32.gmra.mrb[0].mxu0 %v1436
        %v1649 = vpop.f32.mrb[0].mxu0
        %v1650 = vadd.f32 0.0, %v1649
        %v1651 = vpop.f32.mrb[0].mxu0
        %1652 = vmatprep.mubr.f32.mxu0 0.0
        %1653 = vmatmul.mubr.f32.gmra.mrb[0].mxu0 %v1439
        %v1654 = vpop.f32.mrb[0].mxu0
        %v1655 = vadd.f32 0.0, %v1654
        %v1656 = vpop.f32.mrb[0].mxu0
        %1657 = vmatprep.mubr.f32.mxu0 0.0
        %1658 = vmatmul.mubr.f32.gmra.mrb[0].mxu0 %v1442
        %v1659 = vpop.f32.mrb[0].mxu0
        %v1660 = vadd.f32 0.0, %v1659
        %v1661 = vpop.f32.mrb[0].mxu0
        %1662 = vmatprep.mubr.f32.mxu0 0.0
        %1663 = vmatmul.mubr.f32.gmra.mrb[0].mxu0 %v1445
        %v1664 = vpop.f32.mrb[0].mxu0
        %v1665 = vadd.f32 0.0, %v1664
        %v1666 = vpop.f32.mrb[0].mxu0
        %1667 = vmatprep.mubr.f32.mxu0 0.0
        %1668 = vmatmul.mubr.f32.gmra.mrb[0].mxu0 %v1448
        %v1669 = vpop.f32.mrb[0].mxu0
        %v1670 = vadd.f32 0.0, %v1669
        %v1671 = vpop.f32.mrb[0].mxu0
        %1672 = vmatprep.mubr.f32.mxu0 0.0
        %1673 = vmatmul.mubr.f32.gmra.mrb[0].mxu0 %v1451
        %v1674 = vpop.f32.mrb[0].mxu0
        %v1675 = vadd.f32 0.0, %v1674
        %v1676 = vpop.f32.mrb[0].mxu0
        %1677 = vmatprep.mubr.f32.mxu0 0.0
        %1678 = vmatmul.mubr.f32.gmra.mrb[0].mxu0 %v1454
        %v1679 = vpop.f32.mrb[0].mxu0
        %v1680 = vadd.f32 0.0, %v1679
        %v1681 = vpop.f32.mrb[0].mxu0
        %1682 = vmatprep.mubr.f32.mxu0 0.0
        %1683 = vmatmul.mubr.f32.gmra.mrb[0].mxu0 %v1457
        %v1684 = vpop.f32.mrb[0].mxu0
        %v1685 = vadd.f32 0.0, %v1684
        %v1686 = vpop.f32.mrb[0].mxu0
        %1687 = vdwg.mxu0
        %v1689 = vsel %vm1362, %v1295, 0
        %v1692 = vsel %vm1362, %v1296, 0
        %v1695 = vsel %vm1362, %v1297, 0
        %v1698 = vsel %vm1362, %v1298, 0
        %v1701 = vsel %vm1362, %v1299, 0
        %v1704 = vsel %vm1362, %v1300, 0
        %v1707 = vsel %vm1362, %v1301, 0
        %v1710 = vsel %vm1362, %v1302, 0
        %v1713 = vsel %vm1362, %v1303, 0
        %v1716 = vsel %vm1362, %v1304, 0
        %v1719 = vsel %vm1362, %v1305, 0
        %v1722 = vsel %vm1362, %v1306, 0
        %v1725 = vsel %vm1362, %v1307, 0
        %v1728 = vsel %vm1362, %v1308, 0
        %v1731 = vsel %vm1362, %v1309, 0
        %v1734 = vsel %vm1362, %v1310, 0
        %v1737 = vsel %vm1362, %v1311, 0
        %v1740 = vsel %vm1362, %v1312, 0
        %v1743 = vsel %vm1362, %v1313, 0
        %v1746 = vsel %vm1362, %v1314, 0
        %v1749 = vsel %vm1362, %v1315, 0
        %v1752 = vsel %vm1362, %v1316, 0
        %v1755 = vsel %vm1362, %v1317, 0
        %v1758 = vsel %vm1362, %v1318, 0
        %v1761 = vsel %vm1362, %v1319, 0
        %v1764 = vsel %vm1362, %v1320, 0
        %v1767 = vsel %vm1362, %v1321, 0
        %v1770 = vsel %vm1362, %v1322, 0
        %v1773 = vsel %vm1362, %v1323, 0
        %v1776 = vsel %vm1362, %v1324, 0
        %v1779 = vsel %vm1362, %v1325, 0
        %v1782 = vsel %vm1362, %v1326, 0
        %v1785 = vsel %vm1459, %v1327, 0
        %1787 = vmatprep.subr.mxu0 0.0
        %1788 = vmatpush1.msra.mxu0 %v1785
        %1789 = vmatprep.subr.mxu0 0.0
        %1790 = vmatpush1.msra.mxu0 0.0
        %1791 = vmatprep.subr.mxu0 0.0
        %1792 = vmatpush1.msra.mxu0 0.0
        %1793 = vmatprep.subr.mxu0 0.0
        %1794 = vmatpush1.msra.mxu0 0.0
        %1795 = vmatprep.subr.mxu0 0.0
        %1796 = vmatpush1.msra.mxu0 0.0
        %1797 = vmatprep.subr.mxu0 0.0
        %1798 = vmatpush1.msra.mxu0 0.0
        %1799 = vmatprep.subr.mxu0 0.0
        %1800 = vmatpush1.msra.mxu0 0.0
        %1801 = vmatprep.subr.mxu0 0.0
        %1802 = vmatpush1.msra.mxu0 0.0
        %1803 = vmatprep.subr.mxu0 0.0
        %1804 = vmatpush1.msra.mxu0 0.0
        %1805 = vmatprep.subr.mxu0 0.0
        %1806 = vmatpush1.msra.mxu0 0.0
        %1807 = vmatprep.subr.mxu0 0.0
        %1808 = vmatpush1.msra.mxu0 0.0
        %1809 = vmatprep.subr.mxu0 0.0
        %1810 = vmatpush1.msra.mxu0 0.0
        %1811 = vmatprep.subr.mxu0 0.0
        %1812 = vmatpush1.msra.mxu0 0.0
        %1813 = vmatprep.subr.mxu0 0.0
        %1814 = vmatpush1.msra.mxu0 0.0
        %1815 = vmatprep.subr.mxu0 0.0
        %1816 = vmatpush1.msra.mxu0 0.0
        %1817 = vmatprep.subr.mxu0 0.0
        %1818 = vmatpush1.msra.mxu0 0.0
        %1819 = vmatprep.subr.mxu0 0.0
        %1820 = vmatpush1.msra.mxu0 0.0
        %1821 = vmatprep.subr.mxu0 0.0
        %1822 = vmatpush1.msra.mxu0 0.0
        %1823 = vmatprep.subr.mxu0 0.0
        %1824 = vmatpush1.msra.mxu0 0.0
        %1825 = vmatprep.subr.mxu0 0.0
        %1826 = vmatpush1.msra.mxu0 0.0
        %1827 = vmatprep.subr.mxu0 0.0
        %1828 = vmatpush1.msra.mxu0 0.0
        %1829 = vmatprep.subr.mxu0 0.0
        %1830 = vmatpush1.msra.mxu0 0.0
        %1831 = vmatprep.subr.mxu0 0.0
        %1832 = vmatpush1.msra.mxu0 0.0
        %1833 = vmatprep.subr.mxu0 0.0
        %1834 = vmatpush1.msra.mxu0 0.0
        %1835 = vmatprep.subr.mxu0 0.0
        %1836 = vmatpush1.msra.mxu0 0.0
        %1837 = vmatprep.subr.mxu0 0.0
        %1838 = vmatpush1.msra.mxu0 0.0
        %1839 = vmatprep.subr.mxu0 0.0
        %1840 = vmatpush1.msra.mxu0 0.0
        %1841 = vmatprep.subr.mxu0 0.0
        %1842 = vmatpush1.msra.mxu0 0.0
        %1843 = vmatprep.subr.mxu0 0.0
        %1844 = vmatpush1.msra.mxu0 0.0
        %1845 = vmatprep.subr.mxu0 0.0
        %1846 = vmatpush1.msra.mxu0 0.0
        %1847 = vmatprep.subr.mxu0 0.0
        %1848 = vmatpush1.msra.mxu0 0.0
        %1849 = vmatprep.subr.mxu0 0.0
        %1850 = vmatpush1.msra.mxu0 0.0
        %1851 = vmatprep.mubr.f32.mxu0 0.0
        %1852 = vmatmul.mubr.f32.gmra.mrb[0].mxu0 %v1689
        %v1853 = vpop.f32.mrb[0].mxu0
        %v1854 = vadd.f32 %v1530, %v1853
        %v1855 = vpop.f32.mrb[0].mxu0
        %1856 = vmatprep.mubr.f32.mxu0 0.0
        %1857 = vmatmul.mubr.f32.gmra.mrb[0].mxu0 %v1692
        %v1858 = vpop.f32.mrb[0].mxu0
        %v1859 = vadd.f32 %v1535, %v1858
        %v1860 = vpop.f32.mrb[0].mxu0
        %1861 = vmatprep.mubr.f32.mxu0 0.0
        %1862 = vmatmul.mubr.f32.gmra.mrb[0].mxu0 %v1695
        %v1863 = vpop.f32.mrb[0].mxu0
        %v1864 = vadd.f32 %v1540, %v1863
        %v1865 = vpop.f32.mrb[0].mxu0
        %1866 = vmatprep.mubr.f32.mxu0 0.0
        %1867 = vmatmul.mubr.f32.gmra.mrb[0].mxu0 %v1698
        %v1868 = vpop.f32.mrb[0].mxu0
        %v1869 = vadd.f32 %v1545, %v1868
        %v1870 = vpop.f32.mrb[0].mxu0
        %1871 = vmatprep.mubr.f32.mxu0 0.0
        %1872 = vmatmul.mubr.f32.gmra.mrb[0].mxu0 %v1701
        %v1873 = vpop.f32.mrb[0].mxu0
        %v1874 = vadd.f32 %v1550, %v1873
        %v1875 = vpop.f32.mrb[0].mxu0
        %1876 = vmatprep.mubr.f32.mxu0 0.0
        %1877 = vmatmul.mubr.f32.gmra.mrb[0].mxu0 %v1704
        %v1878 = vpop.f32.mrb[0].mxu0
        %v1879 = vadd.f32 %v1555, %v1878
        %v1880 = vpop.f32.mrb[0].mxu0
        %1881 = vmatprep.mubr.f32.mxu0 0.0
        %1882 = vmatmul.mubr.f32.gmra.mrb[0].mxu0 %v1707
        %v1883 = vpop.f32.mrb[0].mxu0
        %v1884 = vadd.f32 %v1560, %v1883
        %v1885 = vpop.f32.mrb[0].mxu0
        %1886 = vmatprep.mubr.f32.mxu0 0.0
        %1887 = vmatmul.mubr.f32.gmra.mrb[0].mxu0 %v1710
        %v1888 = vpop.f32.mrb[0].mxu0
        %v1889 = vadd.f32 %v1565, %v1888
        %v1890 = vpop.f32.mrb[0].mxu0
        %1891 = vmatprep.mubr.f32.mxu0 0.0
        %1892 = vmatmul.mubr.f32.gmra.mrb[0].mxu0 %v1713
        %v1893 = vpop.f32.mrb[0].mxu0
        %v1894 = vadd.f32 %v1570, %v1893
        %v1895 = vpop.f32.mrb[0].mxu0
        %1896 = vmatprep.mubr.f32.mxu0 0.0
        %1897 = vmatmul.mubr.f32.gmra.mrb[0].mxu0 %v1716
        %v1898 = vpop.f32.mrb[0].mxu0
        %v1899 = vadd.f32 %v1575, %v1898
        %v1900 = vpop.f32.mrb[0].mxu0
        %1901 = vmatprep.mubr.f32.mxu0 0.0
        %1902 = vmatmul.mubr.f32.gmra.mrb[0].mxu0 %v1719
        %v1903 = vpop.f32.mrb[0].mxu0
        %v1904 = vadd.f32 %v1580, %v1903
        %v1905 = vpop.f32.mrb[0].mxu0
        %1906 = vmatprep.mubr.f32.mxu0 0.0
        %1907 = vmatmul.mubr.f32.gmra.mrb[0].mxu0 %v1722
        %v1908 = vpop.f32.mrb[0].mxu0
        %v1909 = vadd.f32 %v1585, %v1908
        %v1910 = vpop.f32.mrb[0].mxu0
        %1911 = vmatprep.mubr.f32.mxu0 0.0
        %1912 = vmatmul.mubr.f32.gmra.mrb[0].mxu0 %v1725
        %v1913 = vpop.f32.mrb[0].mxu0
        %v1914 = vadd.f32 %v1590, %v1913
        %v1915 = vpop.f32.mrb[0].mxu0
        %1916 = vmatprep.mubr.f32.mxu0 0.0
        %1917 = vmatmul.mubr.f32.gmra.mrb[0].mxu0 %v1728
        %v1918 = vpop.f32.mrb[0].mxu0
        %v1919 = vadd.f32 %v1595, %v1918
        %v1920 = vpop.f32.mrb[0].mxu0
        %1921 = vmatprep.mubr.f32.mxu0 0.0
        %1922 = vmatmul.mubr.f32.gmra.mrb[0].mxu0 %v1731
        %v1923 = vpop.f32.mrb[0].mxu0
        %v1924 = vadd.f32 %v1600, %v1923
        %v1925 = vpop.f32.mrb[0].mxu0
        %1926 = vmatprep.mubr.f32.mxu0 0.0
        %1927 = vmatmul.mubr.f32.gmra.mrb[0].mxu0 %v1734
        %v1928 = vpop.f32.mrb[0].mxu0
        %v1929 = vadd.f32 %v1605, %v1928
        %v1930 = vpop.f32.mrb[0].mxu0
        %1931 = vmatprep.mubr.f32.mxu0 0.0
        %1932 = vmatmul.mubr.f32.gmra.mrb[0].mxu0 %v1737
        %v1933 = vpop.f32.mrb[0].mxu0
        %v1934 = vadd.f32 %v1610, %v1933
        %v1935 = vpop.f32.mrb[0].mxu0
        %1936 = vmatprep.mubr.f32.mxu0 0.0
        %1937 = vmatmul.mubr.f32.gmra.mrb[0].mxu0 %v1740
        %v1938 = vpop.f32.mrb[0].mxu0
        %v1939 = vadd.f32 %v1615, %v1938
        %v1940 = vpop.f32.mrb[0].mxu0
        %1941 = vmatprep.mubr.f32.mxu0 0.0
        %1942 = vmatmul.mubr.f32.gmra.mrb[0].mxu0 %v1743
        %v1943 = vpop.f32.mrb[0].mxu0
        %v1944 = vadd.f32 %v1620, %v1943
        %v1945 = vpop.f32.mrb[0].mxu0
        %1946 = vmatprep.mubr.f32.mxu0 0.0
        %1947 = vmatmul.mubr.f32.gmra.mrb[0].mxu0 %v1746
        %v1948 = vpop.f32.mrb[0].mxu0
        %v1949 = vadd.f32 %v1625, %v1948
        %v1950 = vpop.f32.mrb[0].mxu0
        %1951 = vmatprep.mubr.f32.mxu0 0.0
        %1952 = vmatmul.mubr.f32.gmra.mrb[0].mxu0 %v1749
        %v1953 = vpop.f32.mrb[0].mxu0
        %v1954 = vadd.f32 %v1630, %v1953
        %v1955 = vpop.f32.mrb[0].mxu0
        %1956 = vmatprep.mubr.f32.mxu0 0.0
        %1957 = vmatmul.mubr.f32.gmra.mrb[0].mxu0 %v1752
        %v1958 = vpop.f32.mrb[0].mxu0
        %v1959 = vadd.f32 %v1635, %v1958
        %v1960 = vpop.f32.mrb[0].mxu0
        %1961 = vmatprep.mubr.f32.mxu0 0.0
        %1962 = vmatmul.mubr.f32.gmra.mrb[0].mxu0 %v1755
        %v1963 = vpop.f32.mrb[0].mxu0
        %v1964 = vadd.f32 %v1640, %v1963
        %v1965 = vpop.f32.mrb[0].mxu0
        %1966 = vmatprep.mubr.f32.mxu0 0.0
        %1967 = vmatmul.mubr.f32.gmra.mrb[0].mxu0 %v1758
        %v1968 = vpop.f32.mrb[0].mxu0
        %v1969 = vadd.f32 %v1645, %v1968
        %v1970 = vpop.f32.mrb[0].mxu0
        %1971 = vmatprep.mubr.f32.mxu0 0.0
        %1972 = vmatmul.mubr.f32.gmra.mrb[0].mxu0 %v1761
        %v1973 = vpop.f32.mrb[0].mxu0
        %v1974 = vadd.f32 %v1650, %v1973
        %v1975 = vpop.f32.mrb[0].mxu0
        %1976 = vmatprep.mubr.f32.mxu0 0.0
        %1977 = vmatmul.mubr.f32.gmra.mrb[0].mxu0 %v1764
        %v1978 = vpop.f32.mrb[0].mxu0
        %v1979 = vadd.f32 %v1655, %v1978
        %v1980 = vpop.f32.mrb[0].mxu0
        %1981 = vmatprep.mubr.f32.mxu0 0.0
        %1982 = vmatmul.mubr.f32.gmra.mrb[0].mxu0 %v1767
        %v1983 = vpop.f32.mrb[0].mxu0
        %v1984 = vadd.f32 %v1660, %v1983
        %v1985 = vpop.f32.mrb[0].mxu0
        %1986 = vmatprep.mubr.f32.mxu0 0.0
        %1987 = vmatmul.mubr.f32.gmra.mrb[0].mxu0 %v1770
        %v1988 = vpop.f32.mrb[0].mxu0
        %v1989 = vadd.f32 %v1665, %v1988
        %v1990 = vpop.f32.mrb[0].mxu0
        %1991 = vmatprep.mubr.f32.mxu0 0.0
        %1992 = vmatmul.mubr.f32.gmra.mrb[0].mxu0 %v1773
        %v1993 = vpop.f32.mrb[0].mxu0
        %v1994 = vadd.f32 %v1670, %v1993
        %v1995 = vpop.f32.mrb[0].mxu0
        %1996 = vmatprep.mubr.f32.mxu0 0.0
        %1997 = vmatmul.mubr.f32.gmra.mrb[0].mxu0 %v1776
        %v1998 = vpop.f32.mrb[0].mxu0
        %v1999 = vadd.f32 %v1675, %v1998
        %v2000 = vpop.f32.mrb[0].mxu0
        %2001 = vmatprep.mubr.f32.mxu0 0.0
        %2002 = vmatmul.mubr.f32.gmra.mrb[0].mxu0 %v1779
        %v2003 = vpop.f32.mrb[0].mxu0
        %v2004 = vadd.f32 %v1680, %v2003
        %v2005 = vpop.f32.mrb[0].mxu0
        %2006 = vmatprep.mubr.f32.mxu0 0.0
        %2007 = vmatmul.mubr.f32.gmra.mrb[0].mxu0 %v1782
        %v2008 = vpop.f32.mrb[0].mxu0
        %v2009 = vadd.f32 %v1685, %v2008
        %v2010 = vpop.f32.mrb[0].mxu0
        %2011 = vdwg.mxu0
        %v2012 = vld [vmem:[#allocation2 + $0x19] sm:$0xff]
        %v2013 = vld [vmem:[#allocation2 + $0x21] sm:$0xff]
        %v2014 = vld [vmem:[#allocation2 + $0x29] sm:$0xff]
        %v2015 = vld [vmem:[#allocation2 + $0x31] sm:$0xff]
        %v2016 = vld [vmem:[#allocation2 + $0x39] sm:$0xff]
        %v2017 = vld [vmem:[#allocation2 + $0x41] sm:$0xff]
        %v2018 = vld [vmem:[#allocation2 + $0x49] sm:$0xff]
        %v2019 = vld [vmem:[#allocation2 + $0x51] sm:$0xff]
        %v2020 = vld [vmem:[#allocation2 + $0x59] sm:$0xff]
        %v2021 = vld [vmem:[#allocation2 + $0x61] sm:$0xff]
        %v2022 = vld [vmem:[#allocation2 + $0x69] sm:$0xff]
        %v2023 = vld [vmem:[#allocation2 + $0x71] sm:$0xff]
        %v2024 = vld [vmem:[#allocation2 + $0x79] sm:$0xff]
        %v2025 = vld [vmem:[#allocation2 + $0x81] sm:$0xff]
        %v2026 = vld [vmem:[#allocation2 + $0x89] sm:$0xff]
        %v2027 = vld [vmem:[#allocation2 + $0x91] sm:$0xff]
        %v2028 = vld [vmem:[#allocation2 + $0x99] sm:$0xff]
        %v2029 = vld [vmem:[#allocation2 + $0xa1] sm:$0xff]
        %v2030 = vld [vmem:[#allocation2 + $0xa9] sm:$0xff]
        %v2031 = vld [vmem:[#allocation2 + $0xb1] sm:$0xff]
        %v2032 = vld [vmem:[#allocation2 + $0xb9] sm:$0xff]
        %v2033 = vld [vmem:[#allocation2 + $0xc1] sm:$0xff]
        %v2034 = vld [vmem:[#allocation2 + $0xc9] sm:$0xff]
        %v2035 = vld [vmem:[#allocation2 + $0xd1] sm:$0xff]
        %v2036 = vld [vmem:[#allocation2 + $0xd9] sm:$0xff]
        %v2037 = vld [vmem:[#allocation2 + $0xe1] sm:$0xff]
        %v2038 = vld [vmem:[#allocation2 + $0xe9] sm:$0xff]
        %v2039 = vld [vmem:[#allocation2 + $0xf1] sm:$0xff]
        %v2040 = vld [vmem:[#allocation2 + $0xf9] sm:$0xff]
        %v2041 = vld [vmem:[#allocation2 + $0x101] sm:$0xff]
        %v2042 = vld [vmem:[#allocation2 + $0x109] sm:$0xff]
        %v2043 = vld [vmem:[#allocation2 + $0x111] sm:$0xff]
        %v2044 = vsel %vm782, 1, 0
        %v2045 = vsel %vm783, 1, 0
        %v2046 = vsel %vm784, 1, 0
        %v2047 = vsel %vm785, 1, 0
        %v2048 = vsel %vm786, 1, 0
        %v2049 = vsel %vm787, 1, 0
        %v2050 = vsel %vm788, 1, 0
        %v2051 = vsel %vm789, 1, 0
        %v2052 = vsel %vm790, 1, 0
        %v2053 = vsel %vm791, 1, 0
        %v2054 = vsel %vm792, 1, 0
        %v2055 = vsel %vm793, 1, 0
        %v2056 = vsel %vm794, 1, 0
        %v2057 = vsel %vm795, 1, 0
        %v2058 = vsel %vm796, 1, 0
        %v2059 = vsel %vm797, 1, 0
        %v2060 = vsel %vm798, 1, 0
        %v2061 = vsel %vm799, 1, 0
        %v2062 = vsel %vm800, 1, 0
        %v2063 = vsel %vm801, 1, 0
        %v2064 = vsel %vm802, 1, 0
        %v2065 = vsel %vm803, 1, 0
        %v2066 = vsel %vm804, 1, 0
        %v2067 = vsel %vm805, 1, 0
        %v2068 = vsel %vm806, 1, 0
        %v2069 = vsel %vm807, 1, 0
        %v2070 = vsel %vm808, 1, 0
        %v2071 = vsel %vm809, 1, 0
        %v2072 = vsel %vm810, 1, 0
        %v2073 = vsel %vm811, 1, 0
        %v2074 = vsel %vm812, 1, 0
        %v2075 = vsel %vm813, 1, 0
        %vm2076 = vcmp.eq.s32.totalorder %v2044, 1
        %vm2077 = vcmp.eq.s32.totalorder %v2045, 1
        %vm2078 = vcmp.eq.s32.totalorder %v2046, 1
        %vm2079 = vcmp.eq.s32.totalorder %v2047, 1
        %vm2080 = vcmp.eq.s32.totalorder %v2048, 1
        %vm2081 = vcmp.eq.s32.totalorder %v2049, 1
        %vm2082 = vcmp.eq.s32.totalorder %v2050, 1
        %vm2083 = vcmp.eq.s32.totalorder %v2051, 1
        %vm2084 = vcmp.eq.s32.totalorder %v2052, 1
        %vm2085 = vcmp.eq.s32.totalorder %v2053, 1
        %vm2086 = vcmp.eq.s32.totalorder %v2054, 1
        %vm2087 = vcmp.eq.s32.totalorder %v2055, 1
        %vm2088 = vcmp.eq.s32.totalorder %v2056, 1
        %vm2089 = vcmp.eq.s32.totalorder %v2057, 1
        %vm2090 = vcmp.eq.s32.totalorder %v2058, 1
        %vm2091 = vcmp.eq.s32.totalorder %v2059, 1
        %vm2092 = vcmp.eq.s32.totalorder %v2060, 1
        %vm2093 = vcmp.eq.s32.totalorder %v2061, 1
        %vm2094 = vcmp.eq.s32.totalorder %v2062, 1
        %vm2095 = vcmp.eq.s32.totalorder %v2063, 1
        %vm2096 = vcmp.eq.s32.totalorder %v2064, 1
        %vm2097 = vcmp.eq.s32.totalorder %v2065, 1
        %vm2098 = vcmp.eq.s32.totalorder %v2066, 1
        %vm2099 = vcmp.eq.s32.totalorder %v2067, 1
        %vm2100 = vcmp.eq.s32.totalorder %v2068, 1
        %vm2101 = vcmp.eq.s32.totalorder %v2069, 1
        %vm2102 = vcmp.eq.s32.totalorder %v2070, 1
        %vm2103 = vcmp.eq.s32.totalorder %v2071, 1
        %vm2104 = vcmp.eq.s32.totalorder %v2072, 1
        %vm2105 = vcmp.eq.s32.totalorder %v2073, 1
        %vm2106 = vcmp.eq.s32.totalorder %v2074, 1
        %vm2107 = vcmp.eq.s32.totalorder %v2075, 1
        %v2108 = vsel %vm2076, %v2012, 0.0
        %v2109 = vsel %vm2077, %v2013, 0.0
        %v2110 = vsel %vm2078, %v2014, 0.0
        %v2111 = vsel %vm2079, %v2015, 0.0
        %v2112 = vsel %vm2080, %v2016, 0.0
        %v2113 = vsel %vm2081, %v2017, 0.0
        %v2114 = vsel %vm2082, %v2018, 0.0
        %v2115 = vsel %vm2083, %v2019, 0.0
        %v2116 = vsel %vm2084, %v2020, 0.0
        %v2117 = vsel %vm2085, %v2021, 0.0
        %v2118 = vsel %vm2086, %v2022, 0.0
        %v2119 = vsel %vm2087, %v2023, 0.0
        %v2120 = vsel %vm2088, %v2024, 0.0
        %v2121 = vsel %vm2089, %v2025, 0.0
        %v2122 = vsel %vm2090, %v2026, 0.0
        %v2123 = vsel %vm2091, %v2027, 0.0
        %v2124 = vsel %vm2092, %v2028, 0.0
        %v2125 = vsel %vm2093, %v2029, 0.0
        %v2126 = vsel %vm2094, %v2030, 0.0
        %v2127 = vsel %vm2095, %v2031, 0.0
        %v2128 = vsel %vm2096, %v2032, 0.0
        %v2129 = vsel %vm2097, %v2033, 0.0
        %v2130 = vsel %vm2098, %v2034, 0.0
        %v2131 = vsel %vm2099, %v2035, 0.0
        %v2132 = vsel %vm2100, %v2036, 0.0
        %v2133 = vsel %vm2101, %v2037, 0.0
        %v2134 = vsel %vm2102, %v2038, 0.0
        %v2135 = vsel %vm2103, %v2039, 0.0
        %v2136 = vsel %vm2104, %v2040, 0.0
        %v2137 = vsel %vm2105, %v2041, 0.0
        %v2138 = vsel %vm2106, %v2042, 0.0
        %v2139 = vsel %vm2107, %v2043, 0.0
        %s2140 = scalar_lea.vmem %s1, 8
        %v2141 = vld [vmem:[%s2140] sm:$0x7]
        %v2143 = vsel %vm1362, %v2108, 0
        %v2146 = vsel %vm1362, %v2109, 0
        %v2149 = vsel %vm1362, %v2110, 0
        %v2152 = vsel %vm1362, %v2111, 0
        %v2155 = vsel %vm1362, %v2112, 0
        %v2158 = vsel %vm1362, %v2113, 0
        %v2161 = vsel %vm1362, %v2114, 0
        %v2164 = vsel %vm1362, %v2115, 0
        %v2167 = vsel %vm1362, %v2116, 0
        %v2170 = vsel %vm1362, %v2117, 0
        %v2173 = vsel %vm1362, %v2118, 0
        %v2176 = vsel %vm1362, %v2119, 0
        %v2179 = vsel %vm1362, %v2120, 0
        %v2182 = vsel %vm1362, %v2121, 0
        %v2185 = vsel %vm1362, %v2122, 0
        %v2188 = vsel %vm1362, %v2123, 0
        %v2191 = vsel %vm1362, %v2124, 0
        %v2194 = vsel %vm1362, %v2125, 0
        %v2197 = vsel %vm1362, %v2126, 0
        %v2200 = vsel %vm1362, %v2127, 0
        %v2203 = vsel %vm1362, %v2128, 0
        %v2206 = vsel %vm1362, %v2129, 0
        %v2209 = vsel %vm1362, %v2130, 0
        %v2212 = vsel %vm1362, %v2131, 0
        %v2215 = vsel %vm1362, %v2132, 0
        %v2218 = vsel %vm1362, %v2133, 0
        %v2221 = vsel %vm1362, %v2134, 0
        %v2224 = vsel %vm1362, %v2135, 0
        %v2227 = vsel %vm1362, %v2136, 0
        %v2230 = vsel %vm1362, %v2137, 0
        %v2233 = vsel %vm1362, %v2138, 0
        %v2236 = vsel %vm1362, %v2139, 0
        %v2239 = vsel %vm1459, %v2141, 0
        %2241 = vmatprep.subr.mxu0 0.0
        %2242 = vmatpush1.msra.mxu0 %v2239
        %2243 = vmatprep.subr.mxu0 0.0
        %2244 = vmatpush1.msra.mxu0 0.0
        %2245 = vmatprep.subr.mxu0 0.0
        %2246 = vmatpush1.msra.mxu0 0.0
        %2247 = vmatprep.subr.mxu0 0.0
        %2248 = vmatpush1.msra.mxu0 0.0
        %2249 = vmatprep.subr.mxu0 0.0
        %2250 = vmatpush1.msra.mxu0 0.0
        %2251 = vmatprep.subr.mxu0 0.0
        %2252 = vmatpush1.msra.mxu0 0.0
        %2253 = vmatprep.subr.mxu0 0.0
        %2254 = vmatpush1.msra.mxu0 0.0
        %2255 = vmatprep.subr.mxu0 0.0
        %2256 = vmatpush1.msra.mxu0 0.0
        %2257 = vmatprep.subr.mxu0 0.0
        %2258 = vmatpush1.msra.mxu0 0.0
        %2259 = vmatprep.subr.mxu0 0.0
        %2260 = vmatpush1.msra.mxu0 0.0
        %2261 = vmatprep.subr.mxu0 0.0
        %2262 = vmatpush1.msra.mxu0 0.0
        %2263 = vmatprep.subr.mxu0 0.0
        %2264 = vmatpush1.msra.mxu0 0.0
        %2265 = vmatprep.subr.mxu0 0.0
        %2266 = vmatpush1.msra.mxu0 0.0
        %2267 = vmatprep.subr.mxu0 0.0
        %2268 = vmatpush1.msra.mxu0 0.0
        %2269 = vmatprep.subr.mxu0 0.0
        %2270 = vmatpush1.msra.mxu0 0.0
        %2271 = vmatprep.subr.mxu0 0.0
        %2272 = vmatpush1.msra.mxu0 0.0
        %2273 = vmatprep.subr.mxu0 0.0
        %2274 = vmatpush1.msra.mxu0 0.0
        %2275 = vmatprep.subr.mxu0 0.0
        %2276 = vmatpush1.msra.mxu0 0.0
        %2277 = vmatprep.subr.mxu0 0.0
        %2278 = vmatpush1.msra.mxu0 0.0
        %2279 = vmatprep.subr.mxu0 0.0
        %2280 = vmatpush1.msra.mxu0 0.0
        %2281 = vmatprep.subr.mxu0 0.0
        %2282 = vmatpush1.msra.mxu0 0.0
        %2283 = vmatprep.subr.mxu0 0.0
        %2284 = vmatpush1.msra.mxu0 0.0
        %2285 = vmatprep.subr.mxu0 0.0
        %2286 = vmatpush1.msra.mxu0 0.0
        %2287 = vmatprep.subr.mxu0 0.0
        %2288 = vmatpush1.msra.mxu0 0.0
        %2289 = vmatprep.subr.mxu0 0.0
        %2290 = vmatpush1.msra.mxu0 0.0
        %2291 = vmatprep.subr.mxu0 0.0
        %2292 = vmatpush1.msra.mxu0 0.0
        %2293 = vmatprep.subr.mxu0 0.0
        %2294 = vmatpush1.msra.mxu0 0.0
        %2295 = vmatprep.subr.mxu0 0.0
        %2296 = vmatpush1.msra.mxu0 0.0
        %2297 = vmatprep.subr.mxu0 0.0
        %2298 = vmatpush1.msra.mxu0 0.0
        %2299 = vmatprep.subr.mxu0 0.0
        %2300 = vmatpush1.msra.mxu0 0.0
        %2301 = vmatprep.subr.mxu0 0.0
        %2302 = vmatpush1.msra.mxu0 0.0
        %2303 = vmatprep.subr.mxu0 0.0
        %2304 = vmatpush1.msra.mxu0 0.0
        %2305 = vmatprep.mubr.f32.mxu0 0.0
        %2306 = vmatmul.mubr.f32.gmra.mrb[0].mxu0 %v2143
        %v2307 = vpop.f32.mrb[0].mxu0
        %v2308 = vadd.f32 0.0, %v2307
        %v2309 = vpop.f32.mrb[0].mxu0
        %2310 = vmatprep.mubr.f32.mxu0 0.0
        %2311 = vmatmul.mubr.f32.gmra.mrb[0].mxu0 %v2146
        %v2312 = vpop.f32.mrb[0].mxu0
        %v2313 = vadd.f32 0.0, %v2312
        %v2314 = vpop.f32.mrb[0].mxu0
        %2315 = vmatprep.mubr.f32.mxu0 0.0
        %2316 = vmatmul.mubr.f32.gmra.mrb[0].mxu0 %v2149
        %v2317 = vpop.f32.mrb[0].mxu0
        %v2318 = vadd.f32 0.0, %v2317
        %v2319 = vpop.f32.mrb[0].mxu0
        %2320 = vmatprep.mubr.f32.mxu0 0.0
        %2321 = vmatmul.mubr.f32.gmra.mrb[0].mxu0 %v2152
        %v2322 = vpop.f32.mrb[0].mxu0
        %v2323 = vadd.f32 0.0, %v2322
        %v2324 = vpop.f32.mrb[0].mxu0
        %2325 = vmatprep.mubr.f32.mxu0 0.0
        %2326 = vmatmul.mubr.f32.gmra.mrb[0].mxu0 %v2155
        %v2327 = vpop.f32.mrb[0].mxu0
        %v2328 = vadd.f32 0.0, %v2327
        %v2329 = vpop.f32.mrb[0].mxu0
        %2330 = vmatprep.mubr.f32.mxu0 0.0
        %2331 = vmatmul.mubr.f32.gmra.mrb[0].mxu0 %v2158
        %v2332 = vpop.f32.mrb[0].mxu0
        %v2333 = vadd.f32 0.0, %v2332
        %v2334 = vpop.f32.mrb[0].mxu0
        %2335 = vmatprep.mubr.f32.mxu0 0.0
        %2336 = vmatmul.mubr.f32.gmra.mrb[0].mxu0 %v2161
        %v2337 = vpop.f32.mrb[0].mxu0
        %v2338 = vadd.f32 0.0, %v2337
        %v2339 = vpop.f32.mrb[0].mxu0
        %2340 = vmatprep.mubr.f32.mxu0 0.0
        %2341 = vmatmul.mubr.f32.gmra.mrb[0].mxu0 %v2164
        %v2342 = vpop.f32.mrb[0].mxu0
        %v2343 = vadd.f32 0.0, %v2342
        %v2344 = vpop.f32.mrb[0].mxu0
        %2345 = vmatprep.mubr.f32.mxu0 0.0
        %2346 = vmatmul.mubr.f32.gmra.mrb[0].mxu0 %v2167
        %v2347 = vpop.f32.mrb[0].mxu0
        %v2348 = vadd.f32 0.0, %v2347
        %v2349 = vpop.f32.mrb[0].mxu0
        %2350 = vmatprep.mubr.f32.mxu0 0.0
        %2351 = vmatmul.mubr.f32.gmra.mrb[0].mxu0 %v2170
        %v2352 = vpop.f32.mrb[0].mxu0
        %v2353 = vadd.f32 0.0, %v2352
        %v2354 = vpop.f32.mrb[0].mxu0
        %2355 = vmatprep.mubr.f32.mxu0 0.0
        %2356 = vmatmul.mubr.f32.gmra.mrb[0].mxu0 %v2173
        %v2357 = vpop.f32.mrb[0].mxu0
        %v2358 = vadd.f32 0.0, %v2357
        %v2359 = vpop.f32.mrb[0].mxu0
        %2360 = vmatprep.mubr.f32.mxu0 0.0
        %2361 = vmatmul.mubr.f32.gmra.mrb[0].mxu0 %v2176
        %v2362 = vpop.f32.mrb[0].mxu0
        %v2363 = vadd.f32 0.0, %v2362
        %v2364 = vpop.f32.mrb[0].mxu0
        %2365 = vmatprep.mubr.f32.mxu0 0.0
        %2366 = vmatmul.mubr.f32.gmra.mrb[0].mxu0 %v2179
        %v2367 = vpop.f32.mrb[0].mxu0
        %v2368 = vadd.f32 0.0, %v2367
        %v2369 = vpop.f32.mrb[0].mxu0
        %2370 = vmatprep.mubr.f32.mxu0 0.0
        %2371 = vmatmul.mubr.f32.gmra.mrb[0].mxu0 %v2182
        %v2372 = vpop.f32.mrb[0].mxu0
        %v2373 = vadd.f32 0.0, %v2372
        %v2374 = vpop.f32.mrb[0].mxu0
        %2375 = vmatprep.mubr.f32.mxu0 0.0
        %2376 = vmatmul.mubr.f32.gmra.mrb[0].mxu0 %v2185
        %v2377 = vpop.f32.mrb[0].mxu0
        %v2378 = vadd.f32 0.0, %v2377
        %v2379 = vpop.f32.mrb[0].mxu0
        %2380 = vmatprep.mubr.f32.mxu0 0.0
        %2381 = vmatmul.mubr.f32.gmra.mrb[0].mxu0 %v2188
        %v2382 = vpop.f32.mrb[0].mxu0
        %v2383 = vadd.f32 0.0, %v2382
        %v2384 = vpop.f32.mrb[0].mxu0
        %2385 = vmatprep.mubr.f32.mxu0 0.0
        %2386 = vmatmul.mubr.f32.gmra.mrb[0].mxu0 %v2191
        %v2387 = vpop.f32.mrb[0].mxu0
        %v2388 = vadd.f32 0.0, %v2387
        %v2389 = vpop.f32.mrb[0].mxu0
        %2390 = vmatprep.mubr.f32.mxu0 0.0
        %2391 = vmatmul.mubr.f32.gmra.mrb[0].mxu0 %v2194
        %v2392 = vpop.f32.mrb[0].mxu0
        %v2393 = vadd.f32 0.0, %v2392
        %v2394 = vpop.f32.mrb[0].mxu0
        %2395 = vmatprep.mubr.f32.mxu0 0.0
        %2396 = vmatmul.mubr.f32.gmra.mrb[0].mxu0 %v2197
        %v2397 = vpop.f32.mrb[0].mxu0
        %v2398 = vadd.f32 0.0, %v2397
        %v2399 = vpop.f32.mrb[0].mxu0
        %2400 = vmatprep.mubr.f32.mxu0 0.0
        %2401 = vmatmul.mubr.f32.gmra.mrb[0].mxu0 %v2200
        %v2402 = vpop.f32.mrb[0].mxu0
        %v2403 = vadd.f32 0.0, %v2402
        %v2404 = vpop.f32.mrb[0].mxu0
        %2405 = vmatprep.mubr.f32.mxu0 0.0
        %2406 = vmatmul.mubr.f32.gmra.mrb[0].mxu0 %v2203
        %v2407 = vpop.f32.mrb[0].mxu0
        %v2408 = vadd.f32 0.0, %v2407
        %v2409 = vpop.f32.mrb[0].mxu0
        %2410 = vmatprep.mubr.f32.mxu0 0.0
        %2411 = vmatmul.mubr.f32.gmra.mrb[0].mxu0 %v2206
        %v2412 = vpop.f32.mrb[0].mxu0
        %v2413 = vadd.f32 0.0, %v2412
        %v2414 = vpop.f32.mrb[0].mxu0
        %2415 = vmatprep.mubr.f32.mxu0 0.0
        %2416 = vmatmul.mubr.f32.gmra.mrb[0].mxu0 %v2209
        %v2417 = vpop.f32.mrb[0].mxu0
        %v2418 = vadd.f32 0.0, %v2417
        %v2419 = vpop.f32.mrb[0].mxu0
        %2420 = vmatprep.mubr.f32.mxu0 0.0
        %2421 = vmatmul.mubr.f32.gmra.mrb[0].mxu0 %v2212
        %v2422 = vpop.f32.mrb[0].mxu0
        %v2423 = vadd.f32 0.0, %v2422
        %v2424 = vpop.f32.mrb[0].mxu0
        %2425 = vmatprep.mubr.f32.mxu0 0.0
        %2426 = vmatmul.mubr.f32.gmra.mrb[0].mxu0 %v2215
        %v2427 = vpop.f32.mrb[0].mxu0
        %v2428 = vadd.f32 0.0, %v2427
        %v2429 = vpop.f32.mrb[0].mxu0
        %2430 = vmatprep.mubr.f32.mxu0 0.0
        %2431 = vmatmul.mubr.f32.gmra.mrb[0].mxu0 %v2218
        %v2432 = vpop.f32.mrb[0].mxu0
        %v2433 = vadd.f32 0.0, %v2432
        %v2434 = vpop.f32.mrb[0].mxu0
        %2435 = vmatprep.mubr.f32.mxu0 0.0
        %2436 = vmatmul.mubr.f32.gmra.mrb[0].mxu0 %v2221
        %v2437 = vpop.f32.mrb[0].mxu0
        %v2438 = vadd.f32 0.0, %v2437
        %v2439 = vpop.f32.mrb[0].mxu0
        %2440 = vmatprep.mubr.f32.mxu0 0.0
        %2441 = vmatmul.mubr.f32.gmra.mrb[0].mxu0 %v2224
        %v2442 = vpop.f32.mrb[0].mxu0
        %v2443 = vadd.f32 0.0, %v2442
        %v2444 = vpop.f32.mrb[0].mxu0
        %2445 = vmatprep.mubr.f32.mxu0 0.0
        %2446 = vmatmul.mubr.f32.gmra.mrb[0].mxu0 %v2227
        %v2447 = vpop.f32.mrb[0].mxu0
        %v2448 = vadd.f32 0.0, %v2447
        %v2449 = vpop.f32.mrb[0].mxu0
        %2450 = vmatprep.mubr.f32.mxu0 0.0
        %2451 = vmatmul.mubr.f32.gmra.mrb[0].mxu0 %v2230
        %v2452 = vpop.f32.mrb[0].mxu0
        %v2453 = vadd.f32 0.0, %v2452
        %v2454 = vpop.f32.mrb[0].mxu0
        %2455 = vmatprep.mubr.f32.mxu0 0.0
        %2456 = vmatmul.mubr.f32.gmra.mrb[0].mxu0 %v2233
        %v2457 = vpop.f32.mrb[0].mxu0
        %v2458 = vadd.f32 0.0, %v2457
        %v2459 = vpop.f32.mrb[0].mxu0
        %2460 = vmatprep.mubr.f32.mxu0 0.0
        %2461 = vmatmul.mubr.f32.gmra.mrb[0].mxu0 %v2236
        %v2462 = vpop.f32.mrb[0].mxu0
        %v2463 = vadd.f32 0.0, %v2462
        %v2464 = vpop.f32.mrb[0].mxu0
        %2465 = vdwg.mxu0
        %v2466 = vadd.f32 %v1854, %v2308
        %v2467 = vadd.f32 %v1859, %v2313
        %v2468 = vadd.f32 %v1864, %v2318
        %v2469 = vadd.f32 %v1869, %v2323
        %v2470 = vadd.f32 %v1874, %v2328
        %v2471 = vadd.f32 %v1879, %v2333
        %v2472 = vadd.f32 %v1884, %v2338
        %v2473 = vadd.f32 %v1889, %v2343
        %v2474 = vadd.f32 %v1894, %v2348
        %v2475 = vadd.f32 %v1899, %v2353
        %v2476 = vadd.f32 %v1904, %v2358
        %v2477 = vadd.f32 %v1909, %v2363
        %v2478 = vadd.f32 %v1914, %v2368
        %v2479 = vadd.f32 %v1919, %v2373
        %v2480 = vadd.f32 %v1924, %v2378
        %v2481 = vadd.f32 %v1929, %v2383
        %v2482 = vadd.f32 %v1934, %v2388
        %v2483 = vadd.f32 %v1939, %v2393
        %v2484 = vadd.f32 %v1944, %v2398
        %v2485 = vadd.f32 %v1949, %v2403
        %v2486 = vadd.f32 %v1954, %v2408
        %v2487 = vadd.f32 %v1959, %v2413
        %v2488 = vadd.f32 %v1964, %v2418
        %v2489 = vadd.f32 %v1969, %v2423
        %v2490 = vadd.f32 %v1974, %v2428
        %v2491 = vadd.f32 %v1979, %v2433
        %v2492 = vadd.f32 %v1984, %v2438
        %v2493 = vadd.f32 %v1989, %v2443
        %v2494 = vadd.f32 %v1994, %v2448
        %v2495 = vadd.f32 %v1999, %v2453
        %v2496 = vadd.f32 %v2004, %v2458
        %v2497 = vadd.f32 %v2009, %v2463
        %v2499 = vlaneseq
        %v2500 = vshrl.u32 %v2499, 7
        %v2501 = vsub.s32 0, %v2500
        %v2502 = vrot.slane %v870, %v2501
        %v2504 = vmul.f32 %v2466, %v2502
        %v2505 = vmul.f32 %v2467, %v2502
        %v2506 = vmul.f32 %v2468, %v2502
        %v2507 = vmul.f32 %v2469, %v2502
        %v2508 = vmul.f32 %v2470, %v2502
        %v2509 = vmul.f32 %v2471, %v2502
        %v2510 = vmul.f32 %v2472, %v2502
        %v2511 = vmul.f32 %v2473, %v2502
        %v2512 = vmul.f32 %v2474, %v2502
        %v2513 = vmul.f32 %v2475, %v2502
        %v2514 = vmul.f32 %v2476, %v2502
        %v2515 = vmul.f32 %v2477, %v2502
        %v2516 = vmul.f32 %v2478, %v2502
        %v2517 = vmul.f32 %v2479, %v2502
        %v2518 = vmul.f32 %v2480, %v2502
        %v2519 = vmul.f32 %v2481, %v2502
        %v2520 = vmul.f32 %v2482, %v2502
        %v2521 = vmul.f32 %v2483, %v2502
        %v2522 = vmul.f32 %v2484, %v2502
        %v2523 = vmul.f32 %v2485, %v2502
        %v2524 = vmul.f32 %v2486, %v2502
        %v2525 = vmul.f32 %v2487, %v2502
        %v2526 = vmul.f32 %v2488, %v2502
        %v2527 = vmul.f32 %v2489, %v2502
        %v2528 = vmul.f32 %v2490, %v2502
        %v2529 = vmul.f32 %v2491, %v2502
        %v2530 = vmul.f32 %v2492, %v2502
        %v2531 = vmul.f32 %v2493, %v2502
        %v2532 = vmul.f32 %v2494, %v2502
        %v2533 = vmul.f32 %v2495, %v2502
        %v2534 = vmul.f32 %v2496, %v2502
        %v2535 = vmul.f32 %v2497, %v2502
        %v2537 = vlaneseq
        %v2538 = vshrl.u32 %v2537, 7
        %v2539 = vsub.s32 0, %v2538
        %v2540 = vrot.slane %v871, %v2539
        %v2542 = vadd.f32 %v2504, %v2540
        %v2543 = vadd.f32 %v2505, %v2540
        %v2544 = vadd.f32 %v2506, %v2540
        %v2545 = vadd.f32 %v2507, %v2540
        %v2546 = vadd.f32 %v2508, %v2540
        %v2547 = vadd.f32 %v2509, %v2540
        %v2548 = vadd.f32 %v2510, %v2540
        %v2549 = vadd.f32 %v2511, %v2540
        %v2550 = vadd.f32 %v2512, %v2540
        %v2551 = vadd.f32 %v2513, %v2540
        %v2552 = vadd.f32 %v2514, %v2540
        %v2553 = vadd.f32 %v2515, %v2540
        %v2554 = vadd.f32 %v2516, %v2540
        %v2555 = vadd.f32 %v2517, %v2540
        %v2556 = vadd.f32 %v2518, %v2540
        %v2557 = vadd.f32 %v2519, %v2540
        %v2558 = vadd.f32 %v2520, %v2540
        %v2559 = vadd.f32 %v2521, %v2540
        %v2560 = vadd.f32 %v2522, %v2540
        %v2561 = vadd.f32 %v2523, %v2540
        %v2562 = vadd.f32 %v2524, %v2540
        %v2563 = vadd.f32 %v2525, %v2540
        %v2564 = vadd.f32 %v2526, %v2540
        %v2565 = vadd.f32 %v2527, %v2540
        %v2566 = vadd.f32 %v2528, %v2540
        %v2567 = vadd.f32 %v2529, %v2540
        %v2568 = vadd.f32 %v2530, %v2540
        %v2569 = vadd.f32 %v2531, %v2540
        %v2570 = vadd.f32 %v2532, %v2540
        %v2571 = vadd.f32 %v2533, %v2540
        %v2572 = vadd.f32 %v2534, %v2540
        %v2573 = vadd.f32 %v2535, %v2540
        %v2574 = vmax.f32 %v2542, 0.0
        %v2575 = vmax.f32 %v2543, 0.0
        %v2576 = vmax.f32 %v2544, 0.0
        %v2577 = vmax.f32 %v2545, 0.0
        %v2578 = vmax.f32 %v2546, 0.0
        %v2579 = vmax.f32 %v2547, 0.0
        %v2580 = vmax.f32 %v2548, 0.0
        %v2581 = vmax.f32 %v2549, 0.0
        %v2582 = vmax.f32 %v2550, 0.0
        %v2583 = vmax.f32 %v2551, 0.0
        %v2584 = vmax.f32 %v2552, 0.0
        %v2585 = vmax.f32 %v2553, 0.0
        %v2586 = vmax.f32 %v2554, 0.0
        %v2587 = vmax.f32 %v2555, 0.0
        %v2588 = vmax.f32 %v2556, 0.0
        %v2589 = vmax.f32 %v2557, 0.0
        %v2590 = vmax.f32 %v2558, 0.0
        %v2591 = vmax.f32 %v2559, 0.0
        %v2592 = vmax.f32 %v2560, 0.0
        %v2593 = vmax.f32 %v2561, 0.0
        %v2594 = vmax.f32 %v2562, 0.0
        %v2595 = vmax.f32 %v2563, 0.0
        %v2596 = vmax.f32 %v2564, 0.0
        %v2597 = vmax.f32 %v2565, 0.0
        %v2598 = vmax.f32 %v2566, 0.0
        %v2599 = vmax.f32 %v2567, 0.0
        %v2600 = vmax.f32 %v2568, 0.0
        %v2601 = vmax.f32 %v2569, 0.0
        %v2602 = vmax.f32 %v2570, 0.0
        %v2603 = vmax.f32 %v2571, 0.0
        %v2604 = vmax.f32 %v2572, 0.0
        %v2605 = vmax.f32 %v2573, 0.0
        %v2606 = vld [vmem:[%s5] sm:$0x1]
        %v2607 = vld [vmem:[%s6] sm:$0x1]
        %vm2608 = vcmask 261120
        %2609 = vst.msk [vmem:[#allocation2 + $0x18] sm:$0xff] %vm2608, 0.0
        %2610 = vst.msk [vmem:[#allocation2 + $0x20] sm:$0xff] %vm2608, 0.0
        %vm2611 = vcmask 785920
        %2612 = vst.msk [vmem:[#allocation2 + $0x108] sm:$0xff] %vm2611, 0.0
        %2613 = vst.msk [vmem:[#allocation2 + $0x110] sm:$0xff] %vm2611, 0.0
        %2614 = vst.msk [vmem:[#allocation2 + $0x28] sm:$0xff] %vm2608, %v2574
        %2615 = vst.msk [vmem:[#allocation2 + $0x30] sm:$0xff] %vm2608, %v2575
        %2616 = vst.msk [vmem:[#allocation2 + $0x38] sm:$0xff] %vm2608, %v2576
        %2617 = vst.msk [vmem:[#allocation2 + $0x40] sm:$0xff] %vm2608, %v2577
        %2618 = vst.msk [vmem:[#allocation2 + $0x48] sm:$0xff] %vm2608, %v2578
        %2619 = vst.msk [vmem:[#allocation2 + $0x50] sm:$0xff] %vm2608, %v2579
        %2620 = vst.msk [vmem:[#allocation2 + $0x58] sm:$0xff] %vm2608, %v2580
        %2621 = vst.msk [vmem:[#allocation2 + $0x60] sm:$0xff] %vm2608, %v2581
        %2622 = vst.msk [vmem:[#allocation2 + $0x68] sm:$0xff] %vm2608, %v2582
        %2623 = vst.msk [vmem:[#allocation2 + $0x70] sm:$0xff] %vm2608, %v2583
        %2624 = vst.msk [vmem:[#allocation2 + $0x78] sm:$0xff] %vm2608, %v2584
        %2625 = vst.msk [vmem:[#allocation2 + $0x80] sm:$0xff] %vm2608, %v2585
        %2626 = vst.msk [vmem:[#allocation2 + $0x88] sm:$0xff] %vm2608, %v2586
        %2627 = vst.msk [vmem:[#allocation2 + $0x90] sm:$0xff] %vm2608, %v2587
        %2628 = vst.msk [vmem:[#allocation2 + $0x98] sm:$0xff] %vm2608, %v2588
        %2629 = vst.msk [vmem:[#allocation2 + $0xa0] sm:$0xff] %vm2608, %v2589
        %2630 = vst.msk [vmem:[#allocation2 + $0xa8] sm:$0xff] %vm2608, %v2590
        %2631 = vst.msk [vmem:[#allocation2 + $0xb0] sm:$0xff] %vm2608, %v2591
        %2632 = vst.msk [vmem:[#allocation2 + $0xb8] sm:$0xff] %vm2608, %v2592
        %2633 = vst.msk [vmem:[#allocation2 + $0xc0] sm:$0xff] %vm2608, %v2593
        %2634 = vst.msk [vmem:[#allocation2 + $0xc8] sm:$0xff] %vm2608, %v2594
        %2635 = vst.msk [vmem:[#allocation2 + $0xd0] sm:$0xff] %vm2608, %v2595
        %2636 = vst.msk [vmem:[#allocation2 + $0xd8] sm:$0xff] %vm2608, %v2596
        %2637 = vst.msk [vmem:[#allocation2 + $0xe0] sm:$0xff] %vm2608, %v2597
        %2638 = vst.msk [vmem:[#allocation2 + $0xe8] sm:$0xff] %vm2608, %v2598
        %2639 = vst.msk [vmem:[#allocation2 + $0xf0] sm:$0xff] %vm2608, %v2599
        %2640 = vst.msk [vmem:[#allocation2 + $0xf8] sm:$0xff] %vm2608, %v2600
        %2641 = vst.msk [vmem:[#allocation2 + $0x100] sm:$0xff] %vm2608, %v2601
        %2642 = vst.msk [vmem:[#allocation2 + $0x108] sm:$0xff] %vm2608, %v2602
        %2643 = vst.msk [vmem:[#allocation2 + $0x110] sm:$0xff] %vm2608, %v2603
        %2644 = vst.msk [vmem:[#allocation2 + $0x118] sm:$0xff] %vm2608, %v2604
        %2645 = vst.msk [vmem:[#allocation2 + $0x120] sm:$0xff] %vm2608, %v2605
        %2678 = vrot.lane.b32.xlu0 %v2574, 32
        %v2679 = vpop.permute.xlu0 %2678
        %2680 = vrot.lane.b32.xlu0 %v2575, 32
        %v2681 = vpop.permute.xlu0 %2680
        %2682 = vrot.lane.b32.xlu0 %v2576, 32
        %v2683 = vpop.permute.xlu0 %2682
        %2684 = vrot.lane.b32.xlu0 %v2577, 32
        %v2685 = vpop.permute.xlu0 %2684
        %2686 = vrot.lane.b32.xlu0 %v2578, 32
        %v2687 = vpop.permute.xlu0 %2686
        %2688 = vrot.lane.b32.xlu0 %v2579, 32
        %v2689 = vpop.permute.xlu0 %2688
        %2690 = vrot.lane.b32.xlu0 %v2580, 32
        %v2691 = vpop.permute.xlu0 %2690
        %2692 = vrot.lane.b32.xlu0 %v2581, 32
        %v2693 = vpop.permute.xlu0 %2692
        %2694 = vrot.lane.b32.xlu0 %v2582, 32
        %v2695 = vpop.permute.xlu0 %2694
        %2696 = vrot.lane.b32.xlu0 %v2583, 32
        %v2697 = vpop.permute.xlu0 %2696
        %2698 = vrot.lane.b32.xlu0 %v2584, 32
        %v2699 = vpop.permute.xlu0 %2698
        %2700 = vrot.lane.b32.xlu0 %v2585, 32
        %v2701 = vpop.permute.xlu0 %2700
        %2702 = vrot.lane.b32.xlu0 %v2586, 32
        %v2703 = vpop.permute.xlu0 %2702
        %2704 = vrot.lane.b32.xlu0 %v2587, 32
        %v2705 = vpop.permute.xlu0 %2704
        %2706 = vrot.lane.b32.xlu0 %v2588, 32
        %v2707 = vpop.permute.xlu0 %2706
        %2708 = vrot.lane.b32.xlu0 %v2589, 32
        %v2709 = vpop.permute.xlu0 %2708
        %2710 = vrot.lane.b32.xlu0 %v2590, 32
        %v2711 = vpop.permute.xlu0 %2710
        %2712 = vrot.lane.b32.xlu0 %v2591, 32
        %v2713 = vpop.permute.xlu0 %2712
        %2714 = vrot.lane.b32.xlu0 %v2592, 32
        %v2715 = vpop.permute.xlu0 %2714
        %2716 = vrot.lane.b32.xlu0 %v2593, 32
        %v2717 = vpop.permute.xlu0 %2716
        %2718 = vrot.lane.b32.xlu0 %v2594, 32
        %v2719 = vpop.permute.xlu0 %2718
        %2720 = vrot.lane.b32.xlu0 %v2595, 32
        %v2721 = vpop.permute.xlu0 %2720
        %2722 = vrot.lane.b32.xlu0 %v2596, 32
        %v2723 = vpop.permute.xlu0 %2722
        %2724 = vrot.lane.b32.xlu0 %v2597, 32
        %v2725 = vpop.permute.xlu0 %2724
        %2726 = vrot.lane.b32.xlu0 %v2598, 32
        %v2727 = vpop.permute.xlu0 %2726
        %2728 = vrot.lane.b32.xlu0 %v2599, 32
        %v2729 = vpop.permute.xlu0 %2728
        %2730 = vrot.lane.b32.xlu0 %v2600, 32
        %v2731 = vpop.permute.xlu0 %2730
        %2732 = vrot.lane.b32.xlu0 %v2601, 32
        %v2733 = vpop.permute.xlu0 %2732
        %2734 = vrot.lane.b32.xlu0 %v2602, 32
        %v2735 = vpop.permute.xlu0 %2734
        %2736 = vrot.lane.b32.xlu0 %v2603, 32
        %v2737 = vpop.permute.xlu0 %2736
        %2738 = vrot.lane.b32.xlu0 %v2604, 32
        %v2739 = vpop.permute.xlu0 %2738
        %2740 = vrot.lane.b32.xlu0 %v2605, 32
        %v2741 = vpop.permute.xlu0 %2740
        %vm2774 = vcmask 523520
        %2775 = vst.msk [vmem:[#allocation2 + $0x18] sm:$0xff] %vm2774, %v2679
        %2776 = vst.msk [vmem:[#allocation2 + $0x20] sm:$0xff] %vm2774, %v2681
        %2777 = vst.msk [vmem:[#allocation2 + $0x28] sm:$0xff] %vm2774, %v2683
        %2778 = vst.msk [vmem:[#allocation2 + $0x30] sm:$0xff] %vm2774, %v2685
        %2779 = vst.msk [vmem:[#allocation2 + $0x38] sm:$0xff] %vm2774, %v2687
        %2780 = vst.msk [vmem:[#allocation2 + $0x40] sm:$0xff] %vm2774, %v2689
        %2781 = vst.msk [vmem:[#allocation2 + $0x48] sm:$0xff] %vm2774, %v2691
        %2782 = vst.msk [vmem:[#allocation2 + $0x50] sm:$0xff] %vm2774, %v2693
        %2783 = vst.msk [vmem:[#allocation2 + $0x58] sm:$0xff] %vm2774, %v2695
        %2784 = vst.msk [vmem:[#allocation2 + $0x60] sm:$0xff] %vm2774, %v2697
        %2785 = vst.msk [vmem:[#allocation2 + $0x68] sm:$0xff] %vm2774, %v2699
        %2786 = vst.msk [vmem:[#allocation2 + $0x70] sm:$0xff] %vm2774, %v2701
        %2787 = vst.msk [vmem:[#allocation2 + $0x78] sm:$0xff] %vm2774, %v2703
        %2788 = vst.msk [vmem:[#allocation2 + $0x80] sm:$0xff] %vm2774, %v2705
        %2789 = vst.msk [vmem:[#allocation2 + $0x88] sm:$0xff] %vm2774, %v2707
        %2790 = vst.msk [vmem:[#allocation2 + $0x90] sm:$0xff] %vm2774, %v2709
        %2791 = vst.msk [vmem:[#allocation2 + $0x98] sm:$0xff] %vm2774, %v2711
        %2792 = vst.msk [vmem:[#allocation2 + $0xa0] sm:$0xff] %vm2774, %v2713
        %2793 = vst.msk [vmem:[#allocation2 + $0xa8] sm:$0xff] %vm2774, %v2715
        %2794 = vst.msk [vmem:[#allocation2 + $0xb0] sm:$0xff] %vm2774, %v2717
        %2795 = vst.msk [vmem:[#allocation2 + $0xb8] sm:$0xff] %vm2774, %v2719
        %2796 = vst.msk [vmem:[#allocation2 + $0xc0] sm:$0xff] %vm2774, %v2721
        %2797 = vst.msk [vmem:[#allocation2 + $0xc8] sm:$0xff] %vm2774, %v2723
        %2798 = vst.msk [vmem:[#allocation2 + $0xd0] sm:$0xff] %vm2774, %v2725
        %2799 = vst.msk [vmem:[#allocation2 + $0xd8] sm:$0xff] %vm2774, %v2727
        %2800 = vst.msk [vmem:[#allocation2 + $0xe0] sm:$0xff] %vm2774, %v2729
        %2801 = vst.msk [vmem:[#allocation2 + $0xe8] sm:$0xff] %vm2774, %v2731
        %2802 = vst.msk [vmem:[#allocation2 + $0xf0] sm:$0xff] %vm2774, %v2733
        %2803 = vst.msk [vmem:[#allocation2 + $0xf8] sm:$0xff] %vm2774, %v2735
        %2804 = vst.msk [vmem:[#allocation2 + $0x100] sm:$0xff] %vm2774, %v2737
        %2805 = vst.msk [vmem:[#allocation2 + $0x108] sm:$0xff] %vm2774, %v2739
        %2806 = vst.msk [vmem:[#allocation2 + $0x110] sm:$0xff] %vm2774, %v2741
        %2807 = vrot.lane.b32.xlu0 %v2574, 64
        %v2808 = vpop.permute.xlu0 %2807
        %2809 = vrot.lane.b32.xlu0 %v2575, 64
        %v2810 = vpop.permute.xlu0 %2809
        %2811 = vrot.lane.b32.xlu0 %v2576, 64
        %v2812 = vpop.permute.xlu0 %2811
        %2813 = vrot.lane.b32.xlu0 %v2577, 64
        %v2814 = vpop.permute.xlu0 %2813
        %2815 = vrot.lane.b32.xlu0 %v2578, 64
        %v2816 = vpop.permute.xlu0 %2815
        %2817 = vrot.lane.b32.xlu0 %v2579, 64
        %v2818 = vpop.permute.xlu0 %2817
        %2819 = vrot.lane.b32.xlu0 %v2580, 64
        %v2820 = vpop.permute.xlu0 %2819
        %2821 = vrot.lane.b32.xlu0 %v2581, 64
        %v2822 = vpop.permute.xlu0 %2821
        %2823 = vrot.lane.b32.xlu0 %v2582, 64
        %v2824 = vpop.permute.xlu0 %2823
        %2825 = vrot.lane.b32.xlu0 %v2583, 64
        %v2826 = vpop.permute.xlu0 %2825
        %2827 = vrot.lane.b32.xlu0 %v2584, 64
        %v2828 = vpop.permute.xlu0 %2827
        %2829 = vrot.lane.b32.xlu0 %v2585, 64
        %v2830 = vpop.permute.xlu0 %2829
        %2831 = vrot.lane.b32.xlu0 %v2586, 64
        %v2832 = vpop.permute.xlu0 %2831
        %2833 = vrot.lane.b32.xlu0 %v2587, 64
        %v2834 = vpop.permute.xlu0 %2833
        %2835 = vrot.lane.b32.xlu0 %v2588, 64
        %v2836 = vpop.permute.xlu0 %2835
        %2837 = vrot.lane.b32.xlu0 %v2589, 64
        %v2838 = vpop.permute.xlu0 %2837
        %2839 = vrot.lane.b32.xlu0 %v2590, 64
        %v2840 = vpop.permute.xlu0 %2839
        %2841 = vrot.lane.b32.xlu0 %v2591, 64
        %v2842 = vpop.permute.xlu0 %2841
        %2843 = vrot.lane.b32.xlu0 %v2592, 64
        %v2844 = vpop.permute.xlu0 %2843
        %2845 = vrot.lane.b32.xlu0 %v2593, 64
        %v2846 = vpop.permute.xlu0 %2845
        %2847 = vrot.lane.b32.xlu0 %v2594, 64
        %v2848 = vpop.permute.xlu0 %2847
        %2849 = vrot.lane.b32.xlu0 %v2595, 64
        %v2850 = vpop.permute.xlu0 %2849
        %2851 = vrot.lane.b32.xlu0 %v2596, 64
        %v2852 = vpop.permute.xlu0 %2851
        %2853 = vrot.lane.b32.xlu0 %v2597, 64
        %v2854 = vpop.permute.xlu0 %2853
        %2855 = vrot.lane.b32.xlu0 %v2598, 64
        %v2856 = vpop.permute.xlu0 %2855
        %2857 = vrot.lane.b32.xlu0 %v2599, 64
        %v2858 = vpop.permute.xlu0 %2857
        %2859 = vrot.lane.b32.xlu0 %v2600, 64
        %v2860 = vpop.permute.xlu0 %2859
        %2861 = vrot.lane.b32.xlu0 %v2601, 64
        %v2862 = vpop.permute.xlu0 %2861
        %2863 = vrot.lane.b32.xlu0 %v2602, 64
        %v2864 = vpop.permute.xlu0 %2863
        %2865 = vrot.lane.b32.xlu0 %v2603, 64
        %v2866 = vpop.permute.xlu0 %2865
        %2867 = vrot.lane.b32.xlu0 %v2604, 64
        %v2868 = vpop.permute.xlu0 %2867
        %2869 = vrot.lane.b32.xlu0 %v2605, 64
        %v2870 = vpop.permute.xlu0 %2869
        %2903 = vst.msk [vmem:[#allocation2 + $0x8] sm:$0xff] %vm2611, %v2808
        %2904 = vst.msk [vmem:[#allocation2 + $0x10] sm:$0xff] %vm2611, %v2810
        %2905 = vst.msk [vmem:[#allocation2 + $0x18] sm:$0xff] %vm2611, %v2812
        %2906 = vst.msk [vmem:[#allocation2 + $0x20] sm:$0xff] %vm2611, %v2814
        %2907 = vst.msk [vmem:[#allocation2 + $0x28] sm:$0xff] %vm2611, %v2816
        %2908 = vst.msk [vmem:[#allocation2 + $0x30] sm:$0xff] %vm2611, %v2818
        %2909 = vst.msk [vmem:[#allocation2 + $0x38] sm:$0xff] %vm2611, %v2820
        %2910 = vst.msk [vmem:[#allocation2 + $0x40] sm:$0xff] %vm2611, %v2822
        %2911 = vst.msk [vmem:[#allocation2 + $0x48] sm:$0xff] %vm2611, %v2824
        %2912 = vst.msk [vmem:[#allocation2 + $0x50] sm:$0xff] %vm2611, %v2826
        %2913 = vst.msk [vmem:[#allocation2 + $0x58] sm:$0xff] %vm2611, %v2828
        %2914 = vst.msk [vmem:[#allocation2 + $0x60] sm:$0xff] %vm2611, %v2830
        %2915 = vst.msk [vmem:[#allocation2 + $0x68] sm:$0xff] %vm2611, %v2832
        %2916 = vst.msk [vmem:[#allocation2 + $0x70] sm:$0xff] %vm2611, %v2834
        %2917 = vst.msk [vmem:[#allocation2 + $0x78] sm:$0xff] %vm2611, %v2836
        %2918 = vst.msk [vmem:[#allocation2 + $0x80] sm:$0xff] %vm2611, %v2838
        %2919 = vst.msk [vmem:[#allocation2 + $0x88] sm:$0xff] %vm2611, %v2840
        %2920 = vst.msk [vmem:[#allocation2 + $0x90] sm:$0xff] %vm2611, %v2842
        %2921 = vst.msk [vmem:[#allocation2 + $0x98] sm:$0xff] %vm2611, %v2844
        %2922 = vst.msk [vmem:[#allocation2 + $0xa0] sm:$0xff] %vm2611, %v2846
        %2923 = vst.msk [vmem:[#allocation2 + $0xa8] sm:$0xff] %vm2611, %v2848
        %2924 = vst.msk [vmem:[#allocation2 + $0xb0] sm:$0xff] %vm2611, %v2850
        %2925 = vst.msk [vmem:[#allocation2 + $0xb8] sm:$0xff] %vm2611, %v2852
        %2926 = vst.msk [vmem:[#allocation2 + $0xc0] sm:$0xff] %vm2611, %v2854
        %2927 = vst.msk [vmem:[#allocation2 + $0xc8] sm:$0xff] %vm2611, %v2856
        %2928 = vst.msk [vmem:[#allocation2 + $0xd0] sm:$0xff] %vm2611, %v2858
        %2929 = vst.msk [vmem:[#allocation2 + $0xd8] sm:$0xff] %vm2611, %v2860
        %2930 = vst.msk [vmem:[#allocation2 + $0xe0] sm:$0xff] %vm2611, %v2862
        %2931 = vst.msk [vmem:[#allocation2 + $0xe8] sm:$0xff] %vm2611, %v2864
        %2932 = vst.msk [vmem:[#allocation2 + $0xf0] sm:$0xff] %vm2611, %v2866
        %2933 = vst.msk [vmem:[#allocation2 + $0xf8] sm:$0xff] %vm2611, %v2868
        %2934 = vst.msk [vmem:[#allocation2 + $0x100] sm:$0xff] %vm2611, %v2870
        %v2935 = vld [vmem:[#allocation2 + $0x17] sm:$0xff]
        %v2936 = vld [vmem:[#allocation2 + $0x1f] sm:$0xff]
        %v2937 = vld [vmem:[#allocation2 + $0x27] sm:$0xff]
        %v2938 = vld [vmem:[#allocation2 + $0x2f] sm:$0xff]
        %v2939 = vld [vmem:[#allocation2 + $0x37] sm:$0xff]
        %v2940 = vld [vmem:[#allocation2 + $0x3f] sm:$0xff]
        %v2941 = vld [vmem:[#allocation2 + $0x47] sm:$0xff]
        %v2942 = vld [vmem:[#allocation2 + $0x4f] sm:$0xff]
        %v2943 = vld [vmem:[#allocation2 + $0x57] sm:$0xff]
        %v2944 = vld [vmem:[#allocation2 + $0x5f] sm:$0xff]
        %v2945 = vld [vmem:[#allocation2 + $0x67] sm:$0xff]
        %v2946 = vld [vmem:[#allocation2 + $0x6f] sm:$0xff]
        %v2947 = vld [vmem:[#allocation2 + $0x77] sm:$0xff]
        %v2948 = vld [vmem:[#allocation2 + $0x7f] sm:$0xff]
        %v2949 = vld [vmem:[#allocation2 + $0x87] sm:$0xff]
        %v2950 = vld [vmem:[#allocation2 + $0x8f] sm:$0xff]
        %v2951 = vld [vmem:[#allocation2 + $0x97] sm:$0xff]
        %v2952 = vld [vmem:[#allocation2 + $0x9f] sm:$0xff]
        %v2953 = vld [vmem:[#allocation2 + $0xa7] sm:$0xff]
        %v2954 = vld [vmem:[#allocation2 + $0xaf] sm:$0xff]
        %v2955 = vld [vmem:[#allocation2 + $0xb7] sm:$0xff]
        %v2956 = vld [vmem:[#allocation2 + $0xbf] sm:$0xff]
        %v2957 = vld [vmem:[#allocation2 + $0xc7] sm:$0xff]
        %v2958 = vld [vmem:[#allocation2 + $0xcf] sm:$0xff]
        %v2959 = vld [vmem:[#allocation2 + $0xd7] sm:$0xff]
        %v2960 = vld [vmem:[#allocation2 + $0xdf] sm:$0xff]
        %v2961 = vld [vmem:[#allocation2 + $0xe7] sm:$0xff]
        %v2962 = vld [vmem:[#allocation2 + $0xef] sm:$0xff]
        %v2963 = vld [vmem:[#allocation2 + $0xf7] sm:$0xff]
        %v2964 = vld [vmem:[#allocation2 + $0xff] sm:$0xff]
        %v2965 = vld [vmem:[#allocation2 + $0x107] sm:$0xff]
        %v2966 = vld [vmem:[#allocation2 + $0x10f] sm:$0xff]
        %v2967 = vsel %vm1263, %v2935, 0.0
        %v2968 = vsel %vm1264, %v2936, 0.0
        %v2969 = vsel %vm1265, %v2937, 0.0
        %v2970 = vsel %vm1266, %v2938, 0.0
        %v2971 = vsel %vm1267, %v2939, 0.0
        %v2972 = vsel %vm1268, %v2940, 0.0
        %v2973 = vsel %vm1269, %v2941, 0.0
        %v2974 = vsel %vm1270, %v2942, 0.0
        %v2975 = vsel %vm1271, %v2943, 0.0
        %v2976 = vsel %vm1272, %v2944, 0.0
        %v2977 = vsel %vm1273, %v2945, 0.0
        %v2978 = vsel %vm1274, %v2946, 0.0
        %v2979 = vsel %vm1275, %v2947, 0.0
        %v2980 = vsel %vm1276, %v2948, 0.0
        %v2981 = vsel %vm1277, %v2949, 0.0
        %v2982 = vsel %vm1278, %v2950, 0.0
        %v2983 = vsel %vm1279, %v2951, 0.0
        %v2984 = vsel %vm1280, %v2952, 0.0
        %v2985 = vsel %vm1281, %v2953, 0.0
        %v2986 = vsel %vm1282, %v2954, 0.0
        %v2987 = vsel %vm1283, %v2955, 0.0
        %v2988 = vsel %vm1284, %v2956, 0.0
        %v2989 = vsel %vm1285, %v2957, 0.0
        %v2990 = vsel %vm1286, %v2958, 0.0
        %v2991 = vsel %vm1287, %v2959, 0.0
        %v2992 = vsel %vm1288, %v2960, 0.0
        %v2993 = vsel %vm1289, %v2961, 0.0
        %v2994 = vsel %vm1290, %v2962, 0.0
        %v2995 = vsel %vm1291, %v2963, 0.0
        %v2996 = vsel %vm1292, %v2964, 0.0
        %v2997 = vsel %vm1293, %v2965, 0.0
        %v2998 = vsel %vm1294, %v2966, 0.0
        %v2999 = vpack.c.bf16 %v2968, %v2967
        %v3000 = vpack.c.bf16 %v2970, %v2969
        %v3001 = vpack.c.bf16 %v2972, %v2971
        %v3002 = vpack.c.bf16 %v2974, %v2973
        %v3003 = vpack.c.bf16 %v2976, %v2975
        %v3004 = vpack.c.bf16 %v2978, %v2977
        %v3005 = vpack.c.bf16 %v2980, %v2979
        %v3006 = vpack.c.bf16 %v2982, %v2981
        %v3007 = vpack.c.bf16 %v2984, %v2983
        %v3008 = vpack.c.bf16 %v2986, %v2985
        %v3009 = vpack.c.bf16 %v2988, %v2987
        %v3010 = vpack.c.bf16 %v2990, %v2989
        %v3011 = vpack.c.bf16 %v2992, %v2991
        %v3012 = vpack.c.bf16 %v2994, %v2993
        %v3013 = vpack.c.bf16 %v2996, %v2995
        %v3014 = vpack.c.bf16 %v2998, %v2997
        %v3015 = vld [vmem:[%s4] sm:$0xf]
        %v3016 = vld [vmem:[%s4 + $0x4] sm:$0xf]
        %v3017 = vld [vmem:[%s4 + $0x8] sm:$0xf]
        %v3018 = vld [vmem:[%s4 + $0xc] sm:$0xf]
        %v3019 = vld [vmem:[%s4 + $0x10] sm:$0xf]
        %v3020 = vld [vmem:[%s4 + $0x14] sm:$0xf]
        %v3021 = vld [vmem:[%s4 + $0x18] sm:$0xf]
        %v3022 = vld [vmem:[%s4 + $0x1c] sm:$0xf]
        %v3023 = vld [vmem:[%s4 + $0x20] sm:$0xf]
        %v3024 = vld [vmem:[%s4 + $0x24] sm:$0xf]
        %v3025 = vld [vmem:[%s4 + $0x28] sm:$0xf]
        %v3026 = vld [vmem:[%s4 + $0x2c] sm:$0xf]
        %v3027 = vld [vmem:[#allocation2 + $0x18] sm:$0xff]
        %v3028 = vld [vmem:[#allocation2 + $0x20] sm:$0xff]
        %v3029 = vld [vmem:[#allocation2 + $0x28] sm:$0xff]
        %v3030 = vld [vmem:[#allocation2 + $0x30] sm:$0xff]
        %v3031 = vld [vmem:[#allocation2 + $0x38] sm:$0xff]
        %v3032 = vld [vmem:[#allocation2 + $0x40] sm:$0xff]
        %v3033 = vld [vmem:[#allocation2 + $0x48] sm:$0xff]
        %v3034 = vld [vmem:[#allocation2 + $0x50] sm:$0xff]
        %v3035 = vld [vmem:[#allocation2 + $0x58] sm:$0xff]
        %v3036 = vld [vmem:[#allocation2 + $0x60] sm:$0xff]
        %v3037 = vld [vmem:[#allocation2 + $0x68] sm:$0xff]
        %v3038 = vld [vmem:[#allocation2 + $0x70] sm:$0xff]
        %v3039 = vld [vmem:[#allocation2 + $0x78] sm:$0xff]
        %v3040 = vld [vmem:[#allocation2 + $0x80] sm:$0xff]
        %v3041 = vld [vmem:[#allocation2 + $0x88] sm:$0xff]
        %v3042 = vld [vmem:[#allocation2 + $0x90] sm:$0xff]
        %v3043 = vld [vmem:[#allocation2 + $0x98] sm:$0xff]
        %v3044 = vld [vmem:[#allocation2 + $0xa0] sm:$0xff]
        %v3045 = vld [vmem:[#allocation2 + $0xa8] sm:$0xff]
        %v3046 = vld [vmem:[#allocation2 + $0xb0] sm:$0xff]
        %v3047 = vld [vmem:[#allocation2 + $0xb8] sm:$0xff]
        %v3048 = vld [vmem:[#allocation2 + $0xc0] sm:$0xff]
        %v3049 = vld [vmem:[#allocation2 + $0xc8] sm:$0xff]
        %v3050 = vld [vmem:[#allocation2 + $0xd0] sm:$0xff]
        %v3051 = vld [vmem:[#allocation2 + $0xd8] sm:$0xff]
        %v3052 = vld [vmem:[#allocation2 + $0xe0] sm:$0xff]
        %v3053 = vld [vmem:[#allocation2 + $0xe8] sm:$0xff]
        %v3054 = vld [vmem:[#allocation2 + $0xf0] sm:$0xff]
        %v3055 = vld [vmem:[#allocation2 + $0xf8] sm:$0xff]
        %v3056 = vld [vmem:[#allocation2 + $0x100] sm:$0xff]
        %v3057 = vld [vmem:[#allocation2 + $0x108] sm:$0xff]
        %v3058 = vld [vmem:[#allocation2 + $0x110] sm:$0xff]
        %v3059 = vpack.c.bf16 %v3028, %v3027
        %v3060 = vpack.c.bf16 %v3030, %v3029
        %v3061 = vpack.c.bf16 %v3032, %v3031
        %v3062 = vpack.c.bf16 %v3034, %v3033
        %v3063 = vpack.c.bf16 %v3036, %v3035
        %v3064 = vpack.c.bf16 %v3038, %v3037
        %v3065 = vpack.c.bf16 %v3040, %v3039
        %v3066 = vpack.c.bf16 %v3042, %v3041
        %v3067 = vpack.c.bf16 %v3044, %v3043
        %v3068 = vpack.c.bf16 %v3046, %v3045
        %v3069 = vpack.c.bf16 %v3048, %v3047
        %v3070 = vpack.c.bf16 %v3050, %v3049
        %v3071 = vpack.c.bf16 %v3052, %v3051
        %v3072 = vpack.c.bf16 %v3054, %v3053
        %v3073 = vpack.c.bf16 %v3056, %v3055
        %v3074 = vpack.c.bf16 %v3058, %v3057
        %s3075 = scalar_lea.vmem %s4, 48
        %v3076 = vld [vmem:[%s3075] sm:$0xf]
        %v3077 = vld [vmem:[%s3075 + $0x4] sm:$0xf]
        %v3078 = vld [vmem:[%s3075 + $0x8] sm:$0xf]
        %v3079 = vld [vmem:[%s3075 + $0xc] sm:$0xf]
        %v3080 = vld [vmem:[%s3075 + $0x10] sm:$0xf]
        %v3081 = vld [vmem:[%s3075 + $0x14] sm:$0xf]
        %v3082 = vld [vmem:[%s3075 + $0x18] sm:$0xf]
        %v3083 = vld [vmem:[%s3075 + $0x1c] sm:$0xf]
        %v3084 = vld [vmem:[%s3075 + $0x20] sm:$0xf]
        %v3085 = vld [vmem:[%s3075 + $0x24] sm:$0xf]
        %v3086 = vld [vmem:[%s3075 + $0x28] sm:$0xf]
        %v3087 = vld [vmem:[%s3075 + $0x2c] sm:$0xf]
        %v3100 = vunpack.c.l.b16 %v3076
        %v3101 = vunpack.c.l.b16 %v3077
        %v3102 = vunpack.c.l.b16 %v3078
        %v3103 = vunpack.c.l.b16 %v3079
        %v3104 = vunpack.c.l.b16 %v3080
        %v3105 = vunpack.c.l.b16 %v3081
        %v3106 = vunpack.c.l.b16 %v3082
        %v3107 = vunpack.c.l.b16 %v3083
        %v3108 = vunpack.c.l.b16 %v3084
        %v3109 = vunpack.c.l.b16 %v3085
        %v3110 = vunpack.c.l.b16 %v3086
        %v3111 = vunpack.c.l.b16 %v3087
        %v3112 = vpack.c.b16 %v3101, %v3100
        %v3113 = vpack.c.b16 %v3103, %v3102
        %v3114 = vpack.c.b16 %v3105, %v3104
        %v3115 = vpack.c.b16 %v3107, %v3106
        %v3116 = vpack.c.b16 %v3109, %v3108
        %v3117 = vpack.c.b16 %v3111, %v3110
        %vm3124 = vcmask 785408
        %v3126 = vsel %vm3124, %v3059, 0
        %v3129 = vsel %vm3124, %v3060, 0
        %v3132 = vsel %vm3124, %v3061, 0
        %v3135 = vsel %vm3124, %v3062, 0
        %v3138 = vsel %vm3124, %v3063, 0
        %v3141 = vsel %vm3124, %v3064, 0
        %v3144 = vsel %vm3124, %v3065, 0
        %v3147 = vsel %vm3124, %v3066, 0
        %v3150 = vsel %vm3124, %v3067, 0
        %v3153 = vsel %vm3124, %v3068, 0
        %v3156 = vsel %vm3124, %v3069, 0
        %v3159 = vsel %vm3124, %v3070, 0
        %v3162 = vsel %vm3124, %v3071, 0
        %v3165 = vsel %vm3124, %v3072, 0
        %v3168 = vsel %vm3124, %v3073, 0
        %v3171 = vsel %vm3124, %v3074, 0
        %3173 = vmatprep.subr.bf16.mxu0 0
        %3174 = vmatpush1.bf16.msra.mxu0 %v3112
        %3175 = vmatprep.subr.bf16.mxu0 0
        %3176 = vmatpush1.bf16.msra.mxu0 %v3113
        %3177 = vmatprep.subr.bf16.mxu0 0
        %3178 = vmatpush1.bf16.msra.mxu0 %v3114
        %3179 = vmatprep.subr.bf16.mxu0 0
        %3180 = vmatpush1.bf16.msra.mxu0 %v3115
        %3181 = vmatprep.subr.bf16.mxu0 0
        %3182 = vmatpush1.bf16.msra.mxu0 %v3116
        %3183 = vmatprep.subr.bf16.mxu0 0
        %3184 = vmatpush1.bf16.msra.mxu0 %v3117
        %3185 = vmatprep.subr.bf16.mxu0 0
        %3186 = vmatpush1.bf16.msra.mxu0 0
        %3187 = vmatprep.subr.bf16.mxu0 0
        %3188 = vmatpush1.bf16.msra.mxu0 0
        %3189 = vmatprep.subr.bf16.mxu0 0
        %3190 = vmatpush1.bf16.msra.mxu0 0
        %3191 = vmatprep.subr.bf16.mxu0 0
        %3192 = vmatpush1.bf16.msra.mxu0 0
        %3193 = vmatprep.subr.bf16.mxu0 0
        %3194 = vmatpush1.bf16.msra.mxu0 0
        %3195 = vmatprep.subr.bf16.mxu0 0
        %3196 = vmatpush1.bf16.msra.mxu0 0
        %3197 = vmatprep.subr.bf16.mxu0 0
        %3198 = vmatpush1.bf16.msra.mxu0 0
        %3199 = vmatprep.subr.bf16.mxu0 0
        %3200 = vmatpush1.bf16.msra.mxu0 0
        %3201 = vmatprep.subr.bf16.mxu0 0
        %3202 = vmatpush1.bf16.msra.mxu0 0
        %3203 = vmatprep.subr.bf16.mxu0 0
        %3204 = vmatpush1.bf16.msra.mxu0 0
        %3205 = vmatprep.mubr.bf16.mxu0 0
        %3206 = vmatmul.mubr.bf16.gmra.mrb[0].mxu0 %v3126
        %v3207 = vpop.f32.mrb[0].mxu0
        %v3208 = vadd.f32 0.0, %v3207
        %v3209 = vpop.f32.mrb[0].mxu0
        %v3210 = vpop.f32.mrb[0].mxu0
        %v3211 = vadd.f32 0.0, %v3210
        %v3212 = vpop.f32.mrb[0].mxu0
        %3213 = vmatprep.mubr.bf16.mxu0 0
        %3214 = vmatmul.mubr.bf16.gmra.mrb[0].mxu0 %v3129
        %v3215 = vpop.f32.mrb[0].mxu0
        %v3216 = vadd.f32 0.0, %v3215
        %v3217 = vpop.f32.mrb[0].mxu0
        %v3218 = vpop.f32.mrb[0].mxu0
        %v3219 = vadd.f32 0.0, %v3218
        %v3220 = vpop.f32.mrb[0].mxu0
        %3221 = vmatprep.mubr.bf16.mxu0 0
        %3222 = vmatmul.mubr.bf16.gmra.mrb[0].mxu0 %v3132
        %v3223 = vpop.f32.mrb[0].mxu0
        %v3224 = vadd.f32 0.0, %v3223
        %v3225 = vpop.f32.mrb[0].mxu0
        %v3226 = vpop.f32.mrb[0].mxu0
        %v3227 = vadd.f32 0.0, %v3226
        %v3228 = vpop.f32.mrb[0].mxu0
        %3229 = vmatprep.mubr.bf16.mxu0 0
        %3230 = vmatmul.mubr.bf16.gmra.mrb[0].mxu0 %v3135
        %v3231 = vpop.f32.mrb[0].mxu0
        %v3232 = vadd.f32 0.0, %v3231
        %v3233 = vpop.f32.mrb[0].mxu0
        %v3234 = vpop.f32.mrb[0].mxu0
        %v3235 = vadd.f32 0.0, %v3234
        %v3236 = vpop.f32.mrb[0].mxu0
        %3237 = vmatprep.mubr.bf16.mxu0 0
        %3238 = vmatmul.mubr.bf16.gmra.mrb[0].mxu0 %v3138
        %v3239 = vpop.f32.mrb[0].mxu0
        %v3240 = vadd.f32 0.0, %v3239
        %v3241 = vpop.f32.mrb[0].mxu0
        %v3242 = vpop.f32.mrb[0].mxu0
        %v3243 = vadd.f32 0.0, %v3242
        %v3244 = vpop.f32.mrb[0].mxu0
        %3245 = vmatprep.mubr.bf16.mxu0 0
        %3246 = vmatmul.mubr.bf16.gmra.mrb[0].mxu0 %v3141
        %v3247 = vpop.f32.mrb[0].mxu0
        %v3248 = vadd.f32 0.0, %v3247
        %v3249 = vpop.f32.mrb[0].mxu0
        %v3250 = vpop.f32.mrb[0].mxu0
        %v3251 = vadd.f32 0.0, %v3250
        %v3252 = vpop.f32.mrb[0].mxu0
        %3253 = vmatprep.mubr.bf16.mxu0 0
        %3254 = vmatmul.mubr.bf16.gmra.mrb[0].mxu0 %v3144
        %v3255 = vpop.f32.mrb[0].mxu0
        %v3256 = vadd.f32 0.0, %v3255
        %v3257 = vpop.f32.mrb[0].mxu0
        %v3258 = vpop.f32.mrb[0].mxu0
        %v3259 = vadd.f32 0.0, %v3258
        %v3260 = vpop.f32.mrb[0].mxu0
        %3261 = vmatprep.mubr.bf16.mxu0 0
        %3262 = vmatmul.mubr.bf16.gmra.mrb[0].mxu0 %v3147
        %v3263 = vpop.f32.mrb[0].mxu0
        %v3264 = vadd.f32 0.0, %v3263
        %v3265 = vpop.f32.mrb[0].mxu0
        %v3266 = vpop.f32.mrb[0].mxu0
        %v3267 = vadd.f32 0.0, %v3266
        %v3268 = vpop.f32.mrb[0].mxu0
        %3269 = vmatprep.mubr.bf16.mxu0 0
        %3270 = vmatmul.mubr.bf16.gmra.mrb[0].mxu0 %v3150
        %v3271 = vpop.f32.mrb[0].mxu0
        %v3272 = vadd.f32 0.0, %v3271
        %v3273 = vpop.f32.mrb[0].mxu0
        %v3274 = vpop.f32.mrb[0].mxu0
        %v3275 = vadd.f32 0.0, %v3274
        %v3276 = vpop.f32.mrb[0].mxu0
        %3277 = vmatprep.mubr.bf16.mxu0 0
        %3278 = vmatmul.mubr.bf16.gmra.mrb[0].mxu0 %v3153
        %v3279 = vpop.f32.mrb[0].mxu0
        %v3280 = vadd.f32 0.0, %v3279
        %v3281 = vpop.f32.mrb[0].mxu0
        %v3282 = vpop.f32.mrb[0].mxu0
        %v3283 = vadd.f32 0.0, %v3282
        %v3284 = vpop.f32.mrb[0].mxu0
        %3285 = vmatprep.mubr.bf16.mxu0 0
        %3286 = vmatmul.mubr.bf16.gmra.mrb[0].mxu0 %v3156
        %v3287 = vpop.f32.mrb[0].mxu0
        %v3288 = vadd.f32 0.0, %v3287
        %v3289 = vpop.f32.mrb[0].mxu0
        %v3290 = vpop.f32.mrb[0].mxu0
        %v3291 = vadd.f32 0.0, %v3290
        %v3292 = vpop.f32.mrb[0].mxu0
        %3293 = vmatprep.mubr.bf16.mxu0 0
        %3294 = vmatmul.mubr.bf16.gmra.mrb[0].mxu0 %v3159
        %v3295 = vpop.f32.mrb[0].mxu0
        %v3296 = vadd.f32 0.0, %v3295
        %v3297 = vpop.f32.mrb[0].mxu0
        %v3298 = vpop.f32.mrb[0].mxu0
        %v3299 = vadd.f32 0.0, %v3298
        %v3300 = vpop.f32.mrb[0].mxu0
        %3301 = vmatprep.mubr.bf16.mxu0 0
        %3302 = vmatmul.mubr.bf16.gmra.mrb[0].mxu0 %v3162
        %v3303 = vpop.f32.mrb[0].mxu0
        %v3304 = vadd.f32 0.0, %v3303
        %v3305 = vpop.f32.mrb[0].mxu0
        %v3306 = vpop.f32.mrb[0].mxu0
        %v3307 = vadd.f32 0.0, %v3306
        %v3308 = vpop.f32.mrb[0].mxu0
        %3309 = vmatprep.mubr.bf16.mxu0 0
        %3310 = vmatmul.mubr.bf16.gmra.mrb[0].mxu0 %v3165
        %v3311 = vpop.f32.mrb[0].mxu0
        %v3312 = vadd.f32 0.0, %v3311
        %v3313 = vpop.f32.mrb[0].mxu0
        %v3314 = vpop.f32.mrb[0].mxu0
        %v3315 = vadd.f32 0.0, %v3314
        %v3316 = vpop.f32.mrb[0].mxu0
        %3317 = vmatprep.mubr.bf16.mxu0 0
        %3318 = vmatmul.mubr.bf16.gmra.mrb[0].mxu0 %v3168
        %v3319 = vpop.f32.mrb[0].mxu0
        %v3320 = vadd.f32 0.0, %v3319
        %v3321 = vpop.f32.mrb[0].mxu0
        %v3322 = vpop.f32.mrb[0].mxu0
        %v3323 = vadd.f32 0.0, %v3322
        %v3324 = vpop.f32.mrb[0].mxu0
        %3325 = vmatprep.mubr.bf16.mxu0 0
        %3326 = vmatmul.mubr.bf16.gmra.mrb[0].mxu0 %v3171
        %v3327 = vpop.f32.mrb[0].mxu0
        %v3328 = vadd.f32 0.0, %v3327
        %v3329 = vpop.f32.mrb[0].mxu0
        %v3330 = vpop.f32.mrb[0].mxu0
        %v3331 = vadd.f32 0.0, %v3330
        %v3332 = vpop.f32.mrb[0].mxu0
        %3333 = vdwg.mxu0
        %v3346 = vunpack.c.l.b16 %v3015
        %v3347 = vunpack.c.l.b16 %v3016
        %v3348 = vunpack.c.l.b16 %v3017
        %v3349 = vunpack.c.l.b16 %v3018
        %v3350 = vunpack.c.l.b16 %v3019
        %v3351 = vunpack.c.l.b16 %v3020
        %v3352 = vunpack.c.l.b16 %v3021
        %v3353 = vunpack.c.l.b16 %v3022
        %v3354 = vunpack.c.l.b16 %v3023
        %v3355 = vunpack.c.l.b16 %v3024
        %v3356 = vunpack.c.l.b16 %v3025
        %v3357 = vunpack.c.l.b16 %v3026
        %v3358 = vpack.c.b16 %v3347, %v3346
        %v3359 = vpack.c.b16 %v3349, %v3348
        %v3360 = vpack.c.b16 %v3351, %v3350
        %v3361 = vpack.c.b16 %v3353, %v3352
        %v3362 = vpack.c.b16 %v3355, %v3354
        %v3363 = vpack.c.b16 %v3357, %v3356
        %v3371 = vsel %vm3124, %v2999, 0
        %v3374 = vsel %vm3124, %v3000, 0
        %v3377 = vsel %vm3124, %v3001, 0
        %v3380 = vsel %vm3124, %v3002, 0
        %v3383 = vsel %vm3124, %v3003, 0
        %v3386 = vsel %vm3124, %v3004, 0
        %v3389 = vsel %vm3124, %v3005, 0
        %v3392 = vsel %vm3124, %v3006, 0
        %v3395 = vsel %vm3124, %v3007, 0
        %v3398 = vsel %vm3124, %v3008, 0
        %v3401 = vsel %vm3124, %v3009, 0
        %v3404 = vsel %vm3124, %v3010, 0
        %v3407 = vsel %vm3124, %v3011, 0
        %v3410 = vsel %vm3124, %v3012, 0
        %v3413 = vsel %vm3124, %v3013, 0
        %v3416 = vsel %vm3124, %v3014, 0
        %3418 = vmatprep.subr.bf16.mxu0 0
        %3419 = vmatpush1.bf16.msra.mxu0 %v3358
        %3420 = vmatprep.subr.bf16.mxu0 0
        %3421 = vmatpush1.bf16.msra.mxu0 %v3359
        %3422 = vmatprep.subr.bf16.mxu0 0
        %3423 = vmatpush1.bf16.msra.mxu0 %v3360
        %3424 = vmatprep.subr.bf16.mxu0 0
        %3425 = vmatpush1.bf16.msra.mxu0 %v3361
        %3426 = vmatprep.subr.bf16.mxu0 0
        %3427 = vmatpush1.bf16.msra.mxu0 %v3362
        %3428 = vmatprep.subr.bf16.mxu0 0
        %3429 = vmatpush1.bf16.msra.mxu0 %v3363
        %3430 = vmatprep.subr.bf16.mxu0 0
        %3431 = vmatpush1.bf16.msra.mxu0 0
        %3432 = vmatprep.subr.bf16.mxu0 0
        %3433 = vmatpush1.bf16.msra.mxu0 0
        %3434 = vmatprep.subr.bf16.mxu0 0
        %3435 = vmatpush1.bf16.msra.mxu0 0
        %3436 = vmatprep.subr.bf16.mxu0 0
        %3437 = vmatpush1.bf16.msra.mxu0 0
        %3438 = vmatprep.subr.bf16.mxu0 0
        %3439 = vmatpush1.bf16.msra.mxu0 0
        %3440 = vmatprep.subr.bf16.mxu0 0
        %3441 = vmatpush1.bf16.msra.mxu0 0
        %3442 = vmatprep.subr.bf16.mxu0 0
        %3443 = vmatpush1.bf16.msra.mxu0 0
        %3444 = vmatprep.subr.bf16.mxu0 0
        %3445 = vmatpush1.bf16.msra.mxu0 0
        %3446 = vmatprep.subr.bf16.mxu0 0
        %3447 = vmatpush1.bf16.msra.mxu0 0
        %3448 = vmatprep.subr.bf16.mxu0 0
        %3449 = vmatpush1.bf16.msra.mxu0 0
        %3450 = vmatprep.mubr.bf16.mxu0 0
        %3451 = vmatmul.mubr.bf16.gmra.mrb[0].mxu0 %v3371
        %v3452 = vpop.f32.mrb[0].mxu0
        %v3453 = vadd.f32 %v3208, %v3452
        %v3454 = vpop.f32.mrb[0].mxu0
        %v3455 = vpop.f32.mrb[0].mxu0
        %v3456 = vadd.f32 %v3211, %v3455
        %v3457 = vpop.f32.mrb[0].mxu0
        %3458 = vmatprep.mubr.bf16.mxu0 0
        %3459 = vmatmul.mubr.bf16.gmra.mrb[0].mxu0 %v3374
        %v3460 = vpop.f32.mrb[0].mxu0
        %v3461 = vadd.f32 %v3216, %v3460
        %v3462 = vpop.f32.mrb[0].mxu0
        %v3463 = vpop.f32.mrb[0].mxu0
        %v3464 = vadd.f32 %v3219, %v3463
        %v3465 = vpop.f32.mrb[0].mxu0
        %3466 = vmatprep.mubr.bf16.mxu0 0
        %3467 = vmatmul.mubr.bf16.gmra.mrb[0].mxu0 %v3377
        %v3468 = vpop.f32.mrb[0].mxu0
        %v3469 = vadd.f32 %v3224, %v3468
        %v3470 = vpop.f32.mrb[0].mxu0
        %v3471 = vpop.f32.mrb[0].mxu0
        %v3472 = vadd.f32 %v3227, %v3471
        %v3473 = vpop.f32.mrb[0].mxu0
        %3474 = vmatprep.mubr.bf16.mxu0 0
        %3475 = vmatmul.mubr.bf16.gmra.mrb[0].mxu0 %v3380
        %v3476 = vpop.f32.mrb[0].mxu0
        %v3477 = vadd.f32 %v3232, %v3476
        %v3478 = vpop.f32.mrb[0].mxu0
        %v3479 = vpop.f32.mrb[0].mxu0
        %v3480 = vadd.f32 %v3235, %v3479
        %v3481 = vpop.f32.mrb[0].mxu0
        %3482 = vmatprep.mubr.bf16.mxu0 0
        %3483 = vmatmul.mubr.bf16.gmra.mrb[0].mxu0 %v3383
        %v3484 = vpop.f32.mrb[0].mxu0
        %v3485 = vadd.f32 %v3240, %v3484
        %v3486 = vpop.f32.mrb[0].mxu0
        %v3487 = vpop.f32.mrb[0].mxu0
        %v3488 = vadd.f32 %v3243, %v3487
        %v3489 = vpop.f32.mrb[0].mxu0
        %3490 = vmatprep.mubr.bf16.mxu0 0
        %3491 = vmatmul.mubr.bf16.gmra.mrb[0].mxu0 %v3386
        %v3492 = vpop.f32.mrb[0].mxu0
        %v3493 = vadd.f32 %v3248, %v3492
        %v3494 = vpop.f32.mrb[0].mxu0
        %v3495 = vpop.f32.mrb[0].mxu0
        %v3496 = vadd.f32 %v3251, %v3495
        %v3497 = vpop.f32.mrb[0].mxu0
        %3498 = vmatprep.mubr.bf16.mxu0 0
        %3499 = vmatmul.mubr.bf16.gmra.mrb[0].mxu0 %v3389
        %v3500 = vpop.f32.mrb[0].mxu0
        %v3501 = vadd.f32 %v3256, %v3500
        %v3502 = vpop.f32.mrb[0].mxu0
        %v3503 = vpop.f32.mrb[0].mxu0
        %v3504 = vadd.f32 %v3259, %v3503
        %v3505 = vpop.f32.mrb[0].mxu0
        %3506 = vmatprep.mubr.bf16.mxu0 0
        %3507 = vmatmul.mubr.bf16.gmra.mrb[0].mxu0 %v3392
        %v3508 = vpop.f32.mrb[0].mxu0
        %v3509 = vadd.f32 %v3264, %v3508
        %v3510 = vpop.f32.mrb[0].mxu0
        %v3511 = vpop.f32.mrb[0].mxu0
        %v3512 = vadd.f32 %v3267, %v3511
        %v3513 = vpop.f32.mrb[0].mxu0
        %3514 = vmatprep.mubr.bf16.mxu0 0
        %3515 = vmatmul.mubr.bf16.gmra.mrb[0].mxu0 %v3395
        %v3516 = vpop.f32.mrb[0].mxu0
        %v3517 = vadd.f32 %v3272, %v3516
        %v3518 = vpop.f32.mrb[0].mxu0
        %v3519 = vpop.f32.mrb[0].mxu0
        %v3520 = vadd.f32 %v3275, %v3519
        %v3521 = vpop.f32.mrb[0].mxu0
        %3522 = vmatprep.mubr.bf16.mxu0 0
        %3523 = vmatmul.mubr.bf16.gmra.mrb[0].mxu0 %v3398
        %v3524 = vpop.f32.mrb[0].mxu0
        %v3525 = vadd.f32 %v3280, %v3524
        %v3526 = vpop.f32.mrb[0].mxu0
        %v3527 = vpop.f32.mrb[0].mxu0
        %v3528 = vadd.f32 %v3283, %v3527
        %v3529 = vpop.f32.mrb[0].mxu0
        %3530 = vmatprep.mubr.bf16.mxu0 0
        %3531 = vmatmul.mubr.bf16.gmra.mrb[0].mxu0 %v3401
        %v3532 = vpop.f32.mrb[0].mxu0
        %v3533 = vadd.f32 %v3288, %v3532
        %v3534 = vpop.f32.mrb[0].mxu0
        %v3535 = vpop.f32.mrb[0].mxu0
        %v3536 = vadd.f32 %v3291, %v3535
        %v3537 = vpop.f32.mrb[0].mxu0
        %3538 = vmatprep.mubr.bf16.mxu0 0
        %3539 = vmatmul.mubr.bf16.gmra.mrb[0].mxu0 %v3404
        %v3540 = vpop.f32.mrb[0].mxu0
        %v3541 = vadd.f32 %v3296, %v3540
        %v3542 = vpop.f32.mrb[0].mxu0
        %v3543 = vpop.f32.mrb[0].mxu0
        %v3544 = vadd.f32 %v3299, %v3543
        %v3545 = vpop.f32.mrb[0].mxu0
        %3546 = vmatprep.mubr.bf16.mxu0 0
        %3547 = vmatmul.mubr.bf16.gmra.mrb[0].mxu0 %v3407
        %v3548 = vpop.f32.mrb[0].mxu0
        %v3549 = vadd.f32 %v3304, %v3548
        %v3550 = vpop.f32.mrb[0].mxu0
        %v3551 = vpop.f32.mrb[0].mxu0
        %v3552 = vadd.f32 %v3307, %v3551
        %v3553 = vpop.f32.mrb[0].mxu0
        %3554 = vmatprep.mubr.bf16.mxu0 0
        %3555 = vmatmul.mubr.bf16.gmra.mrb[0].mxu0 %v3410
        %v3556 = vpop.f32.mrb[0].mxu0
        %v3557 = vadd.f32 %v3312, %v3556
        %v3558 = vpop.f32.mrb[0].mxu0
        %v3559 = vpop.f32.mrb[0].mxu0
        %v3560 = vadd.f32 %v3315, %v3559
        %v3561 = vpop.f32.mrb[0].mxu0
        %3562 = vmatprep.mubr.bf16.mxu0 0
        %3563 = vmatmul.mubr.bf16.gmra.mrb[0].mxu0 %v3413
        %v3564 = vpop.f32.mrb[0].mxu0
        %v3565 = vadd.f32 %v3320, %v3564
        %v3566 = vpop.f32.mrb[0].mxu0
        %v3567 = vpop.f32.mrb[0].mxu0
        %v3568 = vadd.f32 %v3323, %v3567
        %v3569 = vpop.f32.mrb[0].mxu0
        %3570 = vmatprep.mubr.bf16.mxu0 0
        %3571 = vmatmul.mubr.bf16.gmra.mrb[0].mxu0 %v3416
        %v3572 = vpop.f32.mrb[0].mxu0
        %v3573 = vadd.f32 %v3328, %v3572
        %v3574 = vpop.f32.mrb[0].mxu0
        %v3575 = vpop.f32.mrb[0].mxu0
        %v3576 = vadd.f32 %v3331, %v3575
        %v3577 = vpop.f32.mrb[0].mxu0
        %3578 = vdwg.mxu0
        %v3579 = vld [vmem:[#allocation2 + $0x19] sm:$0xff]
        %v3580 = vld [vmem:[#allocation2 + $0x21] sm:$0xff]
        %v3581 = vld [vmem:[#allocation2 + $0x29] sm:$0xff]
        %v3582 = vld [vmem:[#allocation2 + $0x31] sm:$0xff]
        %v3583 = vld [vmem:[#allocation2 + $0x39] sm:$0xff]
        %v3584 = vld [vmem:[#allocation2 + $0x41] sm:$0xff]
        %v3585 = vld [vmem:[#allocation2 + $0x49] sm:$0xff]
        %v3586 = vld [vmem:[#allocation2 + $0x51] sm:$0xff]
        %v3587 = vld [vmem:[#allocation2 + $0x59] sm:$0xff]
        %v3588 = vld [vmem:[#allocation2 + $0x61] sm:$0xff]
        %v3589 = vld [vmem:[#allocation2 + $0x69] sm:$0xff]
        %v3590 = vld [vmem:[#allocation2 + $0x71] sm:$0xff]
        %v3591 = vld [vmem:[#allocation2 + $0x79] sm:$0xff]
        %v3592 = vld [vmem:[#allocation2 + $0x81] sm:$0xff]
        %v3593 = vld [vmem:[#allocation2 + $0x89] sm:$0xff]
        %v3594 = vld [vmem:[#allocation2 + $0x91] sm:$0xff]
        %v3595 = vld [vmem:[#allocation2 + $0x99] sm:$0xff]
        %v3596 = vld [vmem:[#allocation2 + $0xa1] sm:$0xff]
        %v3597 = vld [vmem:[#allocation2 + $0xa9] sm:$0xff]
        %v3598 = vld [vmem:[#allocation2 + $0xb1] sm:$0xff]
        %v3599 = vld [vmem:[#allocation2 + $0xb9] sm:$0xff]
        %v3600 = vld [vmem:[#allocation2 + $0xc1] sm:$0xff]
        %v3601 = vld [vmem:[#allocation2 + $0xc9] sm:$0xff]
        %v3602 = vld [vmem:[#allocation2 + $0xd1] sm:$0xff]
        %v3603 = vld [vmem:[#allocation2 + $0xd9] sm:$0xff]
        %v3604 = vld [vmem:[#allocation2 + $0xe1] sm:$0xff]
        %v3605 = vld [vmem:[#allocation2 + $0xe9] sm:$0xff]
        %v3606 = vld [vmem:[#allocation2 + $0xf1] sm:$0xff]
        %v3607 = vld [vmem:[#allocation2 + $0xf9] sm:$0xff]
        %v3608 = vld [vmem:[#allocation2 + $0x101] sm:$0xff]
        %v3609 = vld [vmem:[#allocation2 + $0x109] sm:$0xff]
        %v3610 = vld [vmem:[#allocation2 + $0x111] sm:$0xff]
        %v3611 = vsel %vm2076, %v3579, 0.0
        %v3612 = vsel %vm2077, %v3580, 0.0
        %v3613 = vsel %vm2078, %v3581, 0.0
        %v3614 = vsel %vm2079, %v3582, 0.0
        %v3615 = vsel %vm2080, %v3583, 0.0
        %v3616 = vsel %vm2081, %v3584, 0.0
        %v3617 = vsel %vm2082, %v3585, 0.0
        %v3618 = vsel %vm2083, %v3586, 0.0
        %v3619 = vsel %vm2084, %v3587, 0.0
        %v3620 = vsel %vm2085, %v3588, 0.0
        %v3621 = vsel %vm2086, %v3589, 0.0
        %v3622 = vsel %vm2087, %v3590, 0.0
        %v3623 = vsel %vm2088, %v3591, 0.0
        %v3624 = vsel %vm2089, %v3592, 0.0
        %v3625 = vsel %vm2090, %v3593, 0.0
        %v3626 = vsel %vm2091, %v3594, 0.0
        %v3627 = vsel %vm2092, %v3595, 0.0
        %v3628 = vsel %vm2093, %v3596, 0.0
        %v3629 = vsel %vm2094, %v3597, 0.0
        %v3630 = vsel %vm2095, %v3598, 0.0
        %v3631 = vsel %vm2096, %v3599, 0.0
        %v3632 = vsel %vm2097, %v3600, 0.0
        %v3633 = vsel %vm2098, %v3601, 0.0
        %v3634 = vsel %vm2099, %v3602, 0.0
        %v3635 = vsel %vm2100, %v3603, 0.0
        %v3636 = vsel %vm2101, %v3604, 0.0
        %v3637 = vsel %vm2102, %v3605, 0.0
        %v3638 = vsel %vm2103, %v3606, 0.0
        %v3639 = vsel %vm2104, %v3607, 0.0
        %v3640 = vsel %vm2105, %v3608, 0.0
        %v3641 = vsel %vm2106, %v3609, 0.0
        %v3642 = vsel %vm2107, %v3610, 0.0
        %v3643 = vpack.c.bf16 %v3612, %v3611
        %v3644 = vpack.c.bf16 %v3614, %v3613
        %v3645 = vpack.c.bf16 %v3616, %v3615
        %v3646 = vpack.c.bf16 %v3618, %v3617
        %v3647 = vpack.c.bf16 %v3620, %v3619
        %v3648 = vpack.c.bf16 %v3622, %v3621
        %v3649 = vpack.c.bf16 %v3624, %v3623
        %v3650 = vpack.c.bf16 %v3626, %v3625
        %v3651 = vpack.c.bf16 %v3628, %v3627
        %v3652 = vpack.c.bf16 %v3630, %v3629
        %v3653 = vpack.c.bf16 %v3632, %v3631
        %v3654 = vpack.c.bf16 %v3634, %v3633
        %v3655 = vpack.c.bf16 %v3636, %v3635
        %v3656 = vpack.c.bf16 %v3638, %v3637
        %v3657 = vpack.c.bf16 %v3640, %v3639
        %v3658 = vpack.c.bf16 %v3642, %v3641
        %s3659 = scalar_lea.vmem %s4, 96
        %v3660 = vld [vmem:[%s3659] sm:$0xf]
        %v3661 = vld [vmem:[%s3659 + $0x4] sm:$0xf]
        %v3662 = vld [vmem:[%s3659 + $0x8] sm:$0xf]
        %v3663 = vld [vmem:[%s3659 + $0xc] sm:$0xf]
        %v3664 = vld [vmem:[%s3659 + $0x10] sm:$0xf]
        %v3665 = vld [vmem:[%s3659 + $0x14] sm:$0xf]
        %v3666 = vld [vmem:[%s3659 + $0x18] sm:$0xf]
        %v3667 = vld [vmem:[%s3659 + $0x1c] sm:$0xf]
        %v3668 = vld [vmem:[%s3659 + $0x20] sm:$0xf]
        %v3669 = vld [vmem:[%s3659 + $0x24] sm:$0xf]
        %v3670 = vld [vmem:[%s3659 + $0x28] sm:$0xf]
        %v3671 = vld [vmem:[%s3659 + $0x2c] sm:$0xf]
        %v3684 = vunpack.c.l.b16 %v3660
        %v3685 = vunpack.c.l.b16 %v3661
        %v3686 = vunpack.c.l.b16 %v3662
        %v3687 = vunpack.c.l.b16 %v3663
        %v3688 = vunpack.c.l.b16 %v3664
        %v3689 = vunpack.c.l.b16 %v3665
        %v3690 = vunpack.c.l.b16 %v3666
        %v3691 = vunpack.c.l.b16 %v3667
        %v3692 = vunpack.c.l.b16 %v3668
        %v3693 = vunpack.c.l.b16 %v3669
        %v3694 = vunpack.c.l.b16 %v3670
        %v3695 = vunpack.c.l.b16 %v3671
        %v3696 = vpack.c.b16 %v3685, %v3684
        %v3697 = vpack.c.b16 %v3687, %v3686
        %v3698 = vpack.c.b16 %v3689, %v3688
        %v3699 = vpack.c.b16 %v3691, %v3690
        %v3700 = vpack.c.b16 %v3693, %v3692
        %v3701 = vpack.c.b16 %v3695, %v3694
        %v3709 = vsel %vm3124, %v3643, 0
        %v3712 = vsel %vm3124, %v3644, 0
        %v3715 = vsel %vm3124, %v3645, 0
        %v3718 = vsel %vm3124, %v3646, 0
        %v3721 = vsel %vm3124, %v3647, 0
        %v3724 = vsel %vm3124, %v3648, 0
        %v3727 = vsel %vm3124, %v3649, 0
        %v3730 = vsel %vm3124, %v3650, 0
        %v3733 = vsel %vm3124, %v3651, 0
        %v3736 = vsel %vm3124, %v3652, 0
        %v3739 = vsel %vm3124, %v3653, 0
        %v3742 = vsel %vm3124, %v3654, 0
        %v3745 = vsel %vm3124, %v3655, 0
        %v3748 = vsel %vm3124, %v3656, 0
        %v3751 = vsel %vm3124, %v3657, 0
        %v3754 = vsel %vm3124, %v3658, 0
        %3756 = vmatprep.subr.bf16.mxu0 0
        %3757 = vmatpush1.bf16.msra.mxu0 %v3696
        %3758 = vmatprep.subr.bf16.mxu0 0
        %3759 = vmatpush1.bf16.msra.mxu0 %v3697
        %3760 = vmatprep.subr.bf16.mxu0 0
        %3761 = vmatpush1.bf16.msra.mxu0 %v3698
        %3762 = vmatprep.subr.bf16.mxu0 0
        %3763 = vmatpush1.bf16.msra.mxu0 %v3699
        %3764 = vmatprep.subr.bf16.mxu0 0
        %3765 = vmatpush1.bf16.msra.mxu0 %v3700
        %3766 = vmatprep.subr.bf16.mxu0 0
        %3767 = vmatpush1.bf16.msra.mxu0 %v3701
        %3768 = vmatprep.subr.bf16.mxu0 0
        %3769 = vmatpush1.bf16.msra.mxu0 0
        %3770 = vmatprep.subr.bf16.mxu0 0
        %3771 = vmatpush1.bf16.msra.mxu0 0
        %3772 = vmatprep.subr.bf16.mxu0 0
        %3773 = vmatpush1.bf16.msra.mxu0 0
        %3774 = vmatprep.subr.bf16.mxu0 0
        %3775 = vmatpush1.bf16.msra.mxu0 0
        %3776 = vmatprep.subr.bf16.mxu0 0
        %3777 = vmatpush1.bf16.msra.mxu0 0
        %3778 = vmatprep.subr.bf16.mxu0 0
        %3779 = vmatpush1.bf16.msra.mxu0 0
        %3780 = vmatprep.subr.bf16.mxu0 0
        %3781 = vmatpush1.bf16.msra.mxu0 0
        %3782 = vmatprep.subr.bf16.mxu0 0
        %3783 = vmatpush1.bf16.msra.mxu0 0
        %3784 = vmatprep.subr.bf16.mxu0 0
        %3785 = vmatpush1.bf16.msra.mxu0 0
        %3786 = vmatprep.subr.bf16.mxu0 0
        %3787 = vmatpush1.bf16.msra.mxu0 0
        %3788 = vmatprep.mubr.bf16.mxu0 0
        %3789 = vmatmul.mubr.bf16.gmra.mrb[0].mxu0 %v3709
        %v3790 = vpop.f32.mrb[0].mxu0
        %v3791 = vadd.f32 0.0, %v3790
        %v3792 = vpop.f32.mrb[0].mxu0
        %v3793 = vpop.f32.mrb[0].mxu0
        %v3794 = vadd.f32 0.0, %v3793
        %v3795 = vpop.f32.mrb[0].mxu0
        %3796 = vmatprep.mubr.bf16.mxu0 0
        %3797 = vmatmul.mubr.bf16.gmra.mrb[0].mxu0 %v3712
        %v3798 = vpop.f32.mrb[0].mxu0
        %v3799 = vadd.f32 0.0, %v3798
        %v3800 = vpop.f32.mrb[0].mxu0
        %v3801 = vpop.f32.mrb[0].mxu0
        %v3802 = vadd.f32 0.0, %v3801
        %v3803 = vpop.f32.mrb[0].mxu0
        %3804 = vmatprep.mubr.bf16.mxu0 0
        %3805 = vmatmul.mubr.bf16.gmra.mrb[0].mxu0 %v3715
        %v3806 = vpop.f32.mrb[0].mxu0
        %v3807 = vadd.f32 0.0, %v3806
        %v3808 = vpop.f32.mrb[0].mxu0
        %v3809 = vpop.f32.mrb[0].mxu0
        %v3810 = vadd.f32 0.0, %v3809
        %v3811 = vpop.f32.mrb[0].mxu0
        %3812 = vmatprep.mubr.bf16.mxu0 0
        %3813 = vmatmul.mubr.bf16.gmra.mrb[0].mxu0 %v3718
        %v3814 = vpop.f32.mrb[0].mxu0
        %v3815 = vadd.f32 0.0, %v3814
        %v3816 = vpop.f32.mrb[0].mxu0
        %v3817 = vpop.f32.mrb[0].mxu0
        %v3818 = vadd.f32 0.0, %v3817
        %v3819 = vpop.f32.mrb[0].mxu0
        %3820 = vmatprep.mubr.bf16.mxu0 0
        %3821 = vmatmul.mubr.bf16.gmra.mrb[0].mxu0 %v3721
        %v3822 = vpop.f32.mrb[0].mxu0
        %v3823 = vadd.f32 0.0, %v3822
        %v3824 = vpop.f32.mrb[0].mxu0
        %v3825 = vpop.f32.mrb[0].mxu0
        %v3826 = vadd.f32 0.0, %v3825
        %v3827 = vpop.f32.mrb[0].mxu0
        %3828 = vmatprep.mubr.bf16.mxu0 0
        %3829 = vmatmul.mubr.bf16.gmra.mrb[0].mxu0 %v3724
        %v3830 = vpop.f32.mrb[0].mxu0
        %v3831 = vadd.f32 0.0, %v3830
        %v3832 = vpop.f32.mrb[0].mxu0
        %v3833 = vpop.f32.mrb[0].mxu0
        %v3834 = vadd.f32 0.0, %v3833
        %v3835 = vpop.f32.mrb[0].mxu0
        %3836 = vmatprep.mubr.bf16.mxu0 0
        %3837 = vmatmul.mubr.bf16.gmra.mrb[0].mxu0 %v3727
        %v3838 = vpop.f32.mrb[0].mxu0
        %v3839 = vadd.f32 0.0, %v3838
        %v3840 = vpop.f32.mrb[0].mxu0
        %v3841 = vpop.f32.mrb[0].mxu0
        %v3842 = vadd.f32 0.0, %v3841
        %v3843 = vpop.f32.mrb[0].mxu0
        %3844 = vmatprep.mubr.bf16.mxu0 0
        %3845 = vmatmul.mubr.bf16.gmra.mrb[0].mxu0 %v3730
        %v3846 = vpop.f32.mrb[0].mxu0
        %v3847 = vadd.f32 0.0, %v3846
        %v3848 = vpop.f32.mrb[0].mxu0
        %v3849 = vpop.f32.mrb[0].mxu0
        %v3850 = vadd.f32 0.0, %v3849
        %v3851 = vpop.f32.mrb[0].mxu0
        %3852 = vmatprep.mubr.bf16.mxu0 0
        %3853 = vmatmul.mubr.bf16.gmra.mrb[0].mxu0 %v3733
        %v3854 = vpop.f32.mrb[0].mxu0
        %v3855 = vadd.f32 0.0, %v3854
        %v3856 = vpop.f32.mrb[0].mxu0
        %v3857 = vpop.f32.mrb[0].mxu0
        %v3858 = vadd.f32 0.0, %v3857
        %v3859 = vpop.f32.mrb[0].mxu0
        %3860 = vmatprep.mubr.bf16.mxu0 0
        %3861 = vmatmul.mubr.bf16.gmra.mrb[0].mxu0 %v3736
        %v3862 = vpop.f32.mrb[0].mxu0
        %v3863 = vadd.f32 0.0, %v3862
        %v3864 = vpop.f32.mrb[0].mxu0
        %v3865 = vpop.f32.mrb[0].mxu0
        %v3866 = vadd.f32 0.0, %v3865
        %v3867 = vpop.f32.mrb[0].mxu0
        %3868 = vmatprep.mubr.bf16.mxu0 0
        %3869 = vmatmul.mubr.bf16.gmra.mrb[0].mxu0 %v3739
        %v3870 = vpop.f32.mrb[0].mxu0
        %v3871 = vadd.f32 0.0, %v3870
        %v3872 = vpop.f32.mrb[0].mxu0
        %v3873 = vpop.f32.mrb[0].mxu0
        %v3874 = vadd.f32 0.0, %v3873
        %v3875 = vpop.f32.mrb[0].mxu0
        %3876 = vmatprep.mubr.bf16.mxu0 0
        %3877 = vmatmul.mubr.bf16.gmra.mrb[0].mxu0 %v3742
        %v3878 = vpop.f32.mrb[0].mxu0
        %v3879 = vadd.f32 0.0, %v3878
        %v3880 = vpop.f32.mrb[0].mxu0
        %v3881 = vpop.f32.mrb[0].mxu0
        %v3882 = vadd.f32 0.0, %v3881
        %v3883 = vpop.f32.mrb[0].mxu0
        %3884 = vmatprep.mubr.bf16.mxu0 0
        %3885 = vmatmul.mubr.bf16.gmra.mrb[0].mxu0 %v3745
        %v3886 = vpop.f32.mrb[0].mxu0
        %v3887 = vadd.f32 0.0, %v3886
        %v3888 = vpop.f32.mrb[0].mxu0
        %v3889 = vpop.f32.mrb[0].mxu0
        %v3890 = vadd.f32 0.0, %v3889
        %v3891 = vpop.f32.mrb[0].mxu0
        %3892 = vmatprep.mubr.bf16.mxu0 0
        %3893 = vmatmul.mubr.bf16.gmra.mrb[0].mxu0 %v3748
        %v3894 = vpop.f32.mrb[0].mxu0
        %v3895 = vadd.f32 0.0, %v3894
        %v3896 = vpop.f32.mrb[0].mxu0
        %v3897 = vpop.f32.mrb[0].mxu0
        %v3898 = vadd.f32 0.0, %v3897
        %v3899 = vpop.f32.mrb[0].mxu0
        %3900 = vmatprep.mubr.bf16.mxu0 0
        %3901 = vmatmul.mubr.bf16.gmra.mrb[0].mxu0 %v3751
        %v3902 = vpop.f32.mrb[0].mxu0
        %v3903 = vadd.f32 0.0, %v3902
        %v3904 = vpop.f32.mrb[0].mxu0
        %v3905 = vpop.f32.mrb[0].mxu0
        %v3906 = vadd.f32 0.0, %v3905
        %v3907 = vpop.f32.mrb[0].mxu0
        %3908 = vmatprep.mubr.bf16.mxu0 0
        %3909 = vmatmul.mubr.bf16.gmra.mrb[0].mxu0 %v3754
        %v3910 = vpop.f32.mrb[0].mxu0
        %v3911 = vadd.f32 0.0, %v3910
        %v3912 = vpop.f32.mrb[0].mxu0
        %v3913 = vpop.f32.mrb[0].mxu0
        %v3914 = vadd.f32 0.0, %v3913
        %v3915 = vpop.f32.mrb[0].mxu0
        %3916 = vdwg.mxu0
        %v3917 = vadd.f32 %v3453, %v3791
        %v3918 = vadd.f32 %v3456, %v3794
        %v3919 = vadd.f32 %v3461, %v3799
        %v3920 = vadd.f32 %v3464, %v3802
        %v3921 = vadd.f32 %v3469, %v3807
        %v3922 = vadd.f32 %v3472, %v3810
        %v3923 = vadd.f32 %v3477, %v3815
        %v3924 = vadd.f32 %v3480, %v3818
        %v3925 = vadd.f32 %v3485, %v3823
        %v3926 = vadd.f32 %v3488, %v3826
        %v3927 = vadd.f32 %v3493, %v3831
        %v3928 = vadd.f32 %v3496, %v3834
        %v3929 = vadd.f32 %v3501, %v3839
        %v3930 = vadd.f32 %v3504, %v3842
        %v3931 = vadd.f32 %v3509, %v3847
        %v3932 = vadd.f32 %v3512, %v3850
        %v3933 = vadd.f32 %v3517, %v3855
        %v3934 = vadd.f32 %v3520, %v3858
        %v3935 = vadd.f32 %v3525, %v3863
        %v3936 = vadd.f32 %v3528, %v3866
        %v3937 = vadd.f32 %v3533, %v3871
        %v3938 = vadd.f32 %v3536, %v3874
        %v3939 = vadd.f32 %v3541, %v3879
        %v3940 = vadd.f32 %v3544, %v3882
        %v3941 = vadd.f32 %v3549, %v3887
        %v3942 = vadd.f32 %v3552, %v3890
        %v3943 = vadd.f32 %v3557, %v3895
        %v3944 = vadd.f32 %v3560, %v3898
        %v3945 = vadd.f32 %v3565, %v3903
        %v3946 = vadd.f32 %v3568, %v3906
        %v3947 = vadd.f32 %v3573, %v3911
        %v3948 = vadd.f32 %v3576, %v3914
        %v3950 = vlaneseq
        %v3951 = vshrl.u32 %v3950, 7
        %v3952 = vsub.s32 0, %v3951
        %v3953 = vrot.slane %v2606, %v3952
        %v3955 = vmul.f32 %v3917, %v3953
        %v3956 = vmul.f32 %v3918, %v3953
        %v3957 = vmul.f32 %v3919, %v3953
        %v3958 = vmul.f32 %v3920, %v3953
        %v3959 = vmul.f32 %v3921, %v3953
        %v3960 = vmul.f32 %v3922, %v3953
        %v3961 = vmul.f32 %v3923, %v3953
        %v3962 = vmul.f32 %v3924, %v3953
        %v3963 = vmul.f32 %v3925, %v3953
        %v3964 = vmul.f32 %v3926, %v3953
        %v3965 = vmul.f32 %v3927, %v3953
        %v3966 = vmul.f32 %v3928, %v3953
        %v3967 = vmul.f32 %v3929, %v3953
        %v3968 = vmul.f32 %v3930, %v3953
        %v3969 = vmul.f32 %v3931, %v3953
        %v3970 = vmul.f32 %v3932, %v3953
        %v3971 = vmul.f32 %v3933, %v3953
        %v3972 = vmul.f32 %v3934, %v3953
        %v3973 = vmul.f32 %v3935, %v3953
        %v3974 = vmul.f32 %v3936, %v3953
        %v3975 = vmul.f32 %v3937, %v3953
        %v3976 = vmul.f32 %v3938, %v3953
        %v3977 = vmul.f32 %v3939, %v3953
        %v3978 = vmul.f32 %v3940, %v3953
        %v3979 = vmul.f32 %v3941, %v3953
        %v3980 = vmul.f32 %v3942, %v3953
        %v3981 = vmul.f32 %v3943, %v3953
        %v3982 = vmul.f32 %v3944, %v3953
        %v3983 = vmul.f32 %v3945, %v3953
        %v3984 = vmul.f32 %v3946, %v3953
        %v3985 = vmul.f32 %v3947, %v3953
        %v3986 = vmul.f32 %v3948, %v3953
        %v3988 = vlaneseq
        %v3989 = vshrl.u32 %v3988, 7
        %v3990 = vsub.s32 0, %v3989
        %v3991 = vrot.slane %v2607, %v3990
        %v3993 = vadd.f32 %v3955, %v3991
        %v3994 = vadd.f32 %v3956, %v3991
        %v3995 = vadd.f32 %v3957, %v3991
        %v3996 = vadd.f32 %v3958, %v3991
        %v3997 = vadd.f32 %v3959, %v3991
        %v3998 = vadd.f32 %v3960, %v3991
        %v3999 = vadd.f32 %v3961, %v3991
        %v4000 = vadd.f32 %v3962, %v3991
        %v4001 = vadd.f32 %v3963, %v3991
        %v4002 = vadd.f32 %v3964, %v3991
        %v4003 = vadd.f32 %v3965, %v3991
        %v4004 = vadd.f32 %v3966, %v3991
        %v4005 = vadd.f32 %v3967, %v3991
        %v4006 = vadd.f32 %v3968, %v3991
        %v4007 = vadd.f32 %v3969, %v3991
        %v4008 = vadd.f32 %v3970, %v3991
        %v4009 = vadd.f32 %v3971, %v3991
        %v4010 = vadd.f32 %v3972, %v3991
        %v4011 = vadd.f32 %v3973, %v3991
        %v4012 = vadd.f32 %v3974, %v3991
        %v4013 = vadd.f32 %v3975, %v3991
        %v4014 = vadd.f32 %v3976, %v3991
        %v4015 = vadd.f32 %v3977, %v3991
        %v4016 = vadd.f32 %v3978, %v3991
        %v4017 = vadd.f32 %v3979, %v3991
        %v4018 = vadd.f32 %v3980, %v3991
        %v4019 = vadd.f32 %v3981, %v3991
        %v4020 = vadd.f32 %v3982, %v3991
        %v4021 = vadd.f32 %v3983, %v3991
        %v4022 = vadd.f32 %v3984, %v3991
        %v4023 = vadd.f32 %v3985, %v3991
        %v4024 = vadd.f32 %v3986, %v3991
        %v4025 = vmax.f32 %v3993, 0.0
        %v4026 = vmax.f32 %v3994, 0.0
        %v4027 = vmax.f32 %v3995, 0.0
        %v4028 = vmax.f32 %v3996, 0.0
        %v4029 = vmax.f32 %v3997, 0.0
        %v4030 = vmax.f32 %v3998, 0.0
        %v4031 = vmax.f32 %v3999, 0.0
        %v4032 = vmax.f32 %v4000, 0.0
        %v4033 = vmax.f32 %v4001, 0.0
        %v4034 = vmax.f32 %v4002, 0.0
        %v4035 = vmax.f32 %v4003, 0.0
        %v4036 = vmax.f32 %v4004, 0.0
        %v4037 = vmax.f32 %v4005, 0.0
        %v4038 = vmax.f32 %v4006, 0.0
        %v4039 = vmax.f32 %v4007, 0.0
        %v4040 = vmax.f32 %v4008, 0.0
        %v4041 = vmax.f32 %v4009, 0.0
        %v4042 = vmax.f32 %v4010, 0.0
        %v4043 = vmax.f32 %v4011, 0.0
        %v4044 = vmax.f32 %v4012, 0.0
        %v4045 = vmax.f32 %v4013, 0.0
        %v4046 = vmax.f32 %v4014, 0.0
        %v4047 = vmax.f32 %v4015, 0.0
        %v4048 = vmax.f32 %v4016, 0.0
        %v4049 = vmax.f32 %v4017, 0.0
        %v4050 = vmax.f32 %v4018, 0.0
        %v4051 = vmax.f32 %v4019, 0.0
        %v4052 = vmax.f32 %v4020, 0.0
        %v4053 = vmax.f32 %v4021, 0.0
        %v4054 = vmax.f32 %v4022, 0.0
        %v4055 = vmax.f32 %v4023, 0.0
        %v4056 = vmax.f32 %v4024, 0.0
        %4057 = vst.msk [vmem:[#allocation2 + $0x18] sm:$0xff] %vm2608, %v4025
        %4058 = vst.msk [vmem:[#allocation2 + $0x20] sm:$0xff] %vm2608, %v4026
        %4059 = vst.msk [vmem:[#allocation2 + $0x28] sm:$0xff] %vm2608, %v4027
        %4060 = vst.msk [vmem:[#allocation2 + $0x30] sm:$0xff] %vm2608, %v4028
        %4061 = vst.msk [vmem:[#allocation2 + $0x38] sm:$0xff] %vm2608, %v4029
        %4062 = vst.msk [vmem:[#allocation2 + $0x40] sm:$0xff] %vm2608, %v4030
        %4063 = vst.msk [vmem:[#allocation2 + $0x48] sm:$0xff] %vm2608, %v4031
        %4064 = vst.msk [vmem:[#allocation2 + $0x50] sm:$0xff] %vm2608, %v4032
        %4065 = vst.msk [vmem:[#allocation2 + $0x58] sm:$0xff] %vm2608, %v4033
        %4066 = vst.msk [vmem:[#allocation2 + $0x60] sm:$0xff] %vm2608, %v4034
        %4067 = vst.msk [vmem:[#allocation2 + $0x68] sm:$0xff] %vm2608, %v4035
        %4068 = vst.msk [vmem:[#allocation2 + $0x70] sm:$0xff] %vm2608, %v4036
        %4069 = vst.msk [vmem:[#allocation2 + $0x78] sm:$0xff] %vm2608, %v4037
        %4070 = vst.msk [vmem:[#allocation2 + $0x80] sm:$0xff] %vm2608, %v4038
        %4071 = vst.msk [vmem:[#allocation2 + $0x88] sm:$0xff] %vm2608, %v4039
        %4072 = vst.msk [vmem:[#allocation2 + $0x90] sm:$0xff] %vm2608, %v4040
        %4073 = vst.msk [vmem:[#allocation2 + $0x98] sm:$0xff] %vm2608, %v4041
        %4074 = vst.msk [vmem:[#allocation2 + $0xa0] sm:$0xff] %vm2608, %v4042
        %4075 = vst.msk [vmem:[#allocation2 + $0xa8] sm:$0xff] %vm2608, %v4043
        %4076 = vst.msk [vmem:[#allocation2 + $0xb0] sm:$0xff] %vm2608, %v4044
        %4077 = vst.msk [vmem:[#allocation2 + $0xb8] sm:$0xff] %vm2608, %v4045
        %4078 = vst.msk [vmem:[#allocation2 + $0xc0] sm:$0xff] %vm2608, %v4046
        %4079 = vst.msk [vmem:[#allocation2 + $0xc8] sm:$0xff] %vm2608, %v4047
        %4080 = vst.msk [vmem:[#allocation2 + $0xd0] sm:$0xff] %vm2608, %v4048
        %4081 = vst.msk [vmem:[#allocation2 + $0xd8] sm:$0xff] %vm2608, %v4049
        %4082 = vst.msk [vmem:[#allocation2 + $0xe0] sm:$0xff] %vm2608, %v4050
        %4083 = vst.msk [vmem:[#allocation2 + $0xe8] sm:$0xff] %vm2608, %v4051
        %4084 = vst.msk [vmem:[#allocation2 + $0xf0] sm:$0xff] %vm2608, %v4052
        %4085 = vst.msk [vmem:[#allocation2 + $0xf8] sm:$0xff] %vm2608, %v4053
        %4086 = vst.msk [vmem:[#allocation2 + $0x100] sm:$0xff] %vm2608, %v4054
        %4087 = vst.msk [vmem:[#allocation2 + $0x108] sm:$0xff] %vm2608, %v4055
        %4088 = vst.msk [vmem:[#allocation2 + $0x110] sm:$0xff] %vm2608, %v4056
        %4089 = vst.msk [vmem:[#allocation2 + $0x118] sm:$0xff] %vm2608, 0.0
        %4090 = vst.msk [vmem:[#allocation2 + $0x120] sm:$0xff] %vm2608, 0.0
        %vm4091 = vcmask 253952
        %4092 = vst.msk [vmem:[#allocation2 + $0x128] sm:$0x1] %vm4091, 0.0
        %v4093 = vld [vmem:[#allocation2 + $0x18] sm:$0xff]
        %v4094 = vld [vmem:[#allocation2 + $0x20] sm:$0xff]
        %v4095 = vld [vmem:[#allocation2 + $0x28] sm:$0xff]
        %v4096 = vld [vmem:[#allocation2 + $0x30] sm:$0xff]
        %v4097 = vld [vmem:[#allocation2 + $0x38] sm:$0xff]
        %v4098 = vld [vmem:[#allocation2 + $0x40] sm:$0xff]
        %v4099 = vld [vmem:[#allocation2 + $0x48] sm:$0xff]
        %v4100 = vld [vmem:[#allocation2 + $0x50] sm:$0xff]
        %v4101 = vld [vmem:[#allocation2 + $0x58] sm:$0xff]
        %v4102 = vld [vmem:[#allocation2 + $0x60] sm:$0xff]
        %v4103 = vld [vmem:[#allocation2 + $0x68] sm:$0xff]
        %v4104 = vld [vmem:[#allocation2 + $0x70] sm:$0xff]
        %v4105 = vld [vmem:[#allocation2 + $0x78] sm:$0xff]
        %v4106 = vld [vmem:[#allocation2 + $0x80] sm:$0xff]
        %v4107 = vld [vmem:[#allocation2 + $0x88] sm:$0xff]
        %v4108 = vld [vmem:[#allocation2 + $0x90] sm:$0xff]
        %v4109 = vld [vmem:[#allocation2 + $0x98] sm:$0xff]
        %v4110 = vld [vmem:[#allocation2 + $0xa0] sm:$0xff]
        %v4111 = vld [vmem:[#allocation2 + $0xa8] sm:$0xff]
        %v4112 = vld [vmem:[#allocation2 + $0xb0] sm:$0xff]
        %v4113 = vld [vmem:[#allocation2 + $0xb8] sm:$0xff]
        %v4114 = vld [vmem:[#allocation2 + $0xc0] sm:$0xff]
        %v4115 = vld [vmem:[#allocation2 + $0xc8] sm:$0xff]
        %v4116 = vld [vmem:[#allocation2 + $0xd0] sm:$0xff]
        %v4117 = vld [vmem:[#allocation2 + $0xd8] sm:$0xff]
        %v4118 = vld [vmem:[#allocation2 + $0xe0] sm:$0xff]
        %v4119 = vld [vmem:[#allocation2 + $0xe8] sm:$0xff]
        %v4120 = vld [vmem:[#allocation2 + $0xf0] sm:$0xff]
        %v4121 = vld [vmem:[#allocation2 + $0xf8] sm:$0xff]
        %v4122 = vld [vmem:[#allocation2 + $0x100] sm:$0xff]
        %v4123 = vld [vmem:[#allocation2 + $0x108] sm:$0xff]
        %v4124 = vld [vmem:[#allocation2 + $0x110] sm:$0xff]
        %v4125 = vld [vmem:[#allocation2 + $0x19] sm:$0xff]
        %v4126 = vld [vmem:[#allocation2 + $0x21] sm:$0xff]
        %v4127 = vld [vmem:[#allocation2 + $0x29] sm:$0xff]
        %v4128 = vld [vmem:[#allocation2 + $0x31] sm:$0xff]
        %v4129 = vld [vmem:[#allocation2 + $0x39] sm:$0xff]
        %v4130 = vld [vmem:[#allocation2 + $0x41] sm:$0xff]
        %v4131 = vld [vmem:[#allocation2 + $0x49] sm:$0xff]
        %v4132 = vld [vmem:[#allocation2 + $0x51] sm:$0xff]
        %v4133 = vld [vmem:[#allocation2 + $0x59] sm:$0xff]
        %v4134 = vld [vmem:[#allocation2 + $0x61] sm:$0xff]
        %v4135 = vld [vmem:[#allocation2 + $0x69] sm:$0xff]
        %v4136 = vld [vmem:[#allocation2 + $0x71] sm:$0xff]
        %v4137 = vld [vmem:[#allocation2 + $0x79] sm:$0xff]
        %v4138 = vld [vmem:[#allocation2 + $0x81] sm:$0xff]
        %v4139 = vld [vmem:[#allocation2 + $0x89] sm:$0xff]
        %v4140 = vld [vmem:[#allocation2 + $0x91] sm:$0xff]
        %v4141 = vld [vmem:[#allocation2 + $0x99] sm:$0xff]
        %v4142 = vld [vmem:[#allocation2 + $0xa1] sm:$0xff]
        %v4143 = vld [vmem:[#allocation2 + $0xa9] sm:$0xff]
        %v4144 = vld [vmem:[#allocation2 + $0xb1] sm:$0xff]
        %v4145 = vld [vmem:[#allocation2 + $0xb9] sm:$0xff]
        %v4146 = vld [vmem:[#allocation2 + $0xc1] sm:$0xff]
        %v4147 = vld [vmem:[#allocation2 + $0xc9] sm:$0xff]
        %v4148 = vld [vmem:[#allocation2 + $0xd1] sm:$0xff]
        %v4149 = vld [vmem:[#allocation2 + $0xd9] sm:$0xff]
        %v4150 = vld [vmem:[#allocation2 + $0xe1] sm:$0xff]
        %v4151 = vld [vmem:[#allocation2 + $0xe9] sm:$0xff]
        %v4152 = vld [vmem:[#allocation2 + $0xf1] sm:$0xff]
        %v4153 = vld [vmem:[#allocation2 + $0xf9] sm:$0xff]
        %v4154 = vld [vmem:[#allocation2 + $0x101] sm:$0xff]
        %v4155 = vld [vmem:[#allocation2 + $0x109] sm:$0xff]
        %v4156 = vld [vmem:[#allocation2 + $0x111] sm:$0xff]
        %v4157 = vmax.f32 %v4093, %v4125
        %v4158 = vmax.f32 %v4094, %v4126
        %v4159 = vmax.f32 %v4095, %v4127
        %v4160 = vmax.f32 %v4096, %v4128
        %v4161 = vmax.f32 %v4097, %v4129
        %v4162 = vmax.f32 %v4098, %v4130
        %v4163 = vmax.f32 %v4099, %v4131
        %v4164 = vmax.f32 %v4100, %v4132
        %v4165 = vmax.f32 %v4101, %v4133
        %v4166 = vmax.f32 %v4102, %v4134
        %v4167 = vmax.f32 %v4103, %v4135
        %v4168 = vmax.f32 %v4104, %v4136
        %v4169 = vmax.f32 %v4105, %v4137
        %v4170 = vmax.f32 %v4106, %v4138
        %v4171 = vmax.f32 %v4107, %v4139
        %v4172 = vmax.f32 %v4108, %v4140
        %v4173 = vmax.f32 %v4109, %v4141
        %v4174 = vmax.f32 %v4110, %v4142
        %v4175 = vmax.f32 %v4111, %v4143
        %v4176 = vmax.f32 %v4112, %v4144
        %v4177 = vmax.f32 %v4113, %v4145
        %v4178 = vmax.f32 %v4114, %v4146
        %v4179 = vmax.f32 %v4115, %v4147
        %v4180 = vmax.f32 %v4116, %v4148
        %v4181 = vmax.f32 %v4117, %v4149
        %v4182 = vmax.f32 %v4118, %v4150
        %v4183 = vmax.f32 %v4119, %v4151
        %v4184 = vmax.f32 %v4120, %v4152
        %v4185 = vmax.f32 %v4121, %v4153
        %v4186 = vmax.f32 %v4122, %v4154
        %v4187 = vmax.f32 %v4123, %v4155
        %v4188 = vmax.f32 %v4124, %v4156
        %v4189 = vld [vmem:[#allocation2 + $0x118] sm:$0xff]
        %v4190 = vld [vmem:[#allocation2 + $0x120] sm:$0xff]
        %v4191 = vld [vmem:[#allocation2 + $0x119] sm:$0xff]
        %v4192 = vld [vmem:[#allocation2 + $0x121] sm:$0xff]
        %v4193 = vmax.f32 %v4189, %v4191
        %v4194 = vmax.f32 %v4190, %v4192
        %v4195 = vmax.f32 %v4157, %v4159
        %v4196 = vmax.f32 %v4158, %v4160
        %v4197 = vmax.f32 %v4159, %v4161
        %v4198 = vmax.f32 %v4160, %v4162
        %v4199 = vmax.f32 %v4161, %v4163
        %v4200 = vmax.f32 %v4162, %v4164
        %v4201 = vmax.f32 %v4163, %v4165
        %v4202 = vmax.f32 %v4164, %v4166
        %v4203 = vmax.f32 %v4165, %v4167
        %v4204 = vmax.f32 %v4166, %v4168
        %v4205 = vmax.f32 %v4167, %v4169
        %v4206 = vmax.f32 %v4168, %v4170
        %v4207 = vmax.f32 %v4169, %v4171
        %v4208 = vmax.f32 %v4170, %v4172
        %v4209 = vmax.f32 %v4171, %v4173
        %v4210 = vmax.f32 %v4172, %v4174
        %v4211 = vmax.f32 %v4173, %v4175
        %v4212 = vmax.f32 %v4174, %v4176
        %v4213 = vmax.f32 %v4175, %v4177
        %v4214 = vmax.f32 %v4176, %v4178
        %v4215 = vmax.f32 %v4177, %v4179
        %v4216 = vmax.f32 %v4178, %v4180
        %v4217 = vmax.f32 %v4179, %v4181
        %v4218 = vmax.f32 %v4180, %v4182
        %v4219 = vmax.f32 %v4181, %v4183
        %v4220 = vmax.f32 %v4182, %v4184
        %v4221 = vmax.f32 %v4183, %v4185
        %v4222 = vmax.f32 %v4184, %v4186
        %v4223 = vmax.f32 %v4185, %v4187
        %v4224 = vmax.f32 %v4186, %v4188
        %v4225 = vmax.f32 %v4187, %v4193
        %v4226 = vmax.f32 %v4188, %v4194
        %v4227 = vld [vmem:[%s7] sm:$0xff]
        %v4228 = vld [vmem:[%s7 + $0x8] sm:$0xff]
        %v4229 = vld [vmem:[%s7 + $0x10] sm:$0xff]
        %v4230 = vld [vmem:[%s7 + $0x18] sm:$0xff]
        %v4231 = vld [vmem:[%s7 + $0x20] sm:$0xff]
        %v4232 = vld [vmem:[%s7 + $0x28] sm:$0xff]
        %v4233 = vld [vmem:[%s7 + $0x30] sm:$0xff]
        %v4234 = vld [vmem:[%s7 + $0x38] sm:$0xff]
        %v4235 = vpack.c.bf16 %v4196, %v4195
        %v4236 = vpack.c.bf16 %v4198, %v4197
        %v4237 = vpack.c.bf16 %v4200, %v4199
        %v4238 = vpack.c.bf16 %v4202, %v4201
        %v4239 = vpack.c.bf16 %v4204, %v4203
        %v4240 = vpack.c.bf16 %v4206, %v4205
        %v4241 = vpack.c.bf16 %v4208, %v4207
        %v4242 = vpack.c.bf16 %v4210, %v4209
        %v4243 = vpack.c.bf16 %v4212, %v4211
        %v4244 = vpack.c.bf16 %v4214, %v4213
        %v4245 = vpack.c.bf16 %v4216, %v4215
        %v4246 = vpack.c.bf16 %v4218, %v4217
        %v4247 = vpack.c.bf16 %v4220, %v4219
        %v4248 = vpack.c.bf16 %v4222, %v4221
        %v4249 = vpack.c.bf16 %v4224, %v4223
        %v4250 = vpack.c.bf16 %v4226, %v4225
        %v4259 = vunpack.c.l.b16 %v4227
        %v4260 = vunpack.c.h.b16 %v4227
        %v4261 = vunpack.c.l.b16 %v4228
        %v4262 = vunpack.c.h.b16 %v4228
        %v4263 = vunpack.c.l.b16 %v4229
        %v4264 = vunpack.c.h.b16 %v4229
        %v4265 = vunpack.c.l.b16 %v4230
        %v4266 = vunpack.c.h.b16 %v4230
        %v4267 = vunpack.c.l.b16 %v4231
        %v4268 = vunpack.c.h.b16 %v4231
        %v4269 = vunpack.c.l.b16 %v4232
        %v4270 = vunpack.c.h.b16 %v4232
        %v4271 = vunpack.c.l.b16 %v4233
        %v4272 = vunpack.c.h.b16 %v4233
        %v4273 = vunpack.c.l.b16 %v4234
        %v4274 = vunpack.c.h.b16 %v4234
        %v4275 = vpack.c.b16 %v4261, %v4259
        %v4276 = vpack.c.b16 %v4262, %v4260
        %v4277 = vpack.c.b16 %v4265, %v4263
        %v4278 = vpack.c.b16 %v4266, %v4264
        %v4279 = vpack.c.b16 %v4269, %v4267
        %v4280 = vpack.c.b16 %v4270, %v4268
        %v4281 = vpack.c.b16 %v4273, %v4271
        %v4282 = vpack.c.b16 %v4274, %v4272
        %4291 = vmatprep.subr.bf16.mxu0 0
        %4292 = vmatpush1.bf16.msra.mxu0 %v4235
        %4293 = vmatprep.subr.bf16.mxu0 0
        %4294 = vmatpush1.bf16.msra.mxu0 %v4236
        %4295 = vmatprep.subr.bf16.mxu0 0
        %4296 = vmatpush1.bf16.msra.mxu0 %v4237
        %4297 = vmatprep.subr.bf16.mxu0 0
        %4298 = vmatpush1.bf16.msra.mxu0 %v4238
        %4299 = vmatprep.subr.bf16.mxu0 0
        %4300 = vmatpush1.bf16.msra.mxu0 %v4239
        %4301 = vmatprep.subr.bf16.mxu0 0
        %4302 = vmatpush1.bf16.msra.mxu0 %v4240
        %4303 = vmatprep.subr.bf16.mxu0 0
        %4304 = vmatpush1.bf16.msra.mxu0 %v4241
        %4305 = vmatprep.subr.bf16.mxu0 0
        %4306 = vmatpush1.bf16.msra.mxu0 %v4242
        %4307 = vmatprep.subr.bf16.mxu0 0
        %4308 = vmatpush1.bf16.msra.mxu0 %v4243
        %4309 = vmatprep.subr.bf16.mxu0 0
        %4310 = vmatpush1.bf16.msra.mxu0 %v4244
        %4311 = vmatprep.subr.bf16.mxu0 0
        %4312 = vmatpush1.bf16.msra.mxu0 %v4245
        %4313 = vmatprep.subr.bf16.mxu0 0
        %4314 = vmatpush1.bf16.msra.mxu0 %v4246
        %4315 = vmatprep.subr.bf16.mxu0 0
        %4316 = vmatpush1.bf16.msra.mxu0 %v4247
        %4317 = vmatprep.subr.bf16.mxu0 0
        %4318 = vmatpush1.bf16.msra.mxu0 %v4248
        %4319 = vmatprep.subr.bf16.mxu0 0
        %4320 = vmatpush1.bf16.msra.mxu0 %v4249
        %4321 = vmatprep.subr.bf16.mxu0 0
        %4322 = vmatpush1.bf16.msra.mxu0 %v4250
        %4323 = vmatprep.mubr.bf16.mxu0 %v4276
        %4324 = vmatmul.mubr.bf16.gmra.mrb[0].mxu0 %v4275
        %v4325 = vpop.f32.mrb[0].mxu0
        %v4326 = vadd.f32 0.0, %v4325
        %v4327 = vpop.f32.mrb[0].mxu0
        %v4328 = vpop.f32.mrb[0].mxu0
        %v4329 = vadd.f32 0.0, %v4328
        %v4330 = vpop.f32.mrb[0].mxu0
        %4331 = vmatprep.mubr.bf16.mxu0 %v4278
        %4332 = vmatmul.mubr.bf16.gmra.mrb[0].mxu0 %v4277
        %v4333 = vpop.f32.mrb[0].mxu0
        %v4334 = vadd.f32 0.0, %v4333
        %v4335 = vpop.f32.mrb[0].mxu0
        %v4336 = vpop.f32.mrb[0].mxu0
        %v4337 = vadd.f32 0.0, %v4336
        %v4338 = vpop.f32.mrb[0].mxu0
        %4339 = vmatprep.mubr.bf16.mxu0 %v4280
        %4340 = vmatmul.mubr.bf16.gmra.mrb[0].mxu0 %v4279
        %v4341 = vpop.f32.mrb[0].mxu0
        %v4342 = vadd.f32 0.0, %v4341
        %v4343 = vpop.f32.mrb[0].mxu0
        %v4344 = vpop.f32.mrb[0].mxu0
        %v4345 = vadd.f32 0.0, %v4344
        %v4346 = vpop.f32.mrb[0].mxu0
        %4347 = vmatprep.mubr.bf16.mxu0 %v4282
        %4348 = vmatmul.mubr.bf16.gmra.mrb[0].mxu0 %v4281
        %v4349 = vpop.f32.mrb[0].mxu0
        %v4350 = vadd.f32 0.0, %v4349
        %v4351 = vpop.f32.mrb[0].mxu0
        %v4352 = vpop.f32.mrb[0].mxu0
        %v4353 = vadd.f32 0.0, %v4352
        %v4354 = vpop.f32.mrb[0].mxu0
        %4355 = vdwg.mxu0
        %v4356 = vld [vmem:[%s9] sm:$0x1]
        %v4357 = vld [vmem:[%s10] sm:$0x1]
        %4358 = vst.msk [vmem:[#allocation2 + $0x18] sm:$0xff] %vm2608, 0.0
        %4359 = vst.msk [vmem:[#allocation2 + $0x50] sm:$0xff] %vm2611, 0.0
        %4360 = vst.msk [vmem:[#allocation2 + $0x20] sm:$0xff] %vm2608, %v4326
        %4361 = vst.msk [vmem:[#allocation2 + $0x28] sm:$0xff] %vm2608, %v4329
        %4362 = vst.msk [vmem:[#allocation2 + $0x30] sm:$0xff] %vm2608, %v4334
        %4363 = vst.msk [vmem:[#allocation2 + $0x38] sm:$0xff] %vm2608, %v4337
        %4364 = vst.msk [vmem:[#allocation2 + $0x40] sm:$0xff] %vm2608, %v4342
        %4365 = vst.msk [vmem:[#allocation2 + $0x48] sm:$0xff] %vm2608, %v4345
        %4366 = vst.msk [vmem:[#allocation2 + $0x50] sm:$0xff] %vm2608, %v4350
        %4367 = vst.msk [vmem:[#allocation2 + $0x58] sm:$0xff] %vm2608, %v4353
        %4376 = vrot.lane.b32.xlu0 %v4326, 32
        %v4377 = vpop.permute.xlu0 %4376
        %4378 = vrot.lane.b32.xlu0 %v4329, 32
        %v4379 = vpop.permute.xlu0 %4378
        %4380 = vrot.lane.b32.xlu0 %v4334, 32
        %v4381 = vpop.permute.xlu0 %4380
        %4382 = vrot.lane.b32.xlu0 %v4337, 32
        %v4383 = vpop.permute.xlu0 %4382
        %4384 = vrot.lane.b32.xlu0 %v4342, 32
        %v4385 = vpop.permute.xlu0 %4384
        %4386 = vrot.lane.b32.xlu0 %v4345, 32
        %v4387 = vpop.permute.xlu0 %4386
        %4388 = vrot.lane.b32.xlu0 %v4350, 32
        %v4389 = vpop.permute.xlu0 %4388
        %4390 = vrot.lane.b32.xlu0 %v4353, 32
        %v4391 = vpop.permute.xlu0 %4390
        %4400 = vst.msk [vmem:[#allocation2 + $0x18] sm:$0xff] %vm2774, %v4377
        %4401 = vst.msk [vmem:[#allocation2 + $0x20] sm:$0xff] %vm2774, %v4379
        %4402 = vst.msk [vmem:[#allocation2 + $0x28] sm:$0xff] %vm2774, %v4381
        %4403 = vst.msk [vmem:[#allocation2 + $0x30] sm:$0xff] %vm2774, %v4383
        %4404 = vst.msk [vmem:[#allocation2 + $0x38] sm:$0xff] %vm2774, %v4385
        %4405 = vst.msk [vmem:[#allocation2 + $0x40] sm:$0xff] %vm2774, %v4387
        %4406 = vst.msk [vmem:[#allocation2 + $0x48] sm:$0xff] %vm2774, %v4389
        %4407 = vst.msk [vmem:[#allocation2 + $0x50] sm:$0xff] %vm2774, %v4391
        %4408 = vrot.lane.b32.xlu0 %v4326, 64
        %v4409 = vpop.permute.xlu0 %4408
        %4410 = vrot.lane.b32.xlu0 %v4329, 64
        %v4411 = vpop.permute.xlu0 %4410
        %4412 = vrot.lane.b32.xlu0 %v4334, 64
        %v4413 = vpop.permute.xlu0 %4412
        %4414 = vrot.lane.b32.xlu0 %v4337, 64
        %v4415 = vpop.permute.xlu0 %4414
        %4416 = vrot.lane.b32.xlu0 %v4342, 64
        %v4417 = vpop.permute.xlu0 %4416
        %4418 = vrot.lane.b32.xlu0 %v4345, 64
        %v4419 = vpop.permute.xlu0 %4418
        %4420 = vrot.lane.b32.xlu0 %v4350, 64
        %v4421 = vpop.permute.xlu0 %4420
        %4422 = vrot.lane.b32.xlu0 %v4353, 64
        %v4423 = vpop.permute.xlu0 %4422
        %4432 = vst.msk [vmem:[#allocation2 + $0x10] sm:$0xff] %vm2611, %v4409
        %4433 = vst.msk [vmem:[#allocation2 + $0x18] sm:$0xff] %vm2611, %v4411
        %4434 = vst.msk [vmem:[#allocation2 + $0x20] sm:$0xff] %vm2611, %v4413
        %4435 = vst.msk [vmem:[#allocation2 + $0x28] sm:$0xff] %vm2611, %v4415
        %4436 = vst.msk [vmem:[#allocation2 + $0x30] sm:$0xff] %vm2611, %v4417
        %4437 = vst.msk [vmem:[#allocation2 + $0x38] sm:$0xff] %vm2611, %v4419
        %4438 = vst.msk [vmem:[#allocation2 + $0x40] sm:$0xff] %vm2611, %v4421
        %4439 = vst.msk [vmem:[#allocation2 + $0x48] sm:$0xff] %vm2611, %v4423
        %v4440 = vld [vmem:[#allocation2 + $0x17] sm:$0xff]
        %v4441 = vld [vmem:[#allocation2 + $0x1f] sm:$0xff]
        %v4442 = vld [vmem:[#allocation2 + $0x27] sm:$0xff]
        %v4443 = vld [vmem:[#allocation2 + $0x2f] sm:$0xff]
        %v4444 = vld [vmem:[#allocation2 + $0x37] sm:$0xff]
        %v4445 = vld [vmem:[#allocation2 + $0x3f] sm:$0xff]
        %v4446 = vld [vmem:[#allocation2 + $0x47] sm:$0xff]
        %v4447 = vld [vmem:[#allocation2 + $0x4f] sm:$0xff]
        %v4448 = vsel %vm822, 1, 0
        %v4449 = vsel %vm823, 1, 0
        %v4450 = vsel %vm824, 1, 0
        %v4451 = vsel %vm825, 1, 0
        %v4452 = vsel %vm826, 1, 0
        %v4453 = vsel %vm827, 1, 0
        %v4454 = vsel %vm828, 1, 0
        %v4455 = vsel %vm829, 1, 0
        %vm4456 = vcmp.eq.s32.totalorder %v4448, 1
        %vm4457 = vcmp.eq.s32.totalorder %v4449, 1
        %vm4458 = vcmp.eq.s32.totalorder %v4450, 1
        %vm4459 = vcmp.eq.s32.totalorder %v4451, 1
        %vm4460 = vcmp.eq.s32.totalorder %v4452, 1
        %vm4461 = vcmp.eq.s32.totalorder %v4453, 1
        %vm4462 = vcmp.eq.s32.totalorder %v4454, 1
        %vm4463 = vcmp.eq.s32.totalorder %v4455, 1
        %v4464 = vsel %vm4456, %v4440, 0.0
        %v4465 = vsel %vm4457, %v4441, 0.0
        %v4466 = vsel %vm4458, %v4442, 0.0
        %v4467 = vsel %vm4459, %v4443, 0.0
        %v4468 = vsel %vm4460, %v4444, 0.0
        %v4469 = vsel %vm4461, %v4445, 0.0
        %v4470 = vsel %vm4462, %v4446, 0.0
        %v4471 = vsel %vm4463, %v4447, 0.0
        %v4472 = vpack.c.bf16 %v4465, %v4464
        %v4473 = vpack.c.bf16 %v4467, %v4466
        %v4474 = vpack.c.bf16 %v4469, %v4468
        %v4475 = vpack.c.bf16 %v4471, %v4470
        %v4476 = vld [vmem:[%s8] sm:$0xf]
        %v4477 = vld [vmem:[%s8 + $0x4] sm:$0xf]
        %v4478 = vld [vmem:[%s8 + $0x8] sm:$0xf]
        %v4479 = vld [vmem:[%s8 + $0xc] sm:$0xf]
        %v4480 = vld [vmem:[%s8 + $0x10] sm:$0xf]
        %v4481 = vld [vmem:[%s8 + $0x14] sm:$0xf]
        %v4482 = vld [vmem:[%s8 + $0x18] sm:$0xf]
        %v4483 = vld [vmem:[%s8 + $0x1c] sm:$0xf]
        %v4484 = vld [vmem:[%s8 + $0x20] sm:$0xf]
        %v4485 = vld [vmem:[%s8 + $0x24] sm:$0xf]
        %v4486 = vld [vmem:[%s8 + $0x28] sm:$0xf]
        %v4487 = vld [vmem:[%s8 + $0x2c] sm:$0xf]
        %v4488 = vld [vmem:[#allocation2 + $0x18] sm:$0xff]
        %v4489 = vld [vmem:[#allocation2 + $0x20] sm:$0xff]
        %v4490 = vld [vmem:[#allocation2 + $0x28] sm:$0xff]
        %v4491 = vld [vmem:[#allocation2 + $0x30] sm:$0xff]
        %v4492 = vld [vmem:[#allocation2 + $0x38] sm:$0xff]
        %v4493 = vld [vmem:[#allocation2 + $0x40] sm:$0xff]
        %v4494 = vld [vmem:[#allocation2 + $0x48] sm:$0xff]
        %v4495 = vld [vmem:[#allocation2 + $0x50] sm:$0xff]
        %v4496 = vpack.c.bf16 %v4489, %v4488
        %v4497 = vpack.c.bf16 %v4491, %v4490
        %v4498 = vpack.c.bf16 %v4493, %v4492
        %v4499 = vpack.c.bf16 %v4495, %v4494
        %s4500 = scalar_lea.vmem %s8, 48
        %v4501 = vld [vmem:[%s4500] sm:$0xf]
        %v4502 = vld [vmem:[%s4500 + $0x4] sm:$0xf]
        %v4503 = vld [vmem:[%s4500 + $0x8] sm:$0xf]
        %v4504 = vld [vmem:[%s4500 + $0xc] sm:$0xf]
        %v4505 = vld [vmem:[%s4500 + $0x10] sm:$0xf]
        %v4506 = vld [vmem:[%s4500 + $0x14] sm:$0xf]
        %v4507 = vld [vmem:[%s4500 + $0x18] sm:$0xf]
        %v4508 = vld [vmem:[%s4500 + $0x1c] sm:$0xf]
        %v4509 = vld [vmem:[%s4500 + $0x20] sm:$0xf]
        %v4510 = vld [vmem:[%s4500 + $0x24] sm:$0xf]
        %v4511 = vld [vmem:[%s4500 + $0x28] sm:$0xf]
        %v4512 = vld [vmem:[%s4500 + $0x2c] sm:$0xf]
        %v4525 = vunpack.c.l.b16 %v4501
        %v4526 = vunpack.c.l.b16 %v4502
        %v4527 = vunpack.c.l.b16 %v4503
        %v4528 = vunpack.c.l.b16 %v4504
        %v4529 = vunpack.c.l.b16 %v4505
        %v4530 = vunpack.c.l.b16 %v4506
        %v4531 = vunpack.c.l.b16 %v4507
        %v4532 = vunpack.c.l.b16 %v4508
        %v4533 = vunpack.c.l.b16 %v4509
        %v4534 = vunpack.c.l.b16 %v4510
        %v4535 = vunpack.c.l.b16 %v4511
        %v4536 = vunpack.c.l.b16 %v4512
        %v4537 = vpack.c.b16 %v4526, %v4525
        %v4538 = vpack.c.b16 %v4528, %v4527
        %v4539 = vpack.c.b16 %v4530, %v4529
        %v4540 = vpack.c.b16 %v4532, %v4531
        %v4541 = vpack.c.b16 %v4534, %v4533
        %v4542 = vpack.c.b16 %v4536, %v4535
        %v4550 = vsel %vm3124, %v4496, 0
        %v4553 = vsel %vm3124, %v4497, 0
        %v4556 = vsel %vm3124, %v4498, 0
        %v4559 = vsel %vm3124, %v4499, 0
        %4561 = vmatprep.subr.bf16.mxu0 0
        %4562 = vmatpush1.bf16.msra.mxu0 %v4537
        %4563 = vmatprep.subr.bf16.mxu0 0
        %4564 = vmatpush1.bf16.msra.mxu0 %v4538
        %4565 = vmatprep.subr.bf16.mxu0 0
        %4566 = vmatpush1.bf16.msra.mxu0 %v4539
        %4567 = vmatprep.subr.bf16.mxu0 0
        %4568 = vmatpush1.bf16.msra.mxu0 %v4540
        %4569 = vmatprep.subr.bf16.mxu0 0
        %4570 = vmatpush1.bf16.msra.mxu0 %v4541
        %4571 = vmatprep.subr.bf16.mxu0 0
        %4572 = vmatpush1.bf16.msra.mxu0 %v4542
        %4573 = vmatprep.subr.bf16.mxu0 0
        %4574 = vmatpush1.bf16.msra.mxu0 0
        %4575 = vmatprep.subr.bf16.mxu0 0
        %4576 = vmatpush1.bf16.msra.mxu0 0
        %4577 = vmatprep.subr.bf16.mxu0 0
        %4578 = vmatpush1.bf16.msra.mxu0 0
        %4579 = vmatprep.subr.bf16.mxu0 0
        %4580 = vmatpush1.bf16.msra.mxu0 0
        %4581 = vmatprep.subr.bf16.mxu0 0
        %4582 = vmatpush1.bf16.msra.mxu0 0
        %4583 = vmatprep.subr.bf16.mxu0 0
        %4584 = vmatpush1.bf16.msra.mxu0 0
        %4585 = vmatprep.subr.bf16.mxu0 0
        %4586 = vmatpush1.bf16.msra.mxu0 0
        %4587 = vmatprep.subr.bf16.mxu0 0
        %4588 = vmatpush1.bf16.msra.mxu0 0
        %4589 = vmatprep.subr.bf16.mxu0 0
        %4590 = vmatpush1.bf16.msra.mxu0 0
        %4591 = vmatprep.subr.bf16.mxu0 0
        %4592 = vmatpush1.bf16.msra.mxu0 0
        %4593 = vmatprep.mubr.bf16.mxu0 0
        %4594 = vmatmul.mubr.bf16.gmra.mrb[0].mxu0 %v4550
        %v4595 = vpop.f32.mrb[0].mxu0
        %v4596 = vadd.f32 0.0, %v4595
        %v4597 = vpop.f32.mrb[0].mxu0
        %v4598 = vpop.f32.mrb[0].mxu0
        %v4599 = vadd.f32 0.0, %v4598
        %v4600 = vpop.f32.mrb[0].mxu0
        %4601 = vmatprep.mubr.bf16.mxu0 0
        %4602 = vmatmul.mubr.bf16.gmra.mrb[0].mxu0 %v4553
        %v4603 = vpop.f32.mrb[0].mxu0
        %v4604 = vadd.f32 0.0, %v4603
        %v4605 = vpop.f32.mrb[0].mxu0
        %v4606 = vpop.f32.mrb[0].mxu0
        %v4607 = vadd.f32 0.0, %v4606
        %v4608 = vpop.f32.mrb[0].mxu0
        %4609 = vmatprep.mubr.bf16.mxu0 0
        %4610 = vmatmul.mubr.bf16.gmra.mrb[0].mxu0 %v4556
        %v4611 = vpop.f32.mrb[0].mxu0
        %v4612 = vadd.f32 0.0, %v4611
        %v4613 = vpop.f32.mrb[0].mxu0
        %v4614 = vpop.f32.mrb[0].mxu0
        %v4615 = vadd.f32 0.0, %v4614
        %v4616 = vpop.f32.mrb[0].mxu0
        %4617 = vmatprep.mubr.bf16.mxu0 0
        %4618 = vmatmul.mubr.bf16.gmra.mrb[0].mxu0 %v4559
        %v4619 = vpop.f32.mrb[0].mxu0
        %v4620 = vadd.f32 0.0, %v4619
        %v4621 = vpop.f32.mrb[0].mxu0
        %v4622 = vpop.f32.mrb[0].mxu0
        %v4623 = vadd.f32 0.0, %v4622
        %v4624 = vpop.f32.mrb[0].mxu0
        %4625 = vdwg.mxu0
        %v4638 = vunpack.c.l.b16 %v4476
        %v4639 = vunpack.c.l.b16 %v4477
        %v4640 = vunpack.c.l.b16 %v4478
        %v4641 = vunpack.c.l.b16 %v4479
        %v4642 = vunpack.c.l.b16 %v4480
        %v4643 = vunpack.c.l.b16 %v4481
        %v4644 = vunpack.c.l.b16 %v4482
        %v4645 = vunpack.c.l.b16 %v4483
        %v4646 = vunpack.c.l.b16 %v4484
        %v4647 = vunpack.c.l.b16 %v4485
        %v4648 = vunpack.c.l.b16 %v4486
        %v4649 = vunpack.c.l.b16 %v4487
        %v4650 = vpack.c.b16 %v4639, %v4638
        %v4651 = vpack.c.b16 %v4641, %v4640
        %v4652 = vpack.c.b16 %v4643, %v4642
        %v4653 = vpack.c.b16 %v4645, %v4644
        %v4654 = vpack.c.b16 %v4647, %v4646
        %v4655 = vpack.c.b16 %v4649, %v4648
        %v4663 = vsel %vm3124, %v4472, 0
        %v4666 = vsel %vm3124, %v4473, 0
        %v4669 = vsel %vm3124, %v4474, 0
        %v4672 = vsel %vm3124, %v4475, 0
        %4674 = vmatprep.subr.bf16.mxu0 0
        %4675 = vmatpush1.bf16.msra.mxu0 %v4650
        %4676 = vmatprep.subr.bf16.mxu0 0
        %4677 = vmatpush1.bf16.msra.mxu0 %v4651
        %4678 = vmatprep.subr.bf16.mxu0 0
        %4679 = vmatpush1.bf16.msra.mxu0 %v4652
        %4680 = vmatprep.subr.bf16.mxu0 0
        %4681 = vmatpush1.bf16.msra.mxu0 %v4653
        %4682 = vmatprep.subr.bf16.mxu0 0
        %4683 = vmatpush1.bf16.msra.mxu0 %v4654
        %4684 = vmatprep.subr.bf16.mxu0 0
        %4685 = vmatpush1.bf16.msra.mxu0 %v4655
        %4686 = vmatprep.subr.bf16.mxu0 0
        %4687 = vmatpush1.bf16.msra.mxu0 0
        %4688 = vmatprep.subr.bf16.mxu0 0
        %4689 = vmatpush1.bf16.msra.mxu0 0
        %4690 = vmatprep.subr.bf16.mxu0 0
        %4691 = vmatpush1.bf16.msra.mxu0 0
        %4692 = vmatprep.subr.bf16.mxu0 0
        %4693 = vmatpush1.bf16.msra.mxu0 0
        %4694 = vmatprep.subr.bf16.mxu0 0
        %4695 = vmatpush1.bf16.msra.mxu0 0
        %4696 = vmatprep.subr.bf16.mxu0 0
        %4697 = vmatpush1.bf16.msra.mxu0 0
        %4698 = vmatprep.subr.bf16.mxu0 0
        %4699 = vmatpush1.bf16.msra.mxu0 0
        %4700 = vmatprep.subr.bf16.mxu0 0
        %4701 = vmatpush1.bf16.msra.mxu0 0
        %4702 = vmatprep.subr.bf16.mxu0 0
        %4703 = vmatpush1.bf16.msra.mxu0 0
        %4704 = vmatprep.subr.bf16.mxu0 0
        %4705 = vmatpush1.bf16.msra.mxu0 0
        %4706 = vmatprep.mubr.bf16.mxu0 0
        %4707 = vmatmul.mubr.bf16.gmra.mrb[0].mxu0 %v4663
        %v4708 = vpop.f32.mrb[0].mxu0
        %v4709 = vadd.f32 %v4596, %v4708
        %v4710 = vpop.f32.mrb[0].mxu0
        %v4711 = vpop.f32.mrb[0].mxu0
        %v4712 = vadd.f32 %v4599, %v4711
        %v4713 = vpop.f32.mrb[0].mxu0
        %4714 = vmatprep.mubr.bf16.mxu0 0
        %4715 = vmatmul.mubr.bf16.gmra.mrb[0].mxu0 %v4666
        %v4716 = vpop.f32.mrb[0].mxu0
        %v4717 = vadd.f32 %v4604, %v4716
        %v4718 = vpop.f32.mrb[0].mxu0
        %v4719 = vpop.f32.mrb[0].mxu0
        %v4720 = vadd.f32 %v4607, %v4719
        %v4721 = vpop.f32.mrb[0].mxu0
        %4722 = vmatprep.mubr.bf16.mxu0 0
        %4723 = vmatmul.mubr.bf16.gmra.mrb[0].mxu0 %v4669
        %v4724 = vpop.f32.mrb[0].mxu0
        %v4725 = vadd.f32 %v4612, %v4724
        %v4726 = vpop.f32.mrb[0].mxu0
        %v4727 = vpop.f32.mrb[0].mxu0
        %v4728 = vadd.f32 %v4615, %v4727
        %v4729 = vpop.f32.mrb[0].mxu0
        %4730 = vmatprep.mubr.bf16.mxu0 0
        %4731 = vmatmul.mubr.bf16.gmra.mrb[0].mxu0 %v4672
        %v4732 = vpop.f32.mrb[0].mxu0
        %v4733 = vadd.f32 %v4620, %v4732
        %v4734 = vpop.f32.mrb[0].mxu0
        %v4735 = vpop.f32.mrb[0].mxu0
        %v4736 = vadd.f32 %v4623, %v4735
        %v4737 = vpop.f32.mrb[0].mxu0
        %4738 = vdwg.mxu0
        %v4739 = vld [vmem:[#allocation2 + $0x19] sm:$0xff]
        %v4740 = vld [vmem:[#allocation2 + $0x21] sm:$0xff]
        %v4741 = vld [vmem:[#allocation2 + $0x29] sm:$0xff]
        %v4742 = vld [vmem:[#allocation2 + $0x31] sm:$0xff]
        %v4743 = vld [vmem:[#allocation2 + $0x39] sm:$0xff]
        %v4744 = vld [vmem:[#allocation2 + $0x41] sm:$0xff]
        %v4745 = vld [vmem:[#allocation2 + $0x49] sm:$0xff]
        %v4746 = vld [vmem:[#allocation2 + $0x51] sm:$0xff]
        %v4747 = vsel %vm830, 1, 0
        %v4748 = vsel %vm831, 1, 0
        %v4749 = vsel %vm832, 1, 0
        %v4750 = vsel %vm833, 1, 0
        %v4751 = vsel %vm834, 1, 0
        %v4752 = vsel %vm835, 1, 0
        %v4753 = vsel %vm836, 1, 0
        %v4754 = vsel %vm837, 1, 0
        %vm4755 = vcmp.eq.s32.totalorder %v4747, 1
        %vm4756 = vcmp.eq.s32.totalorder %v4748, 1
        %vm4757 = vcmp.eq.s32.totalorder %v4749, 1
        %vm4758 = vcmp.eq.s32.totalorder %v4750, 1
        %vm4759 = vcmp.eq.s32.totalorder %v4751, 1
        %vm4760 = vcmp.eq.s32.totalorder %v4752, 1
        %vm4761 = vcmp.eq.s32.totalorder %v4753, 1
        %vm4762 = vcmp.eq.s32.totalorder %v4754, 1
        %v4763 = vsel %vm4755, %v4739, 0.0
        %v4764 = vsel %vm4756, %v4740, 0.0
        %v4765 = vsel %vm4757, %v4741, 0.0
        %v4766 = vsel %vm4758, %v4742, 0.0
        %v4767 = vsel %vm4759, %v4743, 0.0
        %v4768 = vsel %vm4760, %v4744, 0.0
        %v4769 = vsel %vm4761, %v4745, 0.0
        %v4770 = vsel %vm4762, %v4746, 0.0
        %v4771 = vpack.c.bf16 %v4764, %v4763
        %v4772 = vpack.c.bf16 %v4766, %v4765
        %v4773 = vpack.c.bf16 %v4768, %v4767
        %v4774 = vpack.c.bf16 %v4770, %v4769
        %s4775 = scalar_lea.vmem %s8, 96
        %v4776 = vld [vmem:[%s4775] sm:$0xf]
        %v4777 = vld [vmem:[%s4775 + $0x4] sm:$0xf]
        %v4778 = vld [vmem:[%s4775 + $0x8] sm:$0xf]
        %v4779 = vld [vmem:[%s4775 + $0xc] sm:$0xf]
        %v4780 = vld [vmem:[%s4775 + $0x10] sm:$0xf]
        %v4781 = vld [vmem:[%s4775 + $0x14] sm:$0xf]
        %v4782 = vld [vmem:[%s4775 + $0x18] sm:$0xf]
        %v4783 = vld [vmem:[%s4775 + $0x1c] sm:$0xf]
        %v4784 = vld [vmem:[%s4775 + $0x20] sm:$0xf]
        %v4785 = vld [vmem:[%s4775 + $0x24] sm:$0xf]
        %v4786 = vld [vmem:[%s4775 + $0x28] sm:$0xf]
        %v4787 = vld [vmem:[%s4775 + $0x2c] sm:$0xf]
        %v4800 = vunpack.c.l.b16 %v4776
        %v4801 = vunpack.c.l.b16 %v4777
        %v4802 = vunpack.c.l.b16 %v4778
        %v4803 = vunpack.c.l.b16 %v4779
        %v4804 = vunpack.c.l.b16 %v4780
        %v4805 = vunpack.c.l.b16 %v4781
        %v4806 = vunpack.c.l.b16 %v4782
        %v4807 = vunpack.c.l.b16 %v4783
        %v4808 = vunpack.c.l.b16 %v4784
        %v4809 = vunpack.c.l.b16 %v4785
        %v4810 = vunpack.c.l.b16 %v4786
        %v4811 = vunpack.c.l.b16 %v4787
        %v4812 = vpack.c.b16 %v4801, %v4800
        %v4813 = vpack.c.b16 %v4803, %v4802
        %v4814 = vpack.c.b16 %v4805, %v4804
        %v4815 = vpack.c.b16 %v4807, %v4806
        %v4816 = vpack.c.b16 %v4809, %v4808
        %v4817 = vpack.c.b16 %v4811, %v4810
        %v4825 = vsel %vm3124, %v4771, 0
        %v4828 = vsel %vm3124, %v4772, 0
        %v4831 = vsel %vm3124, %v4773, 0
        %v4834 = vsel %vm3124, %v4774, 0
        %4836 = vmatprep.subr.bf16.mxu0 0
        %4837 = vmatpush1.bf16.msra.mxu0 %v4812
        %4838 = vmatprep.subr.bf16.mxu0 0
        %4839 = vmatpush1.bf16.msra.mxu0 %v4813
        %4840 = vmatprep.subr.bf16.mxu0 0
        %4841 = vmatpush1.bf16.msra.mxu0 %v4814
        %4842 = vmatprep.subr.bf16.mxu0 0
        %4843 = vmatpush1.bf16.msra.mxu0 %v4815
        %4844 = vmatprep.subr.bf16.mxu0 0
        %4845 = vmatpush1.bf16.msra.mxu0 %v4816
        %4846 = vmatprep.subr.bf16.mxu0 0
        %4847 = vmatpush1.bf16.msra.mxu0 %v4817
        %4848 = vmatprep.subr.bf16.mxu0 0
        %4849 = vmatpush1.bf16.msra.mxu0 0
        %4850 = vmatprep.subr.bf16.mxu0 0
        %4851 = vmatpush1.bf16.msra.mxu0 0
        %4852 = vmatprep.subr.bf16.mxu0 0
        %4853 = vmatpush1.bf16.msra.mxu0 0
        %4854 = vmatprep.subr.bf16.mxu0 0
        %4855 = vmatpush1.bf16.msra.mxu0 0
        %4856 = vmatprep.subr.bf16.mxu0 0
        %4857 = vmatpush1.bf16.msra.mxu0 0
        %4858 = vmatprep.subr.bf16.mxu0 0
        %4859 = vmatpush1.bf16.msra.mxu0 0
        %4860 = vmatprep.subr.bf16.mxu0 0
        %4861 = vmatpush1.bf16.msra.mxu0 0
        %4862 = vmatprep.subr.bf16.mxu0 0
        %4863 = vmatpush1.bf16.msra.mxu0 0
        %4864 = vmatprep.subr.bf16.mxu0 0
        %4865 = vmatpush1.bf16.msra.mxu0 0
        %4866 = vmatprep.subr.bf16.mxu0 0
        %4867 = vmatpush1.bf16.msra.mxu0 0
        %4868 = vmatprep.mubr.bf16.mxu0 0
        %4869 = vmatmul.mubr.bf16.gmra.mrb[0].mxu0 %v4825
        %v4870 = vpop.f32.mrb[0].mxu0
        %v4871 = vadd.f32 0.0, %v4870
        %v4872 = vpop.f32.mrb[0].mxu0
        %v4873 = vpop.f32.mrb[0].mxu0
        %v4874 = vadd.f32 0.0, %v4873
        %v4875 = vpop.f32.mrb[0].mxu0
        %4876 = vmatprep.mubr.bf16.mxu0 0
        %4877 = vmatmul.mubr.bf16.gmra.mrb[0].mxu0 %v4828
        %v4878 = vpop.f32.mrb[0].mxu0
        %v4879 = vadd.f32 0.0, %v4878
        %v4880 = vpop.f32.mrb[0].mxu0
        %v4881 = vpop.f32.mrb[0].mxu0
        %v4882 = vadd.f32 0.0, %v4881
        %v4883 = vpop.f32.mrb[0].mxu0
        %4884 = vmatprep.mubr.bf16.mxu0 0
        %4885 = vmatmul.mubr.bf16.gmra.mrb[0].mxu0 %v4831
        %v4886 = vpop.f32.mrb[0].mxu0
        %v4887 = vadd.f32 0.0, %v4886
        %v4888 = vpop.f32.mrb[0].mxu0
        %v4889 = vpop.f32.mrb[0].mxu0
        %v4890 = vadd.f32 0.0, %v4889
        %v4891 = vpop.f32.mrb[0].mxu0
        %4892 = vmatprep.mubr.bf16.mxu0 0
        %4893 = vmatmul.mubr.bf16.gmra.mrb[0].mxu0 %v4834
        %v4894 = vpop.f32.mrb[0].mxu0
        %v4895 = vadd.f32 0.0, %v4894
        %v4896 = vpop.f32.mrb[0].mxu0
        %v4897 = vpop.f32.mrb[0].mxu0
        %v4898 = vadd.f32 0.0, %v4897
        %v4899 = vpop.f32.mrb[0].mxu0
        %4900 = vdwg.mxu0
        %v4901 = vadd.f32 %v4709, %v4871
        %v4902 = vadd.f32 %v4712, %v4874
        %v4903 = vadd.f32 %v4717, %v4879
        %v4904 = vadd.f32 %v4720, %v4882
        %v4905 = vadd.f32 %v4725, %v4887
        %v4906 = vadd.f32 %v4728, %v4890
        %v4907 = vadd.f32 %v4733, %v4895
        %v4908 = vadd.f32 %v4736, %v4898
        %v4910 = vlaneseq
        %v4911 = vshrl.u32 %v4910, 7
        %v4912 = vsub.s32 0, %v4911
        %v4913 = vrot.slane %v4356, %v4912
        %v4915 = vmul.f32 %v4901, %v4913
        %v4916 = vmul.f32 %v4902, %v4913
        %v4917 = vmul.f32 %v4903, %v4913
        %v4918 = vmul.f32 %v4904, %v4913
        %v4919 = vmul.f32 %v4905, %v4913
        %v4920 = vmul.f32 %v4906, %v4913
        %v4921 = vmul.f32 %v4907, %v4913
        %v4922 = vmul.f32 %v4908, %v4913
        %v4924 = vlaneseq
        %v4925 = vshrl.u32 %v4924, 7
        %v4926 = vsub.s32 0, %v4925
        %v4927 = vrot.slane %v4357, %v4926
        %v4929 = vadd.f32 %v4915, %v4927
        %v4930 = vadd.f32 %v4916, %v4927
        %v4931 = vadd.f32 %v4917, %v4927
        %v4932 = vadd.f32 %v4918, %v4927
        %v4933 = vadd.f32 %v4919, %v4927
        %v4934 = vadd.f32 %v4920, %v4927
        %v4935 = vadd.f32 %v4921, %v4927
        %v4936 = vadd.f32 %v4922, %v4927
        %v4937 = vmax.f32 %v4929, 0.0
        %v4938 = vmax.f32 %v4930, 0.0
        %v4939 = vmax.f32 %v4931, 0.0
        %v4940 = vmax.f32 %v4932, 0.0
        %v4941 = vmax.f32 %v4933, 0.0
        %v4942 = vmax.f32 %v4934, 0.0
        %v4943 = vmax.f32 %v4935, 0.0
        %v4944 = vmax.f32 %v4936, 0.0
        %vm4945 = vcmask 523264
        %4946 = vst.msk [vmem:[#allocation2 + $0x18] sm:$0xff] %vm4945, %v4937
        %4947 = vst.msk [vmem:[#allocation2 + $0x20] sm:$0xff] %vm4945, %v4938
        %4948 = vst.msk [vmem:[#allocation2 + $0x28] sm:$0xff] %vm4945, %v4939
        %4949 = vst.msk [vmem:[#allocation2 + $0x30] sm:$0xff] %vm4945, %v4940
        %4950 = vst.msk [vmem:[#allocation2 + $0x38] sm:$0xff] %vm4945, %v4941
        %4951 = vst.msk [vmem:[#allocation2 + $0x40] sm:$0xff] %vm4945, %v4942
        %4952 = vst.msk [vmem:[#allocation2 + $0x48] sm:$0xff] %vm4945, %v4943
        %4953 = vst.msk [vmem:[#allocation2 + $0x50] sm:$0xff] %vm4945, %v4944
        %4954 = vst.msk [vmem:[#allocation2 + $0x58] sm:$0xff] %vm4945, 0.0
        %vm4955 = vcmask 516096
        %4956 = vst.msk [vmem:[#allocation2 + $0x60] sm:$0x1] %vm4955, 0.0
        %v4957 = vld [vmem:[#allocation2 + $0x18] sm:$0xff]
        %v4958 = vld [vmem:[#allocation2 + $0x20] sm:$0xff]
        %v4959 = vld [vmem:[#allocation2 + $0x28] sm:$0xff]
        %v4960 = vld [vmem:[#allocation2 + $0x30] sm:$0xff]
        %v4961 = vld [vmem:[#allocation2 + $0x38] sm:$0xff]
        %v4962 = vld [vmem:[#allocation2 + $0x40] sm:$0xff]
        %v4963 = vld [vmem:[#allocation2 + $0x48] sm:$0xff]
        %v4964 = vld [vmem:[#allocation2 + $0x50] sm:$0xff]
        %v4965 = vld [vmem:[#allocation2 + $0x19] sm:$0xff]
        %v4966 = vld [vmem:[#allocation2 + $0x21] sm:$0xff]
        %v4967 = vld [vmem:[#allocation2 + $0x29] sm:$0xff]
        %v4968 = vld [vmem:[#allocation2 + $0x31] sm:$0xff]
        %v4969 = vld [vmem:[#allocation2 + $0x39] sm:$0xff]
        %v4970 = vld [vmem:[#allocation2 + $0x41] sm:$0xff]
        %v4971 = vld [vmem:[#allocation2 + $0x49] sm:$0xff]
        %v4972 = vld [vmem:[#allocation2 + $0x51] sm:$0xff]
        %v4973 = vmax.f32 %v4957, %v4965
        %v4974 = vmax.f32 %v4958, %v4966
        %v4975 = vmax.f32 %v4959, %v4967
        %v4976 = vmax.f32 %v4960, %v4968
        %v4977 = vmax.f32 %v4961, %v4969
        %v4978 = vmax.f32 %v4962, %v4970
        %v4979 = vmax.f32 %v4963, %v4971
        %v4980 = vmax.f32 %v4964, %v4972
        %v4981 = vld [vmem:[#allocation2 + $0x58] sm:$0xff]
        %v4982 = vld [vmem:[#allocation2 + $0x59] sm:$0xff]
        %v4983 = vmax.f32 %v4981, %v4982
        %v4984 = vmax.f32 %v4973, %v4974
        %v4985 = vmax.f32 %v4974, %v4975
        %v4986 = vmax.f32 %v4975, %v4976
        %v4987 = vmax.f32 %v4976, %v4977
        %v4988 = vmax.f32 %v4977, %v4978
        %v4989 = vmax.f32 %v4978, %v4979
        %v4990 = vmax.f32 %v4979, %v4980
        %v4991 = vmax.f32 %v4980, %v4983
        %v4992 = vld [vmem:[%s11] sm:$0xf]
        %v4993 = vld [vmem:[%s11 + $0x4] sm:$0xf]
        %v4994 = vpack.c.bf16 %v4985, %v4984
        %v4995 = vpack.c.bf16 %v4987, %v4986
        %v4996 = vpack.c.bf16 %v4989, %v4988
        %v4997 = vpack.c.bf16 %v4991, %v4990
        %v5000 = vunpack.c.l.b16 %v4992
        %v5001 = vunpack.c.l.b16 %v4993
        %v5002 = vpack.c.b16 %v5001, %v5000
        %v5004 = vsel %vm4945, %v5002, 0
        %5006 = vmatprep.subr.bf16.mxu0 0
        %5007 = vmatpush1.bf16.msra.mxu0 %v4994
        %5008 = vmatprep.subr.bf16.mxu0 0
        %5009 = vmatpush1.bf16.msra.mxu0 %v4995
        %5010 = vmatprep.subr.bf16.mxu0 0
        %5011 = vmatpush1.bf16.msra.mxu0 %v4996
        %5012 = vmatprep.subr.bf16.mxu0 0
        %5013 = vmatpush1.bf16.msra.mxu0 %v4997
        %5014 = vmatprep.subr.bf16.mxu0 0
        %5015 = vmatpush1.bf16.msra.mxu0 0
        %5016 = vmatprep.subr.bf16.mxu0 0
        %5017 = vmatpush1.bf16.msra.mxu0 0
        %5018 = vmatprep.subr.bf16.mxu0 0
        %5019 = vmatpush1.bf16.msra.mxu0 0
        %5020 = vmatprep.subr.bf16.mxu0 0
        %5021 = vmatpush1.bf16.msra.mxu0 0
        %5022 = vmatprep.subr.bf16.mxu0 0
        %5023 = vmatpush1.bf16.msra.mxu0 0
        %5024 = vmatprep.subr.bf16.mxu0 0
        %5025 = vmatpush1.bf16.msra.mxu0 0
        %5026 = vmatprep.subr.bf16.mxu0 0
        %5027 = vmatpush1.bf16.msra.mxu0 0
        %5028 = vmatprep.subr.bf16.mxu0 0
        %5029 = vmatpush1.bf16.msra.mxu0 0
        %5030 = vmatprep.subr.bf16.mxu0 0
        %5031 = vmatpush1.bf16.msra.mxu0 0
        %5032 = vmatprep.subr.bf16.mxu0 0
        %5033 = vmatpush1.bf16.msra.mxu0 0
        %5034 = vmatprep.subr.bf16.mxu0 0
        %5035 = vmatpush1.bf16.msra.mxu0 0
        %5036 = vmatprep.subr.bf16.mxu0 0
        %5037 = vmatpush1.bf16.msra.mxu0 0
        %5038 = vmatprep.mubr.bf16.mxu0 0
        %5039 = vmatmul.mubr.bf16.gmra.mrb[0].mxu0 %v5004
        %v5040 = vpop.f32.mrb[0].mxu0
        %v5041 = vadd.f32 0.0, %v5040
        %v5042 = vpop.f32.mrb[0].mxu0
        %v5043 = vpop.f32.mrb[0].mxu0
        %v5044 = vadd.f32 0.0, %v5043
        %v5045 = vpop.f32.mrb[0].mxu0
        %5046 = vdwg.mxu0
        %v5047 = vld [vmem:[%s13] sm:$0x1]
        %v5048 = vld [vmem:[%s14] sm:$0x1]
        %v5049 = vpack.c.bf16 %v5044, %v5041
        %v5050 = vld [vmem:[%s12] sm:$0xf]
        %v5051 = vld [vmem:[%s12 + $0x4] sm:$0xf]
        %v5052 = vld [vmem:[%s12 + $0x8] sm:$0xf]
        %v5053 = vld [vmem:[%s12 + $0xc] sm:$0xf]
        %v5054 = vld [vmem:[%s12 + $0x10] sm:$0xf]
        %v5055 = vld [vmem:[%s12 + $0x14] sm:$0xf]
        %v5056 = vld [vmem:[%s12 + $0x18] sm:$0xf]
        %v5057 = vld [vmem:[%s12 + $0x1c] sm:$0xf]
        %v5066 = vunpack.c.l.b16 %v5050
        %v5067 = vunpack.c.l.b16 %v5051
        %v5068 = vunpack.c.l.b16 %v5052
        %v5069 = vunpack.c.l.b16 %v5053
        %v5070 = vunpack.c.l.b16 %v5054
        %v5071 = vunpack.c.l.b16 %v5055
        %v5072 = vunpack.c.l.b16 %v5056
        %v5073 = vunpack.c.l.b16 %v5057
        %v5074 = vpack.c.b16 %v5067, %v5066
        %v5075 = vpack.c.b16 %v5069, %v5068
        %v5076 = vpack.c.b16 %v5071, %v5070
        %v5077 = vpack.c.b16 %v5073, %v5072
        %v5083 = vsel %vm4945, %v5049, 0
        %5085 = vmatprep.subr.bf16.mxu0 0
        %5086 = vmatpush1.bf16.msra.mxu0 %v5074
        %5087 = vmatprep.subr.bf16.mxu0 0
        %5088 = vmatpush1.bf16.msra.mxu0 %v5075
        %5089 = vmatprep.subr.bf16.mxu0 0
        %5090 = vmatpush1.bf16.msra.mxu0 %v5076
        %5091 = vmatprep.subr.bf16.mxu0 0
        %5092 = vmatpush1.bf16.msra.mxu0 %v5077
        %5093 = vmatprep.subr.bf16.mxu0 0
        %5094 = vmatpush1.bf16.msra.mxu0 0
        %5095 = vmatprep.subr.bf16.mxu0 0
        %5096 = vmatpush1.bf16.msra.mxu0 0
        %5097 = vmatprep.subr.bf16.mxu0 0
        %5098 = vmatpush1.bf16.msra.mxu0 0
        %5099 = vmatprep.subr.bf16.mxu0 0
        %5100 = vmatpush1.bf16.msra.mxu0 0
        %5101 = vmatprep.subr.bf16.mxu0 0
        %5102 = vmatpush1.bf16.msra.mxu0 0
        %5103 = vmatprep.subr.bf16.mxu0 0
        %5104 = vmatpush1.bf16.msra.mxu0 0
        %5105 = vmatprep.subr.bf16.mxu0 0
        %5106 = vmatpush1.bf16.msra.mxu0 0
        %5107 = vmatprep.subr.bf16.mxu0 0
        %5108 = vmatpush1.bf16.msra.mxu0 0
        %5109 = vmatprep.subr.bf16.mxu0 0
        %5110 = vmatpush1.bf16.msra.mxu0 0
        %5111 = vmatprep.subr.bf16.mxu0 0
        %5112 = vmatpush1.bf16.msra.mxu0 0
        %5113 = vmatprep.subr.bf16.mxu0 0
        %5114 = vmatpush1.bf16.msra.mxu0 0
        %5115 = vmatprep.subr.bf16.mxu0 0
        %5116 = vmatpush1.bf16.msra.mxu0 0
        %5117 = vmatprep.mubr.bf16.mxu0 0
        %5118 = vmatmul.mubr.bf16.gmra.mrb[0].mxu0 %v5083
        %v5119 = vpop.f32.mrb[0].mxu0
        %v5120 = vadd.f32 0.0, %v5119
        %v5121 = vpop.f32.mrb[0].mxu0
        %v5122 = vpop.f32.mrb[0].mxu0
        %v5123 = vadd.f32 0.0, %v5122
        %v5124 = vpop.f32.mrb[0].mxu0
        %5125 = vdwg.mxu0
        %v5126 = vpack.c.bf16 %v5123, %v5120
        %v5127 = vld [vmem:[%s15] sm:$0xf]
        %v5128 = vld [vmem:[%s15 + $0x4] sm:$0xf]
        %v5129 = vld [vmem:[%s15 + $0x8] sm:$0xf]
        %v5130 = vld [vmem:[%s15 + $0xc] sm:$0xf]
        %v5131 = vld [vmem:[%s15 + $0x10] sm:$0xf]
        %v5132 = vld [vmem:[%s15 + $0x14] sm:$0xf]
        %v5133 = vld [vmem:[%s15 + $0x18] sm:$0xf]
        %v5134 = vld [vmem:[%s15 + $0x1c] sm:$0xf]
        %s5135 = scalar_lea.vmem %s15, 32
        %v5136 = vld [vmem:[%s5135] sm:$0xf]
        %v5137 = vld [vmem:[%s5135 + $0x4] sm:$0xf]
        %v5138 = vld [vmem:[%s5135 + $0x8] sm:$0xf]
        %v5139 = vld [vmem:[%s5135 + $0xc] sm:$0xf]
        %v5140 = vld [vmem:[%s5135 + $0x10] sm:$0xf]
        %v5141 = vld [vmem:[%s5135 + $0x14] sm:$0xf]
        %v5142 = vld [vmem:[%s5135 + $0x18] sm:$0xf]
        %v5143 = vld [vmem:[%s5135 + $0x1c] sm:$0xf]
        %v5152 = vunpack.c.l.b16 %v5136
        %v5153 = vunpack.c.l.b16 %v5137
        %v5154 = vunpack.c.l.b16 %v5138
        %v5155 = vunpack.c.l.b16 %v5139
        %v5156 = vunpack.c.l.b16 %v5140
        %v5157 = vunpack.c.l.b16 %v5141
        %v5158 = vunpack.c.l.b16 %v5142
        %v5159 = vunpack.c.l.b16 %v5143
        %v5160 = vpack.c.b16 %v5153, %v5152
        %v5161 = vpack.c.b16 %v5155, %v5154
        %v5162 = vpack.c.b16 %v5157, %v5156
        %v5163 = vpack.c.b16 %v5159, %v5158
        %5165 = vrot.lane.b32.xlu0 %v5126, 96
        %v5166 = vpop.permute.xlu0 %5165
        %vm5168 = vcmask 130048
        %v5170 = vsel %vm5168, %v5160, 0
        %v5173 = vsel %vm5168, %v5161, 0
        %v5176 = vsel %vm5168, %v5162, 0
        %v5179 = vsel %vm5168, %v5163, 0
        %5181 = vmatprep.subr.bf16.mxu0 0
        %5182 = vmatpush1.bf16.msra.mxu0 %v5166
        %5183 = vmatprep.subr.bf16.mxu0 0
        %5184 = vmatpush1.bf16.msra.mxu0 0
        %5185 = vmatprep.subr.bf16.mxu0 0
        %5186 = vmatpush1.bf16.msra.mxu0 0
        %5187 = vmatprep.subr.bf16.mxu0 0
        %5188 = vmatpush1.bf16.msra.mxu0 0
        %5189 = vmatprep.subr.bf16.mxu0 0
        %5190 = vmatpush1.bf16.msra.mxu0 0
        %5191 = vmatprep.subr.bf16.mxu0 0
        %5192 = vmatpush1.bf16.msra.mxu0 0
        %5193 = vmatprep.subr.bf16.mxu0 0
        %5194 = vmatpush1.bf16.msra.mxu0 0
        %5195 = vmatprep.subr.bf16.mxu0 0
        %5196 = vmatpush1.bf16.msra.mxu0 0
        %5197 = vmatprep.subr.bf16.mxu0 0
        %5198 = vmatpush1.bf16.msra.mxu0 0
        %5199 = vmatprep.subr.bf16.mxu0 0
        %5200 = vmatpush1.bf16.msra.mxu0 0
        %5201 = vmatprep.subr.bf16.mxu0 0
        %5202 = vmatpush1.bf16.msra.mxu0 0
        %5203 = vmatprep.subr.bf16.mxu0 0
        %5204 = vmatpush1.bf16.msra.mxu0 0
        %5205 = vmatprep.subr.bf16.mxu0 0
        %5206 = vmatpush1.bf16.msra.mxu0 0
        %5207 = vmatprep.subr.bf16.mxu0 0
        %5208 = vmatpush1.bf16.msra.mxu0 0
        %5209 = vmatprep.subr.bf16.mxu0 0
        %5210 = vmatpush1.bf16.msra.mxu0 0
        %5211 = vmatprep.subr.bf16.mxu0 0
        %5212 = vmatpush1.bf16.msra.mxu0 0
        %5213 = vmatprep.mubr.bf16.mxu0 0
        %5214 = vmatmul.mubr.bf16.gmra.mrb[0].mxu0 %v5170
        %v5215 = vpop.f32.mrb[0].mxu0
        %v5216 = vadd.f32 0.0, %v5215
        %v5217 = vpop.f32.mrb[0].mxu0
        %v5218 = vpop.f32.mrb[0].mxu0
        %v5219 = vadd.f32 0.0, %v5218
        %v5220 = vpop.f32.mrb[0].mxu0
        %5221 = vmatprep.mubr.bf16.mxu0 0
        %5222 = vmatmul.mubr.bf16.gmra.mrb[0].mxu0 %v5173
        %v5223 = vpop.f32.mrb[0].mxu0
        %v5224 = vadd.f32 0.0, %v5223
        %v5225 = vpop.f32.mrb[0].mxu0
        %v5226 = vpop.f32.mrb[0].mxu0
        %v5227 = vadd.f32 0.0, %v5226
        %v5228 = vpop.f32.mrb[0].mxu0
        %5229 = vmatprep.mubr.bf16.mxu0 0
        %5230 = vmatmul.mubr.bf16.gmra.mrb[0].mxu0 %v5176
        %v5231 = vpop.f32.mrb[0].mxu0
        %v5232 = vadd.f32 0.0, %v5231
        %v5233 = vpop.f32.mrb[0].mxu0
        %v5234 = vpop.f32.mrb[0].mxu0
        %v5235 = vadd.f32 0.0, %v5234
        %v5236 = vpop.f32.mrb[0].mxu0
        %5237 = vmatprep.mubr.bf16.mxu0 0
        %5238 = vmatmul.mubr.bf16.gmra.mrb[0].mxu0 %v5179
        %v5239 = vpop.f32.mrb[0].mxu0
        %v5240 = vadd.f32 0.0, %v5239
        %v5241 = vpop.f32.mrb[0].mxu0
        %v5242 = vpop.f32.mrb[0].mxu0
        %v5243 = vadd.f32 0.0, %v5242
        %v5244 = vpop.f32.mrb[0].mxu0
        %5245 = vdwg.mxu0
        %v5254 = vunpack.c.l.b16 %v5127
        %v5255 = vunpack.c.l.b16 %v5128
        %v5256 = vunpack.c.l.b16 %v5129
        %v5257 = vunpack.c.l.b16 %v5130
        %v5258 = vunpack.c.l.b16 %v5131
        %v5259 = vunpack.c.l.b16 %v5132
        %v5260 = vunpack.c.l.b16 %v5133
        %v5261 = vunpack.c.l.b16 %v5134
        %v5262 = vpack.c.b16 %v5255, %v5254
        %v5263 = vpack.c.b16 %v5257, %v5256
        %v5264 = vpack.c.b16 %v5259, %v5258
        %v5265 = vpack.c.b16 %v5261, %v5260
        %v5267 = vsel %vm5168, %v5262, 0
        %v5270 = vsel %vm5168, %v5263, 0
        %v5273 = vsel %vm5168, %v5264, 0
        %v5276 = vsel %vm5168, %v5265, 0
        %5278 = vmatprep.subr.bf16.mxu0 0
        %5279 = vmatpush1.bf16.msra.mxu0 %v5126
        %5280 = vmatprep.subr.bf16.mxu0 0
        %5281 = vmatpush1.bf16.msra.mxu0 0
        %5282 = vmatprep.subr.bf16.mxu0 0
        %5283 = vmatpush1.bf16.msra.mxu0 0
        %5284 = vmatprep.subr.bf16.mxu0 0
        %5285 = vmatpush1.bf16.msra.mxu0 0
        %5286 = vmatprep.subr.bf16.mxu0 0
        %5287 = vmatpush1.bf16.msra.mxu0 0
        %5288 = vmatprep.subr.bf16.mxu0 0
        %5289 = vmatpush1.bf16.msra.mxu0 0
        %5290 = vmatprep.subr.bf16.mxu0 0
        %5291 = vmatpush1.bf16.msra.mxu0 0
        %5292 = vmatprep.subr.bf16.mxu0 0
        %5293 = vmatpush1.bf16.msra.mxu0 0
        %5294 = vmatprep.subr.bf16.mxu0 0
        %5295 = vmatpush1.bf16.msra.mxu0 0
        %5296 = vmatprep.subr.bf16.mxu0 0
        %5297 = vmatpush1.bf16.msra.mxu0 0
        %5298 = vmatprep.subr.bf16.mxu0 0
        %5299 = vmatpush1.bf16.msra.mxu0 0
        %5300 = vmatprep.subr.bf16.mxu0 0
        %5301 = vmatpush1.bf16.msra.mxu0 0
        %5302 = vmatprep.subr.bf16.mxu0 0
        %5303 = vmatpush1.bf16.msra.mxu0 0
        %5304 = vmatprep.subr.bf16.mxu0 0
        %5305 = vmatpush1.bf16.msra.mxu0 0
        %5306 = vmatprep.subr.bf16.mxu0 0
        %5307 = vmatpush1.bf16.msra.mxu0 0
        %5308 = vmatprep.subr.bf16.mxu0 0
        %5309 = vmatpush1.bf16.msra.mxu0 0
        %5310 = vmatprep.mubr.bf16.mxu0 0
        %5311 = vmatmul.mubr.bf16.gmra.mrb[0].mxu0 %v5267
        %v5312 = vpop.f32.mrb[0].mxu0
        %v5313 = vadd.f32 %v5216, %v5312
        %v5314 = vpop.f32.mrb[0].mxu0
        %v5315 = vpop.f32.mrb[0].mxu0
        %v5316 = vadd.f32 %v5219, %v5315
        %v5317 = vpop.f32.mrb[0].mxu0
        %5318 = vmatprep.mubr.bf16.mxu0 0
        %5319 = vmatmul.mubr.bf16.gmra.mrb[0].mxu0 %v5270
        %v5320 = vpop.f32.mrb[0].mxu0
        %v5321 = vadd.f32 %v5224, %v5320
        %v5322 = vpop.f32.mrb[0].mxu0
        %v5323 = vpop.f32.mrb[0].mxu0
        %v5324 = vadd.f32 %v5227, %v5323
        %v5325 = vpop.f32.mrb[0].mxu0
        %5326 = vmatprep.mubr.bf16.mxu0 0
        %5327 = vmatmul.mubr.bf16.gmra.mrb[0].mxu0 %v5273
        %v5328 = vpop.f32.mrb[0].mxu0
        %v5329 = vadd.f32 %v5232, %v5328
        %v5330 = vpop.f32.mrb[0].mxu0
        %v5331 = vpop.f32.mrb[0].mxu0
        %v5332 = vadd.f32 %v5235, %v5331
        %v5333 = vpop.f32.mrb[0].mxu0
        %5334 = vmatprep.mubr.bf16.mxu0 0
        %5335 = vmatmul.mubr.bf16.gmra.mrb[0].mxu0 %v5276
        %v5336 = vpop.f32.mrb[0].mxu0
        %v5337 = vadd.f32 %v5240, %v5336
        %v5338 = vpop.f32.mrb[0].mxu0
        %v5339 = vpop.f32.mrb[0].mxu0
        %v5340 = vadd.f32 %v5243, %v5339
        %v5341 = vpop.f32.mrb[0].mxu0
        %5342 = vdwg.mxu0
        %s5343 = scalar_lea.vmem %s15, 64
        %v5344 = vld [vmem:[%s5343] sm:$0xf]
        %v5345 = vld [vmem:[%s5343 + $0x4] sm:$0xf]
        %v5346 = vld [vmem:[%s5343 + $0x8] sm:$0xf]
        %v5347 = vld [vmem:[%s5343 + $0xc] sm:$0xf]
        %v5348 = vld [vmem:[%s5343 + $0x10] sm:$0xf]
        %v5349 = vld [vmem:[%s5343 + $0x14] sm:$0xf]
        %v5350 = vld [vmem:[%s5343 + $0x18] sm:$0xf]
        %v5351 = vld [vmem:[%s5343 + $0x1c] sm:$0xf]
        %v5360 = vunpack.c.l.b16 %v5344
        %v5361 = vunpack.c.l.b16 %v5345
        %v5362 = vunpack.c.l.b16 %v5346
        %v5363 = vunpack.c.l.b16 %v5347
        %v5364 = vunpack.c.l.b16 %v5348
        %v5365 = vunpack.c.l.b16 %v5349
        %v5366 = vunpack.c.l.b16 %v5350
        %v5367 = vunpack.c.l.b16 %v5351
        %v5368 = vpack.c.b16 %v5361, %v5360
        %v5369 = vpack.c.b16 %v5363, %v5362
        %v5370 = vpack.c.b16 %v5365, %v5364
        %v5371 = vpack.c.b16 %v5367, %v5366
        %5372 = vrot.lane.b32.xlu0 %v5126, 64
        %v5373 = vpop.permute.xlu0 %5372
        %v5376 = vsel %vm5168, %v5368, 0
        %v5379 = vsel %vm5168, %v5369, 0
        %v5382 = vsel %vm5168, %v5370, 0
        %v5385 = vsel %vm5168, %v5371, 0
        %5387 = vmatprep.subr.bf16.mxu0 0
        %5388 = vmatpush1.bf16.msra.mxu0 %v5373
        %5389 = vmatprep.subr.bf16.mxu0 0
        %5390 = vmatpush1.bf16.msra.mxu0 0
        %5391 = vmatprep.subr.bf16.mxu0 0
        %5392 = vmatpush1.bf16.msra.mxu0 0
        %5393 = vmatprep.subr.bf16.mxu0 0
        %5394 = vmatpush1.bf16.msra.mxu0 0
        %5395 = vmatprep.subr.bf16.mxu0 0
        %5396 = vmatpush1.bf16.msra.mxu0 0
        %5397 = vmatprep.subr.bf16.mxu0 0
        %5398 = vmatpush1.bf16.msra.mxu0 0
        %5399 = vmatprep.subr.bf16.mxu0 0
        %5400 = vmatpush1.bf16.msra.mxu0 0
        %5401 = vmatprep.subr.bf16.mxu0 0
        %5402 = vmatpush1.bf16.msra.mxu0 0
        %5403 = vmatprep.subr.bf16.mxu0 0
        %5404 = vmatpush1.bf16.msra.mxu0 0
        %5405 = vmatprep.subr.bf16.mxu0 0
        %5406 = vmatpush1.bf16.msra.mxu0 0
        %5407 = vmatprep.subr.bf16.mxu0 0
        %5408 = vmatpush1.bf16.msra.mxu0 0
        %5409 = vmatprep.subr.bf16.mxu0 0
        %5410 = vmatpush1.bf16.msra.mxu0 0
        %5411 = vmatprep.subr.bf16.mxu0 0
        %5412 = vmatpush1.bf16.msra.mxu0 0
        %5413 = vmatprep.subr.bf16.mxu0 0
        %5414 = vmatpush1.bf16.msra.mxu0 0
        %5415 = vmatprep.subr.bf16.mxu0 0
        %5416 = vmatpush1.bf16.msra.mxu0 0
        %5417 = vmatprep.subr.bf16.mxu0 0
        %5418 = vmatpush1.bf16.msra.mxu0 0
        %5419 = vmatprep.mubr.bf16.mxu0 0
        %5420 = vmatmul.mubr.bf16.gmra.mrb[0].mxu0 %v5376
        %v5421 = vpop.f32.mrb[0].mxu0
        %v5422 = vadd.f32 0.0, %v5421
        %v5423 = vpop.f32.mrb[0].mxu0
        %v5424 = vpop.f32.mrb[0].mxu0
        %v5425 = vadd.f32 0.0, %v5424
        %v5426 = vpop.f32.mrb[0].mxu0
        %5427 = vmatprep.mubr.bf16.mxu0 0
        %5428 = vmatmul.mubr.bf16.gmra.mrb[0].mxu0 %v5379
        %v5429 = vpop.f32.mrb[0].mxu0
        %v5430 = vadd.f32 0.0, %v5429
        %v5431 = vpop.f32.mrb[0].mxu0
        %v5432 = vpop.f32.mrb[0].mxu0
        %v5433 = vadd.f32 0.0, %v5432
        %v5434 = vpop.f32.mrb[0].mxu0
        %5435 = vmatprep.mubr.bf16.mxu0 0
        %5436 = vmatmul.mubr.bf16.gmra.mrb[0].mxu0 %v5382
        %v5437 = vpop.f32.mrb[0].mxu0
        %v5438 = vadd.f32 0.0, %v5437
        %v5439 = vpop.f32.mrb[0].mxu0
        %v5440 = vpop.f32.mrb[0].mxu0
        %v5441 = vadd.f32 0.0, %v5440
        %v5442 = vpop.f32.mrb[0].mxu0
        %5443 = vmatprep.mubr.bf16.mxu0 0
        %5444 = vmatmul.mubr.bf16.gmra.mrb[0].mxu0 %v5385
        %v5445 = vpop.f32.mrb[0].mxu0
        %v5446 = vadd.f32 0.0, %v5445
        %v5447 = vpop.f32.mrb[0].mxu0
        %v5448 = vpop.f32.mrb[0].mxu0
        %v5449 = vadd.f32 0.0, %v5448
        %v5450 = vpop.f32.mrb[0].mxu0
        %5451 = vdwg.mxu0
        %v5452 = vadd.f32 %v5313, %v5422
        %v5453 = vadd.f32 %v5316, %v5425
        %v5454 = vadd.f32 %v5321, %v5430
        %v5455 = vadd.f32 %v5324, %v5433
        %v5456 = vadd.f32 %v5329, %v5438
        %v5457 = vadd.f32 %v5332, %v5441
        %v5458 = vadd.f32 %v5337, %v5446
        %v5459 = vadd.f32 %v5340, %v5449
        %s5460 = scalar_lea.vmem %s15, 96
        %v5461 = vld [vmem:[%s5460] sm:$0xf]
        %v5462 = vld [vmem:[%s5460 + $0x4] sm:$0xf]
        %v5463 = vld [vmem:[%s5460 + $0x8] sm:$0xf]
        %v5464 = vld [vmem:[%s5460 + $0xc] sm:$0xf]
        %v5465 = vld [vmem:[%s5460 + $0x10] sm:$0xf]
        %v5466 = vld [vmem:[%s5460 + $0x14] sm:$0xf]
        %v5467 = vld [vmem:[%s5460 + $0x18] sm:$0xf]
        %v5468 = vld [vmem:[%s5460 + $0x1c] sm:$0xf]
        %v5477 = vunpack.c.l.b16 %v5461
        %v5478 = vunpack.c.l.b16 %v5462
        %v5479 = vunpack.c.l.b16 %v5463
        %v5480 = vunpack.c.l.b16 %v5464
        %v5481 = vunpack.c.l.b16 %v5465
        %v5482 = vunpack.c.l.b16 %v5466
        %v5483 = vunpack.c.l.b16 %v5467
        %v5484 = vunpack.c.l.b16 %v5468
        %v5485 = vpack.c.b16 %v5478, %v5477
        %v5486 = vpack.c.b16 %v5480, %v5479
        %v5487 = vpack.c.b16 %v5482, %v5481
        %v5488 = vpack.c.b16 %v5484, %v5483
        %5489 = vrot.lane.b32.xlu0 %v5126, 32
        %v5490 = vpop.permute.xlu0 %5489
        %v5493 = vsel %vm5168, %v5485, 0
        %v5496 = vsel %vm5168, %v5486, 0
        %v5499 = vsel %vm5168, %v5487, 0
        %v5502 = vsel %vm5168, %v5488, 0
        %5504 = vmatprep.subr.bf16.mxu0 0
        %5505 = vmatpush1.bf16.msra.mxu0 %v5490
        %5506 = vmatprep.subr.bf16.mxu0 0
        %5507 = vmatpush1.bf16.msra.mxu0 0
        %5508 = vmatprep.subr.bf16.mxu0 0
        %5509 = vmatpush1.bf16.msra.mxu0 0
        %5510 = vmatprep.subr.bf16.mxu0 0
        %5511 = vmatpush1.bf16.msra.mxu0 0
        %5512 = vmatprep.subr.bf16.mxu0 0
        %5513 = vmatpush1.bf16.msra.mxu0 0
        %5514 = vmatprep.subr.bf16.mxu0 0
        %5515 = vmatpush1.bf16.msra.mxu0 0
        %5516 = vmatprep.subr.bf16.mxu0 0
        %5517 = vmatpush1.bf16.msra.mxu0 0
        %5518 = vmatprep.subr.bf16.mxu0 0
        %5519 = vmatpush1.bf16.msra.mxu0 0
        %5520 = vmatprep.subr.bf16.mxu0 0
        %5521 = vmatpush1.bf16.msra.mxu0 0
        %5522 = vmatprep.subr.bf16.mxu0 0
        %5523 = vmatpush1.bf16.msra.mxu0 0
        %5524 = vmatprep.subr.bf16.mxu0 0
        %5525 = vmatpush1.bf16.msra.mxu0 0
        %5526 = vmatprep.subr.bf16.mxu0 0
        %5527 = vmatpush1.bf16.msra.mxu0 0
        %5528 = vmatprep.subr.bf16.mxu0 0
        %5529 = vmatpush1.bf16.msra.mxu0 0
        %5530 = vmatprep.subr.bf16.mxu0 0
        %5531 = vmatpush1.bf16.msra.mxu0 0
        %5532 = vmatprep.subr.bf16.mxu0 0
        %5533 = vmatpush1.bf16.msra.mxu0 0
        %5534 = vmatprep.subr.bf16.mxu0 0
        %5535 = vmatpush1.bf16.msra.mxu0 0
        %5536 = vmatprep.mubr.bf16.mxu0 0
        %5537 = vmatmul.mubr.bf16.gmra.mrb[0].mxu0 %v5493
        %v5538 = vpop.f32.mrb[0].mxu0
        %v5539 = vadd.f32 0.0, %v5538
        %v5540 = vpop.f32.mrb[0].mxu0
        %v5541 = vpop.f32.mrb[0].mxu0
        %v5542 = vadd.f32 0.0, %v5541
        %v5543 = vpop.f32.mrb[0].mxu0
        %5544 = vmatprep.mubr.bf16.mxu0 0
        %5545 = vmatmul.mubr.bf16.gmra.mrb[0].mxu0 %v5496
        %v5546 = vpop.f32.mrb[0].mxu0
        %v5547 = vadd.f32 0.0, %v5546
        %v5548 = vpop.f32.mrb[0].mxu0
        %v5549 = vpop.f32.mrb[0].mxu0
        %v5550 = vadd.f32 0.0, %v5549
        %v5551 = vpop.f32.mrb[0].mxu0
        %5552 = vmatprep.mubr.bf16.mxu0 0
        %5553 = vmatmul.mubr.bf16.gmra.mrb[0].mxu0 %v5499
        %v5554 = vpop.f32.mrb[0].mxu0
        %v5555 = vadd.f32 0.0, %v5554
        %v5556 = vpop.f32.mrb[0].mxu0
        %v5557 = vpop.f32.mrb[0].mxu0
        %v5558 = vadd.f32 0.0, %v5557
        %v5559 = vpop.f32.mrb[0].mxu0
        %5560 = vmatprep.mubr.bf16.mxu0 0
        %5561 = vmatmul.mubr.bf16.gmra.mrb[0].mxu0 %v5502
        %v5562 = vpop.f32.mrb[0].mxu0
        %v5563 = vadd.f32 0.0, %v5562
        %v5564 = vpop.f32.mrb[0].mxu0
        %v5565 = vpop.f32.mrb[0].mxu0
        %v5566 = vadd.f32 0.0, %v5565
        %v5567 = vpop.f32.mrb[0].mxu0
        %5568 = vdwg.mxu0
        %v5569 = vadd.f32 %v5452, %v5539
        %v5570 = vadd.f32 %v5453, %v5542
        %v5571 = vadd.f32 %v5454, %v5547
        %v5572 = vadd.f32 %v5455, %v5550
        %v5573 = vadd.f32 %v5456, %v5555
        %v5574 = vadd.f32 %v5457, %v5558
        %v5575 = vadd.f32 %v5458, %v5563
        %v5576 = vadd.f32 %v5459, %v5566
        %v5578 = vlaneseq
        %v5579 = vshrl.u32 %v5578, 7
        %v5580 = vsub.s32 0, %v5579
        %v5581 = vrot.slane %v5047, %v5580
        %v5583 = vmul.f32 %v5569, %v5581
        %v5584 = vmul.f32 %v5570, %v5581
        %v5585 = vmul.f32 %v5571, %v5581
        %v5586 = vmul.f32 %v5572, %v5581
        %v5587 = vmul.f32 %v5573, %v5581
        %v5588 = vmul.f32 %v5574, %v5581
        %v5589 = vmul.f32 %v5575, %v5581
        %v5590 = vmul.f32 %v5576, %v5581
        %v5592 = vlaneseq
        %v5593 = vshrl.u32 %v5592, 7
        %v5594 = vsub.s32 0, %v5593
        %v5595 = vrot.slane %v5048, %v5594
        %v5597 = vadd.f32 %v5583, %v5595
        %v5598 = vadd.f32 %v5584, %v5595
        %v5599 = vadd.f32 %v5585, %v5595
        %v5600 = vadd.f32 %v5586, %v5595
        %v5601 = vadd.f32 %v5587, %v5595
        %v5602 = vadd.f32 %v5588, %v5595
        %v5603 = vadd.f32 %v5589, %v5595
        %v5604 = vadd.f32 %v5590, %v5595
        %v5605 = vmax.f32 %v5597, 0.0
        %v5606 = vmax.f32 %v5598, 0.0
        %v5607 = vmax.f32 %v5599, 0.0
        %v5608 = vmax.f32 %v5600, 0.0
        %v5609 = vmax.f32 %v5601, 0.0
        %v5610 = vmax.f32 %v5602, 0.0
        %v5611 = vmax.f32 %v5603, 0.0
        %v5612 = vmax.f32 %v5604, 0.0
        %v5613 = vld [vmem:[%s17] sm:$0x1]
        %v5614 = vld [vmem:[%s18] sm:$0x1]
        %v5615 = vpack.c.bf16 %v5606, %v5605
        %v5616 = vpack.c.bf16 %v5608, %v5607
        %v5617 = vpack.c.bf16 %v5610, %v5609
        %v5618 = vpack.c.bf16 %v5612, %v5611
        %v5619 = vld [vmem:[%s16] sm:$0xf]
        %v5620 = vld [vmem:[%s16 + $0x4] sm:$0xf]
        %v5621 = vld [vmem:[%s16 + $0x8] sm:$0xf]
        %v5622 = vld [vmem:[%s16 + $0xc] sm:$0xf]
        %v5627 = vunpack.c.l.b16 %v5619
        %v5628 = vunpack.c.l.b16 %v5620
        %v5629 = vunpack.c.l.b16 %v5621
        %v5630 = vunpack.c.l.b16 %v5622
        %v5631 = vpack.c.b16 %v5628, %v5627
        %v5632 = vpack.c.b16 %v5630, %v5629
        %v5636 = vsel %vm2608, %v5615, 0
        %v5639 = vsel %vm2608, %v5616, 0
        %v5642 = vsel %vm2608, %v5617, 0
        %v5645 = vsel %vm2608, %v5618, 0
        %5647 = vmatprep.subr.bf16.mxu0 0
        %5648 = vmatpush1.bf16.msra.mxu0 %v5631
        %5649 = vmatprep.subr.bf16.mxu0 0
        %5650 = vmatpush1.bf16.msra.mxu0 %v5632
        %5651 = vmatprep.subr.bf16.mxu0 0
        %5652 = vmatpush1.bf16.msra.mxu0 0
        %5653 = vmatprep.subr.bf16.mxu0 0
        %5654 = vmatpush1.bf16.msra.mxu0 0
        %5655 = vmatprep.subr.bf16.mxu0 0
        %5656 = vmatpush1.bf16.msra.mxu0 0
        %5657 = vmatprep.subr.bf16.mxu0 0
        %5658 = vmatpush1.bf16.msra.mxu0 0
        %5659 = vmatprep.subr.bf16.mxu0 0
        %5660 = vmatpush1.bf16.msra.mxu0 0
        %5661 = vmatprep.subr.bf16.mxu0 0
        %5662 = vmatpush1.bf16.msra.mxu0 0
        %5663 = vmatprep.subr.bf16.mxu0 0
        %5664 = vmatpush1.bf16.msra.mxu0 0
        %5665 = vmatprep.subr.bf16.mxu0 0
        %5666 = vmatpush1.bf16.msra.mxu0 0
        %5667 = vmatprep.subr.bf16.mxu0 0
        %5668 = vmatpush1.bf16.msra.mxu0 0
        %5669 = vmatprep.subr.bf16.mxu0 0
        %5670 = vmatpush1.bf16.msra.mxu0 0
        %5671 = vmatprep.subr.bf16.mxu0 0
        %5672 = vmatpush1.bf16.msra.mxu0 0
        %5673 = vmatprep.subr.bf16.mxu0 0
        %5674 = vmatpush1.bf16.msra.mxu0 0
        %5675 = vmatprep.subr.bf16.mxu0 0
        %5676 = vmatpush1.bf16.msra.mxu0 0
        %5677 = vmatprep.subr.bf16.mxu0 0
        %5678 = vmatpush1.bf16.msra.mxu0 0
        %5679 = vmatprep.mubr.bf16.mxu0 0
        %5680 = vmatmul.mubr.bf16.gmra.mrb[0].mxu0 %v5636
        %v5681 = vpop.f32.mrb[0].mxu0
        %v5682 = vadd.f32 0.0, %v5681
        %v5683 = vpop.f32.mrb[0].mxu0
        %v5684 = vpop.f32.mrb[0].mxu0
        %v5685 = vadd.f32 0.0, %v5684
        %v5686 = vpop.f32.mrb[0].mxu0
        %5687 = vmatprep.mubr.bf16.mxu0 0
        %5688 = vmatmul.mubr.bf16.gmra.mrb[0].mxu0 %v5639
        %v5689 = vpop.f32.mrb[0].mxu0
        %v5690 = vadd.f32 0.0, %v5689
        %v5691 = vpop.f32.mrb[0].mxu0
        %v5692 = vpop.f32.mrb[0].mxu0
        %v5693 = vadd.f32 0.0, %v5692
        %v5694 = vpop.f32.mrb[0].mxu0
        %5695 = vmatprep.mubr.bf16.mxu0 0
        %5696 = vmatmul.mubr.bf16.gmra.mrb[0].mxu0 %v5642
        %v5697 = vpop.f32.mrb[0].mxu0
        %v5698 = vadd.f32 0.0, %v5697
        %v5699 = vpop.f32.mrb[0].mxu0
        %v5700 = vpop.f32.mrb[0].mxu0
        %v5701 = vadd.f32 0.0, %v5700
        %v5702 = vpop.f32.mrb[0].mxu0
        %5703 = vmatprep.mubr.bf16.mxu0 0
        %5704 = vmatmul.mubr.bf16.gmra.mrb[0].mxu0 %v5645
        %v5705 = vpop.f32.mrb[0].mxu0
        %v5706 = vadd.f32 0.0, %v5705
        %v5707 = vpop.f32.mrb[0].mxu0
        %v5708 = vpop.f32.mrb[0].mxu0
        %v5709 = vadd.f32 0.0, %v5708
        %v5710 = vpop.f32.mrb[0].mxu0
        %5711 = vdwg.mxu0
        %v5712 = vpack.c.bf16 %v5685, %v5682
        %v5713 = vpack.c.bf16 %v5693, %v5690
        %v5714 = vpack.c.bf16 %v5701, %v5698
        %v5715 = vpack.c.bf16 %v5709, %v5706
        %v5716 = vld [vmem:[%s19] sm:$0xf]
        %v5717 = vld [vmem:[%s19 + $0x4] sm:$0xf]
        %v5718 = vld [vmem:[%s19 + $0x8] sm:$0xf]
        %v5719 = vld [vmem:[%s19 + $0xc] sm:$0xf]
        %v5720 = vld [vmem:[%s19 + $0x10] sm:$0xf]
        %v5721 = vld [vmem:[%s19 + $0x14] sm:$0xf]
        %v5722 = vld [vmem:[%s19 + $0x18] sm:$0xf]
        %v5723 = vld [vmem:[%s19 + $0x1c] sm:$0xf]
        %v5724 = vld [vmem:[%s19 + $0x20] sm:$0xf]
        %v5725 = vld [vmem:[%s19 + $0x24] sm:$0xf]
        %v5726 = vld [vmem:[%s19 + $0x28] sm:$0xf]
        %v5727 = vld [vmem:[%s19 + $0x2c] sm:$0xf]
        %v5728 = vld [vmem:[%s19 + $0x30] sm:$0xf]
        %v5729 = vld [vmem:[%s19 + $0x34] sm:$0xf]
        %v5730 = vld [vmem:[%s19 + $0x38] sm:$0xf]
        %v5731 = vld [vmem:[%s19 + $0x3c] sm:$0xf]
        %v5732 = vld [vmem:[%s19 + $0x40] sm:$0xf]
        %v5733 = vld [vmem:[%s19 + $0x44] sm:$0xf]
        %v5734 = vld [vmem:[%s19 + $0x48] sm:$0xf]
        %v5735 = vld [vmem:[%s19 + $0x4c] sm:$0xf]
        %v5736 = vld [vmem:[%s19 + $0x50] sm:$0xf]
        %v5737 = vld [vmem:[%s19 + $0x54] sm:$0xf]
        %v5738 = vld [vmem:[%s19 + $0x58] sm:$0xf]
        %v5739 = vld [vmem:[%s19 + $0x5c] sm:$0xf]
        %v5740 = vld [vmem:[%s19 + $0x60] sm:$0xf]
        %v5741 = vld [vmem:[%s19 + $0x64] sm:$0xf]
        %v5742 = vld [vmem:[%s19 + $0x68] sm:$0xf]
        %v5743 = vld [vmem:[%s19 + $0x6c] sm:$0xf]
        %v5744 = vld [vmem:[%s19 + $0x70] sm:$0xf]
        %v5745 = vld [vmem:[%s19 + $0x74] sm:$0xf]
        %v5746 = vld [vmem:[%s19 + $0x78] sm:$0xf]
        %v5747 = vld [vmem:[%s19 + $0x7c] sm:$0xf]
        %s5748 = scalar_lea.vmem %s19, 128
        %v5749 = vld [vmem:[%s5748] sm:$0xf]
        %v5750 = vld [vmem:[%s5748 + $0x4] sm:$0xf]
        %v5751 = vld [vmem:[%s5748 + $0x8] sm:$0xf]
        %v5752 = vld [vmem:[%s5748 + $0xc] sm:$0xf]
        %v5753 = vld [vmem:[%s5748 + $0x10] sm:$0xf]
        %v5754 = vld [vmem:[%s5748 + $0x14] sm:$0xf]
        %v5755 = vld [vmem:[%s5748 + $0x18] sm:$0xf]
        %v5756 = vld [vmem:[%s5748 + $0x1c] sm:$0xf]
        %v5757 = vld [vmem:[%s5748 + $0x20] sm:$0xf]
        %v5758 = vld [vmem:[%s5748 + $0x24] sm:$0xf]
        %v5759 = vld [vmem:[%s5748 + $0x28] sm:$0xf]
        %v5760 = vld [vmem:[%s5748 + $0x2c] sm:$0xf]
        %v5761 = vld [vmem:[%s5748 + $0x30] sm:$0xf]
        %v5762 = vld [vmem:[%s5748 + $0x34] sm:$0xf]
        %v5763 = vld [vmem:[%s5748 + $0x38] sm:$0xf]
        %v5764 = vld [vmem:[%s5748 + $0x3c] sm:$0xf]
        %v5765 = vld [vmem:[%s5748 + $0x40] sm:$0xf]
        %v5766 = vld [vmem:[%s5748 + $0x44] sm:$0xf]
        %v5767 = vld [vmem:[%s5748 + $0x48] sm:$0xf]
        %v5768 = vld [vmem:[%s5748 + $0x4c] sm:$0xf]
        %v5769 = vld [vmem:[%s5748 + $0x50] sm:$0xf]
        %v5770 = vld [vmem:[%s5748 + $0x54] sm:$0xf]
        %v5771 = vld [vmem:[%s5748 + $0x58] sm:$0xf]
        %v5772 = vld [vmem:[%s5748 + $0x5c] sm:$0xf]
        %v5773 = vld [vmem:[%s5748 + $0x60] sm:$0xf]
        %v5774 = vld [vmem:[%s5748 + $0x64] sm:$0xf]
        %v5775 = vld [vmem:[%s5748 + $0x68] sm:$0xf]
        %v5776 = vld [vmem:[%s5748 + $0x6c] sm:$0xf]
        %v5777 = vld [vmem:[%s5748 + $0x70] sm:$0xf]
        %v5778 = vld [vmem:[%s5748 + $0x74] sm:$0xf]
        %v5779 = vld [vmem:[%s5748 + $0x78] sm:$0xf]
        %v5780 = vld [vmem:[%s5748 + $0x7c] sm:$0xf]
        %v5813 = vunpack.c.l.b16 %v5749
        %v5814 = vunpack.c.l.b16 %v5750
        %v5815 = vunpack.c.l.b16 %v5751
        %v5816 = vunpack.c.l.b16 %v5752
        %v5817 = vunpack.c.l.b16 %v5753
        %v5818 = vunpack.c.l.b16 %v5754
        %v5819 = vunpack.c.l.b16 %v5755
        %v5820 = vunpack.c.l.b16 %v5756
        %v5821 = vunpack.c.l.b16 %v5757
        %v5822 = vunpack.c.l.b16 %v5758
        %v5823 = vunpack.c.l.b16 %v5759
        %v5824 = vunpack.c.l.b16 %v5760
        %v5825 = vunpack.c.l.b16 %v5761
        %v5826 = vunpack.c.l.b16 %v5762
        %v5827 = vunpack.c.l.b16 %v5763
        %v5828 = vunpack.c.l.b16 %v5764
        %v5829 = vunpack.c.l.b16 %v5765
        %v5830 = vunpack.c.l.b16 %v5766
        %v5831 = vunpack.c.l.b16 %v5767
        %v5832 = vunpack.c.l.b16 %v5768
        %v5833 = vunpack.c.l.b16 %v5769
        %v5834 = vunpack.c.l.b16 %v5770
        %v5835 = vunpack.c.l.b16 %v5771
        %v5836 = vunpack.c.l.b16 %v5772
        %v5837 = vunpack.c.l.b16 %v5773
        %v5838 = vunpack.c.l.b16 %v5774
        %v5839 = vunpack.c.l.b16 %v5775
        %v5840 = vunpack.c.l.b16 %v5776
        %v5841 = vunpack.c.l.b16 %v5777
        %v5842 = vunpack.c.l.b16 %v5778
        %v5843 = vunpack.c.l.b16 %v5779
        %v5844 = vunpack.c.l.b16 %v5780
        %v5845 = vpack.c.b16 %v5814, %v5813
        %v5846 = vpack.c.b16 %v5816, %v5815
        %v5847 = vpack.c.b16 %v5818, %v5817
        %v5848 = vpack.c.b16 %v5820, %v5819
        %v5849 = vpack.c.b16 %v5822, %v5821
        %v5850 = vpack.c.b16 %v5824, %v5823
        %v5851 = vpack.c.b16 %v5826, %v5825
        %v5852 = vpack.c.b16 %v5828, %v5827
        %v5853 = vpack.c.b16 %v5830, %v5829
        %v5854 = vpack.c.b16 %v5832, %v5831
        %v5855 = vpack.c.b16 %v5834, %v5833
        %v5856 = vpack.c.b16 %v5836, %v5835
        %v5857 = vpack.c.b16 %v5838, %v5837
        %v5858 = vpack.c.b16 %v5840, %v5839
        %v5859 = vpack.c.b16 %v5842, %v5841
        %v5860 = vpack.c.b16 %v5844, %v5843
        %5865 = vrot.lane.b32.xlu0 %v5712, 96
        %v5866 = vpop.permute.xlu0 %5865
        %5867 = vrot.lane.b32.xlu0 %v5713, 96
        %v5868 = vpop.permute.xlu0 %5867
        %5869 = vrot.lane.b32.xlu0 %v5714, 96
        %v5870 = vpop.permute.xlu0 %5869
        %5871 = vrot.lane.b32.xlu0 %v5715, 96
        %v5872 = vpop.permute.xlu0 %5871
        %v5878 = vsel %vm4945, %v5845, 0
        %v5881 = vsel %vm4945, %v5846, 0
        %v5884 = vsel %vm4945, %v5847, 0
        %v5887 = vsel %vm4945, %v5848, 0
        %v5890 = vsel %vm4945, %v5849, 0
        %v5893 = vsel %vm4945, %v5850, 0
        %v5896 = vsel %vm4945, %v5851, 0
        %v5899 = vsel %vm4945, %v5852, 0
        %v5902 = vsel %vm4945, %v5853, 0
        %v5905 = vsel %vm4945, %v5854, 0
        %v5908 = vsel %vm4945, %v5855, 0
        %v5911 = vsel %vm4945, %v5856, 0
        %v5914 = vsel %vm4945, %v5857, 0
        %v5917 = vsel %vm4945, %v5858, 0
        %v5920 = vsel %vm4945, %v5859, 0
        %v5923 = vsel %vm4945, %v5860, 0
        %5925 = vmatprep.subr.bf16.mxu0 0
        %5926 = vmatpush1.bf16.msra.mxu0 %v5866
        %5927 = vmatprep.subr.bf16.mxu0 0
        %5928 = vmatpush1.bf16.msra.mxu0 %v5868
        %5929 = vmatprep.subr.bf16.mxu0 0
        %5930 = vmatpush1.bf16.msra.mxu0 %v5870
        %5931 = vmatprep.subr.bf16.mxu0 0
        %5932 = vmatpush1.bf16.msra.mxu0 %v5872
        %5933 = vmatprep.subr.bf16.mxu0 0
        %5934 = vmatpush1.bf16.msra.mxu0 0
        %5935 = vmatprep.subr.bf16.mxu0 0
        %5936 = vmatpush1.bf16.msra.mxu0 0
        %5937 = vmatprep.subr.bf16.mxu0 0
        %5938 = vmatpush1.bf16.msra.mxu0 0
        %5939 = vmatprep.subr.bf16.mxu0 0
        %5940 = vmatpush1.bf16.msra.mxu0 0
        %5941 = vmatprep.subr.bf16.mxu0 0
        %5942 = vmatpush1.bf16.msra.mxu0 0
        %5943 = vmatprep.subr.bf16.mxu0 0
        %5944 = vmatpush1.bf16.msra.mxu0 0
        %5945 = vmatprep.subr.bf16.mxu0 0
        %5946 = vmatpush1.bf16.msra.mxu0 0
        %5947 = vmatprep.subr.bf16.mxu0 0
        %5948 = vmatpush1.bf16.msra.mxu0 0
        %5949 = vmatprep.subr.bf16.mxu0 0
        %5950 = vmatpush1.bf16.msra.mxu0 0
        %5951 = vmatprep.subr.bf16.mxu0 0
        %5952 = vmatpush1.bf16.msra.mxu0 0
        %5953 = vmatprep.subr.bf16.mxu0 0
        %5954 = vmatpush1.bf16.msra.mxu0 0
        %5955 = vmatprep.subr.bf16.mxu0 0
        %5956 = vmatpush1.bf16.msra.mxu0 0
        %5957 = vmatprep.mubr.bf16.mxu0 0
        %5958 = vmatmul.mubr.bf16.gmra.mrb[0].mxu0 %v5878
        %v5959 = vpop.f32.mrb[0].mxu0
        %v5960 = vadd.f32 0.0, %v5959
        %v5961 = vpop.f32.mrb[0].mxu0
        %v5962 = vpop.f32.mrb[0].mxu0
        %v5963 = vadd.f32 0.0, %v5962
        %v5964 = vpop.f32.mrb[0].mxu0
        %5965 = vmatprep.mubr.bf16.mxu0 0
        %5966 = vmatmul.mubr.bf16.gmra.mrb[0].mxu0 %v5881
        %v5967 = vpop.f32.mrb[0].mxu0
        %v5968 = vadd.f32 0.0, %v5967
        %v5969 = vpop.f32.mrb[0].mxu0
        %v5970 = vpop.f32.mrb[0].mxu0
        %v5971 = vadd.f32 0.0, %v5970
        %v5972 = vpop.f32.mrb[0].mxu0
        %5973 = vmatprep.mubr.bf16.mxu0 0
        %5974 = vmatmul.mubr.bf16.gmra.mrb[0].mxu0 %v5884
        %v5975 = vpop.f32.mrb[0].mxu0
        %v5976 = vadd.f32 0.0, %v5975
        %v5977 = vpop.f32.mrb[0].mxu0
        %v5978 = vpop.f32.mrb[0].mxu0
        %v5979 = vadd.f32 0.0, %v5978
        %v5980 = vpop.f32.mrb[0].mxu0
        %5981 = vmatprep.mubr.bf16.mxu0 0
        %5982 = vmatmul.mubr.bf16.gmra.mrb[0].mxu0 %v5887
        %v5983 = vpop.f32.mrb[0].mxu0
        %v5984 = vadd.f32 0.0, %v5983
        %v5985 = vpop.f32.mrb[0].mxu0
        %v5986 = vpop.f32.mrb[0].mxu0
        %v5987 = vadd.f32 0.0, %v5986
        %v5988 = vpop.f32.mrb[0].mxu0
        %5989 = vmatprep.mubr.bf16.mxu0 0
        %5990 = vmatmul.mubr.bf16.gmra.mrb[0].mxu0 %v5890
        %v5991 = vpop.f32.mrb[0].mxu0
        %v5992 = vadd.f32 0.0, %v5991
        %v5993 = vpop.f32.mrb[0].mxu0
        %v5994 = vpop.f32.mrb[0].mxu0
        %v5995 = vadd.f32 0.0, %v5994
        %v5996 = vpop.f32.mrb[0].mxu0
        %5997 = vmatprep.mubr.bf16.mxu0 0
        %5998 = vmatmul.mubr.bf16.gmra.mrb[0].mxu0 %v5893
        %v5999 = vpop.f32.mrb[0].mxu0
        %v6000 = vadd.f32 0.0, %v5999
        %v6001 = vpop.f32.mrb[0].mxu0
        %v6002 = vpop.f32.mrb[0].mxu0
        %v6003 = vadd.f32 0.0, %v6002
        %v6004 = vpop.f32.mrb[0].mxu0
        %6005 = vmatprep.mubr.bf16.mxu0 0
        %6006 = vmatmul.mubr.bf16.gmra.mrb[0].mxu0 %v5896
        %v6007 = vpop.f32.mrb[0].mxu0
        %v6008 = vadd.f32 0.0, %v6007
        %v6009 = vpop.f32.mrb[0].mxu0
        %v6010 = vpop.f32.mrb[0].mxu0
        %v6011 = vadd.f32 0.0, %v6010
        %v6012 = vpop.f32.mrb[0].mxu0
        %6013 = vmatprep.mubr.bf16.mxu0 0
        %6014 = vmatmul.mubr.bf16.gmra.mrb[0].mxu0 %v5899
        %v6015 = vpop.f32.mrb[0].mxu0
        %v6016 = vadd.f32 0.0, %v6015
        %v6017 = vpop.f32.mrb[0].mxu0
        %v6018 = vpop.f32.mrb[0].mxu0
        %v6019 = vadd.f32 0.0, %v6018
        %v6020 = vpop.f32.mrb[0].mxu0
        %6021 = vmatprep.mubr.bf16.mxu0 0
        %6022 = vmatmul.mubr.bf16.gmra.mrb[0].mxu0 %v5902
        %v6023 = vpop.f32.mrb[0].mxu0
        %v6024 = vadd.f32 0.0, %v6023
        %v6025 = vpop.f32.mrb[0].mxu0
        %v6026 = vpop.f32.mrb[0].mxu0
        %v6027 = vadd.f32 0.0, %v6026
        %v6028 = vpop.f32.mrb[0].mxu0
        %6029 = vmatprep.mubr.bf16.mxu0 0
        %6030 = vmatmul.mubr.bf16.gmra.mrb[0].mxu0 %v5905
        %v6031 = vpop.f32.mrb[0].mxu0
        %v6032 = vadd.f32 0.0, %v6031
        %v6033 = vpop.f32.mrb[0].mxu0
        %v6034 = vpop.f32.mrb[0].mxu0
        %v6035 = vadd.f32 0.0, %v6034
        %v6036 = vpop.f32.mrb[0].mxu0
        %6037 = vmatprep.mubr.bf16.mxu0 0
        %6038 = vmatmul.mubr.bf16.gmra.mrb[0].mxu0 %v5908
        %v6039 = vpop.f32.mrb[0].mxu0
        %v6040 = vadd.f32 0.0, %v6039
        %v6041 = vpop.f32.mrb[0].mxu0
        %v6042 = vpop.f32.mrb[0].mxu0
        %v6043 = vadd.f32 0.0, %v6042
        %v6044 = vpop.f32.mrb[0].mxu0
        %6045 = vmatprep.mubr.bf16.mxu0 0
        %6046 = vmatmul.mubr.bf16.gmra.mrb[0].mxu0 %v5911
        %v6047 = vpop.f32.mrb[0].mxu0
        %v6048 = vadd.f32 0.0, %v6047
        %v6049 = vpop.f32.mrb[0].mxu0
        %v6050 = vpop.f32.mrb[0].mxu0
        %v6051 = vadd.f32 0.0, %v6050
        %v6052 = vpop.f32.mrb[0].mxu0
        %6053 = vmatprep.mubr.bf16.mxu0 0
        %6054 = vmatmul.mubr.bf16.gmra.mrb[0].mxu0 %v5914
        %v6055 = vpop.f32.mrb[0].mxu0
        %v6056 = vadd.f32 0.0, %v6055
        %v6057 = vpop.f32.mrb[0].mxu0
        %v6058 = vpop.f32.mrb[0].mxu0
        %v6059 = vadd.f32 0.0, %v6058
        %v6060 = vpop.f32.mrb[0].mxu0
        %6061 = vmatprep.mubr.bf16.mxu0 0
        %6062 = vmatmul.mubr.bf16.gmra.mrb[0].mxu0 %v5917
        %v6063 = vpop.f32.mrb[0].mxu0
        %v6064 = vadd.f32 0.0, %v6063
        %v6065 = vpop.f32.mrb[0].mxu0
        %v6066 = vpop.f32.mrb[0].mxu0
        %v6067 = vadd.f32 0.0, %v6066
        %v6068 = vpop.f32.mrb[0].mxu0
        %6069 = vmatprep.mubr.bf16.mxu0 0
        %6070 = vmatmul.mubr.bf16.gmra.mrb[0].mxu0 %v5920
        %v6071 = vpop.f32.mrb[0].mxu0
        %v6072 = vadd.f32 0.0, %v6071
        %v6073 = vpop.f32.mrb[0].mxu0
        %v6074 = vpop.f32.mrb[0].mxu0
        %v6075 = vadd.f32 0.0, %v6074
        %v6076 = vpop.f32.mrb[0].mxu0
        %6077 = vmatprep.mubr.bf16.mxu0 0
        %6078 = vmatmul.mubr.bf16.gmra.mrb[0].mxu0 %v5923
        %v6079 = vpop.f32.mrb[0].mxu0
        %v6080 = vadd.f32 0.0, %v6079
        %v6081 = vpop.f32.mrb[0].mxu0
        %v6082 = vpop.f32.mrb[0].mxu0
        %v6083 = vadd.f32 0.0, %v6082
        %v6084 = vpop.f32.mrb[0].mxu0
        %6085 = vdwg.mxu0
        %v6118 = vunpack.c.l.b16 %v5716
        %v6119 = vunpack.c.l.b16 %v5717
        %v6120 = vunpack.c.l.b16 %v5718
        %v6121 = vunpack.c.l.b16 %v5719
        %v6122 = vunpack.c.l.b16 %v5720
        %v6123 = vunpack.c.l.b16 %v5721
        %v6124 = vunpack.c.l.b16 %v5722
        %v6125 = vunpack.c.l.b16 %v5723
        %v6126 = vunpack.c.l.b16 %v5724
        %v6127 = vunpack.c.l.b16 %v5725
        %v6128 = vunpack.c.l.b16 %v5726
        %v6129 = vunpack.c.l.b16 %v5727
        %v6130 = vunpack.c.l.b16 %v5728
        %v6131 = vunpack.c.l.b16 %v5729
        %v6132 = vunpack.c.l.b16 %v5730
        %v6133 = vunpack.c.l.b16 %v5731
        %v6134 = vunpack.c.l.b16 %v5732
        %v6135 = vunpack.c.l.b16 %v5733
        %v6136 = vunpack.c.l.b16 %v5734
        %v6137 = vunpack.c.l.b16 %v5735
        %v6138 = vunpack.c.l.b16 %v5736
        %v6139 = vunpack.c.l.b16 %v5737
        %v6140 = vunpack.c.l.b16 %v5738
        %v6141 = vunpack.c.l.b16 %v5739
        %v6142 = vunpack.c.l.b16 %v5740
        %v6143 = vunpack.c.l.b16 %v5741
        %v6144 = vunpack.c.l.b16 %v5742
        %v6145 = vunpack.c.l.b16 %v5743
        %v6146 = vunpack.c.l.b16 %v5744
        %v6147 = vunpack.c.l.b16 %v5745
        %v6148 = vunpack.c.l.b16 %v5746
        %v6149 = vunpack.c.l.b16 %v5747
        %v6150 = vpack.c.b16 %v6119, %v6118
        %v6151 = vpack.c.b16 %v6121, %v6120
        %v6152 = vpack.c.b16 %v6123, %v6122
        %v6153 = vpack.c.b16 %v6125, %v6124
        %v6154 = vpack.c.b16 %v6127, %v6126
        %v6155 = vpack.c.b16 %v6129, %v6128
        %v6156 = vpack.c.b16 %v6131, %v6130
        %v6157 = vpack.c.b16 %v6133, %v6132
        %v6158 = vpack.c.b16 %v6135, %v6134
        %v6159 = vpack.c.b16 %v6137, %v6136
        %v6160 = vpack.c.b16 %v6139, %v6138
        %v6161 = vpack.c.b16 %v6141, %v6140
        %v6162 = vpack.c.b16 %v6143, %v6142
        %v6163 = vpack.c.b16 %v6145, %v6144
        %v6164 = vpack.c.b16 %v6147, %v6146
        %v6165 = vpack.c.b16 %v6149, %v6148
        %v6167 = vsel %vm4945, %v6150, 0
        %v6170 = vsel %vm4945, %v6151, 0
        %v6173 = vsel %vm4945, %v6152, 0
        %v6176 = vsel %vm4945, %v6153, 0
        %v6179 = vsel %vm4945, %v6154, 0
        %v6182 = vsel %vm4945, %v6155, 0
        %v6185 = vsel %vm4945, %v6156, 0
        %v6188 = vsel %vm4945, %v6157, 0
        %v6191 = vsel %vm4945, %v6158, 0
        %v6194 = vsel %vm4945, %v6159, 0
        %v6197 = vsel %vm4945, %v6160, 0
        %v6200 = vsel %vm4945, %v6161, 0
        %v6203 = vsel %vm4945, %v6162, 0
        %v6206 = vsel %vm4945, %v6163, 0
        %v6209 = vsel %vm4945, %v6164, 0
        %v6212 = vsel %vm4945, %v6165, 0
        %6214 = vmatprep.subr.bf16.mxu0 0
        %6215 = vmatpush1.bf16.msra.mxu0 %v5712
        %6216 = vmatprep.subr.bf16.mxu0 0
        %6217 = vmatpush1.bf16.msra.mxu0 %v5713
        %6218 = vmatprep.subr.bf16.mxu0 0
        %6219 = vmatpush1.bf16.msra.mxu0 %v5714
        %6220 = vmatprep.subr.bf16.mxu0 0
        %6221 = vmatpush1.bf16.msra.mxu0 %v5715
        %6222 = vmatprep.subr.bf16.mxu0 0
        %6223 = vmatpush1.bf16.msra.mxu0 0
        %6224 = vmatprep.subr.bf16.mxu0 0
        %6225 = vmatpush1.bf16.msra.mxu0 0
        %6226 = vmatprep.subr.bf16.mxu0 0
        %6227 = vmatpush1.bf16.msra.mxu0 0
        %6228 = vmatprep.subr.bf16.mxu0 0
        %6229 = vmatpush1.bf16.msra.mxu0 0
        %6230 = vmatprep.subr.bf16.mxu0 0
        %6231 = vmatpush1.bf16.msra.mxu0 0
        %6232 = vmatprep.subr.bf16.mxu0 0
        %6233 = vmatpush1.bf16.msra.mxu0 0
        %6234 = vmatprep.subr.bf16.mxu0 0
        %6235 = vmatpush1.bf16.msra.mxu0 0
        %6236 = vmatprep.subr.bf16.mxu0 0
        %6237 = vmatpush1.bf16.msra.mxu0 0
        %6238 = vmatprep.subr.bf16.mxu0 0
        %6239 = vmatpush1.bf16.msra.mxu0 0
        %6240 = vmatprep.subr.bf16.mxu0 0
        %6241 = vmatpush1.bf16.msra.mxu0 0
        %6242 = vmatprep.subr.bf16.mxu0 0
        %6243 = vmatpush1.bf16.msra.mxu0 0
        %6244 = vmatprep.subr.bf16.mxu0 0
        %6245 = vmatpush1.bf16.msra.mxu0 0
        %6246 = vmatprep.mubr.bf16.mxu0 0
        %6247 = vmatmul.mubr.bf16.gmra.mrb[0].mxu0 %v6167
        %v6248 = vpop.f32.mrb[0].mxu0
        %v6249 = vadd.f32 %v5960, %v6248
        %v6250 = vpop.f32.mrb[0].mxu0
        %v6251 = vpop.f32.mrb[0].mxu0
        %v6252 = vadd.f32 %v5963, %v6251
        %v6253 = vpop.f32.mrb[0].mxu0
        %6254 = vmatprep.mubr.bf16.mxu0 0
        %6255 = vmatmul.mubr.bf16.gmra.mrb[0].mxu0 %v6170
        %v6256 = vpop.f32.mrb[0].mxu0
        %v6257 = vadd.f32 %v5968, %v6256
        %v6258 = vpop.f32.mrb[0].mxu0
        %v6259 = vpop.f32.mrb[0].mxu0
        %v6260 = vadd.f32 %v5971, %v6259
        %v6261 = vpop.f32.mrb[0].mxu0
        %6262 = vmatprep.mubr.bf16.mxu0 0
        %6263 = vmatmul.mubr.bf16.gmra.mrb[0].mxu0 %v6173
        %v6264 = vpop.f32.mrb[0].mxu0
        %v6265 = vadd.f32 %v5976, %v6264
        %v6266 = vpop.f32.mrb[0].mxu0
        %v6267 = vpop.f32.mrb[0].mxu0
        %v6268 = vadd.f32 %v5979, %v6267
        %v6269 = vpop.f32.mrb[0].mxu0
        %6270 = vmatprep.mubr.bf16.mxu0 0
        %6271 = vmatmul.mubr.bf16.gmra.mrb[0].mxu0 %v6176
        %v6272 = vpop.f32.mrb[0].mxu0
        %v6273 = vadd.f32 %v5984, %v6272
        %v6274 = vpop.f32.mrb[0].mxu0
        %v6275 = vpop.f32.mrb[0].mxu0
        %v6276 = vadd.f32 %v5987, %v6275
        %v6277 = vpop.f32.mrb[0].mxu0
        %6278 = vmatprep.mubr.bf16.mxu0 0
        %6279 = vmatmul.mubr.bf16.gmra.mrb[0].mxu0 %v6179
        %v6280 = vpop.f32.mrb[0].mxu0
        %v6281 = vadd.f32 %v5992, %v6280
        %v6282 = vpop.f32.mrb[0].mxu0
        %v6283 = vpop.f32.mrb[0].mxu0
        %v6284 = vadd.f32 %v5995, %v6283
        %v6285 = vpop.f32.mrb[0].mxu0
        %6286 = vmatprep.mubr.bf16.mxu0 0
        %6287 = vmatmul.mubr.bf16.gmra.mrb[0].mxu0 %v6182
        %v6288 = vpop.f32.mrb[0].mxu0
        %v6289 = vadd.f32 %v6000, %v6288
        %v6290 = vpop.f32.mrb[0].mxu0
        %v6291 = vpop.f32.mrb[0].mxu0
        %v6292 = vadd.f32 %v6003, %v6291
        %v6293 = vpop.f32.mrb[0].mxu0
        %6294 = vmatprep.mubr.bf16.mxu0 0
        %6295 = vmatmul.mubr.bf16.gmra.mrb[0].mxu0 %v6185
        %v6296 = vpop.f32.mrb[0].mxu0
        %v6297 = vadd.f32 %v6008, %v6296
        %v6298 = vpop.f32.mrb[0].mxu0
        %v6299 = vpop.f32.mrb[0].mxu0
        %v6300 = vadd.f32 %v6011, %v6299
        %v6301 = vpop.f32.mrb[0].mxu0
        %6302 = vmatprep.mubr.bf16.mxu0 0
        %6303 = vmatmul.mubr.bf16.gmra.mrb[0].mxu0 %v6188
        %v6304 = vpop.f32.mrb[0].mxu0
        %v6305 = vadd.f32 %v6016, %v6304
        %v6306 = vpop.f32.mrb[0].mxu0
        %v6307 = vpop.f32.mrb[0].mxu0
        %v6308 = vadd.f32 %v6019, %v6307
        %v6309 = vpop.f32.mrb[0].mxu0
        %6310 = vmatprep.mubr.bf16.mxu0 0
        %6311 = vmatmul.mubr.bf16.gmra.mrb[0].mxu0 %v6191
        %v6312 = vpop.f32.mrb[0].mxu0
        %v6313 = vadd.f32 %v6024, %v6312
        %v6314 = vpop.f32.mrb[0].mxu0
        %v6315 = vpop.f32.mrb[0].mxu0
        %v6316 = vadd.f32 %v6027, %v6315
        %v6317 = vpop.f32.mrb[0].mxu0
        %6318 = vmatprep.mubr.bf16.mxu0 0
        %6319 = vmatmul.mubr.bf16.gmra.mrb[0].mxu0 %v6194
        %v6320 = vpop.f32.mrb[0].mxu0
        %v6321 = vadd.f32 %v6032, %v6320
        %v6322 = vpop.f32.mrb[0].mxu0
        %v6323 = vpop.f32.mrb[0].mxu0
        %v6324 = vadd.f32 %v6035, %v6323
        %v6325 = vpop.f32.mrb[0].mxu0
        %6326 = vmatprep.mubr.bf16.mxu0 0
        %6327 = vmatmul.mubr.bf16.gmra.mrb[0].mxu0 %v6197
        %v6328 = vpop.f32.mrb[0].mxu0
        %v6329 = vadd.f32 %v6040, %v6328
        %v6330 = vpop.f32.mrb[0].mxu0
        %v6331 = vpop.f32.mrb[0].mxu0
        %v6332 = vadd.f32 %v6043, %v6331
        %v6333 = vpop.f32.mrb[0].mxu0
        %6334 = vmatprep.mubr.bf16.mxu0 0
        %6335 = vmatmul.mubr.bf16.gmra.mrb[0].mxu0 %v6200
        %v6336 = vpop.f32.mrb[0].mxu0
        %v6337 = vadd.f32 %v6048, %v6336
        %v6338 = vpop.f32.mrb[0].mxu0
        %v6339 = vpop.f32.mrb[0].mxu0
        %v6340 = vadd.f32 %v6051, %v6339
        %v6341 = vpop.f32.mrb[0].mxu0
        %6342 = vmatprep.mubr.bf16.mxu0 0
        %6343 = vmatmul.mubr.bf16.gmra.mrb[0].mxu0 %v6203
        %v6344 = vpop.f32.mrb[0].mxu0
        %v6345 = vadd.f32 %v6056, %v6344
        %v6346 = vpop.f32.mrb[0].mxu0
        %v6347 = vpop.f32.mrb[0].mxu0
        %v6348 = vadd.f32 %v6059, %v6347
        %v6349 = vpop.f32.mrb[0].mxu0
        %6350 = vmatprep.mubr.bf16.mxu0 0
        %6351 = vmatmul.mubr.bf16.gmra.mrb[0].mxu0 %v6206
        %v6352 = vpop.f32.mrb[0].mxu0
        %v6353 = vadd.f32 %v6064, %v6352
        %v6354 = vpop.f32.mrb[0].mxu0
        %v6355 = vpop.f32.mrb[0].mxu0
        %v6356 = vadd.f32 %v6067, %v6355
        %v6357 = vpop.f32.mrb[0].mxu0
        %6358 = vmatprep.mubr.bf16.mxu0 0
        %6359 = vmatmul.mubr.bf16.gmra.mrb[0].mxu0 %v6209
        %v6360 = vpop.f32.mrb[0].mxu0
        %v6361 = vadd.f32 %v6072, %v6360
        %v6362 = vpop.f32.mrb[0].mxu0
        %v6363 = vpop.f32.mrb[0].mxu0
        %v6364 = vadd.f32 %v6075, %v6363
        %v6365 = vpop.f32.mrb[0].mxu0
        %6366 = vmatprep.mubr.bf16.mxu0 0
        %6367 = vmatmul.mubr.bf16.gmra.mrb[0].mxu0 %v6212
        %v6368 = vpop.f32.mrb[0].mxu0
        %v6369 = vadd.f32 %v6080, %v6368
        %v6370 = vpop.f32.mrb[0].mxu0
        %v6371 = vpop.f32.mrb[0].mxu0
        %v6372 = vadd.f32 %v6083, %v6371
        %v6373 = vpop.f32.mrb[0].mxu0
        %6374 = vdwg.mxu0
        %s6375 = scalar_lea.vmem %s19, 256
        %v6376 = vld [vmem:[%s6375] sm:$0xf]
        %v6377 = vld [vmem:[%s6375 + $0x4] sm:$0xf]
        %v6378 = vld [vmem:[%s6375 + $0x8] sm:$0xf]
        %v6379 = vld [vmem:[%s6375 + $0xc] sm:$0xf]
        %v6380 = vld [vmem:[%s6375 + $0x10] sm:$0xf]
        %v6381 = vld [vmem:[%s6375 + $0x14] sm:$0xf]
        %v6382 = vld [vmem:[%s6375 + $0x18] sm:$0xf]
        %v6383 = vld [vmem:[%s6375 + $0x1c] sm:$0xf]
        %v6384 = vld [vmem:[%s6375 + $0x20] sm:$0xf]
        %v6385 = vld [vmem:[%s6375 + $0x24] sm:$0xf]
        %v6386 = vld [vmem:[%s6375 + $0x28] sm:$0xf]
        %v6387 = vld [vmem:[%s6375 + $0x2c] sm:$0xf]
        %v6388 = vld [vmem:[%s6375 + $0x30] sm:$0xf]
        %v6389 = vld [vmem:[%s6375 + $0x34] sm:$0xf]
        %v6390 = vld [vmem:[%s6375 + $0x38] sm:$0xf]
        %v6391 = vld [vmem:[%s6375 + $0x3c] sm:$0xf]
        %v6392 = vld [vmem:[%s6375 + $0x40] sm:$0xf]
        %v6393 = vld [vmem:[%s6375 + $0x44] sm:$0xf]
        %v6394 = vld [vmem:[%s6375 + $0x48] sm:$0xf]
        %v6395 = vld [vmem:[%s6375 + $0x4c] sm:$0xf]
        %v6396 = vld [vmem:[%s6375 + $0x50] sm:$0xf]
        %v6397 = vld [vmem:[%s6375 + $0x54] sm:$0xf]
        %v6398 = vld [vmem:[%s6375 + $0x58] sm:$0xf]
        %v6399 = vld [vmem:[%s6375 + $0x5c] sm:$0xf]
        %v6400 = vld [vmem:[%s6375 + $0x60] sm:$0xf]
        %v6401 = vld [vmem:[%s6375 + $0x64] sm:$0xf]
        %v6402 = vld [vmem:[%s6375 + $0x68] sm:$0xf]
        %v6403 = vld [vmem:[%s6375 + $0x6c] sm:$0xf]
        %v6404 = vld [vmem:[%s6375 + $0x70] sm:$0xf]
        %v6405 = vld [vmem:[%s6375 + $0x74] sm:$0xf]
        %v6406 = vld [vmem:[%s6375 + $0x78] sm:$0xf]
        %v6407 = vld [vmem:[%s6375 + $0x7c] sm:$0xf]
        %v6440 = vunpack.c.l.b16 %v6376
        %v6441 = vunpack.c.l.b16 %v6377
        %v6442 = vunpack.c.l.b16 %v6378
        %v6443 = vunpack.c.l.b16 %v6379
        %v6444 = vunpack.c.l.b16 %v6380
        %v6445 = vunpack.c.l.b16 %v6381
        %v6446 = vunpack.c.l.b16 %v6382
        %v6447 = vunpack.c.l.b16 %v6383
        %v6448 = vunpack.c.l.b16 %v6384
        %v6449 = vunpack.c.l.b16 %v6385
        %v6450 = vunpack.c.l.b16 %v6386
        %v6451 = vunpack.c.l.b16 %v6387
        %v6452 = vunpack.c.l.b16 %v6388
        %v6453 = vunpack.c.l.b16 %v6389
        %v6454 = vunpack.c.l.b16 %v6390
        %v6455 = vunpack.c.l.b16 %v6391
        %v6456 = vunpack.c.l.b16 %v6392
        %v6457 = vunpack.c.l.b16 %v6393
        %v6458 = vunpack.c.l.b16 %v6394
        %v6459 = vunpack.c.l.b16 %v6395
        %v6460 = vunpack.c.l.b16 %v6396
        %v6461 = vunpack.c.l.b16 %v6397
        %v6462 = vunpack.c.l.b16 %v6398
        %v6463 = vunpack.c.l.b16 %v6399
        %v6464 = vunpack.c.l.b16 %v6400
        %v6465 = vunpack.c.l.b16 %v6401
        %v6466 = vunpack.c.l.b16 %v6402
        %v6467 = vunpack.c.l.b16 %v6403
        %v6468 = vunpack.c.l.b16 %v6404
        %v6469 = vunpack.c.l.b16 %v6405
        %v6470 = vunpack.c.l.b16 %v6406
        %v6471 = vunpack.c.l.b16 %v6407
        %v6472 = vpack.c.b16 %v6441, %v6440
        %v6473 = vpack.c.b16 %v6443, %v6442
        %v6474 = vpack.c.b16 %v6445, %v6444
        %v6475 = vpack.c.b16 %v6447, %v6446
        %v6476 = vpack.c.b16 %v6449, %v6448
        %v6477 = vpack.c.b16 %v6451, %v6450
        %v6478 = vpack.c.b16 %v6453, %v6452
        %v6479 = vpack.c.b16 %v6455, %v6454
        %v6480 = vpack.c.b16 %v6457, %v6456
        %v6481 = vpack.c.b16 %v6459, %v6458
        %v6482 = vpack.c.b16 %v6461, %v6460
        %v6483 = vpack.c.b16 %v6463, %v6462
        %v6484 = vpack.c.b16 %v6465, %v6464
        %v6485 = vpack.c.b16 %v6467, %v6466
        %v6486 = vpack.c.b16 %v6469, %v6468
        %v6487 = vpack.c.b16 %v6471, %v6470
        %6488 = vrot.lane.b32.xlu0 %v5712, 64
        %v6489 = vpop.permute.xlu0 %6488
        %6490 = vrot.lane.b32.xlu0 %v5713, 64
        %v6491 = vpop.permute.xlu0 %6490
        %6492 = vrot.lane.b32.xlu0 %v5714, 64
        %v6493 = vpop.permute.xlu0 %6492
        %6494 = vrot.lane.b32.xlu0 %v5715, 64
        %v6495 = vpop.permute.xlu0 %6494
        %v6501 = vsel %vm4945, %v6472, 0
        %v6504 = vsel %vm4945, %v6473, 0
        %v6507 = vsel %vm4945, %v6474, 0
        %v6510 = vsel %vm4945, %v6475, 0
        %v6513 = vsel %vm4945, %v6476, 0
        %v6516 = vsel %vm4945, %v6477, 0
        %v6519 = vsel %vm4945, %v6478, 0
        %v6522 = vsel %vm4945, %v6479, 0
        %v6525 = vsel %vm4945, %v6480, 0
        %v6528 = vsel %vm4945, %v6481, 0
        %v6531 = vsel %vm4945, %v6482, 0
        %v6534 = vsel %vm4945, %v6483, 0
        %v6537 = vsel %vm4945, %v6484, 0
        %v6540 = vsel %vm4945, %v6485, 0
        %v6543 = vsel %vm4945, %v6486, 0
        %v6546 = vsel %vm4945, %v6487, 0
        %6548 = vmatprep.subr.bf16.mxu0 0
        %6549 = vmatpush1.bf16.msra.mxu0 %v6489
        %6550 = vmatprep.subr.bf16.mxu0 0
        %6551 = vmatpush1.bf16.msra.mxu0 %v6491
        %6552 = vmatprep.subr.bf16.mxu0 0
        %6553 = vmatpush1.bf16.msra.mxu0 %v6493
        %6554 = vmatprep.subr.bf16.mxu0 0
        %6555 = vmatpush1.bf16.msra.mxu0 %v6495
        %6556 = vmatprep.subr.bf16.mxu0 0
        %6557 = vmatpush1.bf16.msra.mxu0 0
        %6558 = vmatprep.subr.bf16.mxu0 0
        %6559 = vmatpush1.bf16.msra.mxu0 0
        %6560 = vmatprep.subr.bf16.mxu0 0
        %6561 = vmatpush1.bf16.msra.mxu0 0
        %6562 = vmatprep.subr.bf16.mxu0 0
        %6563 = vmatpush1.bf16.msra.mxu0 0
        %6564 = vmatprep.subr.bf16.mxu0 0
        %6565 = vmatpush1.bf16.msra.mxu0 0
        %6566 = vmatprep.subr.bf16.mxu0 0
        %6567 = vmatpush1.bf16.msra.mxu0 0
        %6568 = vmatprep.subr.bf16.mxu0 0
        %6569 = vmatpush1.bf16.msra.mxu0 0
        %6570 = vmatprep.subr.bf16.mxu0 0
        %6571 = vmatpush1.bf16.msra.mxu0 0
        %6572 = vmatprep.subr.bf16.mxu0 0
        %6573 = vmatpush1.bf16.msra.mxu0 0
        %6574 = vmatprep.subr.bf16.mxu0 0
        %6575 = vmatpush1.bf16.msra.mxu0 0
        %6576 = vmatprep.subr.bf16.mxu0 0
        %6577 = vmatpush1.bf16.msra.mxu0 0
        %6578 = vmatprep.subr.bf16.mxu0 0
        %6579 = vmatpush1.bf16.msra.mxu0 0
        %6580 = vmatprep.mubr.bf16.mxu0 0
        %6581 = vmatmul.mubr.bf16.gmra.mrb[0].mxu0 %v6501
        %v6582 = vpop.f32.mrb[0].mxu0
        %v6583 = vadd.f32 0.0, %v6582
        %v6584 = vpop.f32.mrb[0].mxu0
        %v6585 = vpop.f32.mrb[0].mxu0
        %v6586 = vadd.f32 0.0, %v6585
        %v6587 = vpop.f32.mrb[0].mxu0
        %6588 = vmatprep.mubr.bf16.mxu0 0
        %6589 = vmatmul.mubr.bf16.gmra.mrb[0].mxu0 %v6504
        %v6590 = vpop.f32.mrb[0].mxu0
        %v6591 = vadd.f32 0.0, %v6590
        %v6592 = vpop.f32.mrb[0].mxu0
        %v6593 = vpop.f32.mrb[0].mxu0
        %v6594 = vadd.f32 0.0, %v6593
        %v6595 = vpop.f32.mrb[0].mxu0
        %6596 = vmatprep.mubr.bf16.mxu0 0
        %6597 = vmatmul.mubr.bf16.gmra.mrb[0].mxu0 %v6507
        %v6598 = vpop.f32.mrb[0].mxu0
        %v6599 = vadd.f32 0.0, %v6598
        %v6600 = vpop.f32.mrb[0].mxu0
        %v6601 = vpop.f32.mrb[0].mxu0
        %v6602 = vadd.f32 0.0, %v6601
        %v6603 = vpop.f32.mrb[0].mxu0
        %6604 = vmatprep.mubr.bf16.mxu0 0
        %6605 = vmatmul.mubr.bf16.gmra.mrb[0].mxu0 %v6510
        %v6606 = vpop.f32.mrb[0].mxu0
        %v6607 = vadd.f32 0.0, %v6606
        %v6608 = vpop.f32.mrb[0].mxu0
        %v6609 = vpop.f32.mrb[0].mxu0
        %v6610 = vadd.f32 0.0, %v6609
        %v6611 = vpop.f32.mrb[0].mxu0
        %6612 = vmatprep.mubr.bf16.mxu0 0
        %6613 = vmatmul.mubr.bf16.gmra.mrb[0].mxu0 %v6513
        %v6614 = vpop.f32.mrb[0].mxu0
        %v6615 = vadd.f32 0.0, %v6614
        %v6616 = vpop.f32.mrb[0].mxu0
        %v6617 = vpop.f32.mrb[0].mxu0
        %v6618 = vadd.f32 0.0, %v6617
        %v6619 = vpop.f32.mrb[0].mxu0
        %6620 = vmatprep.mubr.bf16.mxu0 0
        %6621 = vmatmul.mubr.bf16.gmra.mrb[0].mxu0 %v6516
        %v6622 = vpop.f32.mrb[0].mxu0
        %v6623 = vadd.f32 0.0, %v6622
        %v6624 = vpop.f32.mrb[0].mxu0
        %v6625 = vpop.f32.mrb[0].mxu0
        %v6626 = vadd.f32 0.0, %v6625
        %v6627 = vpop.f32.mrb[0].mxu0
        %6628 = vmatprep.mubr.bf16.mxu0 0
        %6629 = vmatmul.mubr.bf16.gmra.mrb[0].mxu0 %v6519
        %v6630 = vpop.f32.mrb[0].mxu0
        %v6631 = vadd.f32 0.0, %v6630
        %v6632 = vpop.f32.mrb[0].mxu0
        %v6633 = vpop.f32.mrb[0].mxu0
        %v6634 = vadd.f32 0.0, %v6633
        %v6635 = vpop.f32.mrb[0].mxu0
        %6636 = vmatprep.mubr.bf16.mxu0 0
        %6637 = vmatmul.mubr.bf16.gmra.mrb[0].mxu0 %v6522
        %v6638 = vpop.f32.mrb[0].mxu0
        %v6639 = vadd.f32 0.0, %v6638
        %v6640 = vpop.f32.mrb[0].mxu0
        %v6641 = vpop.f32.mrb[0].mxu0
        %v6642 = vadd.f32 0.0, %v6641
        %v6643 = vpop.f32.mrb[0].mxu0
        %6644 = vmatprep.mubr.bf16.mxu0 0
        %6645 = vmatmul.mubr.bf16.gmra.mrb[0].mxu0 %v6525
        %v6646 = vpop.f32.mrb[0].mxu0
        %v6647 = vadd.f32 0.0, %v6646
        %v6648 = vpop.f32.mrb[0].mxu0
        %v6649 = vpop.f32.mrb[0].mxu0
        %v6650 = vadd.f32 0.0, %v6649
        %v6651 = vpop.f32.mrb[0].mxu0
        %6652 = vmatprep.mubr.bf16.mxu0 0
        %6653 = vmatmul.mubr.bf16.gmra.mrb[0].mxu0 %v6528
        %v6654 = vpop.f32.mrb[0].mxu0
        %v6655 = vadd.f32 0.0, %v6654
        %v6656 = vpop.f32.mrb[0].mxu0
        %v6657 = vpop.f32.mrb[0].mxu0
        %v6658 = vadd.f32 0.0, %v6657
        %v6659 = vpop.f32.mrb[0].mxu0
        %6660 = vmatprep.mubr.bf16.mxu0 0
        %6661 = vmatmul.mubr.bf16.gmra.mrb[0].mxu0 %v6531
        %v6662 = vpop.f32.mrb[0].mxu0
        %v6663 = vadd.f32 0.0, %v6662
        %v6664 = vpop.f32.mrb[0].mxu0
        %v6665 = vpop.f32.mrb[0].mxu0
        %v6666 = vadd.f32 0.0, %v6665
        %v6667 = vpop.f32.mrb[0].mxu0
        %6668 = vmatprep.mubr.bf16.mxu0 0
        %6669 = vmatmul.mubr.bf16.gmra.mrb[0].mxu0 %v6534
        %v6670 = vpop.f32.mrb[0].mxu0
        %v6671 = vadd.f32 0.0, %v6670
        %v6672 = vpop.f32.mrb[0].mxu0
        %v6673 = vpop.f32.mrb[0].mxu0
        %v6674 = vadd.f32 0.0, %v6673
        %v6675 = vpop.f32.mrb[0].mxu0
        %6676 = vmatprep.mubr.bf16.mxu0 0
        %6677 = vmatmul.mubr.bf16.gmra.mrb[0].mxu0 %v6537
        %v6678 = vpop.f32.mrb[0].mxu0
        %v6679 = vadd.f32 0.0, %v6678
        %v6680 = vpop.f32.mrb[0].mxu0
        %v6681 = vpop.f32.mrb[0].mxu0
        %v6682 = vadd.f32 0.0, %v6681
        %v6683 = vpop.f32.mrb[0].mxu0
        %6684 = vmatprep.mubr.bf16.mxu0 0
        %6685 = vmatmul.mubr.bf16.gmra.mrb[0].mxu0 %v6540
        %v6686 = vpop.f32.mrb[0].mxu0
        %v6687 = vadd.f32 0.0, %v6686
        %v6688 = vpop.f32.mrb[0].mxu0
        %v6689 = vpop.f32.mrb[0].mxu0
        %v6690 = vadd.f32 0.0, %v6689
        %v6691 = vpop.f32.mrb[0].mxu0
        %6692 = vmatprep.mubr.bf16.mxu0 0
        %6693 = vmatmul.mubr.bf16.gmra.mrb[0].mxu0 %v6543
        %v6694 = vpop.f32.mrb[0].mxu0
        %v6695 = vadd.f32 0.0, %v6694
        %v6696 = vpop.f32.mrb[0].mxu0
        %v6697 = vpop.f32.mrb[0].mxu0
        %v6698 = vadd.f32 0.0, %v6697
        %v6699 = vpop.f32.mrb[0].mxu0
        %6700 = vmatprep.mubr.bf16.mxu0 0
        %6701 = vmatmul.mubr.bf16.gmra.mrb[0].mxu0 %v6546
        %v6702 = vpop.f32.mrb[0].mxu0
        %v6703 = vadd.f32 0.0, %v6702
        %v6704 = vpop.f32.mrb[0].mxu0
        %v6705 = vpop.f32.mrb[0].mxu0
        %v6706 = vadd.f32 0.0, %v6705
        %v6707 = vpop.f32.mrb[0].mxu0
        %6708 = vdwg.mxu0
        %v6709 = vadd.f32 %v6249, %v6583
        %v6710 = vadd.f32 %v6252, %v6586
        %v6711 = vadd.f32 %v6257, %v6591
        %v6712 = vadd.f32 %v6260, %v6594
        %v6713 = vadd.f32 %v6265, %v6599
        %v6714 = vadd.f32 %v6268, %v6602
        %v6715 = vadd.f32 %v6273, %v6607
        %v6716 = vadd.f32 %v6276, %v6610
        %v6717 = vadd.f32 %v6281, %v6615
        %v6718 = vadd.f32 %v6284, %v6618
        %v6719 = vadd.f32 %v6289, %v6623
        %v6720 = vadd.f32 %v6292, %v6626
        %v6721 = vadd.f32 %v6297, %v6631
        %v6722 = vadd.f32 %v6300, %v6634
        %v6723 = vadd.f32 %v6305, %v6639
        %v6724 = vadd.f32 %v6308, %v6642
        %v6725 = vadd.f32 %v6313, %v6647
        %v6726 = vadd.f32 %v6316, %v6650
        %v6727 = vadd.f32 %v6321, %v6655
        %v6728 = vadd.f32 %v6324, %v6658
        %v6729 = vadd.f32 %v6329, %v6663
        %v6730 = vadd.f32 %v6332, %v6666
        %v6731 = vadd.f32 %v6337, %v6671
        %v6732 = vadd.f32 %v6340, %v6674
        %v6733 = vadd.f32 %v6345, %v6679
        %v6734 = vadd.f32 %v6348, %v6682
        %v6735 = vadd.f32 %v6353, %v6687
        %v6736 = vadd.f32 %v6356, %v6690
        %v6737 = vadd.f32 %v6361, %v6695
        %v6738 = vadd.f32 %v6364, %v6698
        %v6739 = vadd.f32 %v6369, %v6703
        %v6740 = vadd.f32 %v6372, %v6706
        %s6741 = scalar_lea.vmem %s19, 384
        %v6742 = vld [vmem:[%s6741] sm:$0xf]
        %v6743 = vld [vmem:[%s6741 + $0x4] sm:$0xf]
        %v6744 = vld [vmem:[%s6741 + $0x8] sm:$0xf]
        %v6745 = vld [vmem:[%s6741 + $0xc] sm:$0xf]
        %v6746 = vld [vmem:[%s6741 + $0x10] sm:$0xf]
        %v6747 = vld [vmem:[%s6741 + $0x14] sm:$0xf]
        %v6748 = vld [vmem:[%s6741 + $0x18] sm:$0xf]
        %v6749 = vld [vmem:[%s6741 + $0x1c] sm:$0xf]
        %v6750 = vld [vmem:[%s6741 + $0x20] sm:$0xf]
        %v6751 = vld [vmem:[%s6741 + $0x24] sm:$0xf]
        %v6752 = vld [vmem:[%s6741 + $0x28] sm:$0xf]
        %v6753 = vld [vmem:[%s6741 + $0x2c] sm:$0xf]
        %v6754 = vld [vmem:[%s6741 + $0x30] sm:$0xf]
        %v6755 = vld [vmem:[%s6741 + $0x34] sm:$0xf]
        %v6756 = vld [vmem:[%s6741 + $0x38] sm:$0xf]
        %v6757 = vld [vmem:[%s6741 + $0x3c] sm:$0xf]
        %v6758 = vld [vmem:[%s6741 + $0x40] sm:$0xf]
        %v6759 = vld [vmem:[%s6741 + $0x44] sm:$0xf]
        %v6760 = vld [vmem:[%s6741 + $0x48] sm:$0xf]
        %v6761 = vld [vmem:[%s6741 + $0x4c] sm:$0xf]
        %v6762 = vld [vmem:[%s6741 + $0x50] sm:$0xf]
        %v6763 = vld [vmem:[%s6741 + $0x54] sm:$0xf]
        %v6764 = vld [vmem:[%s6741 + $0x58] sm:$0xf]
        %v6765 = vld [vmem:[%s6741 + $0x5c] sm:$0xf]
        %v6766 = vld [vmem:[%s6741 + $0x60] sm:$0xf]
        %v6767 = vld [vmem:[%s6741 + $0x64] sm:$0xf]
        %v6768 = vld [vmem:[%s6741 + $0x68] sm:$0xf]
        %v6769 = vld [vmem:[%s6741 + $0x6c] sm:$0xf]
        %v6770 = vld [vmem:[%s6741 + $0x70] sm:$0xf]
        %v6771 = vld [vmem:[%s6741 + $0x74] sm:$0xf]
        %v6772 = vld [vmem:[%s6741 + $0x78] sm:$0xf]
        %v6773 = vld [vmem:[%s6741 + $0x7c] sm:$0xf]
        %v6806 = vunpack.c.l.b16 %v6742
        %v6807 = vunpack.c.l.b16 %v6743
        %v6808 = vunpack.c.l.b16 %v6744
        %v6809 = vunpack.c.l.b16 %v6745
        %v6810 = vunpack.c.l.b16 %v6746
        %v6811 = vunpack.c.l.b16 %v6747
        %v6812 = vunpack.c.l.b16 %v6748
        %v6813 = vunpack.c.l.b16 %v6749
        %v6814 = vunpack.c.l.b16 %v6750
        %v6815 = vunpack.c.l.b16 %v6751
        %v6816 = vunpack.c.l.b16 %v6752
        %v6817 = vunpack.c.l.b16 %v6753
        %v6818 = vunpack.c.l.b16 %v6754
        %v6819 = vunpack.c.l.b16 %v6755
        %v6820 = vunpack.c.l.b16 %v6756
        %v6821 = vunpack.c.l.b16 %v6757
        %v6822 = vunpack.c.l.b16 %v6758
        %v6823 = vunpack.c.l.b16 %v6759
        %v6824 = vunpack.c.l.b16 %v6760
        %v6825 = vunpack.c.l.b16 %v6761
        %v6826 = vunpack.c.l.b16 %v6762
        %v6827 = vunpack.c.l.b16 %v6763
        %v6828 = vunpack.c.l.b16 %v6764
        %v6829 = vunpack.c.l.b16 %v6765
        %v6830 = vunpack.c.l.b16 %v6766
        %v6831 = vunpack.c.l.b16 %v6767
        %v6832 = vunpack.c.l.b16 %v6768
        %v6833 = vunpack.c.l.b16 %v6769
        %v6834 = vunpack.c.l.b16 %v6770
        %v6835 = vunpack.c.l.b16 %v6771
        %v6836 = vunpack.c.l.b16 %v6772
        %v6837 = vunpack.c.l.b16 %v6773
        %v6838 = vpack.c.b16 %v6807, %v6806
        %v6839 = vpack.c.b16 %v6809, %v6808
        %v6840 = vpack.c.b16 %v6811, %v6810
        %v6841 = vpack.c.b16 %v6813, %v6812
        %v6842 = vpack.c.b16 %v6815, %v6814
        %v6843 = vpack.c.b16 %v6817, %v6816
        %v6844 = vpack.c.b16 %v6819, %v6818
        %v6845 = vpack.c.b16 %v6821, %v6820
        %v6846 = vpack.c.b16 %v6823, %v6822
        %v6847 = vpack.c.b16 %v6825, %v6824
        %v6848 = vpack.c.b16 %v6827, %v6826
        %v6849 = vpack.c.b16 %v6829, %v6828
        %v6850 = vpack.c.b16 %v6831, %v6830
        %v6851 = vpack.c.b16 %v6833, %v6832
        %v6852 = vpack.c.b16 %v6835, %v6834
        %v6853 = vpack.c.b16 %v6837, %v6836
        %6854 = vrot.lane.b32.xlu0 %v5712, 32
        %v6855 = vpop.permute.xlu0 %6854
        %6856 = vrot.lane.b32.xlu0 %v5713, 32
        %v6857 = vpop.permute.xlu0 %6856
        %6858 = vrot.lane.b32.xlu0 %v5714, 32
        %v6859 = vpop.permute.xlu0 %6858
        %6860 = vrot.lane.b32.xlu0 %v5715, 32
        %v6861 = vpop.permute.xlu0 %6860
        %v6867 = vsel %vm4945, %v6838, 0
        %v6870 = vsel %vm4945, %v6839, 0
        %v6873 = vsel %vm4945, %v6840, 0
        %v6876 = vsel %vm4945, %v6841, 0
        %v6879 = vsel %vm4945, %v6842, 0
        %v6882 = vsel %vm4945, %v6843, 0
        %v6885 = vsel %vm4945, %v6844, 0
        %v6888 = vsel %vm4945, %v6845, 0
        %v6891 = vsel %vm4945, %v6846, 0
        %v6894 = vsel %vm4945, %v6847, 0
        %v6897 = vsel %vm4945, %v6848, 0
        %v6900 = vsel %vm4945, %v6849, 0
        %v6903 = vsel %vm4945, %v6850, 0
        %v6906 = vsel %vm4945, %v6851, 0
        %v6909 = vsel %vm4945, %v6852, 0
        %v6912 = vsel %vm4945, %v6853, 0
        %6914 = vmatprep.subr.bf16.mxu0 0
        %6915 = vmatpush1.bf16.msra.mxu0 %v6855
        %6916 = vmatprep.subr.bf16.mxu0 0
        %6917 = vmatpush1.bf16.msra.mxu0 %v6857
        %6918 = vmatprep.subr.bf16.mxu0 0
        %6919 = vmatpush1.bf16.msra.mxu0 %v6859
        %6920 = vmatprep.subr.bf16.mxu0 0
        %6921 = vmatpush1.bf16.msra.mxu0 %v6861
        %6922 = vmatprep.subr.bf16.mxu0 0
        %6923 = vmatpush1.bf16.msra.mxu0 0
        %6924 = vmatprep.subr.bf16.mxu0 0
        %6925 = vmatpush1.bf16.msra.mxu0 0
        %6926 = vmatprep.subr.bf16.mxu0 0
        %6927 = vmatpush1.bf16.msra.mxu0 0
        %6928 = vmatprep.subr.bf16.mxu0 0
        %6929 = vmatpush1.bf16.msra.mxu0 0
        %6930 = vmatprep.subr.bf16.mxu0 0
        %6931 = vmatpush1.bf16.msra.mxu0 0
        %6932 = vmatprep.subr.bf16.mxu0 0
        %6933 = vmatpush1.bf16.msra.mxu0 0
        %6934 = vmatprep.subr.bf16.mxu0 0
        %6935 = vmatpush1.bf16.msra.mxu0 0
        %6936 = vmatprep.subr.bf16.mxu0 0
        %6937 = vmatpush1.bf16.msra.mxu0 0
        %6938 = vmatprep.subr.bf16.mxu0 0
        %6939 = vmatpush1.bf16.msra.mxu0 0
        %6940 = vmatprep.subr.bf16.mxu0 0
        %6941 = vmatpush1.bf16.msra.mxu0 0
        %6942 = vmatprep.subr.bf16.mxu0 0
        %6943 = vmatpush1.bf16.msra.mxu0 0
        %6944 = vmatprep.subr.bf16.mxu0 0
        %6945 = vmatpush1.bf16.msra.mxu0 0
        %6946 = vmatprep.mubr.bf16.mxu0 0
        %6947 = vmatmul.mubr.bf16.gmra.mrb[0].mxu0 %v6867
        %v6948 = vpop.f32.mrb[0].mxu0
        %v6949 = vadd.f32 0.0, %v6948
        %v6950 = vpop.f32.mrb[0].mxu0
        %v6951 = vpop.f32.mrb[0].mxu0
        %v6952 = vadd.f32 0.0, %v6951
        %v6953 = vpop.f32.mrb[0].mxu0
        %6954 = vmatprep.mubr.bf16.mxu0 0
        %6955 = vmatmul.mubr.bf16.gmra.mrb[0].mxu0 %v6870
        %v6956 = vpop.f32.mrb[0].mxu0
        %v6957 = vadd.f32 0.0, %v6956
        %v6958 = vpop.f32.mrb[0].mxu0
        %v6959 = vpop.f32.mrb[0].mxu0
        %v6960 = vadd.f32 0.0, %v6959
        %v6961 = vpop.f32.mrb[0].mxu0
        %6962 = vmatprep.mubr.bf16.mxu0 0
        %6963 = vmatmul.mubr.bf16.gmra.mrb[0].mxu0 %v6873
        %v6964 = vpop.f32.mrb[0].mxu0
        %v6965 = vadd.f32 0.0, %v6964
        %v6966 = vpop.f32.mrb[0].mxu0
        %v6967 = vpop.f32.mrb[0].mxu0
        %v6968 = vadd.f32 0.0, %v6967
        %v6969 = vpop.f32.mrb[0].mxu0
        %6970 = vmatprep.mubr.bf16.mxu0 0
        %6971 = vmatmul.mubr.bf16.gmra.mrb[0].mxu0 %v6876
        %v6972 = vpop.f32.mrb[0].mxu0
        %v6973 = vadd.f32 0.0, %v6972
        %v6974 = vpop.f32.mrb[0].mxu0
        %v6975 = vpop.f32.mrb[0].mxu0
        %v6976 = vadd.f32 0.0, %v6975
        %v6977 = vpop.f32.mrb[0].mxu0
        %6978 = vmatprep.mubr.bf16.mxu0 0
        %6979 = vmatmul.mubr.bf16.gmra.mrb[0].mxu0 %v6879
        %v6980 = vpop.f32.mrb[0].mxu0
        %v6981 = vadd.f32 0.0, %v6980
        %v6982 = vpop.f32.mrb[0].mxu0
        %v6983 = vpop.f32.mrb[0].mxu0
        %v6984 = vadd.f32 0.0, %v6983
        %v6985 = vpop.f32.mrb[0].mxu0
        %6986 = vmatprep.mubr.bf16.mxu0 0
        %6987 = vmatmul.mubr.bf16.gmra.mrb[0].mxu0 %v6882
        %v6988 = vpop.f32.mrb[0].mxu0
        %v6989 = vadd.f32 0.0, %v6988
        %v6990 = vpop.f32.mrb[0].mxu0
        %v6991 = vpop.f32.mrb[0].mxu0
        %v6992 = vadd.f32 0.0, %v6991
        %v6993 = vpop.f32.mrb[0].mxu0
        %6994 = vmatprep.mubr.bf16.mxu0 0
        %6995 = vmatmul.mubr.bf16.gmra.mrb[0].mxu0 %v6885
        %v6996 = vpop.f32.mrb[0].mxu0
        %v6997 = vadd.f32 0.0, %v6996
        %v6998 = vpop.f32.mrb[0].mxu0
        %v6999 = vpop.f32.mrb[0].mxu0
        %v7000 = vadd.f32 0.0, %v6999
        %v7001 = vpop.f32.mrb[0].mxu0
        %7002 = vmatprep.mubr.bf16.mxu0 0
        %7003 = vmatmul.mubr.bf16.gmra.mrb[0].mxu0 %v6888
        %v7004 = vpop.f32.mrb[0].mxu0
        %v7005 = vadd.f32 0.0, %v7004
        %v7006 = vpop.f32.mrb[0].mxu0
        %v7007 = vpop.f32.mrb[0].mxu0
        %v7008 = vadd.f32 0.0, %v7007
        %v7009 = vpop.f32.mrb[0].mxu0
        %7010 = vmatprep.mubr.bf16.mxu0 0
        %7011 = vmatmul.mubr.bf16.gmra.mrb[0].mxu0 %v6891
        %v7012 = vpop.f32.mrb[0].mxu0
        %v7013 = vadd.f32 0.0, %v7012
        %v7014 = vpop.f32.mrb[0].mxu0
        %v7015 = vpop.f32.mrb[0].mxu0
        %v7016 = vadd.f32 0.0, %v7015
        %v7017 = vpop.f32.mrb[0].mxu0
        %7018 = vmatprep.mubr.bf16.mxu0 0
        %7019 = vmatmul.mubr.bf16.gmra.mrb[0].mxu0 %v6894
        %v7020 = vpop.f32.mrb[0].mxu0
        %v7021 = vadd.f32 0.0, %v7020
        %v7022 = vpop.f32.mrb[0].mxu0
        %v7023 = vpop.f32.mrb[0].mxu0
        %v7024 = vadd.f32 0.0, %v7023
        %v7025 = vpop.f32.mrb[0].mxu0
        %7026 = vmatprep.mubr.bf16.mxu0 0
        %7027 = vmatmul.mubr.bf16.gmra.mrb[0].mxu0 %v6897
        %v7028 = vpop.f32.mrb[0].mxu0
        %v7029 = vadd.f32 0.0, %v7028
        %v7030 = vpop.f32.mrb[0].mxu0
        %v7031 = vpop.f32.mrb[0].mxu0
        %v7032 = vadd.f32 0.0, %v7031
        %v7033 = vpop.f32.mrb[0].mxu0
        %7034 = vmatprep.mubr.bf16.mxu0 0
        %7035 = vmatmul.mubr.bf16.gmra.mrb[0].mxu0 %v6900
        %v7036 = vpop.f32.mrb[0].mxu0
        %v7037 = vadd.f32 0.0, %v7036
        %v7038 = vpop.f32.mrb[0].mxu0
        %v7039 = vpop.f32.mrb[0].mxu0
        %v7040 = vadd.f32 0.0, %v7039
        %v7041 = vpop.f32.mrb[0].mxu0
        %7042 = vmatprep.mubr.bf16.mxu0 0
        %7043 = vmatmul.mubr.bf16.gmra.mrb[0].mxu0 %v6903
        %v7044 = vpop.f32.mrb[0].mxu0
        %v7045 = vadd.f32 0.0, %v7044
        %v7046 = vpop.f32.mrb[0].mxu0
        %v7047 = vpop.f32.mrb[0].mxu0
        %v7048 = vadd.f32 0.0, %v7047
        %v7049 = vpop.f32.mrb[0].mxu0
        %7050 = vmatprep.mubr.bf16.mxu0 0
        %7051 = vmatmul.mubr.bf16.gmra.mrb[0].mxu0 %v6906
        %v7052 = vpop.f32.mrb[0].mxu0
        %v7053 = vadd.f32 0.0, %v7052
        %v7054 = vpop.f32.mrb[0].mxu0
        %v7055 = vpop.f32.mrb[0].mxu0
        %v7056 = vadd.f32 0.0, %v7055
        %v7057 = vpop.f32.mrb[0].mxu0
        %7058 = vmatprep.mubr.bf16.mxu0 0
        %7059 = vmatmul.mubr.bf16.gmra.mrb[0].mxu0 %v6909
        %v7060 = vpop.f32.mrb[0].mxu0
        %v7061 = vadd.f32 0.0, %v7060
        %v7062 = vpop.f32.mrb[0].mxu0
        %v7063 = vpop.f32.mrb[0].mxu0
        %v7064 = vadd.f32 0.0, %v7063
        %v7065 = vpop.f32.mrb[0].mxu0
        %7066 = vmatprep.mubr.bf16.mxu0 0
        %7067 = vmatmul.mubr.bf16.gmra.mrb[0].mxu0 %v6912
        %v7068 = vpop.f32.mrb[0].mxu0
        %v7069 = vadd.f32 0.0, %v7068
        %v7070 = vpop.f32.mrb[0].mxu0
        %v7071 = vpop.f32.mrb[0].mxu0
        %v7072 = vadd.f32 0.0, %v7071
        %v7073 = vpop.f32.mrb[0].mxu0
        %7074 = vdwg.mxu0
        %v7075 = vadd.f32 %v6709, %v6949
        %v7076 = vadd.f32 %v6710, %v6952
        %v7077 = vadd.f32 %v6711, %v6957
        %v7078 = vadd.f32 %v6712, %v6960
        %v7079 = vadd.f32 %v6713, %v6965
        %v7080 = vadd.f32 %v6714, %v6968
        %v7081 = vadd.f32 %v6715, %v6973
        %v7082 = vadd.f32 %v6716, %v6976
        %v7083 = vadd.f32 %v6717, %v6981
        %v7084 = vadd.f32 %v6718, %v6984
        %v7085 = vadd.f32 %v6719, %v6989
        %v7086 = vadd.f32 %v6720, %v6992
        %v7087 = vadd.f32 %v6721, %v6997
        %v7088 = vadd.f32 %v6722, %v7000
        %v7089 = vadd.f32 %v6723, %v7005
        %v7090 = vadd.f32 %v6724, %v7008
        %v7091 = vadd.f32 %v6725, %v7013
        %v7092 = vadd.f32 %v6726, %v7016
        %v7093 = vadd.f32 %v6727, %v7021
        %v7094 = vadd.f32 %v6728, %v7024
        %v7095 = vadd.f32 %v6729, %v7029
        %v7096 = vadd.f32 %v6730, %v7032
        %v7097 = vadd.f32 %v6731, %v7037
        %v7098 = vadd.f32 %v6732, %v7040
        %v7099 = vadd.f32 %v6733, %v7045
        %v7100 = vadd.f32 %v6734, %v7048
        %v7101 = vadd.f32 %v6735, %v7053
        %v7102 = vadd.f32 %v6736, %v7056
        %v7103 = vadd.f32 %v6737, %v7061
        %v7104 = vadd.f32 %v6738, %v7064
        %v7105 = vadd.f32 %v6739, %v7069
        %v7106 = vadd.f32 %v6740, %v7072
        %v7108 = vlaneseq
        %v7109 = vshrl.u32 %v7108, 7
        %v7110 = vsub.s32 0, %v7109
        %v7111 = vrot.slane %v5613, %v7110
        %v7113 = vmul.f32 %v7075, %v7111
        %v7114 = vmul.f32 %v7076, %v7111
        %v7115 = vmul.f32 %v7077, %v7111
        %v7116 = vmul.f32 %v7078, %v7111
        %v7117 = vmul.f32 %v7079, %v7111
        %v7118 = vmul.f32 %v7080, %v7111
        %v7119 = vmul.f32 %v7081, %v7111
        %v7120 = vmul.f32 %v7082, %v7111
        %v7121 = vmul.f32 %v7083, %v7111
        %v7122 = vmul.f32 %v7084, %v7111
        %v7123 = vmul.f32 %v7085, %v7111
        %v7124 = vmul.f32 %v7086, %v7111
        %v7125 = vmul.f32 %v7087, %v7111
        %v7126 = vmul.f32 %v7088, %v7111
        %v7127 = vmul.f32 %v7089, %v7111
        %v7128 = vmul.f32 %v7090, %v7111
        %v7129 = vmul.f32 %v7091, %v7111
        %v7130 = vmul.f32 %v7092, %v7111
        %v7131 = vmul.f32 %v7093, %v7111
        %v7132 = vmul.f32 %v7094, %v7111
        %v7133 = vmul.f32 %v7095, %v7111
        %v7134 = vmul.f32 %v7096, %v7111
        %v7135 = vmul.f32 %v7097, %v7111
        %v7136 = vmul.f32 %v7098, %v7111
        %v7137 = vmul.f32 %v7099, %v7111
        %v7138 = vmul.f32 %v7100, %v7111
        %v7139 = vmul.f32 %v7101, %v7111
        %v7140 = vmul.f32 %v7102, %v7111
        %v7141 = vmul.f32 %v7103, %v7111
        %v7142 = vmul.f32 %v7104, %v7111
        %v7143 = vmul.f32 %v7105, %v7111
        %v7144 = vmul.f32 %v7106, %v7111
        %v7146 = vlaneseq
        %v7147 = vshrl.u32 %v7146, 7
        %v7148 = vsub.s32 0, %v7147
        %v7149 = vrot.slane %v5614, %v7148
        %v7151 = vadd.f32 %v7113, %v7149
        %v7152 = vadd.f32 %v7114, %v7149
        %v7153 = vadd.f32 %v7115, %v7149
        %v7154 = vadd.f32 %v7116, %v7149
        %v7155 = vadd.f32 %v7117, %v7149
        %v7156 = vadd.f32 %v7118, %v7149
        %v7157 = vadd.f32 %v7119, %v7149
        %v7158 = vadd.f32 %v7120, %v7149
        %v7159 = vadd.f32 %v7121, %v7149
        %v7160 = vadd.f32 %v7122, %v7149
        %v7161 = vadd.f32 %v7123, %v7149
        %v7162 = vadd.f32 %v7124, %v7149
        %v7163 = vadd.f32 %v7125, %v7149
        %v7164 = vadd.f32 %v7126, %v7149
        %v7165 = vadd.f32 %v7127, %v7149
        %v7166 = vadd.f32 %v7128, %v7149
        %v7167 = vadd.f32 %v7129, %v7149
        %v7168 = vadd.f32 %v7130, %v7149
        %v7169 = vadd.f32 %v7131, %v7149
        %v7170 = vadd.f32 %v7132, %v7149
        %v7171 = vadd.f32 %v7133, %v7149
        %v7172 = vadd.f32 %v7134, %v7149
        %v7173 = vadd.f32 %v7135, %v7149
        %v7174 = vadd.f32 %v7136, %v7149
        %v7175 = vadd.f32 %v7137, %v7149
        %v7176 = vadd.f32 %v7138, %v7149
        %v7177 = vadd.f32 %v7139, %v7149
        %v7178 = vadd.f32 %v7140, %v7149
        %v7179 = vadd.f32 %v7141, %v7149
        %v7180 = vadd.f32 %v7142, %v7149
        %v7181 = vadd.f32 %v7143, %v7149
        %v7182 = vadd.f32 %v7144, %v7149
        %v7183 = vmax.f32 %v7151, 0.0
        %v7184 = vmax.f32 %v7152, 0.0
        %v7185 = vmax.f32 %v7153, 0.0
        %v7186 = vmax.f32 %v7154, 0.0
        %v7187 = vmax.f32 %v7155, 0.0
        %v7188 = vmax.f32 %v7156, 0.0
        %v7189 = vmax.f32 %v7157, 0.0
        %v7190 = vmax.f32 %v7158, 0.0
        %v7191 = vmax.f32 %v7159, 0.0
        %v7192 = vmax.f32 %v7160, 0.0
        %v7193 = vmax.f32 %v7161, 0.0
        %v7194 = vmax.f32 %v7162, 0.0
        %v7195 = vmax.f32 %v7163, 0.0
        %v7196 = vmax.f32 %v7164, 0.0
        %v7197 = vmax.f32 %v7165, 0.0
        %v7198 = vmax.f32 %v7166, 0.0
        %v7199 = vmax.f32 %v7167, 0.0
        %v7200 = vmax.f32 %v7168, 0.0
        %v7201 = vmax.f32 %v7169, 0.0
        %v7202 = vmax.f32 %v7170, 0.0
        %v7203 = vmax.f32 %v7171, 0.0
        %v7204 = vmax.f32 %v7172, 0.0
        %v7205 = vmax.f32 %v7173, 0.0
        %v7206 = vmax.f32 %v7174, 0.0
        %v7207 = vmax.f32 %v7175, 0.0
        %v7208 = vmax.f32 %v7176, 0.0
        %v7209 = vmax.f32 %v7177, 0.0
        %v7210 = vmax.f32 %v7178, 0.0
        %v7211 = vmax.f32 %v7179, 0.0
        %v7212 = vmax.f32 %v7180, 0.0
        %v7213 = vmax.f32 %v7181, 0.0
        %v7214 = vmax.f32 %v7182, 0.0
        %v7215 = vld [vmem:[#allocation3] sm:$0x1]
        %7216 = vst.msk [vmem:[#allocation2 + $0x18] sm:$0xff] %vm2608, 0.0
        %7217 = vst.msk [vmem:[#allocation2 + $0x20] sm:$0xff] %vm2608, 0.0
        %7218 = vst.msk [vmem:[#allocation2 + $0x108] sm:$0xff] %vm2611, 0.0
        %7219 = vst.msk [vmem:[#allocation2 + $0x110] sm:$0xff] %vm2611, 0.0
        %7220 = vst.msk [vmem:[#allocation2 + $0x28] sm:$0xff] %vm2608, %v7183
        %7221 = vst.msk [vmem:[#allocation2 + $0x30] sm:$0xff] %vm2608, %v7184
        %7222 = vst.msk [vmem:[#allocation2 + $0x38] sm:$0xff] %vm2608, %v7185
        %7223 = vst.msk [vmem:[#allocation2 + $0x40] sm:$0xff] %vm2608, %v7186
        %7224 = vst.msk [vmem:[#allocation2 + $0x48] sm:$0xff] %vm2608, %v7187
        %7225 = vst.msk [vmem:[#allocation2 + $0x50] sm:$0xff] %vm2608, %v7188
        %7226 = vst.msk [vmem:[#allocation2 + $0x58] sm:$0xff] %vm2608, %v7189
        %7227 = vst.msk [vmem:[#allocation2 + $0x60] sm:$0xff] %vm2608, %v7190
        %7228 = vst.msk [vmem:[#allocation2 + $0x68] sm:$0xff] %vm2608, %v7191
        %7229 = vst.msk [vmem:[#allocation2 + $0x70] sm:$0xff] %vm2608, %v7192
        %7230 = vst.msk [vmem:[#allocation2 + $0x78] sm:$0xff] %vm2608, %v7193
        %7231 = vst.msk [vmem:[#allocation2 + $0x80] sm:$0xff] %vm2608, %v7194
        %7232 = vst.msk [vmem:[#allocation2 + $0x88] sm:$0xff] %vm2608, %v7195
        %7233 = vst.msk [vmem:[#allocation2 + $0x90] sm:$0xff] %vm2608, %v7196
        %7234 = vst.msk [vmem:[#allocation2 + $0x98] sm:$0xff] %vm2608, %v7197
        %7235 = vst.msk [vmem:[#allocation2 + $0xa0] sm:$0xff] %vm2608, %v7198
        %7236 = vst.msk [vmem:[#allocation2 + $0xa8] sm:$0xff] %vm2608, %v7199
        %7237 = vst.msk [vmem:[#allocation2 + $0xb0] sm:$0xff] %vm2608, %v7200
        %7238 = vst.msk [vmem:[#allocation2 + $0xb8] sm:$0xff] %vm2608, %v7201
        %7239 = vst.msk [vmem:[#allocation2 + $0xc0] sm:$0xff] %vm2608, %v7202
        %7240 = vst.msk [vmem:[#allocation2 + $0xc8] sm:$0xff] %vm2608, %v7203
        %7241 = vst.msk [vmem:[#allocation2 + $0xd0] sm:$0xff] %vm2608, %v7204
        %7242 = vst.msk [vmem:[#allocation2 + $0xd8] sm:$0xff] %vm2608, %v7205
        %7243 = vst.msk [vmem:[#allocation2 + $0xe0] sm:$0xff] %vm2608, %v7206
        %7244 = vst.msk [vmem:[#allocation2 + $0xe8] sm:$0xff] %vm2608, %v7207
        %7245 = vst.msk [vmem:[#allocation2 + $0xf0] sm:$0xff] %vm2608, %v7208
        %7246 = vst.msk [vmem:[#allocation2 + $0xf8] sm:$0xff] %vm2608, %v7209
        %7247 = vst.msk [vmem:[#allocation2 + $0x100] sm:$0xff] %vm2608, %v7210
        %7248 = vst.msk [vmem:[#allocation2 + $0x108] sm:$0xff] %vm2608, %v7211
        %7249 = vst.msk [vmem:[#allocation2 + $0x110] sm:$0xff] %vm2608, %v7212
        %7250 = vst.msk [vmem:[#allocation2 + $0x118] sm:$0xff] %vm2608, %v7213
        %7251 = vst.msk [vmem:[#allocation2 + $0x120] sm:$0xff] %vm2608, %v7214
        %7284 = vrot.lane.b32.xlu0 %v7183, 32
        %v7285 = vpop.permute.xlu0 %7284
        %7286 = vrot.lane.b32.xlu0 %v7184, 32
        %v7287 = vpop.permute.xlu0 %7286
        %7288 = vrot.lane.b32.xlu0 %v7185, 32
        %v7289 = vpop.permute.xlu0 %7288
        %7290 = vrot.lane.b32.xlu0 %v7186, 32
        %v7291 = vpop.permute.xlu0 %7290
        %7292 = vrot.lane.b32.xlu0 %v7187, 32
        %v7293 = vpop.permute.xlu0 %7292
        %7294 = vrot.lane.b32.xlu0 %v7188, 32
        %v7295 = vpop.permute.xlu0 %7294
        %7296 = vrot.lane.b32.xlu0 %v7189, 32
        %v7297 = vpop.permute.xlu0 %7296
        %7298 = vrot.lane.b32.xlu0 %v7190, 32
        %v7299 = vpop.permute.xlu0 %7298
        %7300 = vrot.lane.b32.xlu0 %v7191, 32
        %v7301 = vpop.permute.xlu0 %7300
        %7302 = vrot.lane.b32.xlu0 %v7192, 32
        %v7303 = vpop.permute.xlu0 %7302
        %7304 = vrot.lane.b32.xlu0 %v7193, 32
        %v7305 = vpop.permute.xlu0 %7304
        %7306 = vrot.lane.b32.xlu0 %v7194, 32
        %v7307 = vpop.permute.xlu0 %7306
        %7308 = vrot.lane.b32.xlu0 %v7195, 32
        %v7309 = vpop.permute.xlu0 %7308
        %7310 = vrot.lane.b32.xlu0 %v7196, 32
        %v7311 = vpop.permute.xlu0 %7310
        %7312 = vrot.lane.b32.xlu0 %v7197, 32
        %v7313 = vpop.permute.xlu0 %7312
        %7314 = vrot.lane.b32.xlu0 %v7198, 32
        %v7315 = vpop.permute.xlu0 %7314
        %7316 = vrot.lane.b32.xlu0 %v7199, 32
        %v7317 = vpop.permute.xlu0 %7316
        %7318 = vrot.lane.b32.xlu0 %v7200, 32
        %v7319 = vpop.permute.xlu0 %7318
        %7320 = vrot.lane.b32.xlu0 %v7201, 32
        %v7321 = vpop.permute.xlu0 %7320
        %7322 = vrot.lane.b32.xlu0 %v7202, 32
        %v7323 = vpop.permute.xlu0 %7322
        %7324 = vrot.lane.b32.xlu0 %v7203, 32
        %v7325 = vpop.permute.xlu0 %7324
        %7326 = vrot.lane.b32.xlu0 %v7204, 32
        %v7327 = vpop.permute.xlu0 %7326
        %7328 = vrot.lane.b32.xlu0 %v7205, 32
        %v7329 = vpop.permute.xlu0 %7328
        %7330 = vrot.lane.b32.xlu0 %v7206, 32
        %v7331 = vpop.permute.xlu0 %7330
        %7332 = vrot.lane.b32.xlu0 %v7207, 32
        %v7333 = vpop.permute.xlu0 %7332
        %7334 = vrot.lane.b32.xlu0 %v7208, 32
        %v7335 = vpop.permute.xlu0 %7334
        %7336 = vrot.lane.b32.xlu0 %v7209, 32
        %v7337 = vpop.permute.xlu0 %7336
        %7338 = vrot.lane.b32.xlu0 %v7210, 32
        %v7339 = vpop.permute.xlu0 %7338
        %7340 = vrot.lane.b32.xlu0 %v7211, 32
        %v7341 = vpop.permute.xlu0 %7340
        %7342 = vrot.lane.b32.xlu0 %v7212, 32
        %v7343 = vpop.permute.xlu0 %7342
        %7344 = vrot.lane.b32.xlu0 %v7213, 32
        %v7345 = vpop.permute.xlu0 %7344
        %7346 = vrot.lane.b32.xlu0 %v7214, 32
        %v7347 = vpop.permute.xlu0 %7346
        %7380 = vst.msk [vmem:[#allocation2 + $0x18] sm:$0xff] %vm2774, %v7285
        %7381 = vst.msk [vmem:[#allocation2 + $0x20] sm:$0xff] %vm2774, %v7287
        %7382 = vst.msk [vmem:[#allocation2 + $0x28] sm:$0xff] %vm2774, %v7289
        %7383 = vst.msk [vmem:[#allocation2 + $0x30] sm:$0xff] %vm2774, %v7291
        %7384 = vst.msk [vmem:[#allocation2 + $0x38] sm:$0xff] %vm2774, %v7293
        %7385 = vst.msk [vmem:[#allocation2 + $0x40] sm:$0xff] %vm2774, %v7295
        %7386 = vst.msk [vmem:[#allocation2 + $0x48] sm:$0xff] %vm2774, %v7297
        %7387 = vst.msk [vmem:[#allocation2 + $0x50] sm:$0xff] %vm2774, %v7299
        %7388 = vst.msk [vmem:[#allocation2 + $0x58] sm:$0xff] %vm2774, %v7301
        %7389 = vst.msk [vmem:[#allocation2 + $0x60] sm:$0xff] %vm2774, %v7303
        %7390 = vst.msk [vmem:[#allocation2 + $0x68] sm:$0xff] %vm2774, %v7305
        %7391 = vst.msk [vmem:[#allocation2 + $0x70] sm:$0xff] %vm2774, %v7307
        %7392 = vst.msk [vmem:[#allocation2 + $0x78] sm:$0xff] %vm2774, %v7309
        %7393 = vst.msk [vmem:[#allocation2 + $0x80] sm:$0xff] %vm2774, %v7311
        %7394 = vst.msk [vmem:[#allocation2 + $0x88] sm:$0xff] %vm2774, %v7313
        %7395 = vst.msk [vmem:[#allocation2 + $0x90] sm:$0xff] %vm2774, %v7315
        %7396 = vst.msk [vmem:[#allocation2 + $0x98] sm:$0xff] %vm2774, %v7317
        %7397 = vst.msk [vmem:[#allocation2 + $0xa0] sm:$0xff] %vm2774, %v7319
        %7398 = vst.msk [vmem:[#allocation2 + $0xa8] sm:$0xff] %vm2774, %v7321
        %7399 = vst.msk [vmem:[#allocation2 + $0xb0] sm:$0xff] %vm2774, %v7323
        %7400 = vst.msk [vmem:[#allocation2 + $0xb8] sm:$0xff] %vm2774, %v7325
        %7401 = vst.msk [vmem:[#allocation2 + $0xc0] sm:$0xff] %vm2774, %v7327
        %7402 = vst.msk [vmem:[#allocation2 + $0xc8] sm:$0xff] %vm2774, %v7329
        %7403 = vst.msk [vmem:[#allocation2 + $0xd0] sm:$0xff] %vm2774, %v7331
        %7404 = vst.msk [vmem:[#allocation2 + $0xd8] sm:$0xff] %vm2774, %v7333
        %7405 = vst.msk [vmem:[#allocation2 + $0xe0] sm:$0xff] %vm2774, %v7335
        %7406 = vst.msk [vmem:[#allocation2 + $0xe8] sm:$0xff] %vm2774, %v7337
        %7407 = vst.msk [vmem:[#allocation2 + $0xf0] sm:$0xff] %vm2774, %v7339
        %7408 = vst.msk [vmem:[#allocation2 + $0xf8] sm:$0xff] %vm2774, %v7341
        %7409 = vst.msk [vmem:[#allocation2 + $0x100] sm:$0xff] %vm2774, %v7343
        %7410 = vst.msk [vmem:[#allocation2 + $0x108] sm:$0xff] %vm2774, %v7345
        %7411 = vst.msk [vmem:[#allocation2 + $0x110] sm:$0xff] %vm2774, %v7347
        %7412 = vrot.lane.b32.xlu0 %v7183, 64
        %v7413 = vpop.permute.xlu0 %7412
        %7414 = vrot.lane.b32.xlu0 %v7184, 64
        %v7415 = vpop.permute.xlu0 %7414
        %7416 = vrot.lane.b32.xlu0 %v7185, 64
        %v7417 = vpop.permute.xlu0 %7416
        %7418 = vrot.lane.b32.xlu0 %v7186, 64
        %v7419 = vpop.permute.xlu0 %7418
        %7420 = vrot.lane.b32.xlu0 %v7187, 64
        %v7421 = vpop.permute.xlu0 %7420
        %7422 = vrot.lane.b32.xlu0 %v7188, 64
        %v7423 = vpop.permute.xlu0 %7422
        %7424 = vrot.lane.b32.xlu0 %v7189, 64
        %v7425 = vpop.permute.xlu0 %7424
        %7426 = vrot.lane.b32.xlu0 %v7190, 64
        %v7427 = vpop.permute.xlu0 %7426
        %7428 = vrot.lane.b32.xlu0 %v7191, 64
        %v7429 = vpop.permute.xlu0 %7428
        %7430 = vrot.lane.b32.xlu0 %v7192, 64
        %v7431 = vpop.permute.xlu0 %7430
        %7432 = vrot.lane.b32.xlu0 %v7193, 64
        %v7433 = vpop.permute.xlu0 %7432
        %7434 = vrot.lane.b32.xlu0 %v7194, 64
        %v7435 = vpop.permute.xlu0 %7434
        %7436 = vrot.lane.b32.xlu0 %v7195, 64
        %v7437 = vpop.permute.xlu0 %7436
        %7438 = vrot.lane.b32.xlu0 %v7196, 64
        %v7439 = vpop.permute.xlu0 %7438
        %7440 = vrot.lane.b32.xlu0 %v7197, 64
        %v7441 = vpop.permute.xlu0 %7440
        %7442 = vrot.lane.b32.xlu0 %v7198, 64
        %v7443 = vpop.permute.xlu0 %7442
        %7444 = vrot.lane.b32.xlu0 %v7199, 64
        %v7445 = vpop.permute.xlu0 %7444
        %7446 = vrot.lane.b32.xlu0 %v7200, 64
        %v7447 = vpop.permute.xlu0 %7446
        %7448 = vrot.lane.b32.xlu0 %v7201, 64
        %v7449 = vpop.permute.xlu0 %7448
        %7450 = vrot.lane.b32.xlu0 %v7202, 64
        %v7451 = vpop.permute.xlu0 %7450
        %7452 = vrot.lane.b32.xlu0 %v7203, 64
        %v7453 = vpop.permute.xlu0 %7452
        %7454 = vrot.lane.b32.xlu0 %v7204, 64
        %v7455 = vpop.permute.xlu0 %7454
        %7456 = vrot.lane.b32.xlu0 %v7205, 64
        %v7457 = vpop.permute.xlu0 %7456
        %7458 = vrot.lane.b32.xlu0 %v7206, 64
        %v7459 = vpop.permute.xlu0 %7458
        %7460 = vrot.lane.b32.xlu0 %v7207, 64
        %v7461 = vpop.permute.xlu0 %7460
        %7462 = vrot.lane.b32.xlu0 %v7208, 64
        %v7463 = vpop.permute.xlu0 %7462
        %7464 = vrot.lane.b32.xlu0 %v7209, 64
        %v7465 = vpop.permute.xlu0 %7464
        %7466 = vrot.lane.b32.xlu0 %v7210, 64
        %v7467 = vpop.permute.xlu0 %7466
        %7468 = vrot.lane.b32.xlu0 %v7211, 64
        %v7469 = vpop.permute.xlu0 %7468
        %7470 = vrot.lane.b32.xlu0 %v7212, 64
        %v7471 = vpop.permute.xlu0 %7470
        %7472 = vrot.lane.b32.xlu0 %v7213, 64
        %v7473 = vpop.permute.xlu0 %7472
        %7474 = vrot.lane.b32.xlu0 %v7214, 64
        %v7475 = vpop.permute.xlu0 %7474
        %7508 = vst.msk [vmem:[#allocation2 + $0x8] sm:$0xff] %vm2611, %v7413
        %7509 = vst.msk [vmem:[#allocation2 + $0x10] sm:$0xff] %vm2611, %v7415
        %7510 = vst.msk [vmem:[#allocation2 + $0x18] sm:$0xff] %vm2611, %v7417
        %7511 = vst.msk [vmem:[#allocation2 + $0x20] sm:$0xff] %vm2611, %v7419
        %7512 = vst.msk [vmem:[#allocation2 + $0x28] sm:$0xff] %vm2611, %v7421
        %7513 = vst.msk [vmem:[#allocation2 + $0x30] sm:$0xff] %vm2611, %v7423
        %7514 = vst.msk [vmem:[#allocation2 + $0x38] sm:$0xff] %vm2611, %v7425
        %7515 = vst.msk [vmem:[#allocation2 + $0x40] sm:$0xff] %vm2611, %v7427
        %7516 = vst.msk [vmem:[#allocation2 + $0x48] sm:$0xff] %vm2611, %v7429
        %7517 = vst.msk [vmem:[#allocation2 + $0x50] sm:$0xff] %vm2611, %v7431
        %7518 = vst.msk [vmem:[#allocation2 + $0x58] sm:$0xff] %vm2611, %v7433
        %7519 = vst.msk [vmem:[#allocation2 + $0x60] sm:$0xff] %vm2611, %v7435
        %7520 = vst.msk [vmem:[#allocation2 + $0x68] sm:$0xff] %vm2611, %v7437
        %7521 = vst.msk [vmem:[#allocation2 + $0x70] sm:$0xff] %vm2611, %v7439
        %7522 = vst.msk [vmem:[#allocation2 + $0x78] sm:$0xff] %vm2611, %v7441
        %7523 = vst.msk [vmem:[#allocation2 + $0x80] sm:$0xff] %vm2611, %v7443
        %7524 = vst.msk [vmem:[#allocation2 + $0x88] sm:$0xff] %vm2611, %v7445
        %7525 = vst.msk [vmem:[#allocation2 + $0x90] sm:$0xff] %vm2611, %v7447
        %7526 = vst.msk [vmem:[#allocation2 + $0x98] sm:$0xff] %vm2611, %v7449
        %7527 = vst.msk [vmem:[#allocation2 + $0xa0] sm:$0xff] %vm2611, %v7451
        %7528 = vst.msk [vmem:[#allocation2 + $0xa8] sm:$0xff] %vm2611, %v7453
        %7529 = vst.msk [vmem:[#allocation2 + $0xb0] sm:$0xff] %vm2611, %v7455
        %7530 = vst.msk [vmem:[#allocation2 + $0xb8] sm:$0xff] %vm2611, %v7457
        %7531 = vst.msk [vmem:[#allocation2 + $0xc0] sm:$0xff] %vm2611, %v7459
        %7532 = vst.msk [vmem:[#allocation2 + $0xc8] sm:$0xff] %vm2611, %v7461
        %7533 = vst.msk [vmem:[#allocation2 + $0xd0] sm:$0xff] %vm2611, %v7463
        %7534 = vst.msk [vmem:[#allocation2 + $0xd8] sm:$0xff] %vm2611, %v7465
        %7535 = vst.msk [vmem:[#allocation2 + $0xe0] sm:$0xff] %vm2611, %v7467
        %7536 = vst.msk [vmem:[#allocation2 + $0xe8] sm:$0xff] %vm2611, %v7469
        %7537 = vst.msk [vmem:[#allocation2 + $0xf0] sm:$0xff] %vm2611, %v7471
        %7538 = vst.msk [vmem:[#allocation2 + $0xf8] sm:$0xff] %vm2611, %v7473
        %7539 = vst.msk [vmem:[#allocation2 + $0x100] sm:$0xff] %vm2611, %v7475
        %v7540 = vld [vmem:[#allocation2 + $0x17] sm:$0xff]
        %v7541 = vld [vmem:[#allocation2 + $0x1f] sm:$0xff]
        %v7542 = vld [vmem:[#allocation2 + $0x27] sm:$0xff]
        %v7543 = vld [vmem:[#allocation2 + $0x2f] sm:$0xff]
        %v7544 = vld [vmem:[#allocation2 + $0x37] sm:$0xff]
        %v7545 = vld [vmem:[#allocation2 + $0x3f] sm:$0xff]
        %v7546 = vld [vmem:[#allocation2 + $0x47] sm:$0xff]
        %v7547 = vld [vmem:[#allocation2 + $0x4f] sm:$0xff]
        %v7548 = vld [vmem:[#allocation2 + $0x57] sm:$0xff]
        %v7549 = vld [vmem:[#allocation2 + $0x5f] sm:$0xff]
        %v7550 = vld [vmem:[#allocation2 + $0x67] sm:$0xff]
        %v7551 = vld [vmem:[#allocation2 + $0x6f] sm:$0xff]
        %v7552 = vld [vmem:[#allocation2 + $0x77] sm:$0xff]
        %v7553 = vld [vmem:[#allocation2 + $0x7f] sm:$0xff]
        %v7554 = vld [vmem:[#allocation2 + $0x87] sm:$0xff]
        %v7555 = vld [vmem:[#allocation2 + $0x8f] sm:$0xff]
        %v7556 = vld [vmem:[#allocation2 + $0x97] sm:$0xff]
        %v7557 = vld [vmem:[#allocation2 + $0x9f] sm:$0xff]
        %v7558 = vld [vmem:[#allocation2 + $0xa7] sm:$0xff]
        %v7559 = vld [vmem:[#allocation2 + $0xaf] sm:$0xff]
        %v7560 = vld [vmem:[#allocation2 + $0xb7] sm:$0xff]
        %v7561 = vld [vmem:[#allocation2 + $0xbf] sm:$0xff]
        %v7562 = vld [vmem:[#allocation2 + $0xc7] sm:$0xff]
        %v7563 = vld [vmem:[#allocation2 + $0xcf] sm:$0xff]
        %v7564 = vld [vmem:[#allocation2 + $0xd7] sm:$0xff]
        %v7565 = vld [vmem:[#allocation2 + $0xdf] sm:$0xff]
        %v7566 = vld [vmem:[#allocation2 + $0xe7] sm:$0xff]
        %v7567 = vld [vmem:[#allocation2 + $0xef] sm:$0xff]
        %v7568 = vld [vmem:[#allocation2 + $0xf7] sm:$0xff]
        %v7569 = vld [vmem:[#allocation2 + $0xff] sm:$0xff]
        %v7570 = vld [vmem:[#allocation2 + $0x107] sm:$0xff]
        %v7571 = vld [vmem:[#allocation2 + $0x10f] sm:$0xff]
        %v7572 = vsel %vm1263, %v7540, 0.0
        %v7573 = vsel %vm1264, %v7541, 0.0
        %v7574 = vsel %vm1265, %v7542, 0.0
        %v7575 = vsel %vm1266, %v7543, 0.0
        %v7576 = vsel %vm1267, %v7544, 0.0
        %v7577 = vsel %vm1268, %v7545, 0.0
        %v7578 = vsel %vm1269, %v7546, 0.0
        %v7579 = vsel %vm1270, %v7547, 0.0
        %v7580 = vsel %vm1271, %v7548, 0.0
        %v7581 = vsel %vm1272, %v7549, 0.0
        %v7582 = vsel %vm1273, %v7550, 0.0
        %v7583 = vsel %vm1274, %v7551, 0.0
        %v7584 = vsel %vm1275, %v7552, 0.0
        %v7585 = vsel %vm1276, %v7553, 0.0
        %v7586 = vsel %vm1277, %v7554, 0.0
        %v7587 = vsel %vm1278, %v7555, 0.0
        %v7588 = vsel %vm1279, %v7556, 0.0
        %v7589 = vsel %vm1280, %v7557, 0.0
        %v7590 = vsel %vm1281, %v7558, 0.0
        %v7591 = vsel %vm1282, %v7559, 0.0
        %v7592 = vsel %vm1283, %v7560, 0.0
        %v7593 = vsel %vm1284, %v7561, 0.0
        %v7594 = vsel %vm1285, %v7562, 0.0
        %v7595 = vsel %vm1286, %v7563, 0.0
        %v7596 = vsel %vm1287, %v7564, 0.0
        %v7597 = vsel %vm1288, %v7565, 0.0
        %v7598 = vsel %vm1289, %v7566, 0.0
        %v7599 = vsel %vm1290, %v7567, 0.0
        %v7600 = vsel %vm1291, %v7568, 0.0
        %v7601 = vsel %vm1292, %v7569, 0.0
        %v7602 = vsel %vm1293, %v7570, 0.0
        %v7603 = vsel %vm1294, %v7571, 0.0
        %v7604 = vld [vmem:[%s20] sm:$0x1]
        %v7605 = vpack.c.bf16 %v7573, %v7572
        %v7606 = vpack.c.bf16 %v7575, %v7574
        %v7607 = vpack.c.bf16 %v7577, %v7576
        %v7608 = vpack.c.bf16 %v7579, %v7578
        %v7609 = vpack.c.bf16 %v7581, %v7580
        %v7610 = vpack.c.bf16 %v7583, %v7582
        %v7611 = vpack.c.bf16 %v7585, %v7584
        %v7612 = vpack.c.bf16 %v7587, %v7586
        %v7613 = vpack.c.bf16 %v7589, %v7588
        %v7614 = vpack.c.bf16 %v7591, %v7590
        %v7615 = vpack.c.bf16 %v7593, %v7592
        %v7616 = vpack.c.bf16 %v7595, %v7594
        %v7617 = vpack.c.bf16 %v7597, %v7596
        %v7618 = vpack.c.bf16 %v7599, %v7598
        %v7619 = vpack.c.bf16 %v7601, %v7600
        %v7620 = vpack.c.bf16 %v7603, %v7602
        %v7621 = vld [vmem:[#allocation2 + $0x18] sm:$0xff]
        %v7622 = vld [vmem:[#allocation2 + $0x20] sm:$0xff]
        %v7623 = vld [vmem:[#allocation2 + $0x28] sm:$0xff]
        %v7624 = vld [vmem:[#allocation2 + $0x30] sm:$0xff]
        %v7625 = vld [vmem:[#allocation2 + $0x38] sm:$0xff]
        %v7626 = vld [vmem:[#allocation2 + $0x40] sm:$0xff]
        %v7627 = vld [vmem:[#allocation2 + $0x48] sm:$0xff]
        %v7628 = vld [vmem:[#allocation2 + $0x50] sm:$0xff]
        %v7629 = vld [vmem:[#allocation2 + $0x58] sm:$0xff]
        %v7630 = vld [vmem:[#allocation2 + $0x60] sm:$0xff]
        %v7631 = vld [vmem:[#allocation2 + $0x68] sm:$0xff]
        %v7632 = vld [vmem:[#allocation2 + $0x70] sm:$0xff]
        %v7633 = vld [vmem:[#allocation2 + $0x78] sm:$0xff]
        %v7634 = vld [vmem:[#allocation2 + $0x80] sm:$0xff]
        %v7635 = vld [vmem:[#allocation2 + $0x88] sm:$0xff]
        %v7636 = vld [vmem:[#allocation2 + $0x90] sm:$0xff]
        %v7637 = vld [vmem:[#allocation2 + $0x98] sm:$0xff]
        %v7638 = vld [vmem:[#allocation2 + $0xa0] sm:$0xff]
        %v7639 = vld [vmem:[#allocation2 + $0xa8] sm:$0xff]
        %v7640 = vld [vmem:[#allocation2 + $0xb0] sm:$0xff]
        %v7641 = vld [vmem:[#allocation2 + $0xb8] sm:$0xff]
        %v7642 = vld [vmem:[#allocation2 + $0xc0] sm:$0xff]
        %v7643 = vld [vmem:[#allocation2 + $0xc8] sm:$0xff]
        %v7644 = vld [vmem:[#allocation2 + $0xd0] sm:$0xff]
        %v7645 = vld [vmem:[#allocation2 + $0xd8] sm:$0xff]
        %v7646 = vld [vmem:[#allocation2 + $0xe0] sm:$0xff]
        %v7647 = vld [vmem:[#allocation2 + $0xe8] sm:$0xff]
        %v7648 = vld [vmem:[#allocation2 + $0xf0] sm:$0xff]
        %v7649 = vld [vmem:[#allocation2 + $0xf8] sm:$0xff]
        %v7650 = vld [vmem:[#allocation2 + $0x100] sm:$0xff]
        %v7651 = vld [vmem:[#allocation2 + $0x108] sm:$0xff]
        %v7652 = vld [vmem:[#allocation2 + $0x110] sm:$0xff]
        %s7653 = scalar_lea.vmem %s20, 1
        %v7654 = vld [vmem:[%s7653] sm:$0x1]
        %v7655 = vpack.c.bf16 %v7622, %v7621
        %v7656 = vpack.c.bf16 %v7624, %v7623
        %v7657 = vpack.c.bf16 %v7626, %v7625
        %v7658 = vpack.c.bf16 %v7628, %v7627
        %v7659 = vpack.c.bf16 %v7630, %v7629
        %v7660 = vpack.c.bf16 %v7632, %v7631
        %v7661 = vpack.c.bf16 %v7634, %v7633
        %v7662 = vpack.c.bf16 %v7636, %v7635
        %v7663 = vpack.c.bf16 %v7638, %v7637
        %v7664 = vpack.c.bf16 %v7640, %v7639
        %v7665 = vpack.c.bf16 %v7642, %v7641
        %v7666 = vpack.c.bf16 %v7644, %v7643
        %v7667 = vpack.c.bf16 %v7646, %v7645
        %v7668 = vpack.c.bf16 %v7648, %v7647
        %v7669 = vpack.c.bf16 %v7650, %v7649
        %v7670 = vpack.c.bf16 %v7652, %v7651
        %v7672 = vsel %vm3124, %v7654, 0
        %v7675 = vsel %vm3124, %v7655, 0
        %v7678 = vsel %vm3124, %v7656, 0
        %v7681 = vsel %vm3124, %v7657, 0
        %v7684 = vsel %vm3124, %v7658, 0
        %v7687 = vsel %vm3124, %v7659, 0
        %v7690 = vsel %vm3124, %v7660, 0
        %v7693 = vsel %vm3124, %v7661, 0
        %v7696 = vsel %vm3124, %v7662, 0
        %v7699 = vsel %vm3124, %v7663, 0
        %v7702 = vsel %vm3124, %v7664, 0
        %v7705 = vsel %vm3124, %v7665, 0
        %v7708 = vsel %vm3124, %v7666, 0
        %v7711 = vsel %vm3124, %v7667, 0
        %v7714 = vsel %vm3124, %v7668, 0
        %v7717 = vsel %vm3124, %v7669, 0
        %v7720 = vsel %vm3124, %v7670, 0
        %7722 = vmatprep.subr.bf16.mxu0 0
        %7723 = vmatpush1.bf16.xpose.msra.mxu0 %v7675
        %7724 = vmatprep.subr.bf16.mxu0 0
        %7725 = vmatpush1.bf16.xpose.msra.mxu0 %v7678
        %7726 = vmatprep.subr.bf16.mxu0 0
        %7727 = vmatpush1.bf16.xpose.msra.mxu0 %v7681
        %7728 = vmatprep.subr.bf16.mxu0 0
        %7729 = vmatpush1.bf16.xpose.msra.mxu0 %v7684
        %7730 = vmatprep.subr.bf16.mxu0 0
        %7731 = vmatpush1.bf16.xpose.msra.mxu0 %v7687
        %7732 = vmatprep.subr.bf16.mxu0 0
        %7733 = vmatpush1.bf16.xpose.msra.mxu0 %v7690
        %7734 = vmatprep.subr.bf16.mxu0 0
        %7735 = vmatpush1.bf16.xpose.msra.mxu0 %v7693
        %7736 = vmatprep.subr.bf16.mxu0 0
        %7737 = vmatpush1.bf16.xpose.msra.mxu0 %v7696
        %7738 = vmatprep.subr.bf16.mxu0 0
        %7739 = vmatpush1.bf16.xpose.msra.mxu0 %v7699
        %7740 = vmatprep.subr.bf16.mxu0 0
        %7741 = vmatpush1.bf16.xpose.msra.mxu0 %v7702
        %7742 = vmatprep.subr.bf16.mxu0 0
        %7743 = vmatpush1.bf16.xpose.msra.mxu0 %v7705
        %7744 = vmatprep.subr.bf16.mxu0 0
        %7745 = vmatpush1.bf16.xpose.msra.mxu0 %v7708
        %7746 = vmatprep.subr.bf16.mxu0 0
        %7747 = vmatpush1.bf16.xpose.msra.mxu0 %v7711
        %7748 = vmatprep.subr.bf16.mxu0 0
        %7749 = vmatpush1.bf16.xpose.msra.mxu0 %v7714
        %7750 = vmatprep.subr.bf16.mxu0 0
        %7751 = vmatpush1.bf16.xpose.msra.mxu0 %v7717
        %7752 = vmatprep.subr.bf16.mxu0 0
        %7753 = vmatpush1.bf16.xpose.msra.mxu0 %v7720
        %7754 = vmatprep.mubr.bf16.mxu0 0
        %7755 = vmatmul.mubr.bf16.gmra.mrb[0].mxu0 %v7672
        %v7756 = vpop.f32.mrb[0].mxu0
        %v7757 = vadd.f32 0.0, %v7756
        %v7758 = vpop.f32.mrb[0].mxu0
        %v7759 = vadd.f32 0.0, %v7758
        %v7760 = vpop.f32.mrb[0].mxu0
        %v7761 = vpop.f32.mrb[0].mxu0
        %7762 = vdwg.mxu0
        %v7764 = vsel %vm3124, %v7604, 0
        %v7767 = vsel %vm3124, %v7605, 0
        %v7770 = vsel %vm3124, %v7606, 0
        %v7773 = vsel %vm3124, %v7607, 0
        %v7776 = vsel %vm3124, %v7608, 0
        %v7779 = vsel %vm3124, %v7609, 0
        %v7782 = vsel %vm3124, %v7610, 0
        %v7785 = vsel %vm3124, %v7611, 0
        %v7788 = vsel %vm3124, %v7612, 0
        %v7791 = vsel %vm3124, %v7613, 0
        %v7794 = vsel %vm3124, %v7614, 0
        %v7797 = vsel %vm3124, %v7615, 0
        %v7800 = vsel %vm3124, %v7616, 0
        %v7803 = vsel %vm3124, %v7617, 0
        %v7806 = vsel %vm3124, %v7618, 0
        %v7809 = vsel %vm3124, %v7619, 0
        %v7812 = vsel %vm3124, %v7620, 0
        %7814 = vmatprep.subr.bf16.mxu0 0
        %7815 = vmatpush1.bf16.xpose.msra.mxu0 %v7767
        %7816 = vmatprep.subr.bf16.mxu0 0
        %7817 = vmatpush1.bf16.xpose.msra.mxu0 %v7770
        %7818 = vmatprep.subr.bf16.mxu0 0
        %7819 = vmatpush1.bf16.xpose.msra.mxu0 %v7773
        %7820 = vmatprep.subr.bf16.mxu0 0
        %7821 = vmatpush1.bf16.xpose.msra.mxu0 %v7776
        %7822 = vmatprep.subr.bf16.mxu0 0
        %7823 = vmatpush1.bf16.xpose.msra.mxu0 %v7779
        %7824 = vmatprep.subr.bf16.mxu0 0
        %7825 = vmatpush1.bf16.xpose.msra.mxu0 %v7782
        %7826 = vmatprep.subr.bf16.mxu0 0
        %7827 = vmatpush1.bf16.xpose.msra.mxu0 %v7785
        %7828 = vmatprep.subr.bf16.mxu0 0
        %7829 = vmatpush1.bf16.xpose.msra.mxu0 %v7788
        %7830 = vmatprep.subr.bf16.mxu0 0
        %7831 = vmatpush1.bf16.xpose.msra.mxu0 %v7791
        %7832 = vmatprep.subr.bf16.mxu0 0
        %7833 = vmatpush1.bf16.xpose.msra.mxu0 %v7794
        %7834 = vmatprep.subr.bf16.mxu0 0
        %7835 = vmatpush1.bf16.xpose.msra.mxu0 %v7797
        %7836 = vmatprep.subr.bf16.mxu0 0
        %7837 = vmatpush1.bf16.xpose.msra.mxu0 %v7800
        %7838 = vmatprep.subr.bf16.mxu0 0
        %7839 = vmatpush1.bf16.xpose.msra.mxu0 %v7803
        %7840 = vmatprep.subr.bf16.mxu0 0
        %7841 = vmatpush1.bf16.xpose.msra.mxu0 %v7806
        %7842 = vmatprep.subr.bf16.mxu0 0
        %7843 = vmatpush1.bf16.xpose.msra.mxu0 %v7809
        %7844 = vmatprep.subr.bf16.mxu0 0
        %7845 = vmatpush1.bf16.xpose.msra.mxu0 %v7812
        %7846 = vmatprep.mubr.bf16.mxu0 0
        %7847 = vmatmul.mubr.bf16.gmra.mrb[0].mxu0 %v7764
        %v7848 = vpop.f32.mrb[0].mxu0
        %v7849 = vadd.f32 %v7757, %v7848
        %v7850 = vpop.f32.mrb[0].mxu0
        %v7851 = vadd.f32 %v7759, %v7850
        %v7852 = vpop.f32.mrb[0].mxu0
        %v7853 = vpop.f32.mrb[0].mxu0
        %7854 = vdwg.mxu0
        %v7855 = vld [vmem:[#allocation2 + $0x19] sm:$0xff]
        %v7856 = vld [vmem:[#allocation2 + $0x21] sm:$0xff]
        %v7857 = vld [vmem:[#allocation2 + $0x29] sm:$0xff]
        %v7858 = vld [vmem:[#allocation2 + $0x31] sm:$0xff]
        %v7859 = vld [vmem:[#allocation2 + $0x39] sm:$0xff]
        %v7860 = vld [vmem:[#allocation2 + $0x41] sm:$0xff]
        %v7861 = vld [vmem:[#allocation2 + $0x49] sm:$0xff]
        %v7862 = vld [vmem:[#allocation2 + $0x51] sm:$0xff]
        %v7863 = vld [vmem:[#allocation2 + $0x59] sm:$0xff]
        %v7864 = vld [vmem:[#allocation2 + $0x61] sm:$0xff]
        %v7865 = vld [vmem:[#allocation2 + $0x69] sm:$0xff]
        %v7866 = vld [vmem:[#allocation2 + $0x71] sm:$0xff]
        %v7867 = vld [vmem:[#allocation2 + $0x79] sm:$0xff]
        %v7868 = vld [vmem:[#allocation2 + $0x81] sm:$0xff]
        %v7869 = vld [vmem:[#allocation2 + $0x89] sm:$0xff]
        %v7870 = vld [vmem:[#allocation2 + $0x91] sm:$0xff]
        %v7871 = vld [vmem:[#allocation2 + $0x99] sm:$0xff]
        %v7872 = vld [vmem:[#allocation2 + $0xa1] sm:$0xff]
        %v7873 = vld [vmem:[#allocation2 + $0xa9] sm:$0xff]
        %v7874 = vld [vmem:[#allocation2 + $0xb1] sm:$0xff]
        %v7875 = vld [vmem:[#allocation2 + $0xb9] sm:$0xff]
        %v7876 = vld [vmem:[#allocation2 + $0xc1] sm:$0xff]
        %v7877 = vld [vmem:[#allocation2 + $0xc9] sm:$0xff]
        %v7878 = vld [vmem:[#allocation2 + $0xd1] sm:$0xff]
        %v7879 = vld [vmem:[#allocation2 + $0xd9] sm:$0xff]
        %v7880 = vld [vmem:[#allocation2 + $0xe1] sm:$0xff]
        %v7881 = vld [vmem:[#allocation2 + $0xe9] sm:$0xff]
        %v7882 = vld [vmem:[#allocation2 + $0xf1] sm:$0xff]
        %v7883 = vld [vmem:[#allocation2 + $0xf9] sm:$0xff]
        %v7884 = vld [vmem:[#allocation2 + $0x101] sm:$0xff]
        %v7885 = vld [vmem:[#allocation2 + $0x109] sm:$0xff]
        %v7886 = vld [vmem:[#allocation2 + $0x111] sm:$0xff]
        %v7887 = vsel %vm2076, %v7855, 0.0
        %v7888 = vsel %vm2077, %v7856, 0.0
        %v7889 = vsel %vm2078, %v7857, 0.0
        %v7890 = vsel %vm2079, %v7858, 0.0
        %v7891 = vsel %vm2080, %v7859, 0.0
        %v7892 = vsel %vm2081, %v7860, 0.0
        %v7893 = vsel %vm2082, %v7861, 0.0
        %v7894 = vsel %vm2083, %v7862, 0.0
        %v7895 = vsel %vm2084, %v7863, 0.0
        %v7896 = vsel %vm2085, %v7864, 0.0
        %v7897 = vsel %vm2086, %v7865, 0.0
        %v7898 = vsel %vm2087, %v7866, 0.0
        %v7899 = vsel %vm2088, %v7867, 0.0
        %v7900 = vsel %vm2089, %v7868, 0.0
        %v7901 = vsel %vm2090, %v7869, 0.0
        %v7902 = vsel %vm2091, %v7870, 0.0
        %v7903 = vsel %vm2092, %v7871, 0.0
        %v7904 = vsel %vm2093, %v7872, 0.0
        %v7905 = vsel %vm2094, %v7873, 0.0
        %v7906 = vsel %vm2095, %v7874, 0.0
        %v7907 = vsel %vm2096, %v7875, 0.0
        %v7908 = vsel %vm2097, %v7876, 0.0
        %v7909 = vsel %vm2098, %v7877, 0.0
        %v7910 = vsel %vm2099, %v7878, 0.0
        %v7911 = vsel %vm2100, %v7879, 0.0
        %v7912 = vsel %vm2101, %v7880, 0.0
        %v7913 = vsel %vm2102, %v7881, 0.0
        %v7914 = vsel %vm2103, %v7882, 0.0
        %v7915 = vsel %vm2104, %v7883, 0.0
        %v7916 = vsel %vm2105, %v7884, 0.0
        %v7917 = vsel %vm2106, %v7885, 0.0
        %v7918 = vsel %vm2107, %v7886, 0.0
        %s7919 = scalar_lea.vmem %s20, 2
        %v7920 = vld [vmem:[%s7919] sm:$0x1]
        %v7921 = vpack.c.bf16 %v7888, %v7887
        %v7922 = vpack.c.bf16 %v7890, %v7889
        %v7923 = vpack.c.bf16 %v7892, %v7891
        %v7924 = vpack.c.bf16 %v7894, %v7893
        %v7925 = vpack.c.bf16 %v7896, %v7895
        %v7926 = vpack.c.bf16 %v7898, %v7897
        %v7927 = vpack.c.bf16 %v7900, %v7899
        %v7928 = vpack.c.bf16 %v7902, %v7901
        %v7929 = vpack.c.bf16 %v7904, %v7903
        %v7930 = vpack.c.bf16 %v7906, %v7905
        %v7931 = vpack.c.bf16 %v7908, %v7907
        %v7932 = vpack.c.bf16 %v7910, %v7909
        %v7933 = vpack.c.bf16 %v7912, %v7911
        %v7934 = vpack.c.bf16 %v7914, %v7913
        %v7935 = vpack.c.bf16 %v7916, %v7915
        %v7936 = vpack.c.bf16 %v7918, %v7917
        %v7938 = vsel %vm3124, %v7920, 0
        %v7941 = vsel %vm3124, %v7921, 0
        %v7944 = vsel %vm3124, %v7922, 0
        %v7947 = vsel %vm3124, %v7923, 0
        %v7950 = vsel %vm3124, %v7924, 0
        %v7953 = vsel %vm3124, %v7925, 0
        %v7956 = vsel %vm3124, %v7926, 0
        %v7959 = vsel %vm3124, %v7927, 0
        %v7962 = vsel %vm3124, %v7928, 0
        %v7965 = vsel %vm3124, %v7929, 0
        %v7968 = vsel %vm3124, %v7930, 0
        %v7971 = vsel %vm3124, %v7931, 0
        %v7974 = vsel %vm3124, %v7932, 0
        %v7977 = vsel %vm3124, %v7933, 0
        %v7980 = vsel %vm3124, %v7934, 0
        %v7983 = vsel %vm3124, %v7935, 0
        %v7986 = vsel %vm3124, %v7936, 0
        %7988 = vmatprep.subr.bf16.mxu0 0
        %7989 = vmatpush1.bf16.xpose.msra.mxu0 %v7941
        %7990 = vmatprep.subr.bf16.mxu0 0
        %7991 = vmatpush1.bf16.xpose.msra.mxu0 %v7944
        %7992 = vmatprep.subr.bf16.mxu0 0
        %7993 = vmatpush1.bf16.xpose.msra.mxu0 %v7947
        %7994 = vmatprep.subr.bf16.mxu0 0
        %7995 = vmatpush1.bf16.xpose.msra.mxu0 %v7950
        %7996 = vmatprep.subr.bf16.mxu0 0
        %7997 = vmatpush1.bf16.xpose.msra.mxu0 %v7953
        %7998 = vmatprep.subr.bf16.mxu0 0
        %7999 = vmatpush1.bf16.xpose.msra.mxu0 %v7956
        %8000 = vmatprep.subr.bf16.mxu0 0
        %8001 = vmatpush1.bf16.xpose.msra.mxu0 %v7959
        %8002 = vmatprep.subr.bf16.mxu0 0
        %8003 = vmatpush1.bf16.xpose.msra.mxu0 %v7962
        %8004 = vmatprep.subr.bf16.mxu0 0
        %8005 = vmatpush1.bf16.xpose.msra.mxu0 %v7965
        %8006 = vmatprep.subr.bf16.mxu0 0
        %8007 = vmatpush1.bf16.xpose.msra.mxu0 %v7968
        %8008 = vmatprep.subr.bf16.mxu0 0
        %8009 = vmatpush1.bf16.xpose.msra.mxu0 %v7971
        %8010 = vmatprep.subr.bf16.mxu0 0
        %8011 = vmatpush1.bf16.xpose.msra.mxu0 %v7974
        %8012 = vmatprep.subr.bf16.mxu0 0
        %8013 = vmatpush1.bf16.xpose.msra.mxu0 %v7977
        %8014 = vmatprep.subr.bf16.mxu0 0
        %8015 = vmatpush1.bf16.xpose.msra.mxu0 %v7980
        %8016 = vmatprep.subr.bf16.mxu0 0
        %8017 = vmatpush1.bf16.xpose.msra.mxu0 %v7983
        %8018 = vmatprep.subr.bf16.mxu0 0
        %8019 = vmatpush1.bf16.xpose.msra.mxu0 %v7986
        %8020 = vmatprep.mubr.bf16.mxu0 0
        %8021 = vmatmul.mubr.bf16.gmra.mrb[0].mxu0 %v7938
        %v8022 = vpop.f32.mrb[0].mxu0
        %v8023 = vadd.f32 0.0, %v8022
        %v8024 = vpop.f32.mrb[0].mxu0
        %v8025 = vadd.f32 0.0, %v8024
        %v8026 = vpop.f32.mrb[0].mxu0
        %v8027 = vpop.f32.mrb[0].mxu0
        %8028 = vdwg.mxu0
        %v8029 = vadd.f32 %v7849, %v8023
        %v8030 = vadd.f32 %v7851, %v8025
        %8032 = vset.pattern.permute.xlu0 0
        %8033 = vperm.xlu0 %8032, %v7215
        %v8034 = vpop.permute.xlu0 %8033
        %v8036 = vlaneseq
        %v8037 = vshrl.u32 %v8036, 7
        %v8038 = vsub.s32 0, %v8037
        %v8039 = vrot.slane %v8034, %v8038
        %v8040 = vadd.f32 %v8029, %v8039
        %v8041 = vadd.f32 %v8030, %v8039
        %v8042 = vsub.f32 0.0, %v8040
        %v8043 = vsub.f32 0.0, %v8041
        %v8044 = vmul.f32 %v8042, 1.442695
        %v8045 = vpow.pop %v8044
        %v8046 = vmul.f32 %v8043, 1.442695
        %v8047 = vpow.pop %v8046
        %v8048 = vadd.f32 %v8045, 1.0
        %v8049 = vadd.f32 %v8047, 1.0
        %v8050 = vrcp.pop %v8048
        %v8051 = vmul.f32 1.0, %v8050
        %v8052 = vrcp.pop %v8049
        %v8053 = vmul.f32 1.0, %v8052
        %v8056 = vcombine.low %v8051, %v8053
        %v8058 = vunpack.c.l.s4 1966171168
        %v8059 = vunpack.c.0.s8 %v8058
        %v8060 = vlaneseq
        %v8061 = vshrl.u32 %v8060, 7
        %v8062 = vsub.s32 %v8059, %v8061
        %v8063 = vrot.slane %v8056, %v8062
        %v8065 = vunpack.c.l.s4 1966171168
        %v8066 = vunpack.c.0.s8 %v8065
        %v8067 = vlaneseq
        %v8068 = vshrl.u32 %v8067, 7
        %v8069 = vsub.s32 %v8066, %v8068
        %v8070 = vrot.slane %v8063, %v8069
        %v8072 = vlaneseq
        %vm8073 = vcmp.ge.s32.totalorder %v8072, 0
        %vm8074 = vcmp.lt.s32.totalorder %v8072, 256
        %vm8075 = vmand %vm8073, %vm8074
        %8076 = vst.msk [vmem:[%s678] sm:$0x3] %vm8075, %v8070
        %s8077 = sand.u32 %s513, 1
        %s8078 = scalar_lea.sflag [#allocation5], %s8077
        %s8079 = sand.u32 %s513, 1
        %s8080 = smul.addr %s8079, 2
        %s8081 = scalar_lea.vmem [#allocation4], %s8080
        // Predicated region
        $region109: #{tpu_custom_call.1} parent=107 // pred_check
          %p8082 = pneg %p523
        $region110: #{tpu_custom_call.1} parent=107 // pred_check_branch
          %8084 = sbr.rel (%p8082) target = $region112
        $region111: #{tpu_custom_call.1} parent=107 // pred_region
          %s8086 = ssub.s32 32, 32
          %8087 = vsyncadd %s8078, %s8086
          %s8088 = smul.addr %s38, 2
          %s8089 = smul.addr %s8088, 16
          %s8090 = scalar_lea.hbm %s22, %s8089
          %s8092 = sshll.u32 %s8081, 4
          %s8093 = int_to_ptr.vmem [resolvable:$true] %s8092
          %8095 = dma.vmem_to_hbm [thread:$0]  %s8093, 32, %s8090, %s8078
        $region112: #{tpu_custom_call.1} parent=107 // pred_fallthru
          _
      $region108: #{tpu_custom_call.1} parent=5 // pred_fallthru
        _
      %p8096 = scmp.le.s32.totalorder 2, %s33
      // Predicated region
      $region113: #{tpu_custom_call.1} parent=5 // pred_check
        %p8097 = pneg %p8096
      $region114: #{tpu_custom_call.1} parent=5 // pred_check_branch
        %8099 = sbr.rel (%p8097) target = $region116
      $region115: #{tpu_custom_call.1} parent=5 // pred_region
        %s8100 = ssub.s32 %s33, 2
        // Predicated region
        $region117: #{tpu_custom_call.1} parent=115 // pred_check
          %p8101 = pneg %p529
        $region118: #{tpu_custom_call.1} parent=115 // pred_check_branch
          %8103 = sbr.rel (%p8101) target = $region120
        $region119: #{tpu_custom_call.1} parent=115 // pred_region
          %s8104 = sand.u32 %s514, 1
          %s8105 = scalar_lea.sflag [#allocation5], %s8104
          %s8106 = sand.u32 %s514, 1
          %s8107 = smul.addr %s8106, 2
          %s8108 = scalar_lea.vmem [#allocation4], %s8107
          %8109 = dma.done %s8105, 32
        $region120: #{tpu_custom_call.1} parent=115 // pred_fallthru
          _
      $region116: #{tpu_custom_call.1} parent=5 // pred_fallthru
        _
    $region6: #{tpu_custom_call.1} parent=1 // loop_footer
      %s37 = sadd.s32 1, %s33
    $region7: #{tpu_custom_call.1} parent=1 // loop_footer_branch
      %32 = sbr.rel target = $region3
    $region8: #{tpu_custom_call.1} parent=1 // loop_exit
      _
    %8110 = vsyncpa [#allocation5], 1
    %s8111 = scalar_lea.sflag [#allocation5], 1
    %8112 = vsyncpa %s8111, 1

</llo_original>
